<compile_context>
chip_gen: v7x
topology: tpu7x:2x2x1
jax: 0.10.0
libtpu: 0.0.40
codegen_flags: <defaults>
</compile_context>

<pallas_src>
import math
from functools import partial

import numpy as np
import jax
import jax.numpy as jnp
from jax.experimental import pallas as pl
from jax.experimental.pallas import tpu as pltpu

# ----------------------------- configuration --------------------------------
EMBED_DIM = 32
N_HEADS = 4
WINDOW_SIZE = 4
SHIFT_SIZE = 2          # > 0 -> ShiftedWindowMSA path (same as the module)
DROP_PATH_RATE = 0.0    # DropPath: identity at inference
LN_EPS = 1e-5
NEG_INF = -1e9          # finite sentinel inside the kernel (exp underflows to exactly 0)

# MXU operand dtype. bf16 inputs (with f32 accumulation) run the bf16-native MXUs at
# full rate and halve DMA/VMEM for the resident constants; elementwise math stays f32.
# Use jnp.float32 here to recover strict <=5e-4 parity with the f32 reference.
MXU_DTYPE = jnp.bfloat16


# ----------------------------- in-kernel helpers -----------------------------
def _erf_poly(x):
    # Abramowitz & Stegun 7.1.26 erf polynomial, max abs err ~1.5e-7 -> matches
    # torch.nn.GELU (exact erf) at f32 precision.  Kept as a polynomial because
    # lax.erf has no guaranteed Mosaic lowering; the exp and the reciprocal below
    # land on the EUP slot, the rest is a handful of VALU ops on a small tile.
    a1, a2, a3, a4, a5 = 0.254829592, -0.284496736, 1.421413741, -1.453152027, 1.061405429
    p = 0.3275911
    s = jnp.where(x >= 0.0, 1.0, -1.0)
    ax = jnp.abs(x)
    t = pl.reciprocal(1.0 + p * ax, approx=False)
    poly = ((((a5 * t + a4) * t + a3) * t + a2) * t + a1) * t
    return s * (1.0 - poly * jnp.exp(-ax * ax))


def _layer_norm(x, g, b):
    mean = jnp.mean(x, axis=-1, keepdims=True)
    var = jnp.mean(jnp.square(x - mean), axis=-1, keepdims=True)
    return (x - mean) * jax.lax.rsqrt(var + LN_EPS) * g + b


# ----------------------------- fused Pallas kernel ----------------------------
def _fused_layer_kernel(x_ref, gat_ref, sct_ref, mask_ref,
                        ln1g_ref, ln1b_ref, ln2g_ref, ln2b_ref,
                        wqkv_ref, bqkv_ref, wo_ref, bo_ref,
                        w1_ref, b1_ref, w2_ref, b2_ref,
                        o_ref, ctx_ref,
                        *, n_heads, n_windows, win_len, imgs_per_step, tokens_per_img):
    C = o_ref.shape[-1]
    dh = C // n_heads
    mxu = wqkv_ref.dtype

    # Residents (constant index_map -> DMA'd once, reused by every grid step).
    gat = gat_ref[...]                 # (Lp, L)   one-hot: shift + pad + window partition
    sct = sct_ref[...]                 # (L, Lp)   one-hot: window reverse + crop + un-shift
    mask = mask_ref[...]               # (H*nW, Lw, Lw) rel-pos bias + shift mask (finite sentinel)
    wqkv, bqkv = wqkv_ref[...], bqkv_ref[...]
    wo, bo = wo_ref[...], bo_ref[...]
    w1, b1 = w1_ref[...], b1_ref[...]
    w2, b2 = w2_ref[...], b2_ref[...]
    ln1g, ln1b = ln1g_ref[...], ln1b_ref[...]
    ln2g, ln2b = ln2g_ref[...], ln2b_ref[...]

    x_all = x_ref[...].astype(jnp.float32)                        # (G*L, C)

    for g in range(imgs_per_step):                                # static, unrolled
        x = x_all[g * tokens_per_img:(g + 1) * tokens_per_img]    # (L, C) one image

        # ---- LN1 ----
        xn = _layer_norm(x, ln1g, ln1b)

        # ---- cyclic shift + pad + window partition: one-hot gather matmul ----
        # pad rows of `gat` are all-zero -> padded tokens are exact zeros (torch F.pad parity)
        xw = jnp.dot(gat, xn.astype(mxu), preferred_element_type=jnp.float32)     # (Lp, C)

        # ---- fused QKV projection (1/sqrt(dh) pre-folded into the q columns) ----
        qkv = jnp.dot(xw.astype(mxu), wqkv, preferred_element_type=jnp.float32) + bqkv
        qkv = qkv.reshape(n_windows, win_len, 3 * C)               # (nW, Lw, 3C)

        # ---- block-diagonal (per-window) attention, one batched einsum per head ----
        for hd in range(n_heads):                                  # small, unrolled
            lo = hd * dh
            qh = qkv[:, :, lo:lo + dh]                             # (nW, Lw, dh), pre-scaled
            kh = qkv[:, :, C + lo:C + lo + dh]
            vh = qkv[:, :, 2 * C + lo:2 * C + lo + dh]
            s = jnp.einsum('wqd,wkd->wqk', qh.astype(mxu), kh.astype(mxu),
                           preferred_element_type=jnp.float32)     # (nW, Lw, Lw)
            s = s + mask[hd * n_windows:(hd + 1) * n_windows]
            s = s - jnp.max(s, axis=-1, keepdims=True)
            e = jnp.exp(s)
            p = e * pl.reciprocal(jnp.sum(e, axis=-1, keepdims=True), approx=True)
            ctx = jnp.einsum('wqk,wkd->wqd', p.astype(mxu), vh.astype(mxu),
                             preferred_element_type=jnp.float32)   # (nW, Lw, dh)
            ctx_ref[:, pl.ds(lo, dh)] = ctx.reshape(n_windows * win_len, dh)

        # ---- ONE output projection for all heads / windows ----
        yw = jnp.dot(ctx_ref[...].astype(mxu), wo, preferred_element_type=jnp.float32) + bo

        # ---- window reverse + crop + un-shift: one-hot scatter matmul ----
        a = jnp.dot(sct, yw.astype(mxu), preferred_element_type=jnp.float32)      # (L, C)

        # TODO(synk): DropPath (stochastic depth) is identity at inference; training-time
        # random path dropping is not reproduced.
        x2 = x + a                                                 # residual 1 (fused)

        # ---- LN2 + FFN + residual 2 (fused) ----
        xn2 = _layer_norm(x2, ln2g, ln2b)
        hmid = jnp.dot(xn2.astype(mxu), w1, preferred_element_type=jnp.float32) + b1
        hmid = 0.5 * hmid * (1.0 + _erf_poly(hmid * (1.0 / math.sqrt(2.0))))       # exact GELU
        yf = jnp.dot(hmid.astype(mxu), w2, preferred_element_type=jnp.float32) + b2
        o_ref[pl.ds(g * tokens_per_img, tokens_per_img), :] = (x2 + yf).astype(o_ref.dtype)


# -------------------- static permutation / mask construction ------------------
def build_gather_scatter(h, w, ws, shift):
    """One-hot matrices implementing (cyclic shift, pad, window partition) and its inverse.

    torch parity: pads a FULL extra window even when h, w divide ws.
    """
    pad_h = ws - h % ws
    pad_w = ws - w % ws
    ph, pw = h + pad_h, w + pad_w
    nwh, nww = ph // ws, pw // ws
    Lw = ws * ws
    Lp = nwh * nww * Lw
    L = h * w
    gat = np.zeros((Lp, L), np.float32)
    for r in range(Lp):
        widx, pos = divmod(r, Lw)
        wh, wwb = divmod(widx, nww)
        wi, wj = divmod(pos, ws)
        pi, pj = wh * ws + wi, wwb * ws + wj
        if pi < h and pj < w:                       # non-pad token
            si, sj = (pi + shift) % h, (pj + shift) % w
            gat[r, si * w + sj] = 1.0
    sct = np.zeros((L, Lp), np.float32)
    for l in range(L):
        i, j = divmod(l, w)
        pi, pj = (i - shift) % h, (j - shift) % w
        r = (pi // ws * nww + pj // ws) * Lw + (pi % ws) * ws + (pj % ws)
        sct[l, r] = 1.0
    return gat, sct


def get_rel_pos_index(ws):
    coords = np.stack(np.meshgrid(np.arange(ws), np.arange(ws), indexing='ij'))
    cf = coords.reshape(2, -1)
    rel = (cf[:, :, None] - cf[:, None, :]).transpose(1, 2, 0).astype(np.int64)
    rel[:, :, 0] += ws - 1
    rel[:, :, 1] += ws - 1
    rel[:, :, 0] *= 2 * ws - 1
    return rel.sum(-1)                                           # (ws*ws, ws*ws)


def window_partition(x, h, w, ws):
    n, _, c = x.shape
    x = x.reshape(n, h, w, c)
    pad_h = ws - h % ws          # torch parity: pads a full `ws` even when divisible
    pad_w = ws - w % ws
    x = jnp.pad(x, ((0, 0), (0, pad_h), (0, pad_w), (0, 0)))
    ph, pw = h + pad_h, w + pad_w
    x = x.reshape(n, ph // ws, ws, pw // ws, ws, c)
    return jnp.swapaxes(x, 2, 3).reshape(-1, ws * ws, c)


def window_reverse(x, h, w, ws):
    c = x.shape[-1]
    ph, pw = h + ws - h % ws, w + ws - w % ws
    x = x.reshape(-1, ph // ws, pw // ws, ws, ws, c)
    x = jnp.swapaxes(x, 2, 3).reshape(-1, ph, pw, c)
    return x[:, :h, :w].reshape(-1, h * w, c)


def cyclic_shift(x, h, w, shift):
    n, _, c = x.shape
    x = x.reshape(n, h, w, c)
    x = jnp.roll(x, (shift, shift), axis=(1, 2))
    return x.reshape(n, -1, c)


def get_shift_mask(h, w, ws, shift, neg=-jnp.inf):
    mask = np.zeros((1, h, w, 1), dtype=np.float32)
    h_slices = (slice(0, -ws), slice(-ws, -shift), slice(-shift, None))
    w_slices = (slice(0, -ws), slice(-ws, -shift), slice(-shift, None))
    cnt = 0
    for hs in h_slices:
        for wss in w_slices:
            mask[:, hs, wss, :] = cnt
            cnt += 1
    mask = jnp.asarray(mask).reshape(1, h * w, 1)
    mask = window_partition(mask, h, w, ws)[:, :, 0]             # (nW, Lw)
    diff = mask[:, :, None] - mask[:, None, :]
    return jnp.where(diff != 0, neg, 0.0).astype(jnp.float32)    # (nW, Lw, Lw)


def build_attn_mask(params, h, w):
    """Per-window additive table (H*nW, Lw, Lw): rel-pos bias + shift mask.
    Batch independent -> DMA'd to VMEM once; finite -1e9 sentinel (NaN-proof)."""
    ws, shift, H = WINDOW_SIZE, SHIFT_SIZE, N_HEADS
    Lw = ws * ws
    ph, pw = h + ws - h % ws, w + ws - w % ws
    nW = (ph // ws) * (pw // ws)
    bias = params['rel_pos_bias_table'].reshape(H, (2 * ws - 1) ** 2)[:, params['rel_pos_index']]
    if shift > 0:
        smask = get_shift_mask(h, w, ws, shift, neg=NEG_INF)     # (nW, Lw, Lw)
    else:
        smask = jnp.zeros((nW, Lw, Lw), jnp.float32)
    combined = bias[:, None, :, :] + smask[None, :, :, :]        # (H, nW, Lw, Lw)
    return combined.reshape(H * nW, Lw, Lw).astype(jnp.float32)


# ----------------------------- fused-kernel wrapper ----------------------------
def transformer_layer_pallas(params, x, h, w):
    N, L, C = x.shape
    ws, shift, H = WINDOW_SIZE, SHIFT_SIZE, N_HEADS
    dh = C // H
    Hd = params['ffn']['w1'].shape[1]
    Lw = ws * ws
    mxu = MXU_DTYPE

    gat_np, sct_np = build_gather_scatter(h, w, ws, shift)
    Lp = gat_np.shape[0]
    nW = Lp // Lw
    gat = jnp.asarray(gat_np).astype(mxu)                        # one-hot: exact in bf16
    sct = jnp.asarray(sct_np).astype(mxu)
    mask = build_attn_mask(params, h, w)                         # (H*nW, Lw, Lw), f32

    pa, pf = params['attn'], params['ffn']
    scale = 1.0 / math.sqrt(dh)
    # Fused QKV weight/bias with the attention scale folded into the q columns.
    wqkv = jnp.concatenate([pa['wq'] * scale, pa['wk'], pa['wv']], axis=1).astype(mxu)
    bqkv = jnp.concatenate([pa['bq'] * scale, pa['bk'], pa['bv']]).reshape(1, 3 * C)

    # Pack several images per grid step (amortizes ~0.35us/step overhead) while keeping
    # the grid length even so both v7x TensorCores get work (v5e/v6e: 1 TC, also fine).
    G = 1
    for cand in (4, 2):
        if N % (2 * cand) == 0:
            G = cand
            break
    n_steps = N // G

    x2d = x.reshape(N * L, C)

    def const(*shape):
        return pl.BlockSpec(shape, lambda b, _n=len(shape): (0,) * _n)

    kern = partial(_fused_layer_kernel, n_heads=H, n_windows=nW, win_len=Lw,
                   imgs_per_step=G, tokens_per_img=L)
    out2d = pl.pallas_call(
        kern,
        out_shape=jax.ShapeDtypeStruct((N * L, C), x.dtype),
        grid=(n_steps,),
        in_specs=[
            pl.BlockSpec((G * L, C), lambda b: (b, 0)),          # x (G images per step)
            const(Lp, L),                                        # gather (shift+pad+partition)
            const(L, Lp),                                        # scatter (reverse+crop+unshift)
            const(H * nW, Lw, Lw),                               # per-window bias+shift mask
            const(1, C), const(1, C), const(1, C), const(1, C),  # ln1_g ln1_b ln2_g ln2_b
            const(C, 3 * C), const(1, 3 * C),                    # fused wqkv / bqkv
            const(C, C), const(1, C),                            # wo / bo
            const(C, Hd), const(1, Hd), const(Hd, C), const(1, C),  # w1 b1 w2 b2
        ],
        out_specs=pl.BlockSpec((G * L, C), lambda b: (b, 0)),
        scratch_shapes=[pltpu.VMEM((Lp, C), jnp.float32)],       # per-head ctx gather buffer
        compiler_params=pltpu.CompilerParams(dimension_semantics=("parallel",)),
    )(x2d, gat, sct, mask,
      params['ln1_g'].reshape(1, C), params['ln1_b'].reshape(1, C),
      params['ln2_g'].reshape(1, C), params['ln2_b'].reshape(1, C),
      wqkv, bqkv,
      pa['wo'].astype(mxu), pa['bo'].reshape(1, C),
      pf['w1'].astype(mxu), pf['b1'].reshape(1, Hd),
      pf['w2'].astype(mxu), pf['b2'].reshape(1, C))
    return out2d.reshape(N, L, C)


# ----------------------------- pure-JAX reference ------------------------------
def ref_layernorm(x2d, g, b):
    mean = jnp.mean(x2d, -1, keepdims=True)
    var = jnp.mean((x2d - mean) ** 2, -1, keepdims=True)
    return (x2d - mean) / jnp.sqrt(var + LN_EPS) * g + b


def ref_mha(xw, attn_mask, p):
    B, L, C = xw.shape
    H, dh = N_HEADS, C // N_HEADS
    q = xw @ p['wq'] + p['bq']
    k = xw @ p['wk'] + p['bk']
    v = xw @ p['wv'] + p['bv']
    sp = lambda t: t.reshape(B, L, H, dh).transpose(0, 2, 1, 3)
    q, k, v = sp(q), sp(k), sp(v)
    s = jnp.einsum('bhld,bhmd->bhlm', q, k) / math.sqrt(dh) + attn_mask
    a = jax.nn.softmax(s, axis=-1)
    ctx = jnp.einsum('bhlm,bhmd->bhld', a, v).transpose(0, 2, 1, 3).reshape(B, L, C)
    return ctx @ p['wo'] + p['bo']


def ref_ffn(x2d, p):
    h = x2d @ p['w1'] + p['b1']
    h = 0.5 * h * (1.0 + jax.lax.erf(h / math.sqrt(2.0)))
    return h @ p['w2'] + p['b2']


def transformer_layer_reference(params, x, h, w):
    N, L, C = x.shape
    ws, shift, H = WINDOW_SIZE, SHIFT_SIZE, N_HEADS
    Lw = ws * ws
    shortcut = x
    xn = ref_layernorm(x.reshape(N * L, C), params['ln1_g'], params['ln1_b']).reshape(N, L, C)
    bias = params['rel_pos_bias_table'].reshape(H, (2 * ws - 1) ** 2)[:, params['rel_pos_index']][None]
    if shift > 0:
        xs = cyclic_shift(xn, h, w, -shift)
        xw = window_partition(xs, h, w, ws)
        win_mask = get_shift_mask(h, w, ws, shift)
        maskr = jnp.tile(win_mask[:, None], (N, 1, 1, 1))
        attn_mask = bias + maskr
        aw = ref_mha(xw, attn_mask, params['attn'])
        a = window_reverse(aw, h, w, ws)
        a = cyclic_shift(a, h, w, shift)
    else:
        xw = window_partition(xn, h, w, ws)
        B = xw.shape[0]
        attn_mask = jnp.broadcast_to(bias, (B, H, Lw, Lw))
        aw = ref_mha(xw, attn_mask, params['attn'])
        a = window_reverse(aw, h, w, ws)
    x = shortcut + a
    shortcut = x
    xn = ref_layernorm(x.reshape(N * L, C), params['ln2_g'], params['ln2_b'])
    f = ref_ffn(xn, params['ffn']).reshape(N, L, C)
    return shortcut + f


# ----------------------------- params -----------------------------------------
def init_params(key):
    C, H, ws = EMBED_DIM, N_HEADS, WINDOW_SIZE
    hidden = 4 * C
    ks = jax.random.split(key, 13)

    def nrm(k, shape, s=0.02):
        return (s * jax.random.normal(k, shape)).astype(jnp.float32)

    return dict(
        ln1_g=jnp.ones((C,), jnp.float32), ln1_b=jnp.zeros((C,), jnp.float32),
        ln2_g=jnp.ones((C,), jnp.float32), ln2_b=jnp.zeros((C,), jnp.float32),
        rel_pos_bias_table=(0.02 * jax.random.truncated_normal(
            ks[0], -2.0, 2.0, (H * (2 * ws - 1) ** 2,))).astype(jnp.float32),
        rel_pos_index=jnp.asarray(get_rel_pos_index(ws)),
        attn=dict(
            wq=nrm(ks[1], (C, C)), wk=nrm(ks[2], (C, C)),
            wv=nrm(ks[3], (C, C)), wo=nrm(ks[4], (C, C)),
            bq=nrm(ks[5], (C,), 0.01), bk=nrm(ks[6], (C,), 0.01),
            bv=nrm(ks[7], (C,), 0.01), bo=nrm(ks[8], (C,), 0.01),
        ),
        ffn=dict(
            w1=nrm(ks[9], (C, hidden)), b1=nrm(ks[10], (hidden,), 0.01),
            w2=nrm(ks[11], (hidden, C)), b2=nrm(ks[12], (C,), 0.01),
        ),
    )


# ----------------------------- main --------------------------------------------
if __name__ == "__main__":
    key = jax.random.PRNGKey(0)
    pkey, xkey = jax.random.split(key)
    params = init_params(pkey)

    N, h, w = 2, 8, 8
    x = jax.random.normal(xkey, (N, h * w, EMBED_DIM), jnp.float32)

    out = jax.block_until_ready(transformer_layer_pallas(params, x, h, w))
    ref = jax.block_until_ready(transformer_layer_reference(params, x, h, w))

    assert out.shape == (N, h * w, EMBED_DIM)
    # bf16-at-the-MXU (f32 accumulate) vs. the all-f32 reference; switch MXU_DTYPE to
    # jnp.float32 to validate at the strict 5e-4 f32-parity bar.
    tol = 5e-4 if MXU_DTYPE == jnp.float32 else 2e-3
    err = float(jnp.max(jnp.abs(out - ref)))
    assert err < tol, f"mismatch vs reference: max abs err {err} (tol {tol})"
    print("KERNEL_OK")
</pallas_src>

<mosaic_0001>
module attributes {stable_mosaic.version = 11 : i64} {
  func.func @_fused_layer_kernel(%arg0: i32, %arg1: memref<64x32xf32, #tpu.memory_space<vmem>>, %arg2: memref<144x64xbf16, #tpu.memory_space<vmem>>, %arg3: memref<64x144xbf16, #tpu.memory_space<vmem>>, %arg4: memref<36x16x16xf32, #tpu.memory_space<vmem>>, %arg5: memref<1x32xf32, #tpu.memory_space<vmem>>, %arg6: memref<1x32xf32, #tpu.memory_space<vmem>>, %arg7: memref<1x32xf32, #tpu.memory_space<vmem>>, %arg8: memref<1x32xf32, #tpu.memory_space<vmem>>, %arg9: memref<32x96xbf16, #tpu.memory_space<vmem>>, %arg10: memref<1x96xf32, #tpu.memory_space<vmem>>, %arg11: memref<32x32xbf16, #tpu.memory_space<vmem>>, %arg12: memref<1x32xf32, #tpu.memory_space<vmem>>, %arg13: memref<32x128xbf16, #tpu.memory_space<vmem>>, %arg14: memref<1x128xf32, #tpu.memory_space<vmem>>, %arg15: memref<128x32xbf16, #tpu.memory_space<vmem>>, %arg16: memref<1x32xf32, #tpu.memory_space<vmem>>, %arg17: memref<64x32xf32, #tpu.memory_space<vmem>>, %arg18: memref<144x32xf32, #tpu.memory_space<vmem>>) attributes {dimension_semantics = [#tpu.dimension_semantics<parallel>], iteration_bounds = array<i64: 2>, scalar_prefetch = 0 : i64, scratch_operands = 1 : i64, tpu.core_type = #tpu.core_type<tc>, window_params = [{transform_indices = @transform_0, window_bounds = array<i64: 64, 32>}, {pipeline_mode = #tpu.pipeline_mode<synchronous>, transform_indices = @transform_1, window_bounds = array<i64: 144, 64>}, {pipeline_mode = #tpu.pipeline_mode<synchronous>, transform_indices = @transform_2, window_bounds = array<i64: 64, 144>}, {pipeline_mode = #tpu.pipeline_mode<synchronous>, transform_indices = @transform_3, window_bounds = array<i64: 36, 16, 16>}, {pipeline_mode = #tpu.pipeline_mode<synchronous>, transform_indices = @transform_4, window_bounds = array<i64: 1, 32>}, {pipeline_mode = #tpu.pipeline_mode<synchronous>, transform_indices = @transform_5, window_bounds = array<i64: 1, 32>}, {pipeline_mode = #tpu.pipeline_mode<synchronous>, transform_indices = @transform_6, window_bounds = array<i64: 1, 32>}, {pipeline_mode = #tpu.pipeline_mode<synchronous>, transform_indices = @transform_7, window_bounds = array<i64: 1, 32>}, {pipeline_mode = #tpu.pipeline_mode<synchronous>, transform_indices = @transform_8, window_bounds = array<i64: 32, 96>}, {pipeline_mode = #tpu.pipeline_mode<synchronous>, transform_indices = @transform_9, window_bounds = array<i64: 1, 96>}, {pipeline_mode = #tpu.pipeline_mode<synchronous>, transform_indices = @transform_10, window_bounds = array<i64: 32, 32>}, {pipeline_mode = #tpu.pipeline_mode<synchronous>, transform_indices = @transform_11, window_bounds = array<i64: 1, 32>}, {pipeline_mode = #tpu.pipeline_mode<synchronous>, transform_indices = @transform_12, window_bounds = array<i64: 32, 128>}, {pipeline_mode = #tpu.pipeline_mode<synchronous>, transform_indices = @transform_13, window_bounds = array<i64: 1, 128>}, {pipeline_mode = #tpu.pipeline_mode<synchronous>, transform_indices = @transform_14, window_bounds = array<i64: 128, 32>}, {pipeline_mode = #tpu.pipeline_mode<synchronous>, transform_indices = @transform_15, window_bounds = array<i64: 1, 32>}, {transform_indices = @transform_16, window_bounds = array<i64: 64, 32>}]} {
    %c0 = arith.constant 0 : index
    %c0_0 = arith.constant 0 : index
    %0 = vector.load %arg2[%c0, %c0_0] : memref<144x64xbf16, #tpu.memory_space<vmem>>, vector<144x64xbf16>
    %c0_1 = arith.constant 0 : index
    %c0_2 = arith.constant 0 : index
    %1 = vector.load %arg3[%c0_1, %c0_2] : memref<64x144xbf16, #tpu.memory_space<vmem>>, vector<64x144xbf16>
    %c0_3 = arith.constant 0 : index
    %c0_4 = arith.constant 0 : index
    %c0_5 = arith.constant 0 : index
    %2 = vector.load %arg4[%c0_3, %c0_4, %c0_5] : memref<36x16x16xf32, #tpu.memory_space<vmem>>, vector<36x16x16xf32>
    %c0_6 = arith.constant 0 : index
    %c0_7 = arith.constant 0 : index
    %3 = vector.load %arg9[%c0_6, %c0_7] : memref<32x96xbf16, #tpu.memory_space<vmem>>, vector<32x96xbf16>
    %c0_8 = arith.constant 0 : index
    %c0_9 = arith.constant 0 : index
    %4 = vector.load %arg10[%c0_8, %c0_9] : memref<1x96xf32, #tpu.memory_space<vmem>>, vector<1x96xf32>
    %c0_10 = arith.constant 0 : index
    %c0_11 = arith.constant 0 : index
    %5 = vector.load %arg11[%c0_10, %c0_11] : memref<32x32xbf16, #tpu.memory_space<vmem>>, vector<32x32xbf16>
    %c0_12 = arith.constant 0 : index
    %c0_13 = arith.constant 0 : index
    %6 = vector.load %arg12[%c0_12, %c0_13] : memref<1x32xf32, #tpu.memory_space<vmem>>, vector<1x32xf32>
    %c0_14 = arith.constant 0 : index
    %c0_15 = arith.constant 0 : index
    %7 = vector.load %arg13[%c0_14, %c0_15] : memref<32x128xbf16, #tpu.memory_space<vmem>>, vector<32x128xbf16>
    %c0_16 = arith.constant 0 : index
    %c0_17 = arith.constant 0 : index
    %8 = vector.load %arg14[%c0_16, %c0_17] : memref<1x128xf32, #tpu.memory_space<vmem>>, vector<1x128xf32>
    %c0_18 = arith.constant 0 : index
    %c0_19 = arith.constant 0 : index
    %9 = vector.load %arg15[%c0_18, %c0_19] : memref<128x32xbf16, #tpu.memory_space<vmem>>, vector<128x32xbf16>
    %c0_20 = arith.constant 0 : index
    %c0_21 = arith.constant 0 : index
    %10 = vector.load %arg16[%c0_20, %c0_21] : memref<1x32xf32, #tpu.memory_space<vmem>>, vector<1x32xf32>
    %c0_22 = arith.constant 0 : index
    %c0_23 = arith.constant 0 : index
    %11 = vector.load %arg5[%c0_22, %c0_23] : memref<1x32xf32, #tpu.memory_space<vmem>>, vector<1x32xf32>
    %c0_24 = arith.constant 0 : index
    %c0_25 = arith.constant 0 : index
    %12 = vector.load %arg6[%c0_24, %c0_25] : memref<1x32xf32, #tpu.memory_space<vmem>>, vector<1x32xf32>
    %c0_26 = arith.constant 0 : index
    %c0_27 = arith.constant 0 : index
    %13 = vector.load %arg7[%c0_26, %c0_27] : memref<1x32xf32, #tpu.memory_space<vmem>>, vector<1x32xf32>
    %c0_28 = arith.constant 0 : index
    %c0_29 = arith.constant 0 : index
    %14 = vector.load %arg8[%c0_28, %c0_29] : memref<1x32xf32, #tpu.memory_space<vmem>>, vector<1x32xf32>
    %c0_30 = arith.constant 0 : index
    %c0_31 = arith.constant 0 : index
    %15 = vector.load %arg1[%c0_30, %c0_31] : memref<64x32xf32, #tpu.memory_space<vmem>>, vector<64x32xf32>
    %cst = arith.constant dense<0.000000e+00> : vector<64xf32>
    %16 = vector.multi_reduction <add>, %15, %cst [1] : vector<64x32xf32> to vector<64xf32>
    %17 = vector.shape_cast %16 : vector<64xf32> to vector<64x1xf32>
    %cst_32 = arith.constant 3.200000e+01 : f32
    %18 = vector.broadcast %cst_32 : f32 to vector<64x1xf32>
    %19 = arith.divf %17, %18 : vector<64x1xf32>
    %20 = vector.broadcast %19 : vector<64x1xf32> to vector<64x32xf32>
    %21 = arith.subf %15, %20 : vector<64x32xf32>
    %22 = arith.mulf %21, %21 : vector<64x32xf32>
    %cst_33 = arith.constant dense<0.000000e+00> : vector<64xf32>
    %23 = vector.multi_reduction <add>, %22, %cst_33 [1] : vector<64x32xf32> to vector<64xf32>
    %24 = vector.shape_cast %23 : vector<64xf32> to vector<64x1xf32>
    %cst_34 = arith.constant 3.200000e+01 : f32
    %25 = vector.broadcast %cst_34 : f32 to vector<64x1xf32>
    %26 = arith.divf %24, %25 : vector<64x1xf32>
    %27 = vector.broadcast %19 : vector<64x1xf32> to vector<64x32xf32>
    %28 = arith.subf %15, %27 : vector<64x32xf32>
    %cst_35 = arith.constant 9.99999974E-6 : f32
    %29 = vector.broadcast %cst_35 : f32 to vector<64x1xf32>
    %30 = arith.addf %26, %29 : vector<64x1xf32>
    %31 = math.rsqrt %30 : vector<64x1xf32>
    %32 = vector.broadcast %31 : vector<64x1xf32> to vector<64x32xf32>
    %33 = arith.mulf %28, %32 : vector<64x32xf32>
    %34 = vector.broadcast %11 : vector<1x32xf32> to vector<64x32xf32>
    %35 = arith.mulf %33, %34 : vector<64x32xf32>
    %36 = vector.broadcast %12 : vector<1x32xf32> to vector<64x32xf32>
    %37 = arith.addf %35, %36 : vector<64x32xf32>
    %38 = arith.truncf %37 : vector<64x32xf32> to vector<64x32xbf16>
    %cst_36 = arith.constant dense<0.000000e+00> : vector<144x32xf32>
    %39 = tpu.matmul %0, %38, %cst_36 {dimension_numbers = #tpu.dot_dimension_numbers<[1], [0], [0], [1], [0, 0, 1, 1], [], []>} : vector<144x64xbf16>, vector<64x32xbf16>, vector<144x32xf32> -> vector<144x32xf32>
    %40 = arith.truncf %39 : vector<144x32xf32> to vector<144x32xbf16>
    %cst_37 = arith.constant dense<0.000000e+00> : vector<144x96xf32>
    %41 = tpu.matmul %40, %3, %cst_37 {dimension_numbers = #tpu.dot_dimension_numbers<[1], [0], [0], [1], [0, 0, 1, 1], [], []>} : vector<144x32xbf16>, vector<32x96xbf16>, vector<144x96xf32> -> vector<144x96xf32>
    %42 = vector.broadcast %4 : vector<1x96xf32> to vector<144x96xf32>
    %43 = arith.addf %41, %42 : vector<144x96xf32>
    %44 = vector.shape_cast %43 : vector<144x96xf32> to vector<9x16x96xf32>
    %45 = vector.extract_strided_slice %44 {offsets = [0, 0, 0], sizes = [9, 16, 8], strides = [1, 1, 1]} : vector<9x16x96xf32> to vector<9x16x8xf32>
    %46 = vector.extract_strided_slice %44 {offsets = [0, 0, 32], sizes = [9, 16, 8], strides = [1, 1, 1]} : vector<9x16x96xf32> to vector<9x16x8xf32>
    %47 = vector.extract_strided_slice %44 {offsets = [0, 0, 64], sizes = [9, 16, 8], strides = [1, 1, 1]} : vector<9x16x96xf32> to vector<9x16x8xf32>
    %48 = arith.truncf %45 : vector<9x16x8xf32> to vector<9x16x8xbf16>
    %49 = arith.truncf %46 : vector<9x16x8xf32> to vector<9x16x8xbf16>
    "tpu.trace_start"() <{level = 10 : i32, message = "wqd,wkd->wqk"}> : () -> ()
    %cst_38 = arith.constant dense<0.000000e+00> : vector<9x16x16xf32>
    %50 = tpu.matmul %48, %49, %cst_38 {dimension_numbers = #tpu.dot_dimension_numbers<[2], [2], [1], [1], [0, 0, 0, 1, 1, 1], [0], [0]>} : vector<9x16x8xbf16>, vector<9x16x8xbf16>, vector<9x16x16xf32> -> vector<9x16x16xf32>
    "tpu.trace_stop"() : () -> ()
    %51 = vector.extract_strided_slice %2 {offsets = [0, 0, 0], sizes = [9, 16, 16], strides = [1, 1, 1]} : vector<36x16x16xf32> to vector<9x16x16xf32>
    %52 = arith.addf %50, %51 : vector<9x16x16xf32>
    %cst_39 = arith.constant dense<0xFF800000> : vector<9x16xf32>
    %53 = vector.multi_reduction <maximumf>, %52, %cst_39 [2] : vector<9x16x16xf32> to vector<9x16xf32>
    %54 = vector.shape_cast %53 : vector<9x16xf32> to vector<9x16x1xf32>
    %55 = vector.broadcast %54 : vector<9x16x1xf32> to vector<9x16x16xf32>
    %56 = arith.subf %52, %55 : vector<9x16x16xf32>
    %57 = math.exp %56 : vector<9x16x16xf32>
    %cst_40 = arith.constant dense<0.000000e+00> : vector<9x16xf32>
    %58 = vector.multi_reduction <add>, %57, %cst_40 [2] : vector<9x16x16xf32> to vector<9x16xf32>
    %59 = vector.shape_cast %58 : vector<9x16xf32> to vector<9x16x1xf32>
    %60 = tpu.reciprocal %59 {approx = true} : vector<9x16x1xf32> -> vector<9x16x1xf32>
    %61 = vector.broadcast %60 : vector<9x16x1xf32> to vector<9x16x16xf32>
    %62 = arith.mulf %57, %61 : vector<9x16x16xf32>
    %63 = arith.truncf %62 : vector<9x16x16xf32> to vector<9x16x16xbf16>
    %64 = arith.truncf %47 : vector<9x16x8xf32> to vector<9x16x8xbf16>
    "tpu.trace_start"() <{level = 10 : i32, message = "wqk,wkd->wqd"}> : () -> ()
    %cst_41 = arith.constant dense<0.000000e+00> : vector<9x16x8xf32>
    %65 = tpu.matmul %63, %64, %cst_41 {dimension_numbers = #tpu.dot_dimension_numbers<[2], [1], [1], [2], [0, 0, 0, 1, 1, 2], [0], [0]>} : vector<9x16x16xbf16>, vector<9x16x8xbf16>, vector<9x16x8xf32> -> vector<9x16x8xf32>
    "tpu.trace_stop"() : () -> ()
    %66 = vector.shape_cast %65 : vector<9x16x8xf32> to vector<144x8xf32>
    %c0_42 = arith.constant 0 : index
    %c0_43 = arith.constant 0 : index
    %67 = vector.load %arg18[%c0_42, %c0_43] : memref<144x32xf32, #tpu.memory_space<vmem>>, vector<144x8xf32>
    tpu.vector_store %arg18[%c0_42, %c0_43], %66 {strides = array<i32>} : memref<144x32xf32, #tpu.memory_space<vmem>>, vector<144x8xf32>,
    %68 = vector.extract_strided_slice %44 {offsets = [0, 0, 8], sizes = [9, 16, 8], strides = [1, 1, 1]} : vector<9x16x96xf32> to vector<9x16x8xf32>
    %69 = vector.extract_strided_slice %44 {offsets = [0, 0, 40], sizes = [9, 16, 8], strides = [1, 1, 1]} : vector<9x16x96xf32> to vector<9x16x8xf32>
    %70 = vector.extract_strided_slice %44 {offsets = [0, 0, 72], sizes = [9, 16, 8], strides = [1, 1, 1]} : vector<9x16x96xf32> to vector<9x16x8xf32>
    %71 = arith.truncf %68 : vector<9x16x8xf32> to vector<9x16x8xbf16>
    %72 = arith.truncf %69 : vector<9x16x8xf32> to vector<9x16x8xbf16>
    "tpu.trace_start"() <{level = 10 : i32, message = "wqd,wkd->wqk"}> : () -> ()
    %cst_44 = arith.constant dense<0.000000e+00> : vector<9x16x16xf32>
    %73 = tpu.matmul %71, %72, %cst_44 {dimension_numbers = #tpu.dot_dimension_numbers<[2], [2], [1], [1], [0, 0, 0, 1, 1, 1], [0], [0]>} : vector<9x16x8xbf16>, vector<9x16x8xbf16>, vector<9x16x16xf32> -> vector<9x16x16xf32>
    "tpu.trace_stop"() : () -> ()
    %74 = vector.extract_strided_slice %2 {offsets = [9, 0, 0], sizes = [9, 16, 16], strides = [1, 1, 1]} : vector<36x16x16xf32> to vector<9x16x16xf32>
    %75 = arith.addf %73, %74 : vector<9x16x16xf32>
    %cst_45 = arith.constant dense<0xFF800000> : vector<9x16xf32>
    %76 = vector.multi_reduction <maximumf>, %75, %cst_45 [2] : vector<9x16x16xf32> to vector<9x16xf32>
    %77 = vector.shape_cast %76 : vector<9x16xf32> to vector<9x16x1xf32>
    %78 = vector.broadcast %77 : vector<9x16x1xf32> to vector<9x16x16xf32>
    %79 = arith.subf %75, %78 : vector<9x16x16xf32>
    %80 = math.exp %79 : vector<9x16x16xf32>
    %cst_46 = arith.constant dense<0.000000e+00> : vector<9x16xf32>
    %81 = vector.multi_reduction <add>, %80, %cst_46 [2] : vector<9x16x16xf32> to vector<9x16xf32>
    %82 = vector.shape_cast %81 : vector<9x16xf32> to vector<9x16x1xf32>
    %83 = tpu.reciprocal %82 {approx = true} : vector<9x16x1xf32> -> vector<9x16x1xf32>
    %84 = vector.broadcast %83 : vector<9x16x1xf32> to vector<9x16x16xf32>
    %85 = arith.mulf %80, %84 : vector<9x16x16xf32>
    %86 = arith.truncf %85 : vector<9x16x16xf32> to vector<9x16x16xbf16>
    %87 = arith.truncf %70 : vector<9x16x8xf32> to vector<9x16x8xbf16>
    "tpu.trace_start"() <{level = 10 : i32, message = "wqk,wkd->wqd"}> : () -> ()
    %cst_47 = arith.constant dense<0.000000e+00> : vector<9x16x8xf32>
    %88 = tpu.matmul %86, %87, %cst_47 {dimension_numbers = #tpu.dot_dimension_numbers<[2], [1], [1], [2], [0, 0, 0, 1, 1, 2], [0], [0]>} : vector<9x16x16xbf16>, vector<9x16x8xbf16>, vector<9x16x8xf32> -> vector<9x16x8xf32>
    "tpu.trace_stop"() : () -> ()
    %89 = vector.shape_cast %88 : vector<9x16x8xf32> to vector<144x8xf32>
    %c0_48 = arith.constant 0 : index
    %c8 = arith.constant 8 : index
    %90 = vector.load %arg18[%c0_48, %c8] : memref<144x32xf32, #tpu.memory_space<vmem>>, vector<144x8xf32>
    tpu.vector_store %arg18[%c0_48, %c8], %89 {strides = array<i32>} : memref<144x32xf32, #tpu.memory_space<vmem>>, vector<144x8xf32>,
    %91 = vector.extract_strided_slice %44 {offsets = [0, 0, 16], sizes = [9, 16, 8], strides = [1, 1, 1]} : vector<9x16x96xf32> to vector<9x16x8xf32>
    %92 = vector.extract_strided_slice %44 {offsets = [0, 0, 48], sizes = [9, 16, 8], strides = [1, 1, 1]} : vector<9x16x96xf32> to vector<9x16x8xf32>
    %93 = vector.extract_strided_slice %44 {offsets = [0, 0, 80], sizes = [9, 16, 8], strides = [1, 1, 1]} : vector<9x16x96xf32> to vector<9x16x8xf32>
    %94 = arith.truncf %91 : vector<9x16x8xf32> to vector<9x16x8xbf16>
    %95 = arith.truncf %92 : vector<9x16x8xf32> to vector<9x16x8xbf16>
    "tpu.trace_start"() <{level = 10 : i32, message = "wqd,wkd->wqk"}> : () -> ()
    %cst_49 = arith.constant dense<0.000000e+00> : vector<9x16x16xf32>
    %96 = tpu.matmul %94, %95, %cst_49 {dimension_numbers = #tpu.dot_dimension_numbers<[2], [2], [1], [1], [0, 0, 0, 1, 1, 1], [0], [0]>} : vector<9x16x8xbf16>, vector<9x16x8xbf16>, vector<9x16x16xf32> -> vector<9x16x16xf32>
    "tpu.trace_stop"() : () -> ()
    %97 = vector.extract_strided_slice %2 {offsets = [18, 0, 0], sizes = [9, 16, 16], strides = [1, 1, 1]} : vector<36x16x16xf32> to vector<9x16x16xf32>
    %98 = arith.addf %96, %97 : vector<9x16x16xf32>
    %cst_50 = arith.constant dense<0xFF800000> : vector<9x16xf32>
    %99 = vector.multi_reduction <maximumf>, %98, %cst_50 [2] : vector<9x16x16xf32> to vector<9x16xf32>
    %100 = vector.shape_cast %99 : vector<9x16xf32> to vector<9x16x1xf32>
    %101 = vector.broadcast %100 : vector<9x16x1xf32> to vector<9x16x16xf32>
    %102 = arith.subf %98, %101 : vector<9x16x16xf32>
    %103 = math.exp %102 : vector<9x16x16xf32>
    %cst_51 = arith.constant dense<0.000000e+00> : vector<9x16xf32>
    %104 = vector.multi_reduction <add>, %103, %cst_51 [2] : vector<9x16x16xf32> to vector<9x16xf32>
    %105 = vector.shape_cast %104 : vector<9x16xf32> to vector<9x16x1xf32>
    %106 = tpu.reciprocal %105 {approx = true} : vector<9x16x1xf32> -> vector<9x16x1xf32>
    %107 = vector.broadcast %106 : vector<9x16x1xf32> to vector<9x16x16xf32>
    %108 = arith.mulf %103, %107 : vector<9x16x16xf32>
    %109 = arith.truncf %108 : vector<9x16x16xf32> to vector<9x16x16xbf16>
    %110 = arith.truncf %93 : vector<9x16x8xf32> to vector<9x16x8xbf16>
    "tpu.trace_start"() <{level = 10 : i32, message = "wqk,wkd->wqd"}> : () -> ()
    %cst_52 = arith.constant dense<0.000000e+00> : vector<9x16x8xf32>
    %111 = tpu.matmul %109, %110, %cst_52 {dimension_numbers = #tpu.dot_dimension_numbers<[2], [1], [1], [2], [0, 0, 0, 1, 1, 2], [0], [0]>} : vector<9x16x16xbf16>, vector<9x16x8xbf16>, vector<9x16x8xf32> -> vector<9x16x8xf32>
    "tpu.trace_stop"() : () -> ()
    %112 = vector.shape_cast %111 : vector<9x16x8xf32> to vector<144x8xf32>
    %c0_53 = arith.constant 0 : index
    %c16 = arith.constant 16 : index
    %113 = vector.load %arg18[%c0_53, %c16] : memref<144x32xf32, #tpu.memory_space<vmem>>, vector<144x8xf32>
    tpu.vector_store %arg18[%c0_53, %c16], %112 {strides = array<i32>} : memref<144x32xf32, #tpu.memory_space<vmem>>, vector<144x8xf32>,
    %114 = vector.extract_strided_slice %44 {offsets = [0, 0, 24], sizes = [9, 16, 8], strides = [1, 1, 1]} : vector<9x16x96xf32> to vector<9x16x8xf32>
    %115 = vector.extract_strided_slice %44 {offsets = [0, 0, 56], sizes = [9, 16, 8], strides = [1, 1, 1]} : vector<9x16x96xf32> to vector<9x16x8xf32>
    %116 = vector.extract_strided_slice %44 {offsets = [0, 0, 88], sizes = [9, 16, 8], strides = [1, 1, 1]} : vector<9x16x96xf32> to vector<9x16x8xf32>
    %117 = arith.truncf %114 : vector<9x16x8xf32> to vector<9x16x8xbf16>
    %118 = arith.truncf %115 : vector<9x16x8xf32> to vector<9x16x8xbf16>
    "tpu.trace_start"() <{level = 10 : i32, message = "wqd,wkd->wqk"}> : () -> ()
    %cst_54 = arith.constant dense<0.000000e+00> : vector<9x16x16xf32>
    %119 = tpu.matmul %117, %118, %cst_54 {dimension_numbers = #tpu.dot_dimension_numbers<[2], [2], [1], [1], [0, 0, 0, 1, 1, 1], [0], [0]>} : vector<9x16x8xbf16>, vector<9x16x8xbf16>, vector<9x16x16xf32> -> vector<9x16x16xf32>
    "tpu.trace_stop"() : () -> ()
    %120 = vector.extract_strided_slice %2 {offsets = [27, 0, 0], sizes = [9, 16, 16], strides = [1, 1, 1]} : vector<36x16x16xf32> to vector<9x16x16xf32>
    %121 = arith.addf %119, %120 : vector<9x16x16xf32>
    %cst_55 = arith.constant dense<0xFF800000> : vector<9x16xf32>
    %122 = vector.multi_reduction <maximumf>, %121, %cst_55 [2] : vector<9x16x16xf32> to vector<9x16xf32>
    %123 = vector.shape_cast %122 : vector<9x16xf32> to vector<9x16x1xf32>
    %124 = vector.broadcast %123 : vector<9x16x1xf32> to vector<9x16x16xf32>
    %125 = arith.subf %121, %124 : vector<9x16x16xf32>
    %126 = math.exp %125 : vector<9x16x16xf32>
    %cst_56 = arith.constant dense<0.000000e+00> : vector<9x16xf32>
    %127 = vector.multi_reduction <add>, %126, %cst_56 [2] : vector<9x16x16xf32> to vector<9x16xf32>
    %128 = vector.shape_cast %127 : vector<9x16xf32> to vector<9x16x1xf32>
    %129 = tpu.reciprocal %128 {approx = true} : vector<9x16x1xf32> -> vector<9x16x1xf32>
    %130 = vector.broadcast %129 : vector<9x16x1xf32> to vector<9x16x16xf32>
    %131 = arith.mulf %126, %130 : vector<9x16x16xf32>
    %132 = arith.truncf %131 : vector<9x16x16xf32> to vector<9x16x16xbf16>
    %133 = arith.truncf %116 : vector<9x16x8xf32> to vector<9x16x8xbf16>
    "tpu.trace_start"() <{level = 10 : i32, message = "wqk,wkd->wqd"}> : () -> ()
    %cst_57 = arith.constant dense<0.000000e+00> : vector<9x16x8xf32>
    %134 = tpu.matmul %132, %133, %cst_57 {dimension_numbers = #tpu.dot_dimension_numbers<[2], [1], [1], [2], [0, 0, 0, 1, 1, 2], [0], [0]>} : vector<9x16x16xbf16>, vector<9x16x8xbf16>, vector<9x16x8xf32> -> vector<9x16x8xf32>
    "tpu.trace_stop"() : () -> ()
    %135 = vector.shape_cast %134 : vector<9x16x8xf32> to vector<144x8xf32>
    %c0_58 = arith.constant 0 : index
    %c24 = arith.constant 24 : index
    %136 = vector.load %arg18[%c0_58, %c24] : memref<144x32xf32, #tpu.memory_space<vmem>>, vector<144x8xf32>
    tpu.vector_store %arg18[%c0_58, %c24], %135 {strides = array<i32>} : memref<144x32xf32, #tpu.memory_space<vmem>>, vector<144x8xf32>,
    %c0_59 = arith.constant 0 : index
    %c0_60 = arith.constant 0 : index
    %137 = vector.load %arg18[%c0_59, %c0_60] : memref<144x32xf32, #tpu.memory_space<vmem>>, vector<144x32xf32>
    %138 = arith.truncf %137 : vector<144x32xf32> to vector<144x32xbf16>
    %cst_61 = arith.constant dense<0.000000e+00> : vector<144x32xf32>
    %139 = tpu.matmul %138, %5, %cst_61 {dimension_numbers = #tpu.dot_dimension_numbers<[1], [0], [0], [1], [0, 0, 1, 1], [], []>} : vector<144x32xbf16>, vector<32x32xbf16>, vector<144x32xf32> -> vector<144x32xf32>
    %140 = vector.broadcast %6 : vector<1x32xf32> to vector<144x32xf32>
    %141 = arith.addf %139, %140 : vector<144x32xf32>
    %142 = arith.truncf %141 : vector<144x32xf32> to vector<144x32xbf16>
    %cst_62 = arith.constant dense<0.000000e+00> : vector<64x32xf32>
    %143 = tpu.matmul %1, %142, %cst_62 {dimension_numbers = #tpu.dot_dimension_numbers<[1], [0], [0], [1], [0, 0, 1, 1], [], []>} : vector<64x144xbf16>, vector<144x32xbf16>, vector<64x32xf32> -> vector<64x32xf32>
    %144 = arith.addf %15, %143 : vector<64x32xf32>
    %cst_63 = arith.constant dense<0.000000e+00> : vector<64xf32>
    %145 = vector.multi_reduction <add>, %144, %cst_63 [1] : vector<64x32xf32> to vector<64xf32>
    %146 = vector.shape_cast %145 : vector<64xf32> to vector<64x1xf32>
    %cst_64 = arith.constant 3.200000e+01 : f32
    %147 = vector.broadcast %cst_64 : f32 to vector<64x1xf32>
    %148 = arith.divf %146, %147 : vector<64x1xf32>
    %149 = vector.broadcast %148 : vector<64x1xf32> to vector<64x32xf32>
    %150 = arith.subf %144, %149 : vector<64x32xf32>
    %151 = arith.mulf %150, %150 : vector<64x32xf32>
    %cst_65 = arith.constant dense<0.000000e+00> : vector<64xf32>
    %152 = vector.multi_reduction <add>, %151, %cst_65 [1] : vector<64x32xf32> to vector<64xf32>
    %153 = vector.shape_cast %152 : vector<64xf32> to vector<64x1xf32>
    %cst_66 = arith.constant 3.200000e+01 : f32
    %154 = vector.broadcast %cst_66 : f32 to vector<64x1xf32>
    %155 = arith.divf %153, %154 : vector<64x1xf32>
    %156 = vector.broadcast %148 : vector<64x1xf32> to vector<64x32xf32>
    %157 = arith.subf %144, %156 : vector<64x32xf32>
    %cst_67 = arith.constant 9.99999974E-6 : f32
    %158 = vector.broadcast %cst_67 : f32 to vector<64x1xf32>
    %159 = arith.addf %155, %158 : vector<64x1xf32>
    %160 = math.rsqrt %159 : vector<64x1xf32>
    %161 = vector.broadcast %160 : vector<64x1xf32> to vector<64x32xf32>
    %162 = arith.mulf %157, %161 : vector<64x32xf32>
    %163 = vector.broadcast %13 : vector<1x32xf32> to vector<64x32xf32>
    %164 = arith.mulf %162, %163 : vector<64x32xf32>
    %165 = vector.broadcast %14 : vector<1x32xf32> to vector<64x32xf32>
    %166 = arith.addf %164, %165 : vector<64x32xf32>
    %167 = arith.truncf %166 : vector<64x32xf32> to vector<64x32xbf16>
    %cst_68 = arith.constant dense<0.000000e+00> : vector<64x128xf32>
    %168 = tpu.matmul %167, %7, %cst_68 {dimension_numbers = #tpu.dot_dimension_numbers<[1], [0], [0], [1], [0, 0, 1, 1], [], []>} : vector<64x32xbf16>, vector<32x128xbf16>, vector<64x128xf32> -> vector<64x128xf32>
    %169 = vector.broadcast %8 : vector<1x128xf32> to vector<64x128xf32>
    %170 = arith.addf %168, %169 : vector<64x128xf32>
    %cst_69 = arith.constant 5.000000e-01 : f32
    %171 = vector.broadcast %cst_69 : f32 to vector<64x128xf32>
    %172 = arith.mulf %171, %170 : vector<64x128xf32>
    %cst_70 = arith.constant 0.707106769 : f32
    %173 = vector.broadcast %cst_70 : f32 to vector<64x128xf32>
    %174 = arith.mulf %170, %173 : vector<64x128xf32>
    %cst_71 = arith.constant 0.000000e+00 : f32
    %175 = vector.broadcast %cst_71 : f32 to vector<64x128xf32>
    %176 = arith.cmpf oge, %174, %175 : vector<64x128xf32>
    %cst_72 = arith.constant 1.000000e+00 : f32
    %cst_73 = arith.constant -1.000000e+00 : f32
    %177 = vector.broadcast %cst_72 : f32 to vector<64x128xf32>
    %178 = vector.broadcast %cst_73 : f32 to vector<64x128xf32>
    %179 = arith.select %176, %177, %178 : vector<64x128xi1>, vector<64x128xf32>
    %180 = math.absf %174 : vector<64x128xf32>
    %cst_74 = arith.constant 0.327591091 : f32
    %181 = vector.broadcast %cst_74 : f32 to vector<64x128xf32>
    %182 = arith.mulf %181, %180 : vector<64x128xf32>
    %cst_75 = arith.constant 1.000000e+00 : f32
    %183 = vector.broadcast %cst_75 : f32 to vector<64x128xf32>
    %184 = arith.addf %183, %182 : vector<64x128xf32>
    %185 = tpu.reciprocal %184 : vector<64x128xf32> -> vector<64x128xf32>
    %cst_76 = arith.constant 1.06140542 : f32
    %186 = vector.broadcast %cst_76 : f32 to vector<64x128xf32>
    %187 = arith.mulf %186, %185 : vector<64x128xf32>
    %cst_77 = arith.constant -1.45315206 : f32
    %188 = vector.broadcast %cst_77 : f32 to vector<64x128xf32>
    %189 = arith.addf %187, %188 : vector<64x128xf32>
    %190 = arith.mulf %189, %185 : vector<64x128xf32>
    %cst_78 = arith.constant 1.42141378 : f32
    %191 = vector.broadcast %cst_78 : f32 to vector<64x128xf32>
    %192 = arith.addf %190, %191 : vector<64x128xf32>
    %193 = arith.mulf %192, %185 : vector<64x128xf32>
    %cst_79 = arith.constant -0.284496725 : f32
    %194 = vector.broadcast %cst_79 : f32 to vector<64x128xf32>
    %195 = arith.addf %193, %194 : vector<64x128xf32>
    %196 = arith.mulf %195, %185 : vector<64x128xf32>
    %cst_80 = arith.constant 0.254829586 : f32
    %197 = vector.broadcast %cst_80 : f32 to vector<64x128xf32>
    %198 = arith.addf %196, %197 : vector<64x128xf32>
    %199 = arith.mulf %198, %185 : vector<64x128xf32>
    %cst_81 = arith.constant 0.000000e+00 : f32
    %200 = vector.broadcast %cst_81 : f32 to vector<64x128xf32>
    %201 = arith.subf %200, %180 : vector<64x128xf32>
    %202 = arith.mulf %201, %180 : vector<64x128xf32>
    %203 = math.exp %202 : vector<64x128xf32>
    %204 = arith.mulf %199, %203 : vector<64x128xf32>
    %cst_82 = arith.constant 1.000000e+00 : f32
    %205 = vector.broadcast %cst_82 : f32 to vector<64x128xf32>
    %206 = arith.subf %205, %204 : vector<64x128xf32>
    %207 = arith.mulf %179, %206 : vector<64x128xf32>
    %cst_83 = arith.constant 1.000000e+00 : f32
    %208 = vector.broadcast %cst_83 : f32 to vector<64x128xf32>
    %209 = arith.addf %208, %207 : vector<64x128xf32>
    %210 = arith.mulf %172, %209 : vector<64x128xf32>
    %211 = arith.truncf %210 : vector<64x128xf32> to vector<64x128xbf16>
    %cst_84 = arith.constant dense<0.000000e+00> : vector<64x32xf32>
    %212 = tpu.matmul %211, %9, %cst_84 {dimension_numbers = #tpu.dot_dimension_numbers<[1], [0], [0], [1], [0, 0, 1, 1], [], []>} : vector<64x128xbf16>, vector<128x32xbf16>, vector<64x32xf32> -> vector<64x32xf32>
    %213 = vector.broadcast %10 : vector<1x32xf32> to vector<64x32xf32>
    %214 = arith.addf %212, %213 : vector<64x32xf32>
    %215 = arith.addf %144, %214 : vector<64x32xf32>
    %c0_85 = arith.constant 0 : index
    %c0_86 = arith.constant 0 : index
    %216 = vector.load %arg17[%c0_85, %c0_86] : memref<64x32xf32, #tpu.memory_space<vmem>>, vector<64x32xf32>
    tpu.vector_store %arg17[%c0_85, %c0_86], %215 {strides = array<i32>} : memref<64x32xf32, #tpu.memory_space<vmem>>, vector<64x32xf32>,
    return
  }
  func.func @transform_0(%arg0: i32) -> (i32, i32) {
    %c0_i32 = arith.constant 0 : i32
    %c0_i32_0 = arith.constant 0 : i32
    return %arg0, %c0_i32 : i32, i32
  }
  func.func @transform_1(%arg0: i32) -> (i32, i32) {
    %c0_i32 = arith.constant 0 : i32
    %c0_i32_0 = arith.constant 0 : i32
    %c0_i32_1 = arith.constant 0 : i32
    return %c0_i32, %c0_i32_0 : i32, i32
  }
  func.func @transform_2(%arg0: i32) -> (i32, i32) {
    %c0_i32 = arith.constant 0 : i32
    %c0_i32_0 = arith.constant 0 : i32
    %c0_i32_1 = arith.constant 0 : i32
    return %c0_i32, %c0_i32_0 : i32, i32
  }
  func.func @transform_3(%arg0: i32) -> (i32, i32, i32) {
    %c0_i32 = arith.constant 0 : i32
    %c0_i32_0 = arith.constant 0 : i32
    %c0_i32_1 = arith.constant 0 : i32
    %c0_i32_2 = arith.constant 0 : i32
    return %c0_i32, %c0_i32_0, %c0_i32_1 : i32, i32, i32
  }
  func.func @transform_4(%arg0: i32) -> (i32, i32) {
    %c0_i32 = arith.constant 0 : i32
    %c0_i32_0 = arith.constant 0 : i32
    %c0_i32_1 = arith.constant 0 : i32
    return %c0_i32, %c0_i32_0 : i32, i32
  }
  func.func @transform_5(%arg0: i32) -> (i32, i32) {
    %c0_i32 = arith.constant 0 : i32
    %c0_i32_0 = arith.constant 0 : i32
    %c0_i32_1 = arith.constant 0 : i32
    return %c0_i32, %c0_i32_0 : i32, i32
  }
  func.func @transform_6(%arg0: i32) -> (i32, i32) {
    %c0_i32 = arith.constant 0 : i32
    %c0_i32_0 = arith.constant 0 : i32
    %c0_i32_1 = arith.constant 0 : i32
    return %c0_i32, %c0_i32_0 : i32, i32
  }
  func.func @transform_7(%arg0: i32) -> (i32, i32) {
    %c0_i32 = arith.constant 0 : i32
    %c0_i32_0 = arith.constant 0 : i32
    %c0_i32_1 = arith.constant 0 : i32
    return %c0_i32, %c0_i32_0 : i32, i32
  }
  func.func @transform_8(%arg0: i32) -> (i32, i32) {
    %c0_i32 = arith.constant 0 : i32
    %c0_i32_0 = arith.constant 0 : i32
    %c0_i32_1 = arith.constant 0 : i32
    return %c0_i32, %c0_i32_0 : i32, i32
  }
  func.func @transform_9(%arg0: i32) -> (i32, i32) {
    %c0_i32 = arith.constant 0 : i32
    %c0_i32_0 = arith.constant 0 : i32
    %c0_i32_1 = arith.constant 0 : i32
    return %c0_i32, %c0_i32_0 : i32, i32
  }
  func.func @transform_10(%arg0: i32) -> (i32, i32) {
    %c0_i32 = arith.constant 0 : i32
    %c0_i32_0 = arith.constant 0 : i32
    %c0_i32_1 = arith.constant 0 : i32
    return %c0_i32, %c0_i32_0 : i32, i32
  }
  func.func @transform_11(%arg0: i32) -> (i32, i32) {
    %c0_i32 = arith.constant 0 : i32
    %c0_i32_0 = arith.constant 0 : i32
    %c0_i32_1 = arith.constant 0 : i32
    return %c0_i32, %c0_i32_0 : i32, i32
  }
  func.func @transform_12(%arg0: i32) -> (i32, i32) {
    %c0_i32 = arith.constant 0 : i32
    %c0_i32_0 = arith.constant 0 : i32
    %c0_i32_1 = arith.constant 0 : i32
    return %c0_i32, %c0_i32_0 : i32, i32
  }
  func.func @transform_13(%arg0: i32) -> (i32, i32) {
    %c0_i32 = arith.constant 0 : i32
    %c0_i32_0 = arith.constant 0 : i32
    %c0_i32_1 = arith.constant 0 : i32
    return %c0_i32, %c0_i32_0 : i32, i32
  }
  func.func @transform_14(%arg0: i32) -> (i32, i32) {
    %c0_i32 = arith.constant 0 : i32
    %c0_i32_0 = arith.constant 0 : i32
    %c0_i32_1 = arith.constant 0 : i32
    return %c0_i32, %c0_i32_0 : i32, i32
  }
  func.func @transform_15(%arg0: i32) -> (i32, i32) {
    %c0_i32 = arith.constant 0 : i32
    %c0_i32_0 = arith.constant 0 : i32
    %c0_i32_1 = arith.constant 0 : i32
    return %c0_i32, %c0_i32_0 : i32, i32
  }
  func.func @transform_16(%arg0: i32) -> (i32, i32) {
    %c0_i32 = arith.constant 0 : i32
    %c0_i32_0 = arith.constant 0 : i32
    return %arg0, %c0_i32 : i32, i32
  }
}

</mosaic_0001>

<llo_original>
// kernel: tpu_custom_call.1
$region0: #{tpu_custom_call.1}
  #allocation0 [shape = 'u32[]', space=smem, size = 0x4, offset = 0x4, fixed_abs, tag = 'smem constant byte address 0x4 - core index']
  #allocation1 [shape = 'u32[144,128]{1,0:T(1,128)}', space=vmem, size = 0x12000, scoped, tag = 'internal scratch']
  #allocation2 [shape = 'f32[144,32]{1,0:T(8,128)}', space=vmem, size = 0x12000, scoped, tag = 'scratch operand']
  %s0 = inlined_call_operand.vmem [shape: f32[128,32], index: 0, kind: input, shape index: {}]
  %s1 = inlined_call_operand.vmem [shape: bf16[144,64], index: 1, kind: input, shape index: {}]
  %s2 = inlined_call_operand.vmem [shape: bf16[64,144], index: 2, kind: input, shape index: {}]
  %s3 = inlined_call_operand.vmem [shape: f32[36,16,16], index: 3, kind: input, shape index: {}]
  %s4 = inlined_call_operand.vmem [shape: f32[1,32], index: 4, kind: input, shape index: {}]
  %s5 = inlined_call_operand.vmem [shape: f32[1,32], index: 5, kind: input, shape index: {}]
  %s6 = inlined_call_operand.vmem [shape: f32[1,32], index: 6, kind: input, shape index: {}]
  %s7 = inlined_call_operand.vmem [shape: f32[1,32], index: 7, kind: input, shape index: {}]
  %s8 = inlined_call_operand.vmem [shape: bf16[32,96], index: 8, kind: input, shape index: {}]
  %s9 = inlined_call_operand.vmem [shape: f32[1,96], index: 9, kind: input, shape index: {}]
  %s10 = inlined_call_operand.vmem [shape: bf16[32,32], index: 10, kind: input, shape index: {}]
  %s11 = inlined_call_operand.vmem [shape: f32[1,32], index: 11, kind: input, shape index: {}]
  %s12 = inlined_call_operand.vmem [shape: bf16[32,128], index: 12, kind: input, shape index: {}]
  %s13 = inlined_call_operand.vmem [shape: f32[1,128], index: 13, kind: input, shape index: {}]
  %s14 = inlined_call_operand.vmem [shape: bf16[128,32], index: 14, kind: input, shape index: {}]
  %s15 = inlined_call_operand.vmem [shape: f32[1,32], index: 15, kind: input, shape index: {}]
  %s16 = inlined_call_operand.vmem [shape: f32[128,32], index: 16, kind: output, shape index: {}]
  %s17 = sld [smem:[#allocation0]]
  $region97: #{tpu_custom_call.1} parent=0
    _
  %s19 = ssub.s32 1, %s17
  %s20 = scalar_select 0, %s19, %s17
  loop: start=0, step=1, limit=4
  $region2: #{tpu_custom_call.1} parent=0 // loop_pre_header
    _
  $region3: #{tpu_custom_call.1} parent=0 // loop_header
    %s22 = sphi 0, %s26
    %p23 = scmp.ge.s32.totalorder %s22, 4
    %s32 = sphi 0, %s34
    %s35 = sphi 0, %s32
    %s36 = sphi 0, %s35
    %s52 = sphi 0, %s36
    %s56 = sphi 0, %s56
    %s58 = sphi 0, %s56
    %s59 = sphi 0, %s58
    %s73 = sphi 0, %s59
    %s77 = sphi 0, %s77
    %s79 = sphi 0, %s77
    %s80 = sphi 0, %s79
    %s94 = sphi 0, %s80
    %s98 = sphi 0, %s98
    %s100 = sphi 0, %s98
    %s101 = sphi 0, %s100
    %s115 = sphi 0, %s101
    %s119 = sphi 0, %s119
    %s121 = sphi 0, %s119
    %s122 = sphi 0, %s121
    %s136 = sphi 0, %s122
    %s140 = sphi 0, %s140
    %s142 = sphi 0, %s140
    %s143 = sphi 0, %s142
    %s157 = sphi 0, %s143
    %s161 = sphi 0, %s161
    %s163 = sphi 0, %s161
    %s164 = sphi 0, %s163
    %s178 = sphi 0, %s164
    %s182 = sphi 0, %s182
    %s184 = sphi 0, %s182
    %s185 = sphi 0, %s184
    %s199 = sphi 0, %s185
    %s203 = sphi 0, %s203
    %s205 = sphi 0, %s203
    %s206 = sphi 0, %s205
    %s220 = sphi 0, %s206
    %s224 = sphi 0, %s224
    %s226 = sphi 0, %s224
    %s227 = sphi 0, %s226
    %s241 = sphi 0, %s227
    %s245 = sphi 0, %s245
    %s247 = sphi 0, %s245
    %s248 = sphi 0, %s247
    %s262 = sphi 0, %s248
    %s266 = sphi 0, %s266
    %s268 = sphi 0, %s266
    %s269 = sphi 0, %s268
    %s283 = sphi 0, %s269
    %s287 = sphi 0, %s287
    %s289 = sphi 0, %s287
    %s290 = sphi 0, %s289
    %s304 = sphi 0, %s290
    %s308 = sphi 0, %s308
    %s310 = sphi 0, %s308
    %s311 = sphi 0, %s310
    %s325 = sphi 0, %s311
    %s329 = sphi 0, %s329
    %s331 = sphi 0, %s329
    %s332 = sphi 0, %s331
    %s346 = sphi 0, %s332
    %s350 = sphi 0, %s350
    %s352 = sphi 0, %s350
    %s353 = sphi 0, %s352
    %s367 = sphi 0, %s353
    %s373 = sphi 0, %s375
    %s376 = sphi 0, %s373
    %s377 = sphi 0, %s376
    %s393 = sphi 0, %s377
  $region4: #{tpu_custom_call.1} parent=0 // loop_header_branch
    %25 = sbr.rel (%p23) target = $region8
  $region5: #{tpu_custom_call.1} parent=0 // loop_body
    %s27 = ssub.s32 %s22, 1
    %s28 = ssub.s32 %s22, 2
    %s29 = sadd.s32 %s22, 1
    %s30 = ssub.s32 %s22, %s29
    %p31 = scmp.eq.s32.totalorder %s30, 0
    %s33 = sadd.s32 %s32, 1
    %s34 = scalar_select %p31, %s32, %s33
    %p37 = pneg %p31
    %p38 = scmp.eq.s32.totalorder %s22, 1
    %p39 = por %p37, %p38
    %p40 = scmp.ne.s32.totalorder %s32, %s35
    %p41 = scmp.eq.s32.totalorder %s22, 0
    %p42 = por %p40, %p41
    %p43 = scmp.ne.s32.totalorder %s32, %s35
    %p44 = scmp.eq.s32.totalorder %s27, 1
    %p45 = por %p43, %p44
    %p46 = scmp.ne.s32.totalorder %s35, %s36
    %p47 = scmp.eq.s32.totalorder %s27, 0
    %p48 = por %p46, %p47
    %p49 = scmp.ne.s32.totalorder %s35, %s36
    %p50 = scmp.eq.s32.totalorder %s28, 1
    %p51 = por %p49, %p50
    %p53 = scmp.ne.s32.totalorder %s36, %s52
    %p54 = scmp.eq.s32.totalorder %s28, 0
    %p55 = por %p53, %p54
    %s57 = sadd.s32 %s56, 1
    %p60 = scmp.eq.s32.totalorder %s22, 1
    %p61 = scmp.ne.s32.totalorder %s56, %s58
    %p62 = scmp.eq.s32.totalorder %s22, 0
    %p63 = por %p61, %p62
    %p64 = scmp.ne.s32.totalorder %s56, %s58
    %p65 = scmp.eq.s32.totalorder %s27, 1
    %p66 = por %p64, %p65
    %p67 = scmp.ne.s32.totalorder %s58, %s59
    %p68 = scmp.eq.s32.totalorder %s27, 0
    %p69 = por %p67, %p68
    %p70 = scmp.ne.s32.totalorder %s58, %s59
    %p71 = scmp.eq.s32.totalorder %s28, 1
    %p72 = por %p70, %p71
    %p74 = scmp.ne.s32.totalorder %s59, %s73
    %p75 = scmp.eq.s32.totalorder %s28, 0
    %p76 = por %p74, %p75
    %s78 = sadd.s32 %s77, 1
    %p81 = scmp.eq.s32.totalorder %s22, 1
    %p82 = scmp.ne.s32.totalorder %s77, %s79
    %p83 = scmp.eq.s32.totalorder %s22, 0
    %p84 = por %p82, %p83
    %p85 = scmp.ne.s32.totalorder %s77, %s79
    %p86 = scmp.eq.s32.totalorder %s27, 1
    %p87 = por %p85, %p86
    %p88 = scmp.ne.s32.totalorder %s79, %s80
    %p89 = scmp.eq.s32.totalorder %s27, 0
    %p90 = por %p88, %p89
    %p91 = scmp.ne.s32.totalorder %s79, %s80
    %p92 = scmp.eq.s32.totalorder %s28, 1
    %p93 = por %p91, %p92
    %p95 = scmp.ne.s32.totalorder %s80, %s94
    %p96 = scmp.eq.s32.totalorder %s28, 0
    %p97 = por %p95, %p96
    %s99 = sadd.s32 %s98, 1
    %p102 = scmp.eq.s32.totalorder %s22, 1
    %p103 = scmp.ne.s32.totalorder %s98, %s100
    %p104 = scmp.eq.s32.totalorder %s22, 0
    %p105 = por %p103, %p104
    %p106 = scmp.ne.s32.totalorder %s98, %s100
    %p107 = scmp.eq.s32.totalorder %s27, 1
    %p108 = por %p106, %p107
    %p109 = scmp.ne.s32.totalorder %s100, %s101
    %p110 = scmp.eq.s32.totalorder %s27, 0
    %p111 = por %p109, %p110
    %p112 = scmp.ne.s32.totalorder %s100, %s101
    %p113 = scmp.eq.s32.totalorder %s28, 1
    %p114 = por %p112, %p113
    %p116 = scmp.ne.s32.totalorder %s101, %s115
    %p117 = scmp.eq.s32.totalorder %s28, 0
    %p118 = por %p116, %p117
    %s120 = sadd.s32 %s119, 1
    %p123 = scmp.eq.s32.totalorder %s22, 1
    %p124 = scmp.ne.s32.totalorder %s119, %s121
    %p125 = scmp.eq.s32.totalorder %s22, 0
    %p126 = por %p124, %p125
    %p127 = scmp.ne.s32.totalorder %s119, %s121
    %p128 = scmp.eq.s32.totalorder %s27, 1
    %p129 = por %p127, %p128
    %p130 = scmp.ne.s32.totalorder %s121, %s122
    %p131 = scmp.eq.s32.totalorder %s27, 0
    %p132 = por %p130, %p131
    %p133 = scmp.ne.s32.totalorder %s121, %s122
    %p134 = scmp.eq.s32.totalorder %s28, 1
    %p135 = por %p133, %p134
    %p137 = scmp.ne.s32.totalorder %s122, %s136
    %p138 = scmp.eq.s32.totalorder %s28, 0
    %p139 = por %p137, %p138
    %s141 = sadd.s32 %s140, 1
    %p144 = scmp.eq.s32.totalorder %s22, 1
    %p145 = scmp.ne.s32.totalorder %s140, %s142
    %p146 = scmp.eq.s32.totalorder %s22, 0
    %p147 = por %p145, %p146
    %p148 = scmp.ne.s32.totalorder %s140, %s142
    %p149 = scmp.eq.s32.totalorder %s27, 1
    %p150 = por %p148, %p149
    %p151 = scmp.ne.s32.totalorder %s142, %s143
    %p152 = scmp.eq.s32.totalorder %s27, 0
    %p153 = por %p151, %p152
    %p154 = scmp.ne.s32.totalorder %s142, %s143
    %p155 = scmp.eq.s32.totalorder %s28, 1
    %p156 = por %p154, %p155
    %p158 = scmp.ne.s32.totalorder %s143, %s157
    %p159 = scmp.eq.s32.totalorder %s28, 0
    %p160 = por %p158, %p159
    %s162 = sadd.s32 %s161, 1
    %p165 = scmp.eq.s32.totalorder %s22, 1
    %p166 = scmp.ne.s32.totalorder %s161, %s163
    %p167 = scmp.eq.s32.totalorder %s22, 0
    %p168 = por %p166, %p167
    %p169 = scmp.ne.s32.totalorder %s161, %s163
    %p170 = scmp.eq.s32.totalorder %s27, 1
    %p171 = por %p169, %p170
    %p172 = scmp.ne.s32.totalorder %s163, %s164
    %p173 = scmp.eq.s32.totalorder %s27, 0
    %p174 = por %p172, %p173
    %p175 = scmp.ne.s32.totalorder %s163, %s164
    %p176 = scmp.eq.s32.totalorder %s28, 1
    %p177 = por %p175, %p176
    %p179 = scmp.ne.s32.totalorder %s164, %s178
    %p180 = scmp.eq.s32.totalorder %s28, 0
    %p181 = por %p179, %p180
    %s183 = sadd.s32 %s182, 1
    %p186 = scmp.eq.s32.totalorder %s22, 1
    %p187 = scmp.ne.s32.totalorder %s182, %s184
    %p188 = scmp.eq.s32.totalorder %s22, 0
    %p189 = por %p187, %p188
    %p190 = scmp.ne.s32.totalorder %s182, %s184
    %p191 = scmp.eq.s32.totalorder %s27, 1
    %p192 = por %p190, %p191
    %p193 = scmp.ne.s32.totalorder %s184, %s185
    %p194 = scmp.eq.s32.totalorder %s27, 0
    %p195 = por %p193, %p194
    %p196 = scmp.ne.s32.totalorder %s184, %s185
    %p197 = scmp.eq.s32.totalorder %s28, 1
    %p198 = por %p196, %p197
    %p200 = scmp.ne.s32.totalorder %s185, %s199
    %p201 = scmp.eq.s32.totalorder %s28, 0
    %p202 = por %p200, %p201
    %s204 = sadd.s32 %s203, 1
    %p207 = scmp.eq.s32.totalorder %s22, 1
    %p208 = scmp.ne.s32.totalorder %s203, %s205
    %p209 = scmp.eq.s32.totalorder %s22, 0
    %p210 = por %p208, %p209
    %p211 = scmp.ne.s32.totalorder %s203, %s205
    %p212 = scmp.eq.s32.totalorder %s27, 1
    %p213 = por %p211, %p212
    %p214 = scmp.ne.s32.totalorder %s205, %s206
    %p215 = scmp.eq.s32.totalorder %s27, 0
    %p216 = por %p214, %p215
    %p217 = scmp.ne.s32.totalorder %s205, %s206
    %p218 = scmp.eq.s32.totalorder %s28, 1
    %p219 = por %p217, %p218
    %p221 = scmp.ne.s32.totalorder %s206, %s220
    %p222 = scmp.eq.s32.totalorder %s28, 0
    %p223 = por %p221, %p222
    %s225 = sadd.s32 %s224, 1
    %p228 = scmp.eq.s32.totalorder %s22, 1
    %p229 = scmp.ne.s32.totalorder %s224, %s226
    %p230 = scmp.eq.s32.totalorder %s22, 0
    %p231 = por %p229, %p230
    %p232 = scmp.ne.s32.totalorder %s224, %s226
    %p233 = scmp.eq.s32.totalorder %s27, 1
    %p234 = por %p232, %p233
    %p235 = scmp.ne.s32.totalorder %s226, %s227
    %p236 = scmp.eq.s32.totalorder %s27, 0
    %p237 = por %p235, %p236
    %p238 = scmp.ne.s32.totalorder %s226, %s227
    %p239 = scmp.eq.s32.totalorder %s28, 1
    %p240 = por %p238, %p239
    %p242 = scmp.ne.s32.totalorder %s227, %s241
    %p243 = scmp.eq.s32.totalorder %s28, 0
    %p244 = por %p242, %p243
    %s246 = sadd.s32 %s245, 1
    %p249 = scmp.eq.s32.totalorder %s22, 1
    %p250 = scmp.ne.s32.totalorder %s245, %s247
    %p251 = scmp.eq.s32.totalorder %s22, 0
    %p252 = por %p250, %p251
    %p253 = scmp.ne.s32.totalorder %s245, %s247
    %p254 = scmp.eq.s32.totalorder %s27, 1
    %p255 = por %p253, %p254
    %p256 = scmp.ne.s32.totalorder %s247, %s248
    %p257 = scmp.eq.s32.totalorder %s27, 0
    %p258 = por %p256, %p257
    %p259 = scmp.ne.s32.totalorder %s247, %s248
    %p260 = scmp.eq.s32.totalorder %s28, 1
    %p261 = por %p259, %p260
    %p263 = scmp.ne.s32.totalorder %s248, %s262
    %p264 = scmp.eq.s32.totalorder %s28, 0
    %p265 = por %p263, %p264
    %s267 = sadd.s32 %s266, 1
    %p270 = scmp.eq.s32.totalorder %s22, 1
    %p271 = scmp.ne.s32.totalorder %s266, %s268
    %p272 = scmp.eq.s32.totalorder %s22, 0
    %p273 = por %p271, %p272
    %p274 = scmp.ne.s32.totalorder %s266, %s268
    %p275 = scmp.eq.s32.totalorder %s27, 1
    %p276 = por %p274, %p275
    %p277 = scmp.ne.s32.totalorder %s268, %s269
    %p278 = scmp.eq.s32.totalorder %s27, 0
    %p279 = por %p277, %p278
    %p280 = scmp.ne.s32.totalorder %s268, %s269
    %p281 = scmp.eq.s32.totalorder %s28, 1
    %p282 = por %p280, %p281
    %p284 = scmp.ne.s32.totalorder %s269, %s283
    %p285 = scmp.eq.s32.totalorder %s28, 0
    %p286 = por %p284, %p285
    %s288 = sadd.s32 %s287, 1
    %p291 = scmp.eq.s32.totalorder %s22, 1
    %p292 = scmp.ne.s32.totalorder %s287, %s289
    %p293 = scmp.eq.s32.totalorder %s22, 0
    %p294 = por %p292, %p293
    %p295 = scmp.ne.s32.totalorder %s287, %s289
    %p296 = scmp.eq.s32.totalorder %s27, 1
    %p297 = por %p295, %p296
    %p298 = scmp.ne.s32.totalorder %s289, %s290
    %p299 = scmp.eq.s32.totalorder %s27, 0
    %p300 = por %p298, %p299
    %p301 = scmp.ne.s32.totalorder %s289, %s290
    %p302 = scmp.eq.s32.totalorder %s28, 1
    %p303 = por %p301, %p302
    %p305 = scmp.ne.s32.totalorder %s290, %s304
    %p306 = scmp.eq.s32.totalorder %s28, 0
    %p307 = por %p305, %p306
    %s309 = sadd.s32 %s308, 1
    %p312 = scmp.eq.s32.totalorder %s22, 1
    %p313 = scmp.ne.s32.totalorder %s308, %s310
    %p314 = scmp.eq.s32.totalorder %s22, 0
    %p315 = por %p313, %p314
    %p316 = scmp.ne.s32.totalorder %s308, %s310
    %p317 = scmp.eq.s32.totalorder %s27, 1
    %p318 = por %p316, %p317
    %p319 = scmp.ne.s32.totalorder %s310, %s311
    %p320 = scmp.eq.s32.totalorder %s27, 0
    %p321 = por %p319, %p320
    %p322 = scmp.ne.s32.totalorder %s310, %s311
    %p323 = scmp.eq.s32.totalorder %s28, 1
    %p324 = por %p322, %p323
    %p326 = scmp.ne.s32.totalorder %s311, %s325
    %p327 = scmp.eq.s32.totalorder %s28, 0
    %p328 = por %p326, %p327
    %s330 = sadd.s32 %s329, 1
    %p333 = scmp.eq.s32.totalorder %s22, 1
    %p334 = scmp.ne.s32.totalorder %s329, %s331
    %p335 = scmp.eq.s32.totalorder %s22, 0
    %p336 = por %p334, %p335
    %p337 = scmp.ne.s32.totalorder %s329, %s331
    %p338 = scmp.eq.s32.totalorder %s27, 1
    %p339 = por %p337, %p338
    %p340 = scmp.ne.s32.totalorder %s331, %s332
    %p341 = scmp.eq.s32.totalorder %s27, 0
    %p342 = por %p340, %p341
    %p343 = scmp.ne.s32.totalorder %s331, %s332
    %p344 = scmp.eq.s32.totalorder %s28, 1
    %p345 = por %p343, %p344
    %p347 = scmp.ne.s32.totalorder %s332, %s346
    %p348 = scmp.eq.s32.totalorder %s28, 0
    %p349 = por %p347, %p348
    %s351 = sadd.s32 %s350, 1
    %p354 = scmp.eq.s32.totalorder %s22, 1
    %p355 = scmp.ne.s32.totalorder %s350, %s352
    %p356 = scmp.eq.s32.totalorder %s22, 0
    %p357 = por %p355, %p356
    %p358 = scmp.ne.s32.totalorder %s350, %s352
    %p359 = scmp.eq.s32.totalorder %s27, 1
    %p360 = por %p358, %p359
    %p361 = scmp.ne.s32.totalorder %s352, %s353
    %p362 = scmp.eq.s32.totalorder %s27, 0
    %p363 = por %p361, %p362
    %p364 = scmp.ne.s32.totalorder %s352, %s353
    %p365 = scmp.eq.s32.totalorder %s28, 1
    %p366 = por %p364, %p365
    %p368 = scmp.ne.s32.totalorder %s353, %s367
    %p369 = scmp.eq.s32.totalorder %s28, 0
    %p370 = por %p368, %p369
    %s371 = ssub.s32 %s22, %s29
    %p372 = scmp.eq.s32.totalorder %s371, 0
    %s374 = sadd.s32 %s373, 1
    %s375 = scalar_select %p372, %s373, %s374
    %p378 = pneg %p372
    %p379 = scmp.eq.s32.totalorder %s22, 1
    %p380 = por %p378, %p379
    %p381 = scmp.ne.s32.totalorder %s373, %s376
    %p382 = scmp.eq.s32.totalorder %s22, 0
    %p383 = por %p381, %p382
    %p384 = scmp.ne.s32.totalorder %s373, %s376
    %p385 = scmp.eq.s32.totalorder %s27, 1
    %p386 = por %p384, %p385
    %p387 = scmp.ne.s32.totalorder %s376, %s377
    %p388 = scmp.eq.s32.totalorder %s27, 0
    %p389 = por %p387, %p388
    %p390 = scmp.ne.s32.totalorder %s376, %s377
    %p391 = scmp.eq.s32.totalorder %s28, 1
    %p392 = por %p390, %p391
    %p394 = scmp.ne.s32.totalorder %s377, %s393
    %p395 = scmp.eq.s32.totalorder %s28, 0
    %p396 = por %p394, %p395
    %p397 = scmp.le.s32.totalorder 1, %s22
    %p398 = scmp.lt.s32.totalorder %s22, 3
    %p399 = pnand %p397, %p398
    %p400 = pneg %p399
    // Predicated region
    $region9: #{tpu_custom_call.1} parent=5 // pred_check
      _
    $region10: #{tpu_custom_call.1} parent=5 // pred_check_branch
      %402 = sbr.rel (%p399) target = $region12
    $region11: #{tpu_custom_call.1} parent=5 // pred_region
      %s403 = ssub.s32 %s22, 1
      // Predicated region
      $region13: #{tpu_custom_call.1} parent=11 // pred_check
        %p404 = pneg %p69
      $region14: #{tpu_custom_call.1} parent=11 // pred_check_branch
        %406 = sbr.rel (%p404) target = $region16
      $region15: #{tpu_custom_call.1} parent=11 // pred_region
        _
      $region16: #{tpu_custom_call.1} parent=11 // pred_fallthru
        _
      // Predicated region
      $region17: #{tpu_custom_call.1} parent=11 // pred_check
        %p407 = pneg %p90
      $region18: #{tpu_custom_call.1} parent=11 // pred_check_branch
        %409 = sbr.rel (%p407) target = $region20
      $region19: #{tpu_custom_call.1} parent=11 // pred_region
        _
      $region20: #{tpu_custom_call.1} parent=11 // pred_fallthru
        _
      // Predicated region
      $region21: #{tpu_custom_call.1} parent=11 // pred_check
        %p410 = pneg %p111
      $region22: #{tpu_custom_call.1} parent=11 // pred_check_branch
        %412 = sbr.rel (%p410) target = $region24
      $region23: #{tpu_custom_call.1} parent=11 // pred_region
        _
      $region24: #{tpu_custom_call.1} parent=11 // pred_fallthru
        _
      // Predicated region
      $region25: #{tpu_custom_call.1} parent=11 // pred_check
        %p413 = pneg %p132
      $region26: #{tpu_custom_call.1} parent=11 // pred_check_branch
        %415 = sbr.rel (%p413) target = $region28
      $region27: #{tpu_custom_call.1} parent=11 // pred_region
        _
      $region28: #{tpu_custom_call.1} parent=11 // pred_fallthru
        _
      // Predicated region
      $region29: #{tpu_custom_call.1} parent=11 // pred_check
        %p416 = pneg %p153
      $region30: #{tpu_custom_call.1} parent=11 // pred_check_branch
        %418 = sbr.rel (%p416) target = $region32
      $region31: #{tpu_custom_call.1} parent=11 // pred_region
        _
      $region32: #{tpu_custom_call.1} parent=11 // pred_fallthru
        _
      // Predicated region
      $region33: #{tpu_custom_call.1} parent=11 // pred_check
        %p419 = pneg %p174
      $region34: #{tpu_custom_call.1} parent=11 // pred_check_branch
        %421 = sbr.rel (%p419) target = $region36
      $region35: #{tpu_custom_call.1} parent=11 // pred_region
        _
      $region36: #{tpu_custom_call.1} parent=11 // pred_fallthru
        _
      // Predicated region
      $region37: #{tpu_custom_call.1} parent=11 // pred_check
        %p422 = pneg %p195
      $region38: #{tpu_custom_call.1} parent=11 // pred_check_branch
        %424 = sbr.rel (%p422) target = $region40
      $region39: #{tpu_custom_call.1} parent=11 // pred_region
        _
      $region40: #{tpu_custom_call.1} parent=11 // pred_fallthru
        _
      // Predicated region
      $region41: #{tpu_custom_call.1} parent=11 // pred_check
        %p425 = pneg %p216
      $region42: #{tpu_custom_call.1} parent=11 // pred_check_branch
        %427 = sbr.rel (%p425) target = $region44
      $region43: #{tpu_custom_call.1} parent=11 // pred_region
        _
      $region44: #{tpu_custom_call.1} parent=11 // pred_fallthru
        _
      // Predicated region
      $region45: #{tpu_custom_call.1} parent=11 // pred_check
        %p428 = pneg %p237
      $region46: #{tpu_custom_call.1} parent=11 // pred_check_branch
        %430 = sbr.rel (%p428) target = $region48
      $region47: #{tpu_custom_call.1} parent=11 // pred_region
        _
      $region48: #{tpu_custom_call.1} parent=11 // pred_fallthru
        _
      // Predicated region
      $region49: #{tpu_custom_call.1} parent=11 // pred_check
        %p431 = pneg %p258
      $region50: #{tpu_custom_call.1} parent=11 // pred_check_branch
        %433 = sbr.rel (%p431) target = $region52
      $region51: #{tpu_custom_call.1} parent=11 // pred_region
        _
      $region52: #{tpu_custom_call.1} parent=11 // pred_fallthru
        _
      // Predicated region
      $region53: #{tpu_custom_call.1} parent=11 // pred_check
        %p434 = pneg %p279
      $region54: #{tpu_custom_call.1} parent=11 // pred_check_branch
        %436 = sbr.rel (%p434) target = $region56
      $region55: #{tpu_custom_call.1} parent=11 // pred_region
        _
      $region56: #{tpu_custom_call.1} parent=11 // pred_fallthru
        _
      // Predicated region
      $region57: #{tpu_custom_call.1} parent=11 // pred_check
        %p437 = pneg %p300
      $region58: #{tpu_custom_call.1} parent=11 // pred_check_branch
        %439 = sbr.rel (%p437) target = $region60
      $region59: #{tpu_custom_call.1} parent=11 // pred_region
        _
      $region60: #{tpu_custom_call.1} parent=11 // pred_fallthru
        _
      // Predicated region
      $region61: #{tpu_custom_call.1} parent=11 // pred_check
        %p440 = pneg %p321
      $region62: #{tpu_custom_call.1} parent=11 // pred_check_branch
        %442 = sbr.rel (%p440) target = $region64
      $region63: #{tpu_custom_call.1} parent=11 // pred_region
        _
      $region64: #{tpu_custom_call.1} parent=11 // pred_fallthru
        _
      // Predicated region
      $region65: #{tpu_custom_call.1} parent=11 // pred_check
        %p443 = pneg %p342
      $region66: #{tpu_custom_call.1} parent=11 // pred_check_branch
        %445 = sbr.rel (%p443) target = $region68
      $region67: #{tpu_custom_call.1} parent=11 // pred_region
        _
      $region68: #{tpu_custom_call.1} parent=11 // pred_fallthru
        _
      // Predicated region
      $region69: #{tpu_custom_call.1} parent=11 // pred_check
        %p446 = pneg %p363
      $region70: #{tpu_custom_call.1} parent=11 // pred_check_branch
        %448 = sbr.rel (%p446) target = $region72
      $region71: #{tpu_custom_call.1} parent=11 // pred_region
        _
      $region72: #{tpu_custom_call.1} parent=11 // pred_fallthru
        _
    $region12: #{tpu_custom_call.1} parent=5 // pred_fallthru
      _
    %p449 = scmp.lt.s32.totalorder %s22, 2
    // Predicated region
    $region73: #{tpu_custom_call.1} parent=5 // pred_check
      %p450 = pneg %p449
    $region74: #{tpu_custom_call.1} parent=5 // pred_check_branch
      %452 = sbr.rel (%p450) target = $region76
    $region75: #{tpu_custom_call.1} parent=5 // pred_region
      // Predicated region
      $region77: #{tpu_custom_call.1} parent=75 // pred_check
        %p453 = pneg %p42
      $region78: #{tpu_custom_call.1} parent=75 // pred_check_branch
        %455 = sbr.rel (%p453) target = $region80
      $region79: #{tpu_custom_call.1} parent=75 // pred_region
        %s456 = smul.u32 8, %s22
        %p457 = scmp.lt.s32.totalorder %s456, 15
        %s458 = scalar_select %p457, %s456, 15
        %s459 = smul.addr %s458, 8
        %s460 = scalar_lea.vmem %s0, %s459
        %s461 = smul.u32 8, %s22
      $region80: #{tpu_custom_call.1} parent=75 // pred_fallthru
        _
    $region76: #{tpu_custom_call.1} parent=5 // pred_fallthru
      _
    %p462 = scmp.le.s32.totalorder 1, %s22
    %p463 = scmp.lt.s32.totalorder %s22, 3
    %p464 = pnand %p462, %p463
    %p465 = pneg %p464
    // Predicated region
    $region81: #{tpu_custom_call.1} parent=5 // pred_check
      _
    $region82: #{tpu_custom_call.1} parent=5 // pred_check_branch
      %467 = sbr.rel (%p464) target = $region84
    $region83: #{tpu_custom_call.1} parent=5 // pred_region
      %s468 = ssub.s32 %s22, 1
      %s469 = smul.u32 8, %s27
      %p470 = scmp.lt.s32.totalorder %s469, 15
      %s471 = scalar_select %p470, %s469, 15
      %s472 = smul.addr %s471, 8
      %s473 = scalar_lea.vmem %s0, %s472
      %p474 = pneg %p48
      %p475 = pneg %p45
      %p476 = pneg %p69
      %p477 = pneg %p66
      %p478 = pneg %p90
      %p479 = pneg %p87
      %p480 = pneg %p111
      %p481 = pneg %p108
      %p482 = pneg %p132
      %p483 = pneg %p129
      %p484 = pneg %p153
      %p485 = pneg %p150
      %p486 = pneg %p174
      %p487 = pneg %p171
      %p488 = pneg %p195
      %p489 = pneg %p192
      %p490 = pneg %p216
      %p491 = pneg %p213
      %p492 = pneg %p237
      %p493 = pneg %p234
      %p494 = pneg %p258
      %p495 = pneg %p255
      %p496 = pneg %p279
      %p497 = pneg %p276
      %p498 = pneg %p300
      %p499 = pneg %p297
      %p500 = pneg %p321
      %p501 = pneg %p318
      %p502 = pneg %p342
      %p503 = pneg %p339
      %p504 = pneg %p363
      %p505 = pneg %p360
      %p506 = pneg %p389
      %p507 = pneg %p386
      %s508 = smul.u32 8, %s27
      %p509 = scmp.lt.s32.totalorder %s508, 15
      %s510 = scalar_select %p509, %s508, 15
      %s511 = smul.addr %s510, 8
      %s512 = scalar_lea.vmem %s16, %s511
      %s513 = smul.u32 8, %s27
      %p514 = scmp.lt.s32.totalorder %s513, 15
      %s515 = scalar_select %p514, %s513, 15
      %s516 = smul.addr %s515, 8
      %s517 = scalar_lea.vmem %s0, %s516
      %s518 = smul.u32 8, %s27
      %s519 = smul.u32 8, %s27
      %p520 = scmp.lt.s32.totalorder %s519, 15
      %s521 = scalar_select %p520, %s519, 15
      %s522 = smul.addr %s521, 8
      %s523 = scalar_lea.vmem %s16, %s522
      %s524 = smul.u32 8, %s27
      %v526 = vld [vmem:[%s1] sm:$0xf]
      %v527 = vld [vmem:[%s1 + $0x4] sm:$0xf]
      %v528 = vld [vmem:[%s1 + $0x8] sm:$0xf]
      %v529 = vld [vmem:[%s1 + $0xc] sm:$0xf]
      %v530 = vld [vmem:[%s1 + $0x10] sm:$0xf]
      %v531 = vld [vmem:[%s1 + $0x14] sm:$0xf]
      %v532 = vld [vmem:[%s1 + $0x18] sm:$0xf]
      %v533 = vld [vmem:[%s1 + $0x1c] sm:$0xf]
      %v534 = vld [vmem:[%s1 + $0x20] sm:$0xf]
      %v535 = vld [vmem:[%s1 + $0x24] sm:$0xf]
      %v536 = vld [vmem:[%s1 + $0x28] sm:$0xf]
      %v537 = vld [vmem:[%s1 + $0x2c] sm:$0xf]
      %v538 = vld [vmem:[%s1 + $0x30] sm:$0xf]
      %v539 = vld [vmem:[%s1 + $0x34] sm:$0xf]
      %v540 = vld [vmem:[%s1 + $0x38] sm:$0xf]
      %v541 = vld [vmem:[%s1 + $0x3c] sm:$0xf]
      %v542 = vld [vmem:[%s1 + $0x40] sm:$0xf]
      %v543 = vld [vmem:[%s1 + $0x44] sm:$0xf]
      %v544 = vld [vmem:[%s2] sm:$0xff]
      %v545 = vld [vmem:[%s2 + $0x8] sm:$0xff]
      %v546 = vld [vmem:[%s2 + $0x10] sm:$0xff]
      %v547 = vld [vmem:[%s2 + $0x18] sm:$0xff]
      %v548 = vld [vmem:[%s2 + $0x20] sm:$0xff]
      %v549 = vld [vmem:[%s2 + $0x28] sm:$0xff]
      %v550 = vld [vmem:[%s2 + $0x30] sm:$0xff]
      %v551 = vld [vmem:[%s2 + $0x38] sm:$0xff]
      %v552 = vld [vmem:[%s3] sm:$0xff]
      %v553 = vld [vmem:[%s3 + $0x8] sm:$0xff]
      %v554 = vld [vmem:[%s3 + $0x10] sm:$0xff]
      %v555 = vld [vmem:[%s3 + $0x18] sm:$0xff]
      %v556 = vld [vmem:[%s3 + $0x20] sm:$0xff]
      %v557 = vld [vmem:[%s3 + $0x28] sm:$0xff]
      %v558 = vld [vmem:[%s3 + $0x30] sm:$0xff]
      %v559 = vld [vmem:[%s3 + $0x38] sm:$0xff]
      %v560 = vld [vmem:[%s3 + $0x40] sm:$0xff]
      %v561 = vld [vmem:[%s3 + $0x48] sm:$0xff]
      %v562 = vld [vmem:[%s3 + $0x50] sm:$0xff]
      %v563 = vld [vmem:[%s3 + $0x58] sm:$0xff]
      %v564 = vld [vmem:[%s3 + $0x60] sm:$0xff]
      %v565 = vld [vmem:[%s3 + $0x68] sm:$0xff]
      %v566 = vld [vmem:[%s3 + $0x70] sm:$0xff]
      %v567 = vld [vmem:[%s3 + $0x78] sm:$0xff]
      %v568 = vld [vmem:[%s3 + $0x80] sm:$0xff]
      %v569 = vld [vmem:[%s3 + $0x88] sm:$0xff]
      %v570 = vld [vmem:[%s3 + $0x90] sm:$0xff]
      %v571 = vld [vmem:[%s3 + $0x98] sm:$0xff]
      %v572 = vld [vmem:[%s3 + $0xa0] sm:$0xff]
      %v573 = vld [vmem:[%s3 + $0xa8] sm:$0xff]
      %v574 = vld [vmem:[%s3 + $0xb0] sm:$0xff]
      %v575 = vld [vmem:[%s3 + $0xb8] sm:$0xff]
      %v576 = vld [vmem:[%s3 + $0xc0] sm:$0xff]
      %v577 = vld [vmem:[%s3 + $0xc8] sm:$0xff]
      %v578 = vld [vmem:[%s3 + $0xd0] sm:$0xff]
      %v579 = vld [vmem:[%s3 + $0xd8] sm:$0xff]
      %v580 = vld [vmem:[%s3 + $0xe0] sm:$0xff]
      %v581 = vld [vmem:[%s3 + $0xe8] sm:$0xff]
      %v582 = vld [vmem:[%s3 + $0xf0] sm:$0xff]
      %v583 = vld [vmem:[%s3 + $0xf8] sm:$0xff]
      %v584 = vld [vmem:[%s3 + $0x100] sm:$0xff]
      %v585 = vld [vmem:[%s3 + $0x108] sm:$0xff]
      %v586 = vld [vmem:[%s3 + $0x110] sm:$0xff]
      %v587 = vld [vmem:[%s3 + $0x118] sm:$0xff]
      %v588 = vld [vmem:[%s3 + $0x120] sm:$0xff]
      %v589 = vld [vmem:[%s3 + $0x128] sm:$0xff]
      %v590 = vld [vmem:[%s3 + $0x130] sm:$0xff]
      %v591 = vld [vmem:[%s3 + $0x138] sm:$0xff]
      %v592 = vld [vmem:[%s3 + $0x140] sm:$0xff]
      %v593 = vld [vmem:[%s3 + $0x148] sm:$0xff]
      %v594 = vld [vmem:[%s3 + $0x150] sm:$0xff]
      %v595 = vld [vmem:[%s3 + $0x158] sm:$0xff]
      %v596 = vld [vmem:[%s3 + $0x160] sm:$0xff]
      %v597 = vld [vmem:[%s3 + $0x168] sm:$0xff]
      %v598 = vld [vmem:[%s3 + $0x170] sm:$0xff]
      %v599 = vld [vmem:[%s3 + $0x178] sm:$0xff]
      %v600 = vld [vmem:[%s3 + $0x180] sm:$0xff]
      %v601 = vld [vmem:[%s3 + $0x188] sm:$0xff]
      %v602 = vld [vmem:[%s3 + $0x190] sm:$0xff]
      %v603 = vld [vmem:[%s3 + $0x198] sm:$0xff]
      %v604 = vld [vmem:[%s3 + $0x1a0] sm:$0xff]
      %v605 = vld [vmem:[%s3 + $0x1a8] sm:$0xff]
      %v606 = vld [vmem:[%s3 + $0x1b0] sm:$0xff]
      %v607 = vld [vmem:[%s3 + $0x1b8] sm:$0xff]
      %v608 = vld [vmem:[%s3 + $0x1c0] sm:$0xff]
      %v609 = vld [vmem:[%s3 + $0x1c8] sm:$0xff]
      %v610 = vld [vmem:[%s3 + $0x1d0] sm:$0xff]
      %v611 = vld [vmem:[%s3 + $0x1d8] sm:$0xff]
      %v612 = vld [vmem:[%s3 + $0x1e0] sm:$0xff]
      %v613 = vld [vmem:[%s3 + $0x1e8] sm:$0xff]
      %v614 = vld [vmem:[%s3 + $0x1f0] sm:$0xff]
      %v615 = vld [vmem:[%s3 + $0x1f8] sm:$0xff]
      %v616 = vld [vmem:[%s3 + $0x200] sm:$0xff]
      %v617 = vld [vmem:[%s3 + $0x208] sm:$0xff]
      %v618 = vld [vmem:[%s3 + $0x210] sm:$0xff]
      %v619 = vld [vmem:[%s3 + $0x218] sm:$0xff]
      %v620 = vld [vmem:[%s3 + $0x220] sm:$0xff]
      %v621 = vld [vmem:[%s3 + $0x228] sm:$0xff]
      %v622 = vld [vmem:[%s3 + $0x230] sm:$0xff]
      %v623 = vld [vmem:[%s3 + $0x238] sm:$0xff]
      %v624 = vld [vmem:[%s8] sm:$0xf]
      %v625 = vld [vmem:[%s8 + $0x4] sm:$0xf]
      %v626 = vld [vmem:[%s8 + $0x8] sm:$0xf]
      %v627 = vld [vmem:[%s8 + $0xc] sm:$0xf]
      %v628 = vld [vmem:[%s9] sm:$0x1]
      %v629 = vld [vmem:[%s10] sm:$0xf]
      %v630 = vld [vmem:[%s10 + $0x4] sm:$0xf]
      %v631 = vld [vmem:[%s10 + $0x8] sm:$0xf]
      %v632 = vld [vmem:[%s10 + $0xc] sm:$0xf]
      %v633 = vld [vmem:[%s11] sm:$0x1]
      %v634 = vld [vmem:[%s12] sm:$0xf]
      %v635 = vld [vmem:[%s12 + $0x4] sm:$0xf]
      %v636 = vld [vmem:[%s12 + $0x8] sm:$0xf]
      %v637 = vld [vmem:[%s12 + $0xc] sm:$0xf]
      %v638 = vld [vmem:[%s13] sm:$0x1]
      %v639 = vld [vmem:[%s14] sm:$0xf]
      %v640 = vld [vmem:[%s14 + $0x4] sm:$0xf]
      %v641 = vld [vmem:[%s14 + $0x8] sm:$0xf]
      %v642 = vld [vmem:[%s14 + $0xc] sm:$0xf]
      %v643 = vld [vmem:[%s14 + $0x10] sm:$0xf]
      %v644 = vld [vmem:[%s14 + $0x14] sm:$0xf]
      %v645 = vld [vmem:[%s14 + $0x18] sm:$0xf]
      %v646 = vld [vmem:[%s14 + $0x1c] sm:$0xf]
      %v647 = vld [vmem:[%s14 + $0x20] sm:$0xf]
      %v648 = vld [vmem:[%s14 + $0x24] sm:$0xf]
      %v649 = vld [vmem:[%s14 + $0x28] sm:$0xf]
      %v650 = vld [vmem:[%s14 + $0x2c] sm:$0xf]
      %v651 = vld [vmem:[%s14 + $0x30] sm:$0xf]
      %v652 = vld [vmem:[%s14 + $0x34] sm:$0xf]
      %v653 = vld [vmem:[%s14 + $0x38] sm:$0xf]
      %v654 = vld [vmem:[%s14 + $0x3c] sm:$0xf]
      %v655 = vld [vmem:[%s15] sm:$0x1]
      %v656 = vld [vmem:[%s4] sm:$0x1]
      %v657 = vld [vmem:[%s5] sm:$0x1]
      %v658 = vld [vmem:[%s6] sm:$0x1]
      %v659 = vld [vmem:[%s7] sm:$0x1]
      %v660 = vld [vmem:[%s517] sm:$0xff]
      %v661 = vld [vmem:[%s517 + $0x8] sm:$0xff]
      %v662 = vld [vmem:[%s517 + $0x10] sm:$0xff]
      %v663 = vld [vmem:[%s517 + $0x18] sm:$0xff]
      %v664 = vld [vmem:[%s517 + $0x20] sm:$0xff]
      %v665 = vld [vmem:[%s517 + $0x28] sm:$0xff]
      %v666 = vld [vmem:[%s517 + $0x30] sm:$0xff]
      %v667 = vld [vmem:[%s517 + $0x38] sm:$0xff]
      %vm668 = vcmask 261120
      %v669 = vsel %vm668, %v660, 0.0
      %670 = vadd.xlane.f32.xlu0 %v669
      %v671 = vpop.xlane.xlu0 %670
      %v672 = vsel %vm668, %v661, 0.0
      %673 = vadd.xlane.f32.xlu0 %v672
      %v674 = vpop.xlane.xlu0 %673
      %v675 = vsel %vm668, %v662, 0.0
      %676 = vadd.xlane.f32.xlu0 %v675
      %v677 = vpop.xlane.xlu0 %676
      %v678 = vsel %vm668, %v663, 0.0
      %679 = vadd.xlane.f32.xlu0 %v678
      %v680 = vpop.xlane.xlu0 %679
      %v681 = vsel %vm668, %v664, 0.0
      %682 = vadd.xlane.f32.xlu0 %v681
      %v683 = vpop.xlane.xlu0 %682
      %v684 = vsel %vm668, %v665, 0.0
      %685 = vadd.xlane.f32.xlu0 %v684
      %v686 = vpop.xlane.xlu0 %685
      %v687 = vsel %vm668, %v666, 0.0
      %688 = vadd.xlane.f32.xlu0 %v687
      %v689 = vpop.xlane.xlu0 %688
      %v690 = vsel %vm668, %v667, 0.0
      %691 = vadd.xlane.f32.xlu0 %v690
      %v692 = vpop.xlane.xlu0 %691
      %v693 = vrcp.pop 32.0
      %v694 = vmul.f32 %v671, %v693
      %v695 = vmul.f32 %v674, %v693
      %v696 = vmul.f32 %v677, %v693
      %v697 = vmul.f32 %v680, %v693
      %v698 = vmul.f32 %v683, %v693
      %v699 = vmul.f32 %v686, %v693
      %v700 = vmul.f32 %v689, %v693
      %v701 = vmul.f32 %v692, %v693
      %v702 = vsub.f32 %v660, %v694
      %v703 = vsub.f32 %v661, %v695
      %v704 = vsub.f32 %v662, %v696
      %v705 = vsub.f32 %v663, %v697
      %v706 = vsub.f32 %v664, %v698
      %v707 = vsub.f32 %v665, %v699
      %v708 = vsub.f32 %v666, %v700
      %v709 = vsub.f32 %v667, %v701
      %v710 = vmul.f32 %v702, %v702
      %v711 = vmul.f32 %v703, %v703
      %v712 = vmul.f32 %v704, %v704
      %v713 = vmul.f32 %v705, %v705
      %v714 = vmul.f32 %v706, %v706
      %v715 = vmul.f32 %v707, %v707
      %v716 = vmul.f32 %v708, %v708
      %v717 = vmul.f32 %v709, %v709
      %v718 = vsel %vm668, %v710, 0.0
      %719 = vadd.xlane.f32.xlu0 %v718
      %v720 = vpop.xlane.xlu0 %719
      %v721 = vsel %vm668, %v711, 0.0
      %722 = vadd.xlane.f32.xlu0 %v721
      %v723 = vpop.xlane.xlu0 %722
      %v724 = vsel %vm668, %v712, 0.0
      %725 = vadd.xlane.f32.xlu0 %v724
      %v726 = vpop.xlane.xlu0 %725
      %v727 = vsel %vm668, %v713, 0.0
      %728 = vadd.xlane.f32.xlu0 %v727
      %v729 = vpop.xlane.xlu0 %728
      %v730 = vsel %vm668, %v714, 0.0
      %731 = vadd.xlane.f32.xlu0 %v730
      %v732 = vpop.xlane.xlu0 %731
      %v733 = vsel %vm668, %v715, 0.0
      %734 = vadd.xlane.f32.xlu0 %v733
      %v735 = vpop.xlane.xlu0 %734
      %v736 = vsel %vm668, %v716, 0.0
      %737 = vadd.xlane.f32.xlu0 %v736
      %v738 = vpop.xlane.xlu0 %737
      %v739 = vsel %vm668, %v717, 0.0
      %740 = vadd.xlane.f32.xlu0 %v739
      %v741 = vpop.xlane.xlu0 %740
      %v742 = vmul.f32 %v720, %v693
      %v743 = vmul.f32 %v723, %v693
      %v744 = vmul.f32 %v726, %v693
      %v745 = vmul.f32 %v729, %v693
      %v746 = vmul.f32 %v732, %v693
      %v747 = vmul.f32 %v735, %v693
      %v748 = vmul.f32 %v738, %v693
      %v749 = vmul.f32 %v741, %v693
      %v750 = vadd.f32 %v742, 1e-05
      %v751 = vadd.f32 %v743, 1e-05
      %v752 = vadd.f32 %v744, 1e-05
      %v753 = vadd.f32 %v745, 1e-05
      %v754 = vadd.f32 %v746, 1e-05
      %v755 = vadd.f32 %v747, 1e-05
      %v756 = vadd.f32 %v748, 1e-05
      %v757 = vadd.f32 %v749, 1e-05
      %v758 = vrsqrt.pop %v750
      %v759 = vrsqrt.pop %v751
      %v760 = vrsqrt.pop %v752
      %v761 = vrsqrt.pop %v753
      %v762 = vrsqrt.pop %v754
      %v763 = vrsqrt.pop %v755
      %v764 = vrsqrt.pop %v756
      %v765 = vrsqrt.pop %v757
      %v766 = vmul.f32 %v702, %v758
      %v767 = vmul.f32 %v703, %v759
      %v768 = vmul.f32 %v704, %v760
      %v769 = vmul.f32 %v705, %v761
      %v770 = vmul.f32 %v706, %v762
      %v771 = vmul.f32 %v707, %v763
      %v772 = vmul.f32 %v708, %v764
      %v773 = vmul.f32 %v709, %v765
      %v775 = vlaneseq
      %v776 = vshrl.u32 %v775, 7
      %v777 = vsub.s32 0, %v776
      %v778 = vrot.slane %v656, %v777
      %v780 = vmul.f32 %v766, %v778
      %v781 = vmul.f32 %v767, %v778
      %v782 = vmul.f32 %v768, %v778
      %v783 = vmul.f32 %v769, %v778
      %v784 = vmul.f32 %v770, %v778
      %v785 = vmul.f32 %v771, %v778
      %v786 = vmul.f32 %v772, %v778
      %v787 = vmul.f32 %v773, %v778
      %v789 = vlaneseq
      %v790 = vshrl.u32 %v789, 7
      %v791 = vsub.s32 0, %v790
      %v792 = vrot.slane %v657, %v791
      %v794 = vadd.f32 %v780, %v792
      %v795 = vadd.f32 %v781, %v792
      %v796 = vadd.f32 %v782, %v792
      %v797 = vadd.f32 %v783, %v792
      %v798 = vadd.f32 %v784, %v792
      %v799 = vadd.f32 %v785, %v792
      %v800 = vadd.f32 %v786, %v792
      %v801 = vadd.f32 %v787, %v792
      %v802 = vpack.c.bf16 %v795, %v794
      %v803 = vpack.c.bf16 %v797, %v796
      %v804 = vpack.c.bf16 %v799, %v798
      %v805 = vpack.c.bf16 %v801, %v800
      %v824 = vunpack.c.l.b16 %v526
      %v825 = vunpack.c.l.b16 %v527
      %v826 = vunpack.c.l.b16 %v528
      %v827 = vunpack.c.l.b16 %v529
      %v828 = vunpack.c.l.b16 %v530
      %v829 = vunpack.c.l.b16 %v531
      %v830 = vunpack.c.l.b16 %v532
      %v831 = vunpack.c.l.b16 %v533
      %v832 = vunpack.c.l.b16 %v534
      %v833 = vunpack.c.l.b16 %v535
      %v834 = vunpack.c.l.b16 %v536
      %v835 = vunpack.c.l.b16 %v537
      %v836 = vunpack.c.l.b16 %v538
      %v837 = vunpack.c.l.b16 %v539
      %v838 = vunpack.c.l.b16 %v540
      %v839 = vunpack.c.l.b16 %v541
      %v840 = vunpack.c.l.b16 %v542
      %v841 = vunpack.c.l.b16 %v543
      %v842 = vpack.c.b16 %v825, %v824
      %v843 = vpack.c.b16 %v827, %v826
      %v844 = vpack.c.b16 %v829, %v828
      %v845 = vpack.c.b16 %v831, %v830
      %v846 = vpack.c.b16 %v833, %v832
      %v847 = vpack.c.b16 %v835, %v834
      %v848 = vpack.c.b16 %v837, %v836
      %v849 = vpack.c.b16 %v839, %v838
      %v850 = vpack.c.b16 %v841, %v840
      %vm851 = vcmask 523264
      %v853 = vsel %vm851, %v842, 0
      %v856 = vsel %vm851, %v843, 0
      %v859 = vsel %vm851, %v844, 0
      %v862 = vsel %vm851, %v845, 0
      %v865 = vsel %vm851, %v846, 0
      %v868 = vsel %vm851, %v847, 0
      %v871 = vsel %vm851, %v848, 0
      %v874 = vsel %vm851, %v849, 0
      %v877 = vsel %vm851, %v850, 0
      %879 = vmatprep.subr.bf16.mxu0 0
      %880 = vmatpush1.bf16.msra.mxu0 %v802
      %881 = vmatprep.subr.bf16.mxu0 0
      %882 = vmatpush1.bf16.msra.mxu0 %v803
      %883 = vmatprep.subr.bf16.mxu0 0
      %884 = vmatpush1.bf16.msra.mxu0 %v804
      %885 = vmatprep.subr.bf16.mxu0 0
      %886 = vmatpush1.bf16.msra.mxu0 %v805
      %887 = vmatprep.subr.bf16.mxu0 0
      %888 = vmatpush1.bf16.msra.mxu0 0
      %889 = vmatprep.subr.bf16.mxu0 0
      %890 = vmatpush1.bf16.msra.mxu0 0
      %891 = vmatprep.subr.bf16.mxu0 0
      %892 = vmatpush1.bf16.msra.mxu0 0
      %893 = vmatprep.subr.bf16.mxu0 0
      %894 = vmatpush1.bf16.msra.mxu0 0
      %895 = vmatprep.subr.bf16.mxu0 0
      %896 = vmatpush1.bf16.msra.mxu0 0
      %897 = vmatprep.subr.bf16.mxu0 0
      %898 = vmatpush1.bf16.msra.mxu0 0
      %899 = vmatprep.subr.bf16.mxu0 0
      %900 = vmatpush1.bf16.msra.mxu0 0
      %901 = vmatprep.subr.bf16.mxu0 0
      %902 = vmatpush1.bf16.msra.mxu0 0
      %903 = vmatprep.subr.bf16.mxu0 0
      %904 = vmatpush1.bf16.msra.mxu0 0
      %905 = vmatprep.subr.bf16.mxu0 0
      %906 = vmatpush1.bf16.msra.mxu0 0
      %907 = vmatprep.subr.bf16.mxu0 0
      %908 = vmatpush1.bf16.msra.mxu0 0
      %909 = vmatprep.subr.bf16.mxu0 0
      %910 = vmatpush1.bf16.msra.mxu0 0
      %911 = vmatprep.mubr.bf16.mxu0 0
      %912 = vmatmul.mubr.bf16.gmra.mrb[0].mxu0 %v853
      %v913 = vpop.f32.mrb[0].mxu0
      %v914 = vadd.f32 0.0, %v913
      %v915 = vpop.f32.mrb[0].mxu0
      %v916 = vpop.f32.mrb[0].mxu0
      %v917 = vadd.f32 0.0, %v916
      %v918 = vpop.f32.mrb[0].mxu0
      %919 = vmatprep.mubr.bf16.mxu0 0
      %920 = vmatmul.mubr.bf16.gmra.mrb[0].mxu0 %v856
      %v921 = vpop.f32.mrb[0].mxu0
      %v922 = vadd.f32 0.0, %v921
      %v923 = vpop.f32.mrb[0].mxu0
      %v924 = vpop.f32.mrb[0].mxu0
      %v925 = vadd.f32 0.0, %v924
      %v926 = vpop.f32.mrb[0].mxu0
      %927 = vmatprep.mubr.bf16.mxu0 0
      %928 = vmatmul.mubr.bf16.gmra.mrb[0].mxu0 %v859
      %v929 = vpop.f32.mrb[0].mxu0
      %v930 = vadd.f32 0.0, %v929
      %v931 = vpop.f32.mrb[0].mxu0
      %v932 = vpop.f32.mrb[0].mxu0
      %v933 = vadd.f32 0.0, %v932
      %v934 = vpop.f32.mrb[0].mxu0
      %935 = vmatprep.mubr.bf16.mxu0 0
      %936 = vmatmul.mubr.bf16.gmra.mrb[0].mxu0 %v862
      %v937 = vpop.f32.mrb[0].mxu0
      %v938 = vadd.f32 0.0, %v937
      %v939 = vpop.f32.mrb[0].mxu0
      %v940 = vpop.f32.mrb[0].mxu0
      %v941 = vadd.f32 0.0, %v940
      %v942 = vpop.f32.mrb[0].mxu0
      %943 = vmatprep.mubr.bf16.mxu0 0
      %944 = vmatmul.mubr.bf16.gmra.mrb[0].mxu0 %v865
      %v945 = vpop.f32.mrb[0].mxu0
      %v946 = vadd.f32 0.0, %v945
      %v947 = vpop.f32.mrb[0].mxu0
      %v948 = vpop.f32.mrb[0].mxu0
      %v949 = vadd.f32 0.0, %v948
      %v950 = vpop.f32.mrb[0].mxu0
      %951 = vmatprep.mubr.bf16.mxu0 0
      %952 = vmatmul.mubr.bf16.gmra.mrb[0].mxu0 %v868
      %v953 = vpop.f32.mrb[0].mxu0
      %v954 = vadd.f32 0.0, %v953
      %v955 = vpop.f32.mrb[0].mxu0
      %v956 = vpop.f32.mrb[0].mxu0
      %v957 = vadd.f32 0.0, %v956
      %v958 = vpop.f32.mrb[0].mxu0
      %959 = vmatprep.mubr.bf16.mxu0 0
      %960 = vmatmul.mubr.bf16.gmra.mrb[0].mxu0 %v871
      %v961 = vpop.f32.mrb[0].mxu0
      %v962 = vadd.f32 0.0, %v961
      %v963 = vpop.f32.mrb[0].mxu0
      %v964 = vpop.f32.mrb[0].mxu0
      %v965 = vadd.f32 0.0, %v964
      %v966 = vpop.f32.mrb[0].mxu0
      %967 = vmatprep.mubr.bf16.mxu0 0
      %968 = vmatmul.mubr.bf16.gmra.mrb[0].mxu0 %v874
      %v969 = vpop.f32.mrb[0].mxu0
      %v970 = vadd.f32 0.0, %v969
      %v971 = vpop.f32.mrb[0].mxu0
      %v972 = vpop.f32.mrb[0].mxu0
      %v973 = vadd.f32 0.0, %v972
      %v974 = vpop.f32.mrb[0].mxu0
      %975 = vmatprep.mubr.bf16.mxu0 0
      %976 = vmatmul.mubr.bf16.gmra.mrb[0].mxu0 %v877
      %v977 = vpop.f32.mrb[0].mxu0
      %v978 = vadd.f32 0.0, %v977
      %v979 = vpop.f32.mrb[0].mxu0
      %v980 = vpop.f32.mrb[0].mxu0
      %v981 = vadd.f32 0.0, %v980
      %v982 = vpop.f32.mrb[0].mxu0
      %983 = vdwg.mxu0
      %v984 = vpack.c.bf16 %v917, %v914
      %v985 = vpack.c.bf16 %v925, %v922
      %v986 = vpack.c.bf16 %v933, %v930
      %v987 = vpack.c.bf16 %v941, %v938
      %v988 = vpack.c.bf16 %v949, %v946
      %v989 = vpack.c.bf16 %v957, %v954
      %v990 = vpack.c.bf16 %v965, %v962
      %v991 = vpack.c.bf16 %v973, %v970
      %v992 = vpack.c.bf16 %v981, %v978
      %v994 = vlaneseq
      %v995 = vshrl.u32 %v994, 7
      %v996 = vsub.s32 0, %v995
      %v997 = vrot.slane %v628, %v996
      %v1003 = vunpack.c.l.b16 %v624
      %v1004 = vunpack.c.l.b16 %v625
      %v1005 = vunpack.c.l.b16 %v626
      %v1006 = vunpack.c.l.b16 %v627
      %v1007 = vpack.c.b16 %v1004, %v1003
      %v1008 = vpack.c.b16 %v1006, %v1005
      %v1012 = vsel %vm668, %v984, 0
      %v1015 = vsel %vm668, %v985, 0
      %v1018 = vsel %vm668, %v986, 0
      %v1021 = vsel %vm668, %v987, 0
      %v1024 = vsel %vm668, %v988, 0
      %v1027 = vsel %vm668, %v989, 0
      %v1030 = vsel %vm668, %v990, 0
      %v1033 = vsel %vm668, %v991, 0
      %v1036 = vsel %vm668, %v992, 0
      %1038 = vmatprep.subr.bf16.mxu0 0
      %1039 = vmatpush1.bf16.msra.mxu0 %v1007
      %1040 = vmatprep.subr.bf16.mxu0 0
      %1041 = vmatpush1.bf16.msra.mxu0 %v1008
      %1042 = vmatprep.subr.bf16.mxu0 0
      %1043 = vmatpush1.bf16.msra.mxu0 0
      %1044 = vmatprep.subr.bf16.mxu0 0
      %1045 = vmatpush1.bf16.msra.mxu0 0
      %1046 = vmatprep.subr.bf16.mxu0 0
      %1047 = vmatpush1.bf16.msra.mxu0 0
      %1048 = vmatprep.subr.bf16.mxu0 0
      %1049 = vmatpush1.bf16.msra.mxu0 0
      %1050 = vmatprep.subr.bf16.mxu0 0
      %1051 = vmatpush1.bf16.msra.mxu0 0
      %1052 = vmatprep.subr.bf16.mxu0 0
      %1053 = vmatpush1.bf16.msra.mxu0 0
      %1054 = vmatprep.subr.bf16.mxu0 0
      %1055 = vmatpush1.bf16.msra.mxu0 0
      %1056 = vmatprep.subr.bf16.mxu0 0
      %1057 = vmatpush1.bf16.msra.mxu0 0
      %1058 = vmatprep.subr.bf16.mxu0 0
      %1059 = vmatpush1.bf16.msra.mxu0 0
      %1060 = vmatprep.subr.bf16.mxu0 0
      %1061 = vmatpush1.bf16.msra.mxu0 0
      %1062 = vmatprep.subr.bf16.mxu0 0
      %1063 = vmatpush1.bf16.msra.mxu0 0
      %1064 = vmatprep.subr.bf16.mxu0 0
      %1065 = vmatpush1.bf16.msra.mxu0 0
      %1066 = vmatprep.subr.bf16.mxu0 0
      %1067 = vmatpush1.bf16.msra.mxu0 0
      %1068 = vmatprep.subr.bf16.mxu0 0
      %1069 = vmatpush1.bf16.msra.mxu0 0
      %1070 = vmatprep.mubr.bf16.mxu0 0
      %1071 = vmatmul.mubr.bf16.gmra.mrb[0].mxu0 %v1012
      %v1072 = vpop.f32.mrb[0].mxu0
      %v1073 = vadd.f32 %v997, %v1072
      %v1074 = vpop.f32.mrb[0].mxu0
      %v1075 = vpop.f32.mrb[0].mxu0
      %v1076 = vadd.f32 %v997, %v1075
      %v1077 = vpop.f32.mrb[0].mxu0
      %1078 = vmatprep.mubr.bf16.mxu0 0
      %1079 = vmatmul.mubr.bf16.gmra.mrb[0].mxu0 %v1015
      %v1080 = vpop.f32.mrb[0].mxu0
      %v1081 = vadd.f32 %v997, %v1080
      %v1082 = vpop.f32.mrb[0].mxu0
      %v1083 = vpop.f32.mrb[0].mxu0
      %v1084 = vadd.f32 %v997, %v1083
      %v1085 = vpop.f32.mrb[0].mxu0
      %1086 = vmatprep.mubr.bf16.mxu0 0
      %1087 = vmatmul.mubr.bf16.gmra.mrb[0].mxu0 %v1018
      %v1088 = vpop.f32.mrb[0].mxu0
      %v1089 = vadd.f32 %v997, %v1088
      %v1090 = vpop.f32.mrb[0].mxu0
      %v1091 = vpop.f32.mrb[0].mxu0
      %v1092 = vadd.f32 %v997, %v1091
      %v1093 = vpop.f32.mrb[0].mxu0
      %1094 = vmatprep.mubr.bf16.mxu0 0
      %1095 = vmatmul.mubr.bf16.gmra.mrb[0].mxu0 %v1021
      %v1096 = vpop.f32.mrb[0].mxu0
      %v1097 = vadd.f32 %v997, %v1096
      %v1098 = vpop.f32.mrb[0].mxu0
      %v1099 = vpop.f32.mrb[0].mxu0
      %v1100 = vadd.f32 %v997, %v1099
      %v1101 = vpop.f32.mrb[0].mxu0
      %1102 = vmatprep.mubr.bf16.mxu0 0
      %1103 = vmatmul.mubr.bf16.gmra.mrb[0].mxu0 %v1024
      %v1104 = vpop.f32.mrb[0].mxu0
      %v1105 = vadd.f32 %v997, %v1104
      %v1106 = vpop.f32.mrb[0].mxu0
      %v1107 = vpop.f32.mrb[0].mxu0
      %v1108 = vadd.f32 %v997, %v1107
      %v1109 = vpop.f32.mrb[0].mxu0
      %1110 = vmatprep.mubr.bf16.mxu0 0
      %1111 = vmatmul.mubr.bf16.gmra.mrb[0].mxu0 %v1027
      %v1112 = vpop.f32.mrb[0].mxu0
      %v1113 = vadd.f32 %v997, %v1112
      %v1114 = vpop.f32.mrb[0].mxu0
      %v1115 = vpop.f32.mrb[0].mxu0
      %v1116 = vadd.f32 %v997, %v1115
      %v1117 = vpop.f32.mrb[0].mxu0
      %1118 = vmatprep.mubr.bf16.mxu0 0
      %1119 = vmatmul.mubr.bf16.gmra.mrb[0].mxu0 %v1030
      %v1120 = vpop.f32.mrb[0].mxu0
      %v1121 = vadd.f32 %v997, %v1120
      %v1122 = vpop.f32.mrb[0].mxu0
      %v1123 = vpop.f32.mrb[0].mxu0
      %v1124 = vadd.f32 %v997, %v1123
      %v1125 = vpop.f32.mrb[0].mxu0
      %1126 = vmatprep.mubr.bf16.mxu0 0
      %1127 = vmatmul.mubr.bf16.gmra.mrb[0].mxu0 %v1033
      %v1128 = vpop.f32.mrb[0].mxu0
      %v1129 = vadd.f32 %v997, %v1128
      %v1130 = vpop.f32.mrb[0].mxu0
      %v1131 = vpop.f32.mrb[0].mxu0
      %v1132 = vadd.f32 %v997, %v1131
      %v1133 = vpop.f32.mrb[0].mxu0
      %1134 = vmatprep.mubr.bf16.mxu0 0
      %1135 = vmatmul.mubr.bf16.gmra.mrb[0].mxu0 %v1036
      %v1136 = vpop.f32.mrb[0].mxu0
      %v1137 = vadd.f32 %v997, %v1136
      %v1138 = vpop.f32.mrb[0].mxu0
      %v1139 = vpop.f32.mrb[0].mxu0
      %v1140 = vadd.f32 %v997, %v1139
      %v1141 = vpop.f32.mrb[0].mxu0
      %1142 = vdwg.mxu0
      %v1143 = vpack.c.bf16 %v1076, %v1073
      %v1144 = vpack.c.bf16 %v1084, %v1081
      %v1145 = vpack.c.bf16 %v1092, %v1089
      %v1146 = vpack.c.bf16 %v1100, %v1097
      %v1147 = vpack.c.bf16 %v1108, %v1105
      %v1148 = vpack.c.bf16 %v1116, %v1113
      %v1149 = vpack.c.bf16 %v1124, %v1121
      %v1150 = vpack.c.bf16 %v1132, %v1129
      %v1151 = vpack.c.bf16 %v1140, %v1137
      %1153 = vrot.lane.b32.xlu0 %v1143, 96
      %v1154 = vpop.permute.xlu0 %1153
      %vm1155 = vcmask 64512
      %v1157 = vsel %vm1155, %v1143, 0
      %v1160 = vsel %vm1155, %v1154, 0
      %1162 = vmatprep.subr.bf16.mxu0 0
      %1163 = vmatpush1.bf16.xpose.msra.mxu0 %v1160
      %1164 = vmatprep.subr.bf16.mxu0 0
      %1165 = vmatpush1.bf16.xpose.msra.mxu0 0
      %1166 = vmatprep.subr.bf16.mxu0 0
      %1167 = vmatpush1.bf16.xpose.msra.mxu0 0
      %1168 = vmatprep.subr.bf16.mxu0 0
      %1169 = vmatpush1.bf16.xpose.msra.mxu0 0
      %1170 = vmatprep.subr.bf16.mxu0 0
      %1171 = vmatpush1.bf16.xpose.msra.mxu0 0
      %1172 = vmatprep.subr.bf16.mxu0 0
      %1173 = vmatpush1.bf16.xpose.msra.mxu0 0
      %1174 = vmatprep.subr.bf16.mxu0 0
      %1175 = vmatpush1.bf16.xpose.msra.mxu0 0
      %1176 = vmatprep.subr.bf16.mxu0 0
      %1177 = vmatpush1.bf16.xpose.msra.mxu0 0
      %1178 = vmatprep.subr.bf16.mxu0 0
      %1179 = vmatpush1.bf16.xpose.msra.mxu0 0
      %1180 = vmatprep.subr.bf16.mxu0 0
      %1181 = vmatpush1.bf16.xpose.msra.mxu0 0
      %1182 = vmatprep.subr.bf16.mxu0 0
      %1183 = vmatpush1.bf16.xpose.msra.mxu0 0
      %1184 = vmatprep.subr.bf16.mxu0 0
      %1185 = vmatpush1.bf16.xpose.msra.mxu0 0
      %1186 = vmatprep.subr.bf16.mxu0 0
      %1187 = vmatpush1.bf16.xpose.msra.mxu0 0
      %1188 = vmatprep.subr.bf16.mxu0 0
      %1189 = vmatpush1.bf16.xpose.msra.mxu0 0
      %1190 = vmatprep.subr.bf16.mxu0 0
      %1191 = vmatpush1.bf16.xpose.msra.mxu0 0
      %1192 = vmatprep.subr.bf16.mxu0 0
      %1193 = vmatpush1.bf16.xpose.msra.mxu0 0
      %1194 = vmatprep.mubr.bf16.mxu0 0
      %1195 = vmatmul.mubr.bf16.gmra.mrb[0].mxu0 %v1157
      %v1196 = vpop.f32.mrb[0].mxu0
      %v1197 = vadd.f32 %v552, %v1196
      %v1198 = vpop.f32.mrb[0].mxu0
      %v1199 = vpop.f32.mrb[0].mxu0
      %v1200 = vadd.f32 %v553, %v1199
      %v1201 = vpop.f32.mrb[0].mxu0
      %1202 = vdwg.mxu0
      %1204 = vrot.lane.b32.xlu0 %v1144, 96
      %v1205 = vpop.permute.xlu0 %1204
      %v1207 = vsel %vm1155, %v1144, 0
      %v1210 = vsel %vm1155, %v1205, 0
      %1212 = vmatprep.subr.bf16.mxu0 0
      %1213 = vmatpush1.bf16.xpose.msra.mxu0 %v1210
      %1214 = vmatprep.subr.bf16.mxu0 0
      %1215 = vmatpush1.bf16.xpose.msra.mxu0 0
      %1216 = vmatprep.subr.bf16.mxu0 0
      %1217 = vmatpush1.bf16.xpose.msra.mxu0 0
      %1218 = vmatprep.subr.bf16.mxu0 0
      %1219 = vmatpush1.bf16.xpose.msra.mxu0 0
      %1220 = vmatprep.subr.bf16.mxu0 0
      %1221 = vmatpush1.bf16.xpose.msra.mxu0 0
      %1222 = vmatprep.subr.bf16.mxu0 0
      %1223 = vmatpush1.bf16.xpose.msra.mxu0 0
      %1224 = vmatprep.subr.bf16.mxu0 0
      %1225 = vmatpush1.bf16.xpose.msra.mxu0 0
      %1226 = vmatprep.subr.bf16.mxu0 0
      %1227 = vmatpush1.bf16.xpose.msra.mxu0 0
      %1228 = vmatprep.subr.bf16.mxu0 0
      %1229 = vmatpush1.bf16.xpose.msra.mxu0 0
      %1230 = vmatprep.subr.bf16.mxu0 0
      %1231 = vmatpush1.bf16.xpose.msra.mxu0 0
      %1232 = vmatprep.subr.bf16.mxu0 0
      %1233 = vmatpush1.bf16.xpose.msra.mxu0 0
      %1234 = vmatprep.subr.bf16.mxu0 0
      %1235 = vmatpush1.bf16.xpose.msra.mxu0 0
      %1236 = vmatprep.subr.bf16.mxu0 0
      %1237 = vmatpush1.bf16.xpose.msra.mxu0 0
      %1238 = vmatprep.subr.bf16.mxu0 0
      %1239 = vmatpush1.bf16.xpose.msra.mxu0 0
      %1240 = vmatprep.subr.bf16.mxu0 0
      %1241 = vmatpush1.bf16.xpose.msra.mxu0 0
      %1242 = vmatprep.subr.bf16.mxu0 0
      %1243 = vmatpush1.bf16.xpose.msra.mxu0 0
      %1244 = vmatprep.mubr.bf16.mxu0 0
      %1245 = vmatmul.mubr.bf16.gmra.mrb[0].mxu0 %v1207
      %v1246 = vpop.f32.mrb[0].mxu0
      %v1247 = vadd.f32 %v554, %v1246
      %v1248 = vpop.f32.mrb[0].mxu0
      %v1249 = vpop.f32.mrb[0].mxu0
      %v1250 = vadd.f32 %v555, %v1249
      %v1251 = vpop.f32.mrb[0].mxu0
      %1252 = vdwg.mxu0
      %1254 = vrot.lane.b32.xlu0 %v1145, 96
      %v1255 = vpop.permute.xlu0 %1254
      %v1257 = vsel %vm1155, %v1145, 0
      %v1260 = vsel %vm1155, %v1255, 0
      %1262 = vmatprep.subr.bf16.mxu0 0
      %1263 = vmatpush1.bf16.xpose.msra.mxu0 %v1260
      %1264 = vmatprep.subr.bf16.mxu0 0
      %1265 = vmatpush1.bf16.xpose.msra.mxu0 0
      %1266 = vmatprep.subr.bf16.mxu0 0
      %1267 = vmatpush1.bf16.xpose.msra.mxu0 0
      %1268 = vmatprep.subr.bf16.mxu0 0
      %1269 = vmatpush1.bf16.xpose.msra.mxu0 0
      %1270 = vmatprep.subr.bf16.mxu0 0
      %1271 = vmatpush1.bf16.xpose.msra.mxu0 0
      %1272 = vmatprep.subr.bf16.mxu0 0
      %1273 = vmatpush1.bf16.xpose.msra.mxu0 0
      %1274 = vmatprep.subr.bf16.mxu0 0
      %1275 = vmatpush1.bf16.xpose.msra.mxu0 0
      %1276 = vmatprep.subr.bf16.mxu0 0
      %1277 = vmatpush1.bf16.xpose.msra.mxu0 0
      %1278 = vmatprep.subr.bf16.mxu0 0
      %1279 = vmatpush1.bf16.xpose.msra.mxu0 0
      %1280 = vmatprep.subr.bf16.mxu0 0
      %1281 = vmatpush1.bf16.xpose.msra.mxu0 0
      %1282 = vmatprep.subr.bf16.mxu0 0
      %1283 = vmatpush1.bf16.xpose.msra.mxu0 0
      %1284 = vmatprep.subr.bf16.mxu0 0
      %1285 = vmatpush1.bf16.xpose.msra.mxu0 0
      %1286 = vmatprep.subr.bf16.mxu0 0
      %1287 = vmatpush1.bf16.xpose.msra.mxu0 0
      %1288 = vmatprep.subr.bf16.mxu0 0
      %1289 = vmatpush1.bf16.xpose.msra.mxu0 0
      %1290 = vmatprep.subr.bf16.mxu0 0
      %1291 = vmatpush1.bf16.xpose.msra.mxu0 0
      %1292 = vmatprep.subr.bf16.mxu0 0
      %1293 = vmatpush1.bf16.xpose.msra.mxu0 0
      %1294 = vmatprep.mubr.bf16.mxu0 0
      %1295 = vmatmul.mubr.bf16.gmra.mrb[0].mxu0 %v1257
      %v1296 = vpop.f32.mrb[0].mxu0
      %v1297 = vadd.f32 %v556, %v1296
      %v1298 = vpop.f32.mrb[0].mxu0
      %v1299 = vpop.f32.mrb[0].mxu0
      %v1300 = vadd.f32 %v557, %v1299
      %v1301 = vpop.f32.mrb[0].mxu0
      %1302 = vdwg.mxu0
      %1304 = vrot.lane.b32.xlu0 %v1146, 96
      %v1305 = vpop.permute.xlu0 %1304
      %v1307 = vsel %vm1155, %v1146, 0
      %v1310 = vsel %vm1155, %v1305, 0
      %1312 = vmatprep.subr.bf16.mxu0 0
      %1313 = vmatpush1.bf16.xpose.msra.mxu0 %v1310
      %1314 = vmatprep.subr.bf16.mxu0 0
      %1315 = vmatpush1.bf16.xpose.msra.mxu0 0
      %1316 = vmatprep.subr.bf16.mxu0 0
      %1317 = vmatpush1.bf16.xpose.msra.mxu0 0
      %1318 = vmatprep.subr.bf16.mxu0 0
      %1319 = vmatpush1.bf16.xpose.msra.mxu0 0
      %1320 = vmatprep.subr.bf16.mxu0 0
      %1321 = vmatpush1.bf16.xpose.msra.mxu0 0
      %1322 = vmatprep.subr.bf16.mxu0 0
      %1323 = vmatpush1.bf16.xpose.msra.mxu0 0
      %1324 = vmatprep.subr.bf16.mxu0 0
      %1325 = vmatpush1.bf16.xpose.msra.mxu0 0
      %1326 = vmatprep.subr.bf16.mxu0 0
      %1327 = vmatpush1.bf16.xpose.msra.mxu0 0
      %1328 = vmatprep.subr.bf16.mxu0 0
      %1329 = vmatpush1.bf16.xpose.msra.mxu0 0
      %1330 = vmatprep.subr.bf16.mxu0 0
      %1331 = vmatpush1.bf16.xpose.msra.mxu0 0
      %1332 = vmatprep.subr.bf16.mxu0 0
      %1333 = vmatpush1.bf16.xpose.msra.mxu0 0
      %1334 = vmatprep.subr.bf16.mxu0 0
      %1335 = vmatpush1.bf16.xpose.msra.mxu0 0
      %1336 = vmatprep.subr.bf16.mxu0 0
      %1337 = vmatpush1.bf16.xpose.msra.mxu0 0
      %1338 = vmatprep.subr.bf16.mxu0 0
      %1339 = vmatpush1.bf16.xpose.msra.mxu0 0
      %1340 = vmatprep.subr.bf16.mxu0 0
      %1341 = vmatpush1.bf16.xpose.msra.mxu0 0
      %1342 = vmatprep.subr.bf16.mxu0 0
      %1343 = vmatpush1.bf16.xpose.msra.mxu0 0
      %1344 = vmatprep.mubr.bf16.mxu0 0
      %1345 = vmatmul.mubr.bf16.gmra.mrb[0].mxu0 %v1307
      %v1346 = vpop.f32.mrb[0].mxu0
      %v1347 = vadd.f32 %v558, %v1346
      %v1348 = vpop.f32.mrb[0].mxu0
      %v1349 = vpop.f32.mrb[0].mxu0
      %v1350 = vadd.f32 %v559, %v1349
      %v1351 = vpop.f32.mrb[0].mxu0
      %1352 = vdwg.mxu0
      %1354 = vrot.lane.b32.xlu0 %v1147, 96
      %v1355 = vpop.permute.xlu0 %1354
      %v1357 = vsel %vm1155, %v1147, 0
      %v1360 = vsel %vm1155, %v1355, 0
      %1362 = vmatprep.subr.bf16.mxu0 0
      %1363 = vmatpush1.bf16.xpose.msra.mxu0 %v1360
      %1364 = vmatprep.subr.bf16.mxu0 0
      %1365 = vmatpush1.bf16.xpose.msra.mxu0 0
      %1366 = vmatprep.subr.bf16.mxu0 0
      %1367 = vmatpush1.bf16.xpose.msra.mxu0 0
      %1368 = vmatprep.subr.bf16.mxu0 0
      %1369 = vmatpush1.bf16.xpose.msra.mxu0 0
      %1370 = vmatprep.subr.bf16.mxu0 0
      %1371 = vmatpush1.bf16.xpose.msra.mxu0 0
      %1372 = vmatprep.subr.bf16.mxu0 0
      %1373 = vmatpush1.bf16.xpose.msra.mxu0 0
      %1374 = vmatprep.subr.bf16.mxu0 0
      %1375 = vmatpush1.bf16.xpose.msra.mxu0 0
      %1376 = vmatprep.subr.bf16.mxu0 0
      %1377 = vmatpush1.bf16.xpose.msra.mxu0 0
      %1378 = vmatprep.subr.bf16.mxu0 0
      %1379 = vmatpush1.bf16.xpose.msra.mxu0 0
      %1380 = vmatprep.subr.bf16.mxu0 0
      %1381 = vmatpush1.bf16.xpose.msra.mxu0 0
      %1382 = vmatprep.subr.bf16.mxu0 0
      %1383 = vmatpush1.bf16.xpose.msra.mxu0 0
      %1384 = vmatprep.subr.bf16.mxu0 0
      %1385 = vmatpush1.bf16.xpose.msra.mxu0 0
      %1386 = vmatprep.subr.bf16.mxu0 0
      %1387 = vmatpush1.bf16.xpose.msra.mxu0 0
      %1388 = vmatprep.subr.bf16.mxu0 0
      %1389 = vmatpush1.bf16.xpose.msra.mxu0 0
      %1390 = vmatprep.subr.bf16.mxu0 0
      %1391 = vmatpush1.bf16.xpose.msra.mxu0 0
      %1392 = vmatprep.subr.bf16.mxu0 0
      %1393 = vmatpush1.bf16.xpose.msra.mxu0 0
      %1394 = vmatprep.mubr.bf16.mxu0 0
      %1395 = vmatmul.mubr.bf16.gmra.mrb[0].mxu0 %v1357
      %v1396 = vpop.f32.mrb[0].mxu0
      %v1397 = vadd.f32 %v560, %v1396
      %v1398 = vpop.f32.mrb[0].mxu0
      %v1399 = vpop.f32.mrb[0].mxu0
      %v1400 = vadd.f32 %v561, %v1399
      %v1401 = vpop.f32.mrb[0].mxu0
      %1402 = vdwg.mxu0
      %1404 = vrot.lane.b32.xlu0 %v1148, 96
      %v1405 = vpop.permute.xlu0 %1404
      %v1407 = vsel %vm1155, %v1148, 0
      %v1410 = vsel %vm1155, %v1405, 0
      %1412 = vmatprep.subr.bf16.mxu0 0
      %1413 = vmatpush1.bf16.xpose.msra.mxu0 %v1410
      %1414 = vmatprep.subr.bf16.mxu0 0
      %1415 = vmatpush1.bf16.xpose.msra.mxu0 0
      %1416 = vmatprep.subr.bf16.mxu0 0
      %1417 = vmatpush1.bf16.xpose.msra.mxu0 0
      %1418 = vmatprep.subr.bf16.mxu0 0
      %1419 = vmatpush1.bf16.xpose.msra.mxu0 0
      %1420 = vmatprep.subr.bf16.mxu0 0
      %1421 = vmatpush1.bf16.xpose.msra.mxu0 0
      %1422 = vmatprep.subr.bf16.mxu0 0
      %1423 = vmatpush1.bf16.xpose.msra.mxu0 0
      %1424 = vmatprep.subr.bf16.mxu0 0
      %1425 = vmatpush1.bf16.xpose.msra.mxu0 0
      %1426 = vmatprep.subr.bf16.mxu0 0
      %1427 = vmatpush1.bf16.xpose.msra.mxu0 0
      %1428 = vmatprep.subr.bf16.mxu0 0
      %1429 = vmatpush1.bf16.xpose.msra.mxu0 0
      %1430 = vmatprep.subr.bf16.mxu0 0
      %1431 = vmatpush1.bf16.xpose.msra.mxu0 0
      %1432 = vmatprep.subr.bf16.mxu0 0
      %1433 = vmatpush1.bf16.xpose.msra.mxu0 0
      %1434 = vmatprep.subr.bf16.mxu0 0
      %1435 = vmatpush1.bf16.xpose.msra.mxu0 0
      %1436 = vmatprep.subr.bf16.mxu0 0
      %1437 = vmatpush1.bf16.xpose.msra.mxu0 0
      %1438 = vmatprep.subr.bf16.mxu0 0
      %1439 = vmatpush1.bf16.xpose.msra.mxu0 0
      %1440 = vmatprep.subr.bf16.mxu0 0
      %1441 = vmatpush1.bf16.xpose.msra.mxu0 0
      %1442 = vmatprep.subr.bf16.mxu0 0
      %1443 = vmatpush1.bf16.xpose.msra.mxu0 0
      %1444 = vmatprep.mubr.bf16.mxu0 0
      %1445 = vmatmul.mubr.bf16.gmra.mrb[0].mxu0 %v1407
      %v1446 = vpop.f32.mrb[0].mxu0
      %v1447 = vadd.f32 %v562, %v1446
      %v1448 = vpop.f32.mrb[0].mxu0
      %v1449 = vpop.f32.mrb[0].mxu0
      %v1450 = vadd.f32 %v563, %v1449
      %v1451 = vpop.f32.mrb[0].mxu0
      %1452 = vdwg.mxu0
      %1454 = vrot.lane.b32.xlu0 %v1149, 96
      %v1455 = vpop.permute.xlu0 %1454
      %v1457 = vsel %vm1155, %v1149, 0
      %v1460 = vsel %vm1155, %v1455, 0
      %1462 = vmatprep.subr.bf16.mxu0 0
      %1463 = vmatpush1.bf16.xpose.msra.mxu0 %v1460
      %1464 = vmatprep.subr.bf16.mxu0 0
      %1465 = vmatpush1.bf16.xpose.msra.mxu0 0
      %1466 = vmatprep.subr.bf16.mxu0 0
      %1467 = vmatpush1.bf16.xpose.msra.mxu0 0
      %1468 = vmatprep.subr.bf16.mxu0 0
      %1469 = vmatpush1.bf16.xpose.msra.mxu0 0
      %1470 = vmatprep.subr.bf16.mxu0 0
      %1471 = vmatpush1.bf16.xpose.msra.mxu0 0
      %1472 = vmatprep.subr.bf16.mxu0 0
      %1473 = vmatpush1.bf16.xpose.msra.mxu0 0
      %1474 = vmatprep.subr.bf16.mxu0 0
      %1475 = vmatpush1.bf16.xpose.msra.mxu0 0
      %1476 = vmatprep.subr.bf16.mxu0 0
      %1477 = vmatpush1.bf16.xpose.msra.mxu0 0
      %1478 = vmatprep.subr.bf16.mxu0 0
      %1479 = vmatpush1.bf16.xpose.msra.mxu0 0
      %1480 = vmatprep.subr.bf16.mxu0 0
      %1481 = vmatpush1.bf16.xpose.msra.mxu0 0
      %1482 = vmatprep.subr.bf16.mxu0 0
      %1483 = vmatpush1.bf16.xpose.msra.mxu0 0
      %1484 = vmatprep.subr.bf16.mxu0 0
      %1485 = vmatpush1.bf16.xpose.msra.mxu0 0
      %1486 = vmatprep.subr.bf16.mxu0 0
      %1487 = vmatpush1.bf16.xpose.msra.mxu0 0
      %1488 = vmatprep.subr.bf16.mxu0 0
      %1489 = vmatpush1.bf16.xpose.msra.mxu0 0
      %1490 = vmatprep.subr.bf16.mxu0 0
      %1491 = vmatpush1.bf16.xpose.msra.mxu0 0
      %1492 = vmatprep.subr.bf16.mxu0 0
      %1493 = vmatpush1.bf16.xpose.msra.mxu0 0
      %1494 = vmatprep.mubr.bf16.mxu0 0
      %1495 = vmatmul.mubr.bf16.gmra.mrb[0].mxu0 %v1457
      %v1496 = vpop.f32.mrb[0].mxu0
      %v1497 = vadd.f32 %v564, %v1496
      %v1498 = vpop.f32.mrb[0].mxu0
      %v1499 = vpop.f32.mrb[0].mxu0
      %v1500 = vadd.f32 %v565, %v1499
      %v1501 = vpop.f32.mrb[0].mxu0
      %1502 = vdwg.mxu0
      %1504 = vrot.lane.b32.xlu0 %v1150, 96
      %v1505 = vpop.permute.xlu0 %1504
      %v1507 = vsel %vm1155, %v1150, 0
      %v1510 = vsel %vm1155, %v1505, 0
      %1512 = vmatprep.subr.bf16.mxu0 0
      %1513 = vmatpush1.bf16.xpose.msra.mxu0 %v1510
      %1514 = vmatprep.subr.bf16.mxu0 0
      %1515 = vmatpush1.bf16.xpose.msra.mxu0 0
      %1516 = vmatprep.subr.bf16.mxu0 0
      %1517 = vmatpush1.bf16.xpose.msra.mxu0 0
      %1518 = vmatprep.subr.bf16.mxu0 0
      %1519 = vmatpush1.bf16.xpose.msra.mxu0 0
      %1520 = vmatprep.subr.bf16.mxu0 0
      %1521 = vmatpush1.bf16.xpose.msra.mxu0 0
      %1522 = vmatprep.subr.bf16.mxu0 0
      %1523 = vmatpush1.bf16.xpose.msra.mxu0 0
      %1524 = vmatprep.subr.bf16.mxu0 0
      %1525 = vmatpush1.bf16.xpose.msra.mxu0 0
      %1526 = vmatprep.subr.bf16.mxu0 0
      %1527 = vmatpush1.bf16.xpose.msra.mxu0 0
      %1528 = vmatprep.subr.bf16.mxu0 0
      %1529 = vmatpush1.bf16.xpose.msra.mxu0 0
      %1530 = vmatprep.subr.bf16.mxu0 0
      %1531 = vmatpush1.bf16.xpose.msra.mxu0 0
      %1532 = vmatprep.subr.bf16.mxu0 0
      %1533 = vmatpush1.bf16.xpose.msra.mxu0 0
      %1534 = vmatprep.subr.bf16.mxu0 0
      %1535 = vmatpush1.bf16.xpose.msra.mxu0 0
      %1536 = vmatprep.subr.bf16.mxu0 0
      %1537 = vmatpush1.bf16.xpose.msra.mxu0 0
      %1538 = vmatprep.subr.bf16.mxu0 0
      %1539 = vmatpush1.bf16.xpose.msra.mxu0 0
      %1540 = vmatprep.subr.bf16.mxu0 0
      %1541 = vmatpush1.bf16.xpose.msra.mxu0 0
      %1542 = vmatprep.subr.bf16.mxu0 0
      %1543 = vmatpush1.bf16.xpose.msra.mxu0 0
      %1544 = vmatprep.mubr.bf16.mxu0 0
      %1545 = vmatmul.mubr.bf16.gmra.mrb[0].mxu0 %v1507
      %v1546 = vpop.f32.mrb[0].mxu0
      %v1547 = vadd.f32 %v566, %v1546
      %v1548 = vpop.f32.mrb[0].mxu0
      %v1549 = vpop.f32.mrb[0].mxu0
      %v1550 = vadd.f32 %v567, %v1549
      %v1551 = vpop.f32.mrb[0].mxu0
      %1552 = vdwg.mxu0
      %1554 = vrot.lane.b32.xlu0 %v1151, 96
      %v1555 = vpop.permute.xlu0 %1554
      %v1557 = vsel %vm1155, %v1151, 0
      %v1560 = vsel %vm1155, %v1555, 0
      %1562 = vmatprep.subr.bf16.mxu0 0
      %1563 = vmatpush1.bf16.xpose.msra.mxu0 %v1560
      %1564 = vmatprep.subr.bf16.mxu0 0
      %1565 = vmatpush1.bf16.xpose.msra.mxu0 0
      %1566 = vmatprep.subr.bf16.mxu0 0
      %1567 = vmatpush1.bf16.xpose.msra.mxu0 0
      %1568 = vmatprep.subr.bf16.mxu0 0
      %1569 = vmatpush1.bf16.xpose.msra.mxu0 0
      %1570 = vmatprep.subr.bf16.mxu0 0
      %1571 = vmatpush1.bf16.xpose.msra.mxu0 0
      %1572 = vmatprep.subr.bf16.mxu0 0
      %1573 = vmatpush1.bf16.xpose.msra.mxu0 0
      %1574 = vmatprep.subr.bf16.mxu0 0
      %1575 = vmatpush1.bf16.xpose.msra.mxu0 0
      %1576 = vmatprep.subr.bf16.mxu0 0
      %1577 = vmatpush1.bf16.xpose.msra.mxu0 0
      %1578 = vmatprep.subr.bf16.mxu0 0
      %1579 = vmatpush1.bf16.xpose.msra.mxu0 0
      %1580 = vmatprep.subr.bf16.mxu0 0
      %1581 = vmatpush1.bf16.xpose.msra.mxu0 0
      %1582 = vmatprep.subr.bf16.mxu0 0
      %1583 = vmatpush1.bf16.xpose.msra.mxu0 0
      %1584 = vmatprep.subr.bf16.mxu0 0
      %1585 = vmatpush1.bf16.xpose.msra.mxu0 0
      %1586 = vmatprep.subr.bf16.mxu0 0
      %1587 = vmatpush1.bf16.xpose.msra.mxu0 0
      %1588 = vmatprep.subr.bf16.mxu0 0
      %1589 = vmatpush1.bf16.xpose.msra.mxu0 0
      %1590 = vmatprep.subr.bf16.mxu0 0
      %1591 = vmatpush1.bf16.xpose.msra.mxu0 0
      %1592 = vmatprep.subr.bf16.mxu0 0
      %1593 = vmatpush1.bf16.xpose.msra.mxu0 0
      %1594 = vmatprep.mubr.bf16.mxu0 0
      %1595 = vmatmul.mubr.bf16.gmra.mrb[0].mxu0 %v1557
      %v1596 = vpop.f32.mrb[0].mxu0
      %v1597 = vadd.f32 %v568, %v1596
      %v1598 = vpop.f32.mrb[0].mxu0
      %v1599 = vpop.f32.mrb[0].mxu0
      %v1600 = vadd.f32 %v569, %v1599
      %v1601 = vpop.f32.mrb[0].mxu0
      %1602 = vdwg.mxu0
      %vm1603 = vcmask 130048
      %v1604 = vsel %vm1603, %v1197, -inf
      %1605 = vmax.xlane.f32.xlu0 %v1604
      %v1606 = vpop.xlane.xlu0 %1605
      %v1607 = vsel %vm1603, %v1200, -inf
      %1608 = vmax.xlane.f32.xlu0 %v1607
      %v1609 = vpop.xlane.xlu0 %1608
      %v1610 = vsel %vm1603, %v1247, -inf
      %1611 = vmax.xlane.f32.xlu0 %v1610
      %v1612 = vpop.xlane.xlu0 %1611
      %v1613 = vsel %vm1603, %v1250, -inf
      %1614 = vmax.xlane.f32.xlu0 %v1613
      %v1615 = vpop.xlane.xlu0 %1614
      %v1616 = vsel %vm1603, %v1297, -inf
      %1617 = vmax.xlane.f32.xlu0 %v1616
      %v1618 = vpop.xlane.xlu0 %1617
      %v1619 = vsel %vm1603, %v1300, -inf
      %1620 = vmax.xlane.f32.xlu0 %v1619
      %v1621 = vpop.xlane.xlu0 %1620
      %v1622 = vsel %vm1603, %v1347, -inf
      %1623 = vmax.xlane.f32.xlu0 %v1622
      %v1624 = vpop.xlane.xlu0 %1623
      %v1625 = vsel %vm1603, %v1350, -inf
      %1626 = vmax.xlane.f32.xlu0 %v1625
      %v1627 = vpop.xlane.xlu0 %1626
      %v1628 = vsel %vm1603, %v1397, -inf
      %1629 = vmax.xlane.f32.xlu0 %v1628
      %v1630 = vpop.xlane.xlu0 %1629
      %v1631 = vsel %vm1603, %v1400, -inf
      %1632 = vmax.xlane.f32.xlu0 %v1631
      %v1633 = vpop.xlane.xlu0 %1632
      %v1634 = vsel %vm1603, %v1447, -inf
      %1635 = vmax.xlane.f32.xlu0 %v1634
      %v1636 = vpop.xlane.xlu0 %1635
      %v1637 = vsel %vm1603, %v1450, -inf
      %1638 = vmax.xlane.f32.xlu0 %v1637
      %v1639 = vpop.xlane.xlu0 %1638
      %v1640 = vsel %vm1603, %v1497, -inf
      %1641 = vmax.xlane.f32.xlu0 %v1640
      %v1642 = vpop.xlane.xlu0 %1641
      %v1643 = vsel %vm1603, %v1500, -inf
      %1644 = vmax.xlane.f32.xlu0 %v1643
      %v1645 = vpop.xlane.xlu0 %1644
      %v1646 = vsel %vm1603, %v1547, -inf
      %1647 = vmax.xlane.f32.xlu0 %v1646
      %v1648 = vpop.xlane.xlu0 %1647
      %v1649 = vsel %vm1603, %v1550, -inf
      %1650 = vmax.xlane.f32.xlu0 %v1649
      %v1651 = vpop.xlane.xlu0 %1650
      %v1652 = vsel %vm1603, %v1597, -inf
      %1653 = vmax.xlane.f32.xlu0 %v1652
      %v1654 = vpop.xlane.xlu0 %1653
      %v1655 = vsel %vm1603, %v1600, -inf
      %1656 = vmax.xlane.f32.xlu0 %v1655
      %v1657 = vpop.xlane.xlu0 %1656
      %v1658 = vsub.f32 %v1197, %v1606
      %v1659 = vsub.f32 %v1200, %v1609
      %v1660 = vsub.f32 %v1247, %v1612
      %v1661 = vsub.f32 %v1250, %v1615
      %v1662 = vsub.f32 %v1297, %v1618
      %v1663 = vsub.f32 %v1300, %v1621
      %v1664 = vsub.f32 %v1347, %v1624
      %v1665 = vsub.f32 %v1350, %v1627
      %v1666 = vsub.f32 %v1397, %v1630
      %v1667 = vsub.f32 %v1400, %v1633
      %v1668 = vsub.f32 %v1447, %v1636
      %v1669 = vsub.f32 %v1450, %v1639
      %v1670 = vsub.f32 %v1497, %v1642
      %v1671 = vsub.f32 %v1500, %v1645
      %v1672 = vsub.f32 %v1547, %v1648
      %v1673 = vsub.f32 %v1550, %v1651
      %v1674 = vsub.f32 %v1597, %v1654
      %v1675 = vsub.f32 %v1600, %v1657
      %v1676 = vmul.f32 %v1658, 1.442695
      %v1677 = vpow.pop %v1676
      %v1678 = vmul.f32 %v1659, 1.442695
      %v1679 = vpow.pop %v1678
      %v1680 = vmul.f32 %v1660, 1.442695
      %v1681 = vpow.pop %v1680
      %v1682 = vmul.f32 %v1661, 1.442695
      %v1683 = vpow.pop %v1682
      %v1684 = vmul.f32 %v1662, 1.442695
      %v1685 = vpow.pop %v1684
      %v1686 = vmul.f32 %v1663, 1.442695
      %v1687 = vpow.pop %v1686
      %v1688 = vmul.f32 %v1664, 1.442695
      %v1689 = vpow.pop %v1688
      %v1690 = vmul.f32 %v1665, 1.442695
      %v1691 = vpow.pop %v1690
      %v1692 = vmul.f32 %v1666, 1.442695
      %v1693 = vpow.pop %v1692
      %v1694 = vmul.f32 %v1667, 1.442695
      %v1695 = vpow.pop %v1694
      %v1696 = vmul.f32 %v1668, 1.442695
      %v1697 = vpow.pop %v1696
      %v1698 = vmul.f32 %v1669, 1.442695
      %v1699 = vpow.pop %v1698
      %v1700 = vmul.f32 %v1670, 1.442695
      %v1701 = vpow.pop %v1700
      %v1702 = vmul.f32 %v1671, 1.442695
      %v1703 = vpow.pop %v1702
      %v1704 = vmul.f32 %v1672, 1.442695
      %v1705 = vpow.pop %v1704
      %v1706 = vmul.f32 %v1673, 1.442695
      %v1707 = vpow.pop %v1706
      %v1708 = vmul.f32 %v1674, 1.442695
      %v1709 = vpow.pop %v1708
      %v1710 = vmul.f32 %v1675, 1.442695
      %v1711 = vpow.pop %v1710
      %v1712 = vsel %vm1603, %v1677, 0.0
      %1713 = vadd.xlane.f32.xlu0 %v1712
      %v1714 = vpop.xlane.xlu0 %1713
      %v1715 = vsel %vm1603, %v1679, 0.0
      %1716 = vadd.xlane.f32.xlu0 %v1715
      %v1717 = vpop.xlane.xlu0 %1716
      %v1718 = vsel %vm1603, %v1681, 0.0
      %1719 = vadd.xlane.f32.xlu0 %v1718
      %v1720 = vpop.xlane.xlu0 %1719
      %v1721 = vsel %vm1603, %v1683, 0.0
      %1722 = vadd.xlane.f32.xlu0 %v1721
      %v1723 = vpop.xlane.xlu0 %1722
      %v1724 = vsel %vm1603, %v1685, 0.0
      %1725 = vadd.xlane.f32.xlu0 %v1724
      %v1726 = vpop.xlane.xlu0 %1725
      %v1727 = vsel %vm1603, %v1687, 0.0
      %1728 = vadd.xlane.f32.xlu0 %v1727
      %v1729 = vpop.xlane.xlu0 %1728
      %v1730 = vsel %vm1603, %v1689, 0.0
      %1731 = vadd.xlane.f32.xlu0 %v1730
      %v1732 = vpop.xlane.xlu0 %1731
      %v1733 = vsel %vm1603, %v1691, 0.0
      %1734 = vadd.xlane.f32.xlu0 %v1733
      %v1735 = vpop.xlane.xlu0 %1734
      %v1736 = vsel %vm1603, %v1693, 0.0
      %1737 = vadd.xlane.f32.xlu0 %v1736
      %v1738 = vpop.xlane.xlu0 %1737
      %v1739 = vsel %vm1603, %v1695, 0.0
      %1740 = vadd.xlane.f32.xlu0 %v1739
      %v1741 = vpop.xlane.xlu0 %1740
      %v1742 = vsel %vm1603, %v1697, 0.0
      %1743 = vadd.xlane.f32.xlu0 %v1742
      %v1744 = vpop.xlane.xlu0 %1743
      %v1745 = vsel %vm1603, %v1699, 0.0
      %1746 = vadd.xlane.f32.xlu0 %v1745
      %v1747 = vpop.xlane.xlu0 %1746
      %v1748 = vsel %vm1603, %v1701, 0.0
      %1749 = vadd.xlane.f32.xlu0 %v1748
      %v1750 = vpop.xlane.xlu0 %1749
      %v1751 = vsel %vm1603, %v1703, 0.0
      %1752 = vadd.xlane.f32.xlu0 %v1751
      %v1753 = vpop.xlane.xlu0 %1752
      %v1754 = vsel %vm1603, %v1705, 0.0
      %1755 = vadd.xlane.f32.xlu0 %v1754
      %v1756 = vpop.xlane.xlu0 %1755
      %v1757 = vsel %vm1603, %v1707, 0.0
      %1758 = vadd.xlane.f32.xlu0 %v1757
      %v1759 = vpop.xlane.xlu0 %1758
      %v1760 = vsel %vm1603, %v1709, 0.0
      %1761 = vadd.xlane.f32.xlu0 %v1760
      %v1762 = vpop.xlane.xlu0 %1761
      %v1763 = vsel %vm1603, %v1711, 0.0
      %1764 = vadd.xlane.f32.xlu0 %v1763
      %v1765 = vpop.xlane.xlu0 %1764
      %v1766 = vrcp.pop %v1714
      %v1767 = vrcp.pop %v1717
      %v1768 = vrcp.pop %v1720
      %v1769 = vrcp.pop %v1723
      %v1770 = vrcp.pop %v1726
      %v1771 = vrcp.pop %v1729
      %v1772 = vrcp.pop %v1732
      %v1773 = vrcp.pop %v1735
      %v1774 = vrcp.pop %v1738
      %v1775 = vrcp.pop %v1741
      %v1776 = vrcp.pop %v1744
      %v1777 = vrcp.pop %v1747
      %v1778 = vrcp.pop %v1750
      %v1779 = vrcp.pop %v1753
      %v1780 = vrcp.pop %v1756
      %v1781 = vrcp.pop %v1759
      %v1782 = vrcp.pop %v1762
      %v1783 = vrcp.pop %v1765
      %v1784 = vmul.f32 %v1677, %v1766
      %v1785 = vmul.f32 %v1679, %v1767
      %v1786 = vmul.f32 %v1681, %v1768
      %v1787 = vmul.f32 %v1683, %v1769
      %v1788 = vmul.f32 %v1685, %v1770
      %v1789 = vmul.f32 %v1687, %v1771
      %v1790 = vmul.f32 %v1689, %v1772
      %v1791 = vmul.f32 %v1691, %v1773
      %v1792 = vmul.f32 %v1693, %v1774
      %v1793 = vmul.f32 %v1695, %v1775
      %v1794 = vmul.f32 %v1697, %v1776
      %v1795 = vmul.f32 %v1699, %v1777
      %v1796 = vmul.f32 %v1701, %v1778
      %v1797 = vmul.f32 %v1703, %v1779
      %v1798 = vmul.f32 %v1705, %v1780
      %v1799 = vmul.f32 %v1707, %v1781
      %v1800 = vmul.f32 %v1709, %v1782
      %v1801 = vmul.f32 %v1711, %v1783
      %v1802 = vpack.c.bf16 %v1785, %v1784
      %v1803 = vpack.c.bf16 %v1787, %v1786
      %v1804 = vpack.c.bf16 %v1789, %v1788
      %v1805 = vpack.c.bf16 %v1791, %v1790
      %v1806 = vpack.c.bf16 %v1793, %v1792
      %v1807 = vpack.c.bf16 %v1795, %v1794
      %v1808 = vpack.c.bf16 %v1797, %v1796
      %v1809 = vpack.c.bf16 %v1799, %v1798
      %v1810 = vpack.c.bf16 %v1801, %v1800
      %1811 = vrot.lane.b32.xlu0 %v1143, 64
      %v1812 = vpop.permute.xlu0 %1811
      %v1815 = vsel %vm1603, %v1802, 0
      %1817 = vmatprep.subr.bf16.mxu0 0
      %1818 = vmatpush1.bf16.msra.mxu0 %v1812
      %1819 = vmatprep.subr.bf16.mxu0 0
      %1820 = vmatpush1.bf16.msra.mxu0 0
      %1821 = vmatprep.subr.bf16.mxu0 0
      %1822 = vmatpush1.bf16.msra.mxu0 0
      %1823 = vmatprep.subr.bf16.mxu0 0
      %1824 = vmatpush1.bf16.msra.mxu0 0
      %1825 = vmatprep.subr.bf16.mxu0 0
      %1826 = vmatpush1.bf16.msra.mxu0 0
      %1827 = vmatprep.subr.bf16.mxu0 0
      %1828 = vmatpush1.bf16.msra.mxu0 0
      %1829 = vmatprep.subr.bf16.mxu0 0
      %1830 = vmatpush1.bf16.msra.mxu0 0
      %1831 = vmatprep.subr.bf16.mxu0 0
      %1832 = vmatpush1.bf16.msra.mxu0 0
      %1833 = vmatprep.subr.bf16.mxu0 0
      %1834 = vmatpush1.bf16.msra.mxu0 0
      %1835 = vmatprep.subr.bf16.mxu0 0
      %1836 = vmatpush1.bf16.msra.mxu0 0
      %1837 = vmatprep.subr.bf16.mxu0 0
      %1838 = vmatpush1.bf16.msra.mxu0 0
      %1839 = vmatprep.subr.bf16.mxu0 0
      %1840 = vmatpush1.bf16.msra.mxu0 0
      %1841 = vmatprep.subr.bf16.mxu0 0
      %1842 = vmatpush1.bf16.msra.mxu0 0
      %1843 = vmatprep.subr.bf16.mxu0 0
      %1844 = vmatpush1.bf16.msra.mxu0 0
      %1845 = vmatprep.subr.bf16.mxu0 0
      %1846 = vmatpush1.bf16.msra.mxu0 0
      %1847 = vmatprep.subr.bf16.mxu0 0
      %1848 = vmatpush1.bf16.msra.mxu0 0
      %1849 = vmatprep.mubr.bf16.mxu0 0
      %1850 = vmatmul.mubr.bf16.gmra.mrb[0].mxu0 %v1815
      %v1851 = vpop.f32.mrb[0].mxu0
      %v1852 = vadd.f32 0.0, %v1851
      %v1853 = vpop.f32.mrb[0].mxu0
      %v1854 = vpop.f32.mrb[0].mxu0
      %v1855 = vadd.f32 0.0, %v1854
      %v1856 = vpop.f32.mrb[0].mxu0
      %1857 = vdwg.mxu0
      %1858 = vrot.lane.b32.xlu0 %v1144, 64
      %v1859 = vpop.permute.xlu0 %1858
      %v1862 = vsel %vm1603, %v1803, 0
      %1864 = vmatprep.subr.bf16.mxu0 0
      %1865 = vmatpush1.bf16.msra.mxu0 %v1859
      %1866 = vmatprep.subr.bf16.mxu0 0
      %1867 = vmatpush1.bf16.msra.mxu0 0
      %1868 = vmatprep.subr.bf16.mxu0 0
      %1869 = vmatpush1.bf16.msra.mxu0 0
      %1870 = vmatprep.subr.bf16.mxu0 0
      %1871 = vmatpush1.bf16.msra.mxu0 0
      %1872 = vmatprep.subr.bf16.mxu0 0
      %1873 = vmatpush1.bf16.msra.mxu0 0
      %1874 = vmatprep.subr.bf16.mxu0 0
      %1875 = vmatpush1.bf16.msra.mxu0 0
      %1876 = vmatprep.subr.bf16.mxu0 0
      %1877 = vmatpush1.bf16.msra.mxu0 0
      %1878 = vmatprep.subr.bf16.mxu0 0
      %1879 = vmatpush1.bf16.msra.mxu0 0
      %1880 = vmatprep.subr.bf16.mxu0 0
      %1881 = vmatpush1.bf16.msra.mxu0 0
      %1882 = vmatprep.subr.bf16.mxu0 0
      %1883 = vmatpush1.bf16.msra.mxu0 0
      %1884 = vmatprep.subr.bf16.mxu0 0
      %1885 = vmatpush1.bf16.msra.mxu0 0
      %1886 = vmatprep.subr.bf16.mxu0 0
      %1887 = vmatpush1.bf16.msra.mxu0 0
      %1888 = vmatprep.subr.bf16.mxu0 0
      %1889 = vmatpush1.bf16.msra.mxu0 0
      %1890 = vmatprep.subr.bf16.mxu0 0
      %1891 = vmatpush1.bf16.msra.mxu0 0
      %1892 = vmatprep.subr.bf16.mxu0 0
      %1893 = vmatpush1.bf16.msra.mxu0 0
      %1894 = vmatprep.subr.bf16.mxu0 0
      %1895 = vmatpush1.bf16.msra.mxu0 0
      %1896 = vmatprep.mubr.bf16.mxu0 0
      %1897 = vmatmul.mubr.bf16.gmra.mrb[0].mxu0 %v1862
      %v1898 = vpop.f32.mrb[0].mxu0
      %v1899 = vadd.f32 0.0, %v1898
      %v1900 = vpop.f32.mrb[0].mxu0
      %v1901 = vpop.f32.mrb[0].mxu0
      %v1902 = vadd.f32 0.0, %v1901
      %v1903 = vpop.f32.mrb[0].mxu0
      %1904 = vdwg.mxu0
      %1905 = vrot.lane.b32.xlu0 %v1145, 64
      %v1906 = vpop.permute.xlu0 %1905
      %v1909 = vsel %vm1603, %v1804, 0
      %1911 = vmatprep.subr.bf16.mxu0 0
      %1912 = vmatpush1.bf16.msra.mxu0 %v1906
      %1913 = vmatprep.subr.bf16.mxu0 0
      %1914 = vmatpush1.bf16.msra.mxu0 0
      %1915 = vmatprep.subr.bf16.mxu0 0
      %1916 = vmatpush1.bf16.msra.mxu0 0
      %1917 = vmatprep.subr.bf16.mxu0 0
      %1918 = vmatpush1.bf16.msra.mxu0 0
      %1919 = vmatprep.subr.bf16.mxu0 0
      %1920 = vmatpush1.bf16.msra.mxu0 0
      %1921 = vmatprep.subr.bf16.mxu0 0
      %1922 = vmatpush1.bf16.msra.mxu0 0
      %1923 = vmatprep.subr.bf16.mxu0 0
      %1924 = vmatpush1.bf16.msra.mxu0 0
      %1925 = vmatprep.subr.bf16.mxu0 0
      %1926 = vmatpush1.bf16.msra.mxu0 0
      %1927 = vmatprep.subr.bf16.mxu0 0
      %1928 = vmatpush1.bf16.msra.mxu0 0
      %1929 = vmatprep.subr.bf16.mxu0 0
      %1930 = vmatpush1.bf16.msra.mxu0 0
      %1931 = vmatprep.subr.bf16.mxu0 0
      %1932 = vmatpush1.bf16.msra.mxu0 0
      %1933 = vmatprep.subr.bf16.mxu0 0
      %1934 = vmatpush1.bf16.msra.mxu0 0
      %1935 = vmatprep.subr.bf16.mxu0 0
      %1936 = vmatpush1.bf16.msra.mxu0 0
      %1937 = vmatprep.subr.bf16.mxu0 0
      %1938 = vmatpush1.bf16.msra.mxu0 0
      %1939 = vmatprep.subr.bf16.mxu0 0
      %1940 = vmatpush1.bf16.msra.mxu0 0
      %1941 = vmatprep.subr.bf16.mxu0 0
      %1942 = vmatpush1.bf16.msra.mxu0 0
      %1943 = vmatprep.mubr.bf16.mxu0 0
      %1944 = vmatmul.mubr.bf16.gmra.mrb[0].mxu0 %v1909
      %v1945 = vpop.f32.mrb[0].mxu0
      %v1946 = vadd.f32 0.0, %v1945
      %v1947 = vpop.f32.mrb[0].mxu0
      %v1948 = vpop.f32.mrb[0].mxu0
      %v1949 = vadd.f32 0.0, %v1948
      %v1950 = vpop.f32.mrb[0].mxu0
      %1951 = vdwg.mxu0
      %1952 = vrot.lane.b32.xlu0 %v1146, 64
      %v1953 = vpop.permute.xlu0 %1952
      %v1956 = vsel %vm1603, %v1805, 0
      %1958 = vmatprep.subr.bf16.mxu0 0
      %1959 = vmatpush1.bf16.msra.mxu0 %v1953
      %1960 = vmatprep.subr.bf16.mxu0 0
      %1961 = vmatpush1.bf16.msra.mxu0 0
      %1962 = vmatprep.subr.bf16.mxu0 0
      %1963 = vmatpush1.bf16.msra.mxu0 0
      %1964 = vmatprep.subr.bf16.mxu0 0
      %1965 = vmatpush1.bf16.msra.mxu0 0
      %1966 = vmatprep.subr.bf16.mxu0 0
      %1967 = vmatpush1.bf16.msra.mxu0 0
      %1968 = vmatprep.subr.bf16.mxu0 0
      %1969 = vmatpush1.bf16.msra.mxu0 0
      %1970 = vmatprep.subr.bf16.mxu0 0
      %1971 = vmatpush1.bf16.msra.mxu0 0
      %1972 = vmatprep.subr.bf16.mxu0 0
      %1973 = vmatpush1.bf16.msra.mxu0 0
      %1974 = vmatprep.subr.bf16.mxu0 0
      %1975 = vmatpush1.bf16.msra.mxu0 0
      %1976 = vmatprep.subr.bf16.mxu0 0
      %1977 = vmatpush1.bf16.msra.mxu0 0
      %1978 = vmatprep.subr.bf16.mxu0 0
      %1979 = vmatpush1.bf16.msra.mxu0 0
      %1980 = vmatprep.subr.bf16.mxu0 0
      %1981 = vmatpush1.bf16.msra.mxu0 0
      %1982 = vmatprep.subr.bf16.mxu0 0
      %1983 = vmatpush1.bf16.msra.mxu0 0
      %1984 = vmatprep.subr.bf16.mxu0 0
      %1985 = vmatpush1.bf16.msra.mxu0 0
      %1986 = vmatprep.subr.bf16.mxu0 0
      %1987 = vmatpush1.bf16.msra.mxu0 0
      %1988 = vmatprep.subr.bf16.mxu0 0
      %1989 = vmatpush1.bf16.msra.mxu0 0
      %1990 = vmatprep.mubr.bf16.mxu0 0
      %1991 = vmatmul.mubr.bf16.gmra.mrb[0].mxu0 %v1956
      %v1992 = vpop.f32.mrb[0].mxu0
      %v1993 = vadd.f32 0.0, %v1992
      %v1994 = vpop.f32.mrb[0].mxu0
      %v1995 = vpop.f32.mrb[0].mxu0
      %v1996 = vadd.f32 0.0, %v1995
      %v1997 = vpop.f32.mrb[0].mxu0
      %1998 = vdwg.mxu0
      %1999 = vrot.lane.b32.xlu0 %v1147, 64
      %v2000 = vpop.permute.xlu0 %1999
      %v2003 = vsel %vm1603, %v1806, 0
      %2005 = vmatprep.subr.bf16.mxu0 0
      %2006 = vmatpush1.bf16.msra.mxu0 %v2000
      %2007 = vmatprep.subr.bf16.mxu0 0
      %2008 = vmatpush1.bf16.msra.mxu0 0
      %2009 = vmatprep.subr.bf16.mxu0 0
      %2010 = vmatpush1.bf16.msra.mxu0 0
      %2011 = vmatprep.subr.bf16.mxu0 0
      %2012 = vmatpush1.bf16.msra.mxu0 0
      %2013 = vmatprep.subr.bf16.mxu0 0
      %2014 = vmatpush1.bf16.msra.mxu0 0
      %2015 = vmatprep.subr.bf16.mxu0 0
      %2016 = vmatpush1.bf16.msra.mxu0 0
      %2017 = vmatprep.subr.bf16.mxu0 0
      %2018 = vmatpush1.bf16.msra.mxu0 0
      %2019 = vmatprep.subr.bf16.mxu0 0
      %2020 = vmatpush1.bf16.msra.mxu0 0
      %2021 = vmatprep.subr.bf16.mxu0 0
      %2022 = vmatpush1.bf16.msra.mxu0 0
      %2023 = vmatprep.subr.bf16.mxu0 0
      %2024 = vmatpush1.bf16.msra.mxu0 0
      %2025 = vmatprep.subr.bf16.mxu0 0
      %2026 = vmatpush1.bf16.msra.mxu0 0
      %2027 = vmatprep.subr.bf16.mxu0 0
      %2028 = vmatpush1.bf16.msra.mxu0 0
      %2029 = vmatprep.subr.bf16.mxu0 0
      %2030 = vmatpush1.bf16.msra.mxu0 0
      %2031 = vmatprep.subr.bf16.mxu0 0
      %2032 = vmatpush1.bf16.msra.mxu0 0
      %2033 = vmatprep.subr.bf16.mxu0 0
      %2034 = vmatpush1.bf16.msra.mxu0 0
      %2035 = vmatprep.subr.bf16.mxu0 0
      %2036 = vmatpush1.bf16.msra.mxu0 0
      %2037 = vmatprep.mubr.bf16.mxu0 0
      %2038 = vmatmul.mubr.bf16.gmra.mrb[0].mxu0 %v2003
      %v2039 = vpop.f32.mrb[0].mxu0
      %v2040 = vadd.f32 0.0, %v2039
      %v2041 = vpop.f32.mrb[0].mxu0
      %v2042 = vpop.f32.mrb[0].mxu0
      %v2043 = vadd.f32 0.0, %v2042
      %v2044 = vpop.f32.mrb[0].mxu0
      %2045 = vdwg.mxu0
      %2046 = vrot.lane.b32.xlu0 %v1148, 64
      %v2047 = vpop.permute.xlu0 %2046
      %v2050 = vsel %vm1603, %v1807, 0
      %2052 = vmatprep.subr.bf16.mxu0 0
      %2053 = vmatpush1.bf16.msra.mxu0 %v2047
      %2054 = vmatprep.subr.bf16.mxu0 0
      %2055 = vmatpush1.bf16.msra.mxu0 0
      %2056 = vmatprep.subr.bf16.mxu0 0
      %2057 = vmatpush1.bf16.msra.mxu0 0
      %2058 = vmatprep.subr.bf16.mxu0 0
      %2059 = vmatpush1.bf16.msra.mxu0 0
      %2060 = vmatprep.subr.bf16.mxu0 0
      %2061 = vmatpush1.bf16.msra.mxu0 0
      %2062 = vmatprep.subr.bf16.mxu0 0
      %2063 = vmatpush1.bf16.msra.mxu0 0
      %2064 = vmatprep.subr.bf16.mxu0 0
      %2065 = vmatpush1.bf16.msra.mxu0 0
      %2066 = vmatprep.subr.bf16.mxu0 0
      %2067 = vmatpush1.bf16.msra.mxu0 0
      %2068 = vmatprep.subr.bf16.mxu0 0
      %2069 = vmatpush1.bf16.msra.mxu0 0
      %2070 = vmatprep.subr.bf16.mxu0 0
      %2071 = vmatpush1.bf16.msra.mxu0 0
      %2072 = vmatprep.subr.bf16.mxu0 0
      %2073 = vmatpush1.bf16.msra.mxu0 0
      %2074 = vmatprep.subr.bf16.mxu0 0
      %2075 = vmatpush1.bf16.msra.mxu0 0
      %2076 = vmatprep.subr.bf16.mxu0 0
      %2077 = vmatpush1.bf16.msra.mxu0 0
      %2078 = vmatprep.subr.bf16.mxu0 0
      %2079 = vmatpush1.bf16.msra.mxu0 0
      %2080 = vmatprep.subr.bf16.mxu0 0
      %2081 = vmatpush1.bf16.msra.mxu0 0
      %2082 = vmatprep.subr.bf16.mxu0 0
      %2083 = vmatpush1.bf16.msra.mxu0 0
      %2084 = vmatprep.mubr.bf16.mxu0 0
      %2085 = vmatmul.mubr.bf16.gmra.mrb[0].mxu0 %v2050
      %v2086 = vpop.f32.mrb[0].mxu0
      %v2087 = vadd.f32 0.0, %v2086
      %v2088 = vpop.f32.mrb[0].mxu0
      %v2089 = vpop.f32.mrb[0].mxu0
      %v2090 = vadd.f32 0.0, %v2089
      %v2091 = vpop.f32.mrb[0].mxu0
      %2092 = vdwg.mxu0
      %2093 = vrot.lane.b32.xlu0 %v1149, 64
      %v2094 = vpop.permute.xlu0 %2093
      %v2097 = vsel %vm1603, %v1808, 0
      %2099 = vmatprep.subr.bf16.mxu0 0
      %2100 = vmatpush1.bf16.msra.mxu0 %v2094
      %2101 = vmatprep.subr.bf16.mxu0 0
      %2102 = vmatpush1.bf16.msra.mxu0 0
      %2103 = vmatprep.subr.bf16.mxu0 0
      %2104 = vmatpush1.bf16.msra.mxu0 0
      %2105 = vmatprep.subr.bf16.mxu0 0
      %2106 = vmatpush1.bf16.msra.mxu0 0
      %2107 = vmatprep.subr.bf16.mxu0 0
      %2108 = vmatpush1.bf16.msra.mxu0 0
      %2109 = vmatprep.subr.bf16.mxu0 0
      %2110 = vmatpush1.bf16.msra.mxu0 0
      %2111 = vmatprep.subr.bf16.mxu0 0
      %2112 = vmatpush1.bf16.msra.mxu0 0
      %2113 = vmatprep.subr.bf16.mxu0 0
      %2114 = vmatpush1.bf16.msra.mxu0 0
      %2115 = vmatprep.subr.bf16.mxu0 0
      %2116 = vmatpush1.bf16.msra.mxu0 0
      %2117 = vmatprep.subr.bf16.mxu0 0
      %2118 = vmatpush1.bf16.msra.mxu0 0
      %2119 = vmatprep.subr.bf16.mxu0 0
      %2120 = vmatpush1.bf16.msra.mxu0 0
      %2121 = vmatprep.subr.bf16.mxu0 0
      %2122 = vmatpush1.bf16.msra.mxu0 0
      %2123 = vmatprep.subr.bf16.mxu0 0
      %2124 = vmatpush1.bf16.msra.mxu0 0
      %2125 = vmatprep.subr.bf16.mxu0 0
      %2126 = vmatpush1.bf16.msra.mxu0 0
      %2127 = vmatprep.subr.bf16.mxu0 0
      %2128 = vmatpush1.bf16.msra.mxu0 0
      %2129 = vmatprep.subr.bf16.mxu0 0
      %2130 = vmatpush1.bf16.msra.mxu0 0
      %2131 = vmatprep.mubr.bf16.mxu0 0
      %2132 = vmatmul.mubr.bf16.gmra.mrb[0].mxu0 %v2097
      %v2133 = vpop.f32.mrb[0].mxu0
      %v2134 = vadd.f32 0.0, %v2133
      %v2135 = vpop.f32.mrb[0].mxu0
      %v2136 = vpop.f32.mrb[0].mxu0
      %v2137 = vadd.f32 0.0, %v2136
      %v2138 = vpop.f32.mrb[0].mxu0
      %2139 = vdwg.mxu0
      %2140 = vrot.lane.b32.xlu0 %v1150, 64
      %v2141 = vpop.permute.xlu0 %2140
      %v2144 = vsel %vm1603, %v1809, 0
      %2146 = vmatprep.subr.bf16.mxu0 0
      %2147 = vmatpush1.bf16.msra.mxu0 %v2141
      %2148 = vmatprep.subr.bf16.mxu0 0
      %2149 = vmatpush1.bf16.msra.mxu0 0
      %2150 = vmatprep.subr.bf16.mxu0 0
      %2151 = vmatpush1.bf16.msra.mxu0 0
      %2152 = vmatprep.subr.bf16.mxu0 0
      %2153 = vmatpush1.bf16.msra.mxu0 0
      %2154 = vmatprep.subr.bf16.mxu0 0
      %2155 = vmatpush1.bf16.msra.mxu0 0
      %2156 = vmatprep.subr.bf16.mxu0 0
      %2157 = vmatpush1.bf16.msra.mxu0 0
      %2158 = vmatprep.subr.bf16.mxu0 0
      %2159 = vmatpush1.bf16.msra.mxu0 0
      %2160 = vmatprep.subr.bf16.mxu0 0
      %2161 = vmatpush1.bf16.msra.mxu0 0
      %2162 = vmatprep.subr.bf16.mxu0 0
      %2163 = vmatpush1.bf16.msra.mxu0 0
      %2164 = vmatprep.subr.bf16.mxu0 0
      %2165 = vmatpush1.bf16.msra.mxu0 0
      %2166 = vmatprep.subr.bf16.mxu0 0
      %2167 = vmatpush1.bf16.msra.mxu0 0
      %2168 = vmatprep.subr.bf16.mxu0 0
      %2169 = vmatpush1.bf16.msra.mxu0 0
      %2170 = vmatprep.subr.bf16.mxu0 0
      %2171 = vmatpush1.bf16.msra.mxu0 0
      %2172 = vmatprep.subr.bf16.mxu0 0
      %2173 = vmatpush1.bf16.msra.mxu0 0
      %2174 = vmatprep.subr.bf16.mxu0 0
      %2175 = vmatpush1.bf16.msra.mxu0 0
      %2176 = vmatprep.subr.bf16.mxu0 0
      %2177 = vmatpush1.bf16.msra.mxu0 0
      %2178 = vmatprep.mubr.bf16.mxu0 0
      %2179 = vmatmul.mubr.bf16.gmra.mrb[0].mxu0 %v2144
      %v2180 = vpop.f32.mrb[0].mxu0
      %v2181 = vadd.f32 0.0, %v2180
      %v2182 = vpop.f32.mrb[0].mxu0
      %v2183 = vpop.f32.mrb[0].mxu0
      %v2184 = vadd.f32 0.0, %v2183
      %v2185 = vpop.f32.mrb[0].mxu0
      %2186 = vdwg.mxu0
      %2187 = vrot.lane.b32.xlu0 %v1151, 64
      %v2188 = vpop.permute.xlu0 %2187
      %v2191 = vsel %vm1603, %v1810, 0
      %2193 = vmatprep.subr.bf16.mxu0 0
      %2194 = vmatpush1.bf16.msra.mxu0 %v2188
      %2195 = vmatprep.subr.bf16.mxu0 0
      %2196 = vmatpush1.bf16.msra.mxu0 0
      %2197 = vmatprep.subr.bf16.mxu0 0
      %2198 = vmatpush1.bf16.msra.mxu0 0
      %2199 = vmatprep.subr.bf16.mxu0 0
      %2200 = vmatpush1.bf16.msra.mxu0 0
      %2201 = vmatprep.subr.bf16.mxu0 0
      %2202 = vmatpush1.bf16.msra.mxu0 0
      %2203 = vmatprep.subr.bf16.mxu0 0
      %2204 = vmatpush1.bf16.msra.mxu0 0
      %2205 = vmatprep.subr.bf16.mxu0 0
      %2206 = vmatpush1.bf16.msra.mxu0 0
      %2207 = vmatprep.subr.bf16.mxu0 0
      %2208 = vmatpush1.bf16.msra.mxu0 0
      %2209 = vmatprep.subr.bf16.mxu0 0
      %2210 = vmatpush1.bf16.msra.mxu0 0
      %2211 = vmatprep.subr.bf16.mxu0 0
      %2212 = vmatpush1.bf16.msra.mxu0 0
      %2213 = vmatprep.subr.bf16.mxu0 0
      %2214 = vmatpush1.bf16.msra.mxu0 0
      %2215 = vmatprep.subr.bf16.mxu0 0
      %2216 = vmatpush1.bf16.msra.mxu0 0
      %2217 = vmatprep.subr.bf16.mxu0 0
      %2218 = vmatpush1.bf16.msra.mxu0 0
      %2219 = vmatprep.subr.bf16.mxu0 0
      %2220 = vmatpush1.bf16.msra.mxu0 0
      %2221 = vmatprep.subr.bf16.mxu0 0
      %2222 = vmatpush1.bf16.msra.mxu0 0
      %2223 = vmatprep.subr.bf16.mxu0 0
      %2224 = vmatpush1.bf16.msra.mxu0 0
      %2225 = vmatprep.mubr.bf16.mxu0 0
      %2226 = vmatmul.mubr.bf16.gmra.mrb[0].mxu0 %v2191
      %v2227 = vpop.f32.mrb[0].mxu0
      %v2228 = vadd.f32 0.0, %v2227
      %v2229 = vpop.f32.mrb[0].mxu0
      %v2230 = vpop.f32.mrb[0].mxu0
      %v2231 = vadd.f32 0.0, %v2230
      %v2232 = vpop.f32.mrb[0].mxu0
      %2233 = vdwg.mxu0
      %2234 = vst.msk [vmem:[#allocation2] sm:$0xff] %vm1155, %v1852
      %2235 = vst.msk [vmem:[#allocation2 + $0x8] sm:$0xff] %vm1155, %v1855
      %2236 = vst.msk [vmem:[#allocation2 + $0x10] sm:$0xff] %vm1155, %v1899
      %2237 = vst.msk [vmem:[#allocation2 + $0x18] sm:$0xff] %vm1155, %v1902
      %2238 = vst.msk [vmem:[#allocation2 + $0x20] sm:$0xff] %vm1155, %v1946
      %2239 = vst.msk [vmem:[#allocation2 + $0x28] sm:$0xff] %vm1155, %v1949
      %2240 = vst.msk [vmem:[#allocation2 + $0x30] sm:$0xff] %vm1155, %v1993
      %2241 = vst.msk [vmem:[#allocation2 + $0x38] sm:$0xff] %vm1155, %v1996
      %2242 = vst.msk [vmem:[#allocation2 + $0x40] sm:$0xff] %vm1155, %v2040
      %2243 = vst.msk [vmem:[#allocation2 + $0x48] sm:$0xff] %vm1155, %v2043
      %2244 = vst.msk [vmem:[#allocation2 + $0x50] sm:$0xff] %vm1155, %v2087
      %2245 = vst.msk [vmem:[#allocation2 + $0x58] sm:$0xff] %vm1155, %v2090
      %2246 = vst.msk [vmem:[#allocation2 + $0x60] sm:$0xff] %vm1155, %v2134
      %2247 = vst.msk [vmem:[#allocation2 + $0x68] sm:$0xff] %vm1155, %v2137
      %2248 = vst.msk [vmem:[#allocation2 + $0x70] sm:$0xff] %vm1155, %v2181
      %2249 = vst.msk [vmem:[#allocation2 + $0x78] sm:$0xff] %vm1155, %v2184
      %2250 = vst.msk [vmem:[#allocation2 + $0x80] sm:$0xff] %vm1155, %v2228
      %2251 = vst.msk [vmem:[#allocation2 + $0x88] sm:$0xff] %vm1155, %v2231
      %2252 = vrot.lane.b32.xlu0 %v1143, 120
      %v2253 = vpop.permute.xlu0 %2252
      %2254 = vrot.lane.b32.xlu0 %v1143, 88
      %v2255 = vpop.permute.xlu0 %2254
      %v2257 = vsel %vm1155, %v2253, 0
      %v2260 = vsel %vm1155, %v2255, 0
      %2262 = vmatprep.subr.bf16.mxu0 0
      %2263 = vmatpush1.bf16.xpose.msra.mxu0 %v2260
      %2264 = vmatprep.subr.bf16.mxu0 0
      %2265 = vmatpush1.bf16.xpose.msra.mxu0 0
      %2266 = vmatprep.subr.bf16.mxu0 0
      %2267 = vmatpush1.bf16.xpose.msra.mxu0 0
      %2268 = vmatprep.subr.bf16.mxu0 0
      %2269 = vmatpush1.bf16.xpose.msra.mxu0 0
      %2270 = vmatprep.subr.bf16.mxu0 0
      %2271 = vmatpush1.bf16.xpose.msra.mxu0 0
      %2272 = vmatprep.subr.bf16.mxu0 0
      %2273 = vmatpush1.bf16.xpose.msra.mxu0 0
      %2274 = vmatprep.subr.bf16.mxu0 0
      %2275 = vmatpush1.bf16.xpose.msra.mxu0 0
      %2276 = vmatprep.subr.bf16.mxu0 0
      %2277 = vmatpush1.bf16.xpose.msra.mxu0 0
      %2278 = vmatprep.subr.bf16.mxu0 0
      %2279 = vmatpush1.bf16.xpose.msra.mxu0 0
      %2280 = vmatprep.subr.bf16.mxu0 0
      %2281 = vmatpush1.bf16.xpose.msra.mxu0 0
      %2282 = vmatprep.subr.bf16.mxu0 0
      %2283 = vmatpush1.bf16.xpose.msra.mxu0 0
      %2284 = vmatprep.subr.bf16.mxu0 0
      %2285 = vmatpush1.bf16.xpose.msra.mxu0 0
      %2286 = vmatprep.subr.bf16.mxu0 0
      %2287 = vmatpush1.bf16.xpose.msra.mxu0 0
      %2288 = vmatprep.subr.bf16.mxu0 0
      %2289 = vmatpush1.bf16.xpose.msra.mxu0 0
      %2290 = vmatprep.subr.bf16.mxu0 0
      %2291 = vmatpush1.bf16.xpose.msra.mxu0 0
      %2292 = vmatprep.subr.bf16.mxu0 0
      %2293 = vmatpush1.bf16.xpose.msra.mxu0 0
      %2294 = vmatprep.mubr.bf16.mxu0 0
      %2295 = vmatmul.mubr.bf16.gmra.mrb[0].mxu0 %v2257
      %v2296 = vpop.f32.mrb[0].mxu0
      %v2297 = vadd.f32 %v570, %v2296
      %v2298 = vpop.f32.mrb[0].mxu0
      %v2299 = vpop.f32.mrb[0].mxu0
      %v2300 = vadd.f32 %v571, %v2299
      %v2301 = vpop.f32.mrb[0].mxu0
      %2302 = vdwg.mxu0
      %2303 = vrot.lane.b32.xlu0 %v1144, 120
      %v2304 = vpop.permute.xlu0 %2303
      %2305 = vrot.lane.b32.xlu0 %v1144, 88
      %v2306 = vpop.permute.xlu0 %2305
      %v2308 = vsel %vm1155, %v2304, 0
      %v2311 = vsel %vm1155, %v2306, 0
      %2313 = vmatprep.subr.bf16.mxu0 0
      %2314 = vmatpush1.bf16.xpose.msra.mxu0 %v2311
      %2315 = vmatprep.subr.bf16.mxu0 0
      %2316 = vmatpush1.bf16.xpose.msra.mxu0 0
      %2317 = vmatprep.subr.bf16.mxu0 0
      %2318 = vmatpush1.bf16.xpose.msra.mxu0 0
      %2319 = vmatprep.subr.bf16.mxu0 0
      %2320 = vmatpush1.bf16.xpose.msra.mxu0 0
      %2321 = vmatprep.subr.bf16.mxu0 0
      %2322 = vmatpush1.bf16.xpose.msra.mxu0 0
      %2323 = vmatprep.subr.bf16.mxu0 0
      %2324 = vmatpush1.bf16.xpose.msra.mxu0 0
      %2325 = vmatprep.subr.bf16.mxu0 0
      %2326 = vmatpush1.bf16.xpose.msra.mxu0 0
      %2327 = vmatprep.subr.bf16.mxu0 0
      %2328 = vmatpush1.bf16.xpose.msra.mxu0 0
      %2329 = vmatprep.subr.bf16.mxu0 0
      %2330 = vmatpush1.bf16.xpose.msra.mxu0 0
      %2331 = vmatprep.subr.bf16.mxu0 0
      %2332 = vmatpush1.bf16.xpose.msra.mxu0 0
      %2333 = vmatprep.subr.bf16.mxu0 0
      %2334 = vmatpush1.bf16.xpose.msra.mxu0 0
      %2335 = vmatprep.subr.bf16.mxu0 0
      %2336 = vmatpush1.bf16.xpose.msra.mxu0 0
      %2337 = vmatprep.subr.bf16.mxu0 0
      %2338 = vmatpush1.bf16.xpose.msra.mxu0 0
      %2339 = vmatprep.subr.bf16.mxu0 0
      %2340 = vmatpush1.bf16.xpose.msra.mxu0 0
      %2341 = vmatprep.subr.bf16.mxu0 0
      %2342 = vmatpush1.bf16.xpose.msra.mxu0 0
      %2343 = vmatprep.subr.bf16.mxu0 0
      %2344 = vmatpush1.bf16.xpose.msra.mxu0 0
      %2345 = vmatprep.mubr.bf16.mxu0 0
      %2346 = vmatmul.mubr.bf16.gmra.mrb[0].mxu0 %v2308
      %v2347 = vpop.f32.mrb[0].mxu0
      %v2348 = vadd.f32 %v572, %v2347
      %v2349 = vpop.f32.mrb[0].mxu0
      %v2350 = vpop.f32.mrb[0].mxu0
      %v2351 = vadd.f32 %v573, %v2350
      %v2352 = vpop.f32.mrb[0].mxu0
      %2353 = vdwg.mxu0
      %2354 = vrot.lane.b32.xlu0 %v1145, 120
      %v2355 = vpop.permute.xlu0 %2354
      %2356 = vrot.lane.b32.xlu0 %v1145, 88
      %v2357 = vpop.permute.xlu0 %2356
      %v2359 = vsel %vm1155, %v2355, 0
      %v2362 = vsel %vm1155, %v2357, 0
      %2364 = vmatprep.subr.bf16.mxu0 0
      %2365 = vmatpush1.bf16.xpose.msra.mxu0 %v2362
      %2366 = vmatprep.subr.bf16.mxu0 0
      %2367 = vmatpush1.bf16.xpose.msra.mxu0 0
      %2368 = vmatprep.subr.bf16.mxu0 0
      %2369 = vmatpush1.bf16.xpose.msra.mxu0 0
      %2370 = vmatprep.subr.bf16.mxu0 0
      %2371 = vmatpush1.bf16.xpose.msra.mxu0 0
      %2372 = vmatprep.subr.bf16.mxu0 0
      %2373 = vmatpush1.bf16.xpose.msra.mxu0 0
      %2374 = vmatprep.subr.bf16.mxu0 0
      %2375 = vmatpush1.bf16.xpose.msra.mxu0 0
      %2376 = vmatprep.subr.bf16.mxu0 0
      %2377 = vmatpush1.bf16.xpose.msra.mxu0 0
      %2378 = vmatprep.subr.bf16.mxu0 0
      %2379 = vmatpush1.bf16.xpose.msra.mxu0 0
      %2380 = vmatprep.subr.bf16.mxu0 0
      %2381 = vmatpush1.bf16.xpose.msra.mxu0 0
      %2382 = vmatprep.subr.bf16.mxu0 0
      %2383 = vmatpush1.bf16.xpose.msra.mxu0 0
      %2384 = vmatprep.subr.bf16.mxu0 0
      %2385 = vmatpush1.bf16.xpose.msra.mxu0 0
      %2386 = vmatprep.subr.bf16.mxu0 0
      %2387 = vmatpush1.bf16.xpose.msra.mxu0 0
      %2388 = vmatprep.subr.bf16.mxu0 0
      %2389 = vmatpush1.bf16.xpose.msra.mxu0 0
      %2390 = vmatprep.subr.bf16.mxu0 0
      %2391 = vmatpush1.bf16.xpose.msra.mxu0 0
      %2392 = vmatprep.subr.bf16.mxu0 0
      %2393 = vmatpush1.bf16.xpose.msra.mxu0 0
      %2394 = vmatprep.subr.bf16.mxu0 0
      %2395 = vmatpush1.bf16.xpose.msra.mxu0 0
      %2396 = vmatprep.mubr.bf16.mxu0 0
      %2397 = vmatmul.mubr.bf16.gmra.mrb[0].mxu0 %v2359
      %v2398 = vpop.f32.mrb[0].mxu0
      %v2399 = vadd.f32 %v574, %v2398
      %v2400 = vpop.f32.mrb[0].mxu0
      %v2401 = vpop.f32.mrb[0].mxu0
      %v2402 = vadd.f32 %v575, %v2401
      %v2403 = vpop.f32.mrb[0].mxu0
      %2404 = vdwg.mxu0
      %2405 = vrot.lane.b32.xlu0 %v1146, 120
      %v2406 = vpop.permute.xlu0 %2405
      %2407 = vrot.lane.b32.xlu0 %v1146, 88
      %v2408 = vpop.permute.xlu0 %2407
      %v2410 = vsel %vm1155, %v2406, 0
      %v2413 = vsel %vm1155, %v2408, 0
      %2415 = vmatprep.subr.bf16.mxu0 0
      %2416 = vmatpush1.bf16.xpose.msra.mxu0 %v2413
      %2417 = vmatprep.subr.bf16.mxu0 0
      %2418 = vmatpush1.bf16.xpose.msra.mxu0 0
      %2419 = vmatprep.subr.bf16.mxu0 0
      %2420 = vmatpush1.bf16.xpose.msra.mxu0 0
      %2421 = vmatprep.subr.bf16.mxu0 0
      %2422 = vmatpush1.bf16.xpose.msra.mxu0 0
      %2423 = vmatprep.subr.bf16.mxu0 0
      %2424 = vmatpush1.bf16.xpose.msra.mxu0 0
      %2425 = vmatprep.subr.bf16.mxu0 0
      %2426 = vmatpush1.bf16.xpose.msra.mxu0 0
      %2427 = vmatprep.subr.bf16.mxu0 0
      %2428 = vmatpush1.bf16.xpose.msra.mxu0 0
      %2429 = vmatprep.subr.bf16.mxu0 0
      %2430 = vmatpush1.bf16.xpose.msra.mxu0 0
      %2431 = vmatprep.subr.bf16.mxu0 0
      %2432 = vmatpush1.bf16.xpose.msra.mxu0 0
      %2433 = vmatprep.subr.bf16.mxu0 0
      %2434 = vmatpush1.bf16.xpose.msra.mxu0 0
      %2435 = vmatprep.subr.bf16.mxu0 0
      %2436 = vmatpush1.bf16.xpose.msra.mxu0 0
      %2437 = vmatprep.subr.bf16.mxu0 0
      %2438 = vmatpush1.bf16.xpose.msra.mxu0 0
      %2439 = vmatprep.subr.bf16.mxu0 0
      %2440 = vmatpush1.bf16.xpose.msra.mxu0 0
      %2441 = vmatprep.subr.bf16.mxu0 0
      %2442 = vmatpush1.bf16.xpose.msra.mxu0 0
      %2443 = vmatprep.subr.bf16.mxu0 0
      %2444 = vmatpush1.bf16.xpose.msra.mxu0 0
      %2445 = vmatprep.subr.bf16.mxu0 0
      %2446 = vmatpush1.bf16.xpose.msra.mxu0 0
      %2447 = vmatprep.mubr.bf16.mxu0 0
      %2448 = vmatmul.mubr.bf16.gmra.mrb[0].mxu0 %v2410
      %v2449 = vpop.f32.mrb[0].mxu0
      %v2450 = vadd.f32 %v576, %v2449
      %v2451 = vpop.f32.mrb[0].mxu0
      %v2452 = vpop.f32.mrb[0].mxu0
      %v2453 = vadd.f32 %v577, %v2452
      %v2454 = vpop.f32.mrb[0].mxu0
      %2455 = vdwg.mxu0
      %2456 = vrot.lane.b32.xlu0 %v1147, 120
      %v2457 = vpop.permute.xlu0 %2456
      %2458 = vrot.lane.b32.xlu0 %v1147, 88
      %v2459 = vpop.permute.xlu0 %2458
      %v2461 = vsel %vm1155, %v2457, 0
      %v2464 = vsel %vm1155, %v2459, 0
      %2466 = vmatprep.subr.bf16.mxu0 0
      %2467 = vmatpush1.bf16.xpose.msra.mxu0 %v2464
      %2468 = vmatprep.subr.bf16.mxu0 0
      %2469 = vmatpush1.bf16.xpose.msra.mxu0 0
      %2470 = vmatprep.subr.bf16.mxu0 0
      %2471 = vmatpush1.bf16.xpose.msra.mxu0 0
      %2472 = vmatprep.subr.bf16.mxu0 0
      %2473 = vmatpush1.bf16.xpose.msra.mxu0 0
      %2474 = vmatprep.subr.bf16.mxu0 0
      %2475 = vmatpush1.bf16.xpose.msra.mxu0 0
      %2476 = vmatprep.subr.bf16.mxu0 0
      %2477 = vmatpush1.bf16.xpose.msra.mxu0 0
      %2478 = vmatprep.subr.bf16.mxu0 0
      %2479 = vmatpush1.bf16.xpose.msra.mxu0 0
      %2480 = vmatprep.subr.bf16.mxu0 0
      %2481 = vmatpush1.bf16.xpose.msra.mxu0 0
      %2482 = vmatprep.subr.bf16.mxu0 0
      %2483 = vmatpush1.bf16.xpose.msra.mxu0 0
      %2484 = vmatprep.subr.bf16.mxu0 0
      %2485 = vmatpush1.bf16.xpose.msra.mxu0 0
      %2486 = vmatprep.subr.bf16.mxu0 0
      %2487 = vmatpush1.bf16.xpose.msra.mxu0 0
      %2488 = vmatprep.subr.bf16.mxu0 0
      %2489 = vmatpush1.bf16.xpose.msra.mxu0 0
      %2490 = vmatprep.subr.bf16.mxu0 0
      %2491 = vmatpush1.bf16.xpose.msra.mxu0 0
      %2492 = vmatprep.subr.bf16.mxu0 0
      %2493 = vmatpush1.bf16.xpose.msra.mxu0 0
      %2494 = vmatprep.subr.bf16.mxu0 0
      %2495 = vmatpush1.bf16.xpose.msra.mxu0 0
      %2496 = vmatprep.subr.bf16.mxu0 0
      %2497 = vmatpush1.bf16.xpose.msra.mxu0 0
      %2498 = vmatprep.mubr.bf16.mxu0 0
      %2499 = vmatmul.mubr.bf16.gmra.mrb[0].mxu0 %v2461
      %v2500 = vpop.f32.mrb[0].mxu0
      %v2501 = vadd.f32 %v578, %v2500
      %v2502 = vpop.f32.mrb[0].mxu0
      %v2503 = vpop.f32.mrb[0].mxu0
      %v2504 = vadd.f32 %v579, %v2503
      %v2505 = vpop.f32.mrb[0].mxu0
      %2506 = vdwg.mxu0
      %2507 = vrot.lane.b32.xlu0 %v1148, 120
      %v2508 = vpop.permute.xlu0 %2507
      %2509 = vrot.lane.b32.xlu0 %v1148, 88
      %v2510 = vpop.permute.xlu0 %2509
      %v2512 = vsel %vm1155, %v2508, 0
      %v2515 = vsel %vm1155, %v2510, 0
      %2517 = vmatprep.subr.bf16.mxu0 0
      %2518 = vmatpush1.bf16.xpose.msra.mxu0 %v2515
      %2519 = vmatprep.subr.bf16.mxu0 0
      %2520 = vmatpush1.bf16.xpose.msra.mxu0 0
      %2521 = vmatprep.subr.bf16.mxu0 0
      %2522 = vmatpush1.bf16.xpose.msra.mxu0 0
      %2523 = vmatprep.subr.bf16.mxu0 0
      %2524 = vmatpush1.bf16.xpose.msra.mxu0 0
      %2525 = vmatprep.subr.bf16.mxu0 0
      %2526 = vmatpush1.bf16.xpose.msra.mxu0 0
      %2527 = vmatprep.subr.bf16.mxu0 0
      %2528 = vmatpush1.bf16.xpose.msra.mxu0 0
      %2529 = vmatprep.subr.bf16.mxu0 0
      %2530 = vmatpush1.bf16.xpose.msra.mxu0 0
      %2531 = vmatprep.subr.bf16.mxu0 0
      %2532 = vmatpush1.bf16.xpose.msra.mxu0 0
      %2533 = vmatprep.subr.bf16.mxu0 0
      %2534 = vmatpush1.bf16.xpose.msra.mxu0 0
      %2535 = vmatprep.subr.bf16.mxu0 0
      %2536 = vmatpush1.bf16.xpose.msra.mxu0 0
      %2537 = vmatprep.subr.bf16.mxu0 0
      %2538 = vmatpush1.bf16.xpose.msra.mxu0 0
      %2539 = vmatprep.subr.bf16.mxu0 0
      %2540 = vmatpush1.bf16.xpose.msra.mxu0 0
      %2541 = vmatprep.subr.bf16.mxu0 0
      %2542 = vmatpush1.bf16.xpose.msra.mxu0 0
      %2543 = vmatprep.subr.bf16.mxu0 0
      %2544 = vmatpush1.bf16.xpose.msra.mxu0 0
      %2545 = vmatprep.subr.bf16.mxu0 0
      %2546 = vmatpush1.bf16.xpose.msra.mxu0 0
      %2547 = vmatprep.subr.bf16.mxu0 0
      %2548 = vmatpush1.bf16.xpose.msra.mxu0 0
      %2549 = vmatprep.mubr.bf16.mxu0 0
      %2550 = vmatmul.mubr.bf16.gmra.mrb[0].mxu0 %v2512
      %v2551 = vpop.f32.mrb[0].mxu0
      %v2552 = vadd.f32 %v580, %v2551
      %v2553 = vpop.f32.mrb[0].mxu0
      %v2554 = vpop.f32.mrb[0].mxu0
      %v2555 = vadd.f32 %v581, %v2554
      %v2556 = vpop.f32.mrb[0].mxu0
      %2557 = vdwg.mxu0
      %2558 = vrot.lane.b32.xlu0 %v1149, 120
      %v2559 = vpop.permute.xlu0 %2558
      %2560 = vrot.lane.b32.xlu0 %v1149, 88
      %v2561 = vpop.permute.xlu0 %2560
      %v2563 = vsel %vm1155, %v2559, 0
      %v2566 = vsel %vm1155, %v2561, 0
      %2568 = vmatprep.subr.bf16.mxu0 0
      %2569 = vmatpush1.bf16.xpose.msra.mxu0 %v2566
      %2570 = vmatprep.subr.bf16.mxu0 0
      %2571 = vmatpush1.bf16.xpose.msra.mxu0 0
      %2572 = vmatprep.subr.bf16.mxu0 0
      %2573 = vmatpush1.bf16.xpose.msra.mxu0 0
      %2574 = vmatprep.subr.bf16.mxu0 0
      %2575 = vmatpush1.bf16.xpose.msra.mxu0 0
      %2576 = vmatprep.subr.bf16.mxu0 0
      %2577 = vmatpush1.bf16.xpose.msra.mxu0 0
      %2578 = vmatprep.subr.bf16.mxu0 0
      %2579 = vmatpush1.bf16.xpose.msra.mxu0 0
      %2580 = vmatprep.subr.bf16.mxu0 0
      %2581 = vmatpush1.bf16.xpose.msra.mxu0 0
      %2582 = vmatprep.subr.bf16.mxu0 0
      %2583 = vmatpush1.bf16.xpose.msra.mxu0 0
      %2584 = vmatprep.subr.bf16.mxu0 0
      %2585 = vmatpush1.bf16.xpose.msra.mxu0 0
      %2586 = vmatprep.subr.bf16.mxu0 0
      %2587 = vmatpush1.bf16.xpose.msra.mxu0 0
      %2588 = vmatprep.subr.bf16.mxu0 0
      %2589 = vmatpush1.bf16.xpose.msra.mxu0 0
      %2590 = vmatprep.subr.bf16.mxu0 0
      %2591 = vmatpush1.bf16.xpose.msra.mxu0 0
      %2592 = vmatprep.subr.bf16.mxu0 0
      %2593 = vmatpush1.bf16.xpose.msra.mxu0 0
      %2594 = vmatprep.subr.bf16.mxu0 0
      %2595 = vmatpush1.bf16.xpose.msra.mxu0 0
      %2596 = vmatprep.subr.bf16.mxu0 0
      %2597 = vmatpush1.bf16.xpose.msra.mxu0 0
      %2598 = vmatprep.subr.bf16.mxu0 0
      %2599 = vmatpush1.bf16.xpose.msra.mxu0 0
      %2600 = vmatprep.mubr.bf16.mxu0 0
      %2601 = vmatmul.mubr.bf16.gmra.mrb[0].mxu0 %v2563
      %v2602 = vpop.f32.mrb[0].mxu0
      %v2603 = vadd.f32 %v582, %v2602
      %v2604 = vpop.f32.mrb[0].mxu0
      %v2605 = vpop.f32.mrb[0].mxu0
      %v2606 = vadd.f32 %v583, %v2605
      %v2607 = vpop.f32.mrb[0].mxu0
      %2608 = vdwg.mxu0
      %2609 = vrot.lane.b32.xlu0 %v1150, 120
      %v2610 = vpop.permute.xlu0 %2609
      %2611 = vrot.lane.b32.xlu0 %v1150, 88
      %v2612 = vpop.permute.xlu0 %2611
      %v2614 = vsel %vm1155, %v2610, 0
      %v2617 = vsel %vm1155, %v2612, 0
      %2619 = vmatprep.subr.bf16.mxu0 0
      %2620 = vmatpush1.bf16.xpose.msra.mxu0 %v2617
      %2621 = vmatprep.subr.bf16.mxu0 0
      %2622 = vmatpush1.bf16.xpose.msra.mxu0 0
      %2623 = vmatprep.subr.bf16.mxu0 0
      %2624 = vmatpush1.bf16.xpose.msra.mxu0 0
      %2625 = vmatprep.subr.bf16.mxu0 0
      %2626 = vmatpush1.bf16.xpose.msra.mxu0 0
      %2627 = vmatprep.subr.bf16.mxu0 0
      %2628 = vmatpush1.bf16.xpose.msra.mxu0 0
      %2629 = vmatprep.subr.bf16.mxu0 0
      %2630 = vmatpush1.bf16.xpose.msra.mxu0 0
      %2631 = vmatprep.subr.bf16.mxu0 0
      %2632 = vmatpush1.bf16.xpose.msra.mxu0 0
      %2633 = vmatprep.subr.bf16.mxu0 0
      %2634 = vmatpush1.bf16.xpose.msra.mxu0 0
      %2635 = vmatprep.subr.bf16.mxu0 0
      %2636 = vmatpush1.bf16.xpose.msra.mxu0 0
      %2637 = vmatprep.subr.bf16.mxu0 0
      %2638 = vmatpush1.bf16.xpose.msra.mxu0 0
      %2639 = vmatprep.subr.bf16.mxu0 0
      %2640 = vmatpush1.bf16.xpose.msra.mxu0 0
      %2641 = vmatprep.subr.bf16.mxu0 0
      %2642 = vmatpush1.bf16.xpose.msra.mxu0 0
      %2643 = vmatprep.subr.bf16.mxu0 0
      %2644 = vmatpush1.bf16.xpose.msra.mxu0 0
      %2645 = vmatprep.subr.bf16.mxu0 0
      %2646 = vmatpush1.bf16.xpose.msra.mxu0 0
      %2647 = vmatprep.subr.bf16.mxu0 0
      %2648 = vmatpush1.bf16.xpose.msra.mxu0 0
      %2649 = vmatprep.subr.bf16.mxu0 0
      %2650 = vmatpush1.bf16.xpose.msra.mxu0 0
      %2651 = vmatprep.mubr.bf16.mxu0 0
      %2652 = vmatmul.mubr.bf16.gmra.mrb[0].mxu0 %v2614
      %v2653 = vpop.f32.mrb[0].mxu0
      %v2654 = vadd.f32 %v584, %v2653
      %v2655 = vpop.f32.mrb[0].mxu0
      %v2656 = vpop.f32.mrb[0].mxu0
      %v2657 = vadd.f32 %v585, %v2656
      %v2658 = vpop.f32.mrb[0].mxu0
      %2659 = vdwg.mxu0
      %2660 = vrot.lane.b32.xlu0 %v1151, 120
      %v2661 = vpop.permute.xlu0 %2660
      %2662 = vrot.lane.b32.xlu0 %v1151, 88
      %v2663 = vpop.permute.xlu0 %2662
      %v2665 = vsel %vm1155, %v2661, 0
      %v2668 = vsel %vm1155, %v2663, 0
      %2670 = vmatprep.subr.bf16.mxu0 0
      %2671 = vmatpush1.bf16.xpose.msra.mxu0 %v2668
      %2672 = vmatprep.subr.bf16.mxu0 0
      %2673 = vmatpush1.bf16.xpose.msra.mxu0 0
      %2674 = vmatprep.subr.bf16.mxu0 0
      %2675 = vmatpush1.bf16.xpose.msra.mxu0 0
      %2676 = vmatprep.subr.bf16.mxu0 0
      %2677 = vmatpush1.bf16.xpose.msra.mxu0 0
      %2678 = vmatprep.subr.bf16.mxu0 0
      %2679 = vmatpush1.bf16.xpose.msra.mxu0 0
      %2680 = vmatprep.subr.bf16.mxu0 0
      %2681 = vmatpush1.bf16.xpose.msra.mxu0 0
      %2682 = vmatprep.subr.bf16.mxu0 0
      %2683 = vmatpush1.bf16.xpose.msra.mxu0 0
      %2684 = vmatprep.subr.bf16.mxu0 0
      %2685 = vmatpush1.bf16.xpose.msra.mxu0 0
      %2686 = vmatprep.subr.bf16.mxu0 0
      %2687 = vmatpush1.bf16.xpose.msra.mxu0 0
      %2688 = vmatprep.subr.bf16.mxu0 0
      %2689 = vmatpush1.bf16.xpose.msra.mxu0 0
      %2690 = vmatprep.subr.bf16.mxu0 0
      %2691 = vmatpush1.bf16.xpose.msra.mxu0 0
      %2692 = vmatprep.subr.bf16.mxu0 0
      %2693 = vmatpush1.bf16.xpose.msra.mxu0 0
      %2694 = vmatprep.subr.bf16.mxu0 0
      %2695 = vmatpush1.bf16.xpose.msra.mxu0 0
      %2696 = vmatprep.subr.bf16.mxu0 0
      %2697 = vmatpush1.bf16.xpose.msra.mxu0 0
      %2698 = vmatprep.subr.bf16.mxu0 0
      %2699 = vmatpush1.bf16.xpose.msra.mxu0 0
      %2700 = vmatprep.subr.bf16.mxu0 0
      %2701 = vmatpush1.bf16.xpose.msra.mxu0 0
      %2702 = vmatprep.mubr.bf16.mxu0 0
      %2703 = vmatmul.mubr.bf16.gmra.mrb[0].mxu0 %v2665
      %v2704 = vpop.f32.mrb[0].mxu0
      %v2705 = vadd.f32 %v586, %v2704
      %v2706 = vpop.f32.mrb[0].mxu0
      %v2707 = vpop.f32.mrb[0].mxu0
      %v2708 = vadd.f32 %v587, %v2707
      %v2709 = vpop.f32.mrb[0].mxu0
      %2710 = vdwg.mxu0
      %v2711 = vsel %vm1603, %v2297, -inf
      %2712 = vmax.xlane.f32.xlu0 %v2711
      %v2713 = vpop.xlane.xlu0 %2712
      %v2714 = vsel %vm1603, %v2300, -inf
      %2715 = vmax.xlane.f32.xlu0 %v2714
      %v2716 = vpop.xlane.xlu0 %2715
      %v2717 = vsel %vm1603, %v2348, -inf
      %2718 = vmax.xlane.f32.xlu0 %v2717
      %v2719 = vpop.xlane.xlu0 %2718
      %v2720 = vsel %vm1603, %v2351, -inf
      %2721 = vmax.xlane.f32.xlu0 %v2720
      %v2722 = vpop.xlane.xlu0 %2721
      %v2723 = vsel %vm1603, %v2399, -inf
      %2724 = vmax.xlane.f32.xlu0 %v2723
      %v2725 = vpop.xlane.xlu0 %2724
      %v2726 = vsel %vm1603, %v2402, -inf
      %2727 = vmax.xlane.f32.xlu0 %v2726
      %v2728 = vpop.xlane.xlu0 %2727
      %v2729 = vsel %vm1603, %v2450, -inf
      %2730 = vmax.xlane.f32.xlu0 %v2729
      %v2731 = vpop.xlane.xlu0 %2730
      %v2732 = vsel %vm1603, %v2453, -inf
      %2733 = vmax.xlane.f32.xlu0 %v2732
      %v2734 = vpop.xlane.xlu0 %2733
      %v2735 = vsel %vm1603, %v2501, -inf
      %2736 = vmax.xlane.f32.xlu0 %v2735
      %v2737 = vpop.xlane.xlu0 %2736
      %v2738 = vsel %vm1603, %v2504, -inf
      %2739 = vmax.xlane.f32.xlu0 %v2738
      %v2740 = vpop.xlane.xlu0 %2739
      %v2741 = vsel %vm1603, %v2552, -inf
      %2742 = vmax.xlane.f32.xlu0 %v2741
      %v2743 = vpop.xlane.xlu0 %2742
      %v2744 = vsel %vm1603, %v2555, -inf
      %2745 = vmax.xlane.f32.xlu0 %v2744
      %v2746 = vpop.xlane.xlu0 %2745
      %v2747 = vsel %vm1603, %v2603, -inf
      %2748 = vmax.xlane.f32.xlu0 %v2747
      %v2749 = vpop.xlane.xlu0 %2748
      %v2750 = vsel %vm1603, %v2606, -inf
      %2751 = vmax.xlane.f32.xlu0 %v2750
      %v2752 = vpop.xlane.xlu0 %2751
      %v2753 = vsel %vm1603, %v2654, -inf
      %2754 = vmax.xlane.f32.xlu0 %v2753
      %v2755 = vpop.xlane.xlu0 %2754
      %v2756 = vsel %vm1603, %v2657, -inf
      %2757 = vmax.xlane.f32.xlu0 %v2756
      %v2758 = vpop.xlane.xlu0 %2757
      %v2759 = vsel %vm1603, %v2705, -inf
      %2760 = vmax.xlane.f32.xlu0 %v2759
      %v2761 = vpop.xlane.xlu0 %2760
      %v2762 = vsel %vm1603, %v2708, -inf
      %2763 = vmax.xlane.f32.xlu0 %v2762
      %v2764 = vpop.xlane.xlu0 %2763
      %v2765 = vsub.f32 %v2297, %v2713
      %v2766 = vsub.f32 %v2300, %v2716
      %v2767 = vsub.f32 %v2348, %v2719
      %v2768 = vsub.f32 %v2351, %v2722
      %v2769 = vsub.f32 %v2399, %v2725
      %v2770 = vsub.f32 %v2402, %v2728
      %v2771 = vsub.f32 %v2450, %v2731
      %v2772 = vsub.f32 %v2453, %v2734
      %v2773 = vsub.f32 %v2501, %v2737
      %v2774 = vsub.f32 %v2504, %v2740
      %v2775 = vsub.f32 %v2552, %v2743
      %v2776 = vsub.f32 %v2555, %v2746
      %v2777 = vsub.f32 %v2603, %v2749
      %v2778 = vsub.f32 %v2606, %v2752
      %v2779 = vsub.f32 %v2654, %v2755
      %v2780 = vsub.f32 %v2657, %v2758
      %v2781 = vsub.f32 %v2705, %v2761
      %v2782 = vsub.f32 %v2708, %v2764
      %v2783 = vmul.f32 %v2765, 1.442695
      %v2784 = vpow.pop %v2783
      %v2785 = vmul.f32 %v2766, 1.442695
      %v2786 = vpow.pop %v2785
      %v2787 = vmul.f32 %v2767, 1.442695
      %v2788 = vpow.pop %v2787
      %v2789 = vmul.f32 %v2768, 1.442695
      %v2790 = vpow.pop %v2789
      %v2791 = vmul.f32 %v2769, 1.442695
      %v2792 = vpow.pop %v2791
      %v2793 = vmul.f32 %v2770, 1.442695
      %v2794 = vpow.pop %v2793
      %v2795 = vmul.f32 %v2771, 1.442695
      %v2796 = vpow.pop %v2795
      %v2797 = vmul.f32 %v2772, 1.442695
      %v2798 = vpow.pop %v2797
      %v2799 = vmul.f32 %v2773, 1.442695
      %v2800 = vpow.pop %v2799
      %v2801 = vmul.f32 %v2774, 1.442695
      %v2802 = vpow.pop %v2801
      %v2803 = vmul.f32 %v2775, 1.442695
      %v2804 = vpow.pop %v2803
      %v2805 = vmul.f32 %v2776, 1.442695
      %v2806 = vpow.pop %v2805
      %v2807 = vmul.f32 %v2777, 1.442695
      %v2808 = vpow.pop %v2807
      %v2809 = vmul.f32 %v2778, 1.442695
      %v2810 = vpow.pop %v2809
      %v2811 = vmul.f32 %v2779, 1.442695
      %v2812 = vpow.pop %v2811
      %v2813 = vmul.f32 %v2780, 1.442695
      %v2814 = vpow.pop %v2813
      %v2815 = vmul.f32 %v2781, 1.442695
      %v2816 = vpow.pop %v2815
      %v2817 = vmul.f32 %v2782, 1.442695
      %v2818 = vpow.pop %v2817
      %v2819 = vsel %vm1603, %v2784, 0.0
      %2820 = vadd.xlane.f32.xlu0 %v2819
      %v2821 = vpop.xlane.xlu0 %2820
      %v2822 = vsel %vm1603, %v2786, 0.0
      %2823 = vadd.xlane.f32.xlu0 %v2822
      %v2824 = vpop.xlane.xlu0 %2823
      %v2825 = vsel %vm1603, %v2788, 0.0
      %2826 = vadd.xlane.f32.xlu0 %v2825
      %v2827 = vpop.xlane.xlu0 %2826
      %v2828 = vsel %vm1603, %v2790, 0.0
      %2829 = vadd.xlane.f32.xlu0 %v2828
      %v2830 = vpop.xlane.xlu0 %2829
      %v2831 = vsel %vm1603, %v2792, 0.0
      %2832 = vadd.xlane.f32.xlu0 %v2831
      %v2833 = vpop.xlane.xlu0 %2832
      %v2834 = vsel %vm1603, %v2794, 0.0
      %2835 = vadd.xlane.f32.xlu0 %v2834
      %v2836 = vpop.xlane.xlu0 %2835
      %v2837 = vsel %vm1603, %v2796, 0.0
      %2838 = vadd.xlane.f32.xlu0 %v2837
      %v2839 = vpop.xlane.xlu0 %2838
      %v2840 = vsel %vm1603, %v2798, 0.0
      %2841 = vadd.xlane.f32.xlu0 %v2840
      %v2842 = vpop.xlane.xlu0 %2841
      %v2843 = vsel %vm1603, %v2800, 0.0
      %2844 = vadd.xlane.f32.xlu0 %v2843
      %v2845 = vpop.xlane.xlu0 %2844
      %v2846 = vsel %vm1603, %v2802, 0.0
      %2847 = vadd.xlane.f32.xlu0 %v2846
      %v2848 = vpop.xlane.xlu0 %2847
      %v2849 = vsel %vm1603, %v2804, 0.0
      %2850 = vadd.xlane.f32.xlu0 %v2849
      %v2851 = vpop.xlane.xlu0 %2850
      %v2852 = vsel %vm1603, %v2806, 0.0
      %2853 = vadd.xlane.f32.xlu0 %v2852
      %v2854 = vpop.xlane.xlu0 %2853
      %v2855 = vsel %vm1603, %v2808, 0.0
      %2856 = vadd.xlane.f32.xlu0 %v2855
      %v2857 = vpop.xlane.xlu0 %2856
      %v2858 = vsel %vm1603, %v2810, 0.0
      %2859 = vadd.xlane.f32.xlu0 %v2858
      %v2860 = vpop.xlane.xlu0 %2859
      %v2861 = vsel %vm1603, %v2812, 0.0
      %2862 = vadd.xlane.f32.xlu0 %v2861
      %v2863 = vpop.xlane.xlu0 %2862
      %v2864 = vsel %vm1603, %v2814, 0.0
      %2865 = vadd.xlane.f32.xlu0 %v2864
      %v2866 = vpop.xlane.xlu0 %2865
      %v2867 = vsel %vm1603, %v2816, 0.0
      %2868 = vadd.xlane.f32.xlu0 %v2867
      %v2869 = vpop.xlane.xlu0 %2868
      %v2870 = vsel %vm1603, %v2818, 0.0
      %2871 = vadd.xlane.f32.xlu0 %v2870
      %v2872 = vpop.xlane.xlu0 %2871
      %v2873 = vrcp.pop %v2821
      %v2874 = vrcp.pop %v2824
      %v2875 = vrcp.pop %v2827
      %v2876 = vrcp.pop %v2830
      %v2877 = vrcp.pop %v2833
      %v2878 = vrcp.pop %v2836
      %v2879 = vrcp.pop %v2839
      %v2880 = vrcp.pop %v2842
      %v2881 = vrcp.pop %v2845
      %v2882 = vrcp.pop %v2848
      %v2883 = vrcp.pop %v2851
      %v2884 = vrcp.pop %v2854
      %v2885 = vrcp.pop %v2857
      %v2886 = vrcp.pop %v2860
      %v2887 = vrcp.pop %v2863
      %v2888 = vrcp.pop %v2866
      %v2889 = vrcp.pop %v2869
      %v2890 = vrcp.pop %v2872
      %v2891 = vmul.f32 %v2784, %v2873
      %v2892 = vmul.f32 %v2786, %v2874
      %v2893 = vmul.f32 %v2788, %v2875
      %v2894 = vmul.f32 %v2790, %v2876
      %v2895 = vmul.f32 %v2792, %v2877
      %v2896 = vmul.f32 %v2794, %v2878
      %v2897 = vmul.f32 %v2796, %v2879
      %v2898 = vmul.f32 %v2798, %v2880
      %v2899 = vmul.f32 %v2800, %v2881
      %v2900 = vmul.f32 %v2802, %v2882
      %v2901 = vmul.f32 %v2804, %v2883
      %v2902 = vmul.f32 %v2806, %v2884
      %v2903 = vmul.f32 %v2808, %v2885
      %v2904 = vmul.f32 %v2810, %v2886
      %v2905 = vmul.f32 %v2812, %v2887
      %v2906 = vmul.f32 %v2814, %v2888
      %v2907 = vmul.f32 %v2816, %v2889
      %v2908 = vmul.f32 %v2818, %v2890
      %v2909 = vpack.c.bf16 %v2892, %v2891
      %v2910 = vpack.c.bf16 %v2894, %v2893
      %v2911 = vpack.c.bf16 %v2896, %v2895
      %v2912 = vpack.c.bf16 %v2898, %v2897
      %v2913 = vpack.c.bf16 %v2900, %v2899
      %v2914 = vpack.c.bf16 %v2902, %v2901
      %v2915 = vpack.c.bf16 %v2904, %v2903
      %v2916 = vpack.c.bf16 %v2906, %v2905
      %v2917 = vpack.c.bf16 %v2908, %v2907
      %2918 = vrot.lane.b32.xlu0 %v1143, 56
      %v2919 = vpop.permute.xlu0 %2918
      %v2922 = vsel %vm1603, %v2909, 0
      %2924 = vmatprep.subr.bf16.mxu0 0
      %2925 = vmatpush1.bf16.msra.mxu0 %v2919
      %2926 = vmatprep.subr.bf16.mxu0 0
      %2927 = vmatpush1.bf16.msra.mxu0 0
      %2928 = vmatprep.subr.bf16.mxu0 0
      %2929 = vmatpush1.bf16.msra.mxu0 0
      %2930 = vmatprep.subr.bf16.mxu0 0
      %2931 = vmatpush1.bf16.msra.mxu0 0
      %2932 = vmatprep.subr.bf16.mxu0 0
      %2933 = vmatpush1.bf16.msra.mxu0 0
      %2934 = vmatprep.subr.bf16.mxu0 0
      %2935 = vmatpush1.bf16.msra.mxu0 0
      %2936 = vmatprep.subr.bf16.mxu0 0
      %2937 = vmatpush1.bf16.msra.mxu0 0
      %2938 = vmatprep.subr.bf16.mxu0 0
      %2939 = vmatpush1.bf16.msra.mxu0 0
      %2940 = vmatprep.subr.bf16.mxu0 0
      %2941 = vmatpush1.bf16.msra.mxu0 0
      %2942 = vmatprep.subr.bf16.mxu0 0
      %2943 = vmatpush1.bf16.msra.mxu0 0
      %2944 = vmatprep.subr.bf16.mxu0 0
      %2945 = vmatpush1.bf16.msra.mxu0 0
      %2946 = vmatprep.subr.bf16.mxu0 0
      %2947 = vmatpush1.bf16.msra.mxu0 0
      %2948 = vmatprep.subr.bf16.mxu0 0
      %2949 = vmatpush1.bf16.msra.mxu0 0
      %2950 = vmatprep.subr.bf16.mxu0 0
      %2951 = vmatpush1.bf16.msra.mxu0 0
      %2952 = vmatprep.subr.bf16.mxu0 0
      %2953 = vmatpush1.bf16.msra.mxu0 0
      %2954 = vmatprep.subr.bf16.mxu0 0
      %2955 = vmatpush1.bf16.msra.mxu0 0
      %2956 = vmatprep.mubr.bf16.mxu0 0
      %2957 = vmatmul.mubr.bf16.gmra.mrb[0].mxu0 %v2922
      %v2958 = vpop.f32.mrb[0].mxu0
      %v2959 = vadd.f32 0.0, %v2958
      %v2960 = vpop.f32.mrb[0].mxu0
      %v2961 = vpop.f32.mrb[0].mxu0
      %v2962 = vadd.f32 0.0, %v2961
      %v2963 = vpop.f32.mrb[0].mxu0
      %2964 = vdwg.mxu0
      %2965 = vrot.lane.b32.xlu0 %v1144, 56
      %v2966 = vpop.permute.xlu0 %2965
      %v2969 = vsel %vm1603, %v2910, 0
      %2971 = vmatprep.subr.bf16.mxu0 0
      %2972 = vmatpush1.bf16.msra.mxu0 %v2966
      %2973 = vmatprep.subr.bf16.mxu0 0
      %2974 = vmatpush1.bf16.msra.mxu0 0
      %2975 = vmatprep.subr.bf16.mxu0 0
      %2976 = vmatpush1.bf16.msra.mxu0 0
      %2977 = vmatprep.subr.bf16.mxu0 0
      %2978 = vmatpush1.bf16.msra.mxu0 0
      %2979 = vmatprep.subr.bf16.mxu0 0
      %2980 = vmatpush1.bf16.msra.mxu0 0
      %2981 = vmatprep.subr.bf16.mxu0 0
      %2982 = vmatpush1.bf16.msra.mxu0 0
      %2983 = vmatprep.subr.bf16.mxu0 0
      %2984 = vmatpush1.bf16.msra.mxu0 0
      %2985 = vmatprep.subr.bf16.mxu0 0
      %2986 = vmatpush1.bf16.msra.mxu0 0
      %2987 = vmatprep.subr.bf16.mxu0 0
      %2988 = vmatpush1.bf16.msra.mxu0 0
      %2989 = vmatprep.subr.bf16.mxu0 0
      %2990 = vmatpush1.bf16.msra.mxu0 0
      %2991 = vmatprep.subr.bf16.mxu0 0
      %2992 = vmatpush1.bf16.msra.mxu0 0
      %2993 = vmatprep.subr.bf16.mxu0 0
      %2994 = vmatpush1.bf16.msra.mxu0 0
      %2995 = vmatprep.subr.bf16.mxu0 0
      %2996 = vmatpush1.bf16.msra.mxu0 0
      %2997 = vmatprep.subr.bf16.mxu0 0
      %2998 = vmatpush1.bf16.msra.mxu0 0
      %2999 = vmatprep.subr.bf16.mxu0 0
      %3000 = vmatpush1.bf16.msra.mxu0 0
      %3001 = vmatprep.subr.bf16.mxu0 0
      %3002 = vmatpush1.bf16.msra.mxu0 0
      %3003 = vmatprep.mubr.bf16.mxu0 0
      %3004 = vmatmul.mubr.bf16.gmra.mrb[0].mxu0 %v2969
      %v3005 = vpop.f32.mrb[0].mxu0
      %v3006 = vadd.f32 0.0, %v3005
      %v3007 = vpop.f32.mrb[0].mxu0
      %v3008 = vpop.f32.mrb[0].mxu0
      %v3009 = vadd.f32 0.0, %v3008
      %v3010 = vpop.f32.mrb[0].mxu0
      %3011 = vdwg.mxu0
      %3012 = vrot.lane.b32.xlu0 %v1145, 56
      %v3013 = vpop.permute.xlu0 %3012
      %v3016 = vsel %vm1603, %v2911, 0
      %3018 = vmatprep.subr.bf16.mxu0 0
      %3019 = vmatpush1.bf16.msra.mxu0 %v3013
      %3020 = vmatprep.subr.bf16.mxu0 0
      %3021 = vmatpush1.bf16.msra.mxu0 0
      %3022 = vmatprep.subr.bf16.mxu0 0
      %3023 = vmatpush1.bf16.msra.mxu0 0
      %3024 = vmatprep.subr.bf16.mxu0 0
      %3025 = vmatpush1.bf16.msra.mxu0 0
      %3026 = vmatprep.subr.bf16.mxu0 0
      %3027 = vmatpush1.bf16.msra.mxu0 0
      %3028 = vmatprep.subr.bf16.mxu0 0
      %3029 = vmatpush1.bf16.msra.mxu0 0
      %3030 = vmatprep.subr.bf16.mxu0 0
      %3031 = vmatpush1.bf16.msra.mxu0 0
      %3032 = vmatprep.subr.bf16.mxu0 0
      %3033 = vmatpush1.bf16.msra.mxu0 0
      %3034 = vmatprep.subr.bf16.mxu0 0
      %3035 = vmatpush1.bf16.msra.mxu0 0
      %3036 = vmatprep.subr.bf16.mxu0 0
      %3037 = vmatpush1.bf16.msra.mxu0 0
      %3038 = vmatprep.subr.bf16.mxu0 0
      %3039 = vmatpush1.bf16.msra.mxu0 0
      %3040 = vmatprep.subr.bf16.mxu0 0
      %3041 = vmatpush1.bf16.msra.mxu0 0
      %3042 = vmatprep.subr.bf16.mxu0 0
      %3043 = vmatpush1.bf16.msra.mxu0 0
      %3044 = vmatprep.subr.bf16.mxu0 0
      %3045 = vmatpush1.bf16.msra.mxu0 0
      %3046 = vmatprep.subr.bf16.mxu0 0
      %3047 = vmatpush1.bf16.msra.mxu0 0
      %3048 = vmatprep.subr.bf16.mxu0 0
      %3049 = vmatpush1.bf16.msra.mxu0 0
      %3050 = vmatprep.mubr.bf16.mxu0 0
      %3051 = vmatmul.mubr.bf16.gmra.mrb[0].mxu0 %v3016
      %v3052 = vpop.f32.mrb[0].mxu0
      %v3053 = vadd.f32 0.0, %v3052
      %v3054 = vpop.f32.mrb[0].mxu0
      %v3055 = vpop.f32.mrb[0].mxu0
      %v3056 = vadd.f32 0.0, %v3055
      %v3057 = vpop.f32.mrb[0].mxu0
      %3058 = vdwg.mxu0
      %3059 = vrot.lane.b32.xlu0 %v1146, 56
      %v3060 = vpop.permute.xlu0 %3059
      %v3063 = vsel %vm1603, %v2912, 0
      %3065 = vmatprep.subr.bf16.mxu0 0
      %3066 = vmatpush1.bf16.msra.mxu0 %v3060
      %3067 = vmatprep.subr.bf16.mxu0 0
      %3068 = vmatpush1.bf16.msra.mxu0 0
      %3069 = vmatprep.subr.bf16.mxu0 0
      %3070 = vmatpush1.bf16.msra.mxu0 0
      %3071 = vmatprep.subr.bf16.mxu0 0
      %3072 = vmatpush1.bf16.msra.mxu0 0
      %3073 = vmatprep.subr.bf16.mxu0 0
      %3074 = vmatpush1.bf16.msra.mxu0 0
      %3075 = vmatprep.subr.bf16.mxu0 0
      %3076 = vmatpush1.bf16.msra.mxu0 0
      %3077 = vmatprep.subr.bf16.mxu0 0
      %3078 = vmatpush1.bf16.msra.mxu0 0
      %3079 = vmatprep.subr.bf16.mxu0 0
      %3080 = vmatpush1.bf16.msra.mxu0 0
      %3081 = vmatprep.subr.bf16.mxu0 0
      %3082 = vmatpush1.bf16.msra.mxu0 0
      %3083 = vmatprep.subr.bf16.mxu0 0
      %3084 = vmatpush1.bf16.msra.mxu0 0
      %3085 = vmatprep.subr.bf16.mxu0 0
      %3086 = vmatpush1.bf16.msra.mxu0 0
      %3087 = vmatprep.subr.bf16.mxu0 0
      %3088 = vmatpush1.bf16.msra.mxu0 0
      %3089 = vmatprep.subr.bf16.mxu0 0
      %3090 = vmatpush1.bf16.msra.mxu0 0
      %3091 = vmatprep.subr.bf16.mxu0 0
      %3092 = vmatpush1.bf16.msra.mxu0 0
      %3093 = vmatprep.subr.bf16.mxu0 0
      %3094 = vmatpush1.bf16.msra.mxu0 0
      %3095 = vmatprep.subr.bf16.mxu0 0
      %3096 = vmatpush1.bf16.msra.mxu0 0
      %3097 = vmatprep.mubr.bf16.mxu0 0
      %3098 = vmatmul.mubr.bf16.gmra.mrb[0].mxu0 %v3063
      %v3099 = vpop.f32.mrb[0].mxu0
      %v3100 = vadd.f32 0.0, %v3099
      %v3101 = vpop.f32.mrb[0].mxu0
      %v3102 = vpop.f32.mrb[0].mxu0
      %v3103 = vadd.f32 0.0, %v3102
      %v3104 = vpop.f32.mrb[0].mxu0
      %3105 = vdwg.mxu0
      %3106 = vrot.lane.b32.xlu0 %v1147, 56
      %v3107 = vpop.permute.xlu0 %3106
      %v3110 = vsel %vm1603, %v2913, 0
      %3112 = vmatprep.subr.bf16.mxu0 0
      %3113 = vmatpush1.bf16.msra.mxu0 %v3107
      %3114 = vmatprep.subr.bf16.mxu0 0
      %3115 = vmatpush1.bf16.msra.mxu0 0
      %3116 = vmatprep.subr.bf16.mxu0 0
      %3117 = vmatpush1.bf16.msra.mxu0 0
      %3118 = vmatprep.subr.bf16.mxu0 0
      %3119 = vmatpush1.bf16.msra.mxu0 0
      %3120 = vmatprep.subr.bf16.mxu0 0
      %3121 = vmatpush1.bf16.msra.mxu0 0
      %3122 = vmatprep.subr.bf16.mxu0 0
      %3123 = vmatpush1.bf16.msra.mxu0 0
      %3124 = vmatprep.subr.bf16.mxu0 0
      %3125 = vmatpush1.bf16.msra.mxu0 0
      %3126 = vmatprep.subr.bf16.mxu0 0
      %3127 = vmatpush1.bf16.msra.mxu0 0
      %3128 = vmatprep.subr.bf16.mxu0 0
      %3129 = vmatpush1.bf16.msra.mxu0 0
      %3130 = vmatprep.subr.bf16.mxu0 0
      %3131 = vmatpush1.bf16.msra.mxu0 0
      %3132 = vmatprep.subr.bf16.mxu0 0
      %3133 = vmatpush1.bf16.msra.mxu0 0
      %3134 = vmatprep.subr.bf16.mxu0 0
      %3135 = vmatpush1.bf16.msra.mxu0 0
      %3136 = vmatprep.subr.bf16.mxu0 0
      %3137 = vmatpush1.bf16.msra.mxu0 0
      %3138 = vmatprep.subr.bf16.mxu0 0
      %3139 = vmatpush1.bf16.msra.mxu0 0
      %3140 = vmatprep.subr.bf16.mxu0 0
      %3141 = vmatpush1.bf16.msra.mxu0 0
      %3142 = vmatprep.subr.bf16.mxu0 0
      %3143 = vmatpush1.bf16.msra.mxu0 0
      %3144 = vmatprep.mubr.bf16.mxu0 0
      %3145 = vmatmul.mubr.bf16.gmra.mrb[0].mxu0 %v3110
      %v3146 = vpop.f32.mrb[0].mxu0
      %v3147 = vadd.f32 0.0, %v3146
      %v3148 = vpop.f32.mrb[0].mxu0
      %v3149 = vpop.f32.mrb[0].mxu0
      %v3150 = vadd.f32 0.0, %v3149
      %v3151 = vpop.f32.mrb[0].mxu0
      %3152 = vdwg.mxu0
      %3153 = vrot.lane.b32.xlu0 %v1148, 56
      %v3154 = vpop.permute.xlu0 %3153
      %v3157 = vsel %vm1603, %v2914, 0
      %3159 = vmatprep.subr.bf16.mxu0 0
      %3160 = vmatpush1.bf16.msra.mxu0 %v3154
      %3161 = vmatprep.subr.bf16.mxu0 0
      %3162 = vmatpush1.bf16.msra.mxu0 0
      %3163 = vmatprep.subr.bf16.mxu0 0
      %3164 = vmatpush1.bf16.msra.mxu0 0
      %3165 = vmatprep.subr.bf16.mxu0 0
      %3166 = vmatpush1.bf16.msra.mxu0 0
      %3167 = vmatprep.subr.bf16.mxu0 0
      %3168 = vmatpush1.bf16.msra.mxu0 0
      %3169 = vmatprep.subr.bf16.mxu0 0
      %3170 = vmatpush1.bf16.msra.mxu0 0
      %3171 = vmatprep.subr.bf16.mxu0 0
      %3172 = vmatpush1.bf16.msra.mxu0 0
      %3173 = vmatprep.subr.bf16.mxu0 0
      %3174 = vmatpush1.bf16.msra.mxu0 0
      %3175 = vmatprep.subr.bf16.mxu0 0
      %3176 = vmatpush1.bf16.msra.mxu0 0
      %3177 = vmatprep.subr.bf16.mxu0 0
      %3178 = vmatpush1.bf16.msra.mxu0 0
      %3179 = vmatprep.subr.bf16.mxu0 0
      %3180 = vmatpush1.bf16.msra.mxu0 0
      %3181 = vmatprep.subr.bf16.mxu0 0
      %3182 = vmatpush1.bf16.msra.mxu0 0
      %3183 = vmatprep.subr.bf16.mxu0 0
      %3184 = vmatpush1.bf16.msra.mxu0 0
      %3185 = vmatprep.subr.bf16.mxu0 0
      %3186 = vmatpush1.bf16.msra.mxu0 0
      %3187 = vmatprep.subr.bf16.mxu0 0
      %3188 = vmatpush1.bf16.msra.mxu0 0
      %3189 = vmatprep.subr.bf16.mxu0 0
      %3190 = vmatpush1.bf16.msra.mxu0 0
      %3191 = vmatprep.mubr.bf16.mxu0 0
      %3192 = vmatmul.mubr.bf16.gmra.mrb[0].mxu0 %v3157
      %v3193 = vpop.f32.mrb[0].mxu0
      %v3194 = vadd.f32 0.0, %v3193
      %v3195 = vpop.f32.mrb[0].mxu0
      %v3196 = vpop.f32.mrb[0].mxu0
      %v3197 = vadd.f32 0.0, %v3196
      %v3198 = vpop.f32.mrb[0].mxu0
      %3199 = vdwg.mxu0
      %3200 = vrot.lane.b32.xlu0 %v1149, 56
      %v3201 = vpop.permute.xlu0 %3200
      %v3204 = vsel %vm1603, %v2915, 0
      %3206 = vmatprep.subr.bf16.mxu0 0
      %3207 = vmatpush1.bf16.msra.mxu0 %v3201
      %3208 = vmatprep.subr.bf16.mxu0 0
      %3209 = vmatpush1.bf16.msra.mxu0 0
      %3210 = vmatprep.subr.bf16.mxu0 0
      %3211 = vmatpush1.bf16.msra.mxu0 0
      %3212 = vmatprep.subr.bf16.mxu0 0
      %3213 = vmatpush1.bf16.msra.mxu0 0
      %3214 = vmatprep.subr.bf16.mxu0 0
      %3215 = vmatpush1.bf16.msra.mxu0 0
      %3216 = vmatprep.subr.bf16.mxu0 0
      %3217 = vmatpush1.bf16.msra.mxu0 0
      %3218 = vmatprep.subr.bf16.mxu0 0
      %3219 = vmatpush1.bf16.msra.mxu0 0
      %3220 = vmatprep.subr.bf16.mxu0 0
      %3221 = vmatpush1.bf16.msra.mxu0 0
      %3222 = vmatprep.subr.bf16.mxu0 0
      %3223 = vmatpush1.bf16.msra.mxu0 0
      %3224 = vmatprep.subr.bf16.mxu0 0
      %3225 = vmatpush1.bf16.msra.mxu0 0
      %3226 = vmatprep.subr.bf16.mxu0 0
      %3227 = vmatpush1.bf16.msra.mxu0 0
      %3228 = vmatprep.subr.bf16.mxu0 0
      %3229 = vmatpush1.bf16.msra.mxu0 0
      %3230 = vmatprep.subr.bf16.mxu0 0
      %3231 = vmatpush1.bf16.msra.mxu0 0
      %3232 = vmatprep.subr.bf16.mxu0 0
      %3233 = vmatpush1.bf16.msra.mxu0 0
      %3234 = vmatprep.subr.bf16.mxu0 0
      %3235 = vmatpush1.bf16.msra.mxu0 0
      %3236 = vmatprep.subr.bf16.mxu0 0
      %3237 = vmatpush1.bf16.msra.mxu0 0
      %3238 = vmatprep.mubr.bf16.mxu0 0
      %3239 = vmatmul.mubr.bf16.gmra.mrb[0].mxu0 %v3204
      %v3240 = vpop.f32.mrb[0].mxu0
      %v3241 = vadd.f32 0.0, %v3240
      %v3242 = vpop.f32.mrb[0].mxu0
      %v3243 = vpop.f32.mrb[0].mxu0
      %v3244 = vadd.f32 0.0, %v3243
      %v3245 = vpop.f32.mrb[0].mxu0
      %3246 = vdwg.mxu0
      %3247 = vrot.lane.b32.xlu0 %v1150, 56
      %v3248 = vpop.permute.xlu0 %3247
      %v3251 = vsel %vm1603, %v2916, 0
      %3253 = vmatprep.subr.bf16.mxu0 0
      %3254 = vmatpush1.bf16.msra.mxu0 %v3248
      %3255 = vmatprep.subr.bf16.mxu0 0
      %3256 = vmatpush1.bf16.msra.mxu0 0
      %3257 = vmatprep.subr.bf16.mxu0 0
      %3258 = vmatpush1.bf16.msra.mxu0 0
      %3259 = vmatprep.subr.bf16.mxu0 0
      %3260 = vmatpush1.bf16.msra.mxu0 0
      %3261 = vmatprep.subr.bf16.mxu0 0
      %3262 = vmatpush1.bf16.msra.mxu0 0
      %3263 = vmatprep.subr.bf16.mxu0 0
      %3264 = vmatpush1.bf16.msra.mxu0 0
      %3265 = vmatprep.subr.bf16.mxu0 0
      %3266 = vmatpush1.bf16.msra.mxu0 0
      %3267 = vmatprep.subr.bf16.mxu0 0
      %3268 = vmatpush1.bf16.msra.mxu0 0
      %3269 = vmatprep.subr.bf16.mxu0 0
      %3270 = vmatpush1.bf16.msra.mxu0 0
      %3271 = vmatprep.subr.bf16.mxu0 0
      %3272 = vmatpush1.bf16.msra.mxu0 0
      %3273 = vmatprep.subr.bf16.mxu0 0
      %3274 = vmatpush1.bf16.msra.mxu0 0
      %3275 = vmatprep.subr.bf16.mxu0 0
      %3276 = vmatpush1.bf16.msra.mxu0 0
      %3277 = vmatprep.subr.bf16.mxu0 0
      %3278 = vmatpush1.bf16.msra.mxu0 0
      %3279 = vmatprep.subr.bf16.mxu0 0
      %3280 = vmatpush1.bf16.msra.mxu0 0
      %3281 = vmatprep.subr.bf16.mxu0 0
      %3282 = vmatpush1.bf16.msra.mxu0 0
      %3283 = vmatprep.subr.bf16.mxu0 0
      %3284 = vmatpush1.bf16.msra.mxu0 0
      %3285 = vmatprep.mubr.bf16.mxu0 0
      %3286 = vmatmul.mubr.bf16.gmra.mrb[0].mxu0 %v3251
      %v3287 = vpop.f32.mrb[0].mxu0
      %v3288 = vadd.f32 0.0, %v3287
      %v3289 = vpop.f32.mrb[0].mxu0
      %v3290 = vpop.f32.mrb[0].mxu0
      %v3291 = vadd.f32 0.0, %v3290
      %v3292 = vpop.f32.mrb[0].mxu0
      %3293 = vdwg.mxu0
      %3294 = vrot.lane.b32.xlu0 %v1151, 56
      %v3295 = vpop.permute.xlu0 %3294
      %v3298 = vsel %vm1603, %v2917, 0
      %3300 = vmatprep.subr.bf16.mxu0 0
      %3301 = vmatpush1.bf16.msra.mxu0 %v3295
      %3302 = vmatprep.subr.bf16.mxu0 0
      %3303 = vmatpush1.bf16.msra.mxu0 0
      %3304 = vmatprep.subr.bf16.mxu0 0
      %3305 = vmatpush1.bf16.msra.mxu0 0
      %3306 = vmatprep.subr.bf16.mxu0 0
      %3307 = vmatpush1.bf16.msra.mxu0 0
      %3308 = vmatprep.subr.bf16.mxu0 0
      %3309 = vmatpush1.bf16.msra.mxu0 0
      %3310 = vmatprep.subr.bf16.mxu0 0
      %3311 = vmatpush1.bf16.msra.mxu0 0
      %3312 = vmatprep.subr.bf16.mxu0 0
      %3313 = vmatpush1.bf16.msra.mxu0 0
      %3314 = vmatprep.subr.bf16.mxu0 0
      %3315 = vmatpush1.bf16.msra.mxu0 0
      %3316 = vmatprep.subr.bf16.mxu0 0
      %3317 = vmatpush1.bf16.msra.mxu0 0
      %3318 = vmatprep.subr.bf16.mxu0 0
      %3319 = vmatpush1.bf16.msra.mxu0 0
      %3320 = vmatprep.subr.bf16.mxu0 0
      %3321 = vmatpush1.bf16.msra.mxu0 0
      %3322 = vmatprep.subr.bf16.mxu0 0
      %3323 = vmatpush1.bf16.msra.mxu0 0
      %3324 = vmatprep.subr.bf16.mxu0 0
      %3325 = vmatpush1.bf16.msra.mxu0 0
      %3326 = vmatprep.subr.bf16.mxu0 0
      %3327 = vmatpush1.bf16.msra.mxu0 0
      %3328 = vmatprep.subr.bf16.mxu0 0
      %3329 = vmatpush1.bf16.msra.mxu0 0
      %3330 = vmatprep.subr.bf16.mxu0 0
      %3331 = vmatpush1.bf16.msra.mxu0 0
      %3332 = vmatprep.mubr.bf16.mxu0 0
      %3333 = vmatmul.mubr.bf16.gmra.mrb[0].mxu0 %v3298
      %v3334 = vpop.f32.mrb[0].mxu0
      %v3335 = vadd.f32 0.0, %v3334
      %v3336 = vpop.f32.mrb[0].mxu0
      %v3337 = vpop.f32.mrb[0].mxu0
      %v3338 = vadd.f32 0.0, %v3337
      %v3339 = vpop.f32.mrb[0].mxu0
      %3340 = vdwg.mxu0
      %3359 = vrot.lane.b32.xlu0 %v2959, 8
      %v3360 = vpop.permute.xlu0 %3359
      %3361 = vrot.lane.b32.xlu0 %v2962, 8
      %v3362 = vpop.permute.xlu0 %3361
      %3363 = vrot.lane.b32.xlu0 %v3006, 8
      %v3364 = vpop.permute.xlu0 %3363
      %3365 = vrot.lane.b32.xlu0 %v3009, 8
      %v3366 = vpop.permute.xlu0 %3365
      %3367 = vrot.lane.b32.xlu0 %v3053, 8
      %v3368 = vpop.permute.xlu0 %3367
      %3369 = vrot.lane.b32.xlu0 %v3056, 8
      %v3370 = vpop.permute.xlu0 %3369
      %3371 = vrot.lane.b32.xlu0 %v3100, 8
      %v3372 = vpop.permute.xlu0 %3371
      %3373 = vrot.lane.b32.xlu0 %v3103, 8
      %v3374 = vpop.permute.xlu0 %3373
      %3375 = vrot.lane.b32.xlu0 %v3147, 8
      %v3376 = vpop.permute.xlu0 %3375
      %3377 = vrot.lane.b32.xlu0 %v3150, 8
      %v3378 = vpop.permute.xlu0 %3377
      %3379 = vrot.lane.b32.xlu0 %v3194, 8
      %v3380 = vpop.permute.xlu0 %3379
      %3381 = vrot.lane.b32.xlu0 %v3197, 8
      %v3382 = vpop.permute.xlu0 %3381
      %3383 = vrot.lane.b32.xlu0 %v3241, 8
      %v3384 = vpop.permute.xlu0 %3383
      %3385 = vrot.lane.b32.xlu0 %v3244, 8
      %v3386 = vpop.permute.xlu0 %3385
      %3387 = vrot.lane.b32.xlu0 %v3288, 8
      %v3388 = vpop.permute.xlu0 %3387
      %3389 = vrot.lane.b32.xlu0 %v3291, 8
      %v3390 = vpop.permute.xlu0 %3389
      %3391 = vrot.lane.b32.xlu0 %v3335, 8
      %v3392 = vpop.permute.xlu0 %3391
      %3393 = vrot.lane.b32.xlu0 %v3338, 8
      %v3394 = vpop.permute.xlu0 %3393
      %vm3413 = vcmask 130112
      %3414 = vst.msk [vmem:[#allocation2] sm:$0xff] %vm3413, %v3360
      %3415 = vst.msk [vmem:[#allocation2 + $0x8] sm:$0xff] %vm3413, %v3362
      %3416 = vst.msk [vmem:[#allocation2 + $0x10] sm:$0xff] %vm3413, %v3364
      %3417 = vst.msk [vmem:[#allocation2 + $0x18] sm:$0xff] %vm3413, %v3366
      %3418 = vst.msk [vmem:[#allocation2 + $0x20] sm:$0xff] %vm3413, %v3368
      %3419 = vst.msk [vmem:[#allocation2 + $0x28] sm:$0xff] %vm3413, %v3370
      %3420 = vst.msk [vmem:[#allocation2 + $0x30] sm:$0xff] %vm3413, %v3372
      %3421 = vst.msk [vmem:[#allocation2 + $0x38] sm:$0xff] %vm3413, %v3374
      %3422 = vst.msk [vmem:[#allocation2 + $0x40] sm:$0xff] %vm3413, %v3376
      %3423 = vst.msk [vmem:[#allocation2 + $0x48] sm:$0xff] %vm3413, %v3378
      %3424 = vst.msk [vmem:[#allocation2 + $0x50] sm:$0xff] %vm3413, %v3380
      %3425 = vst.msk [vmem:[#allocation2 + $0x58] sm:$0xff] %vm3413, %v3382
      %3426 = vst.msk [vmem:[#allocation2 + $0x60] sm:$0xff] %vm3413, %v3384
      %3427 = vst.msk [vmem:[#allocation2 + $0x68] sm:$0xff] %vm3413, %v3386
      %3428 = vst.msk [vmem:[#allocation2 + $0x70] sm:$0xff] %vm3413, %v3388
      %3429 = vst.msk [vmem:[#allocation2 + $0x78] sm:$0xff] %vm3413, %v3390
      %3430 = vst.msk [vmem:[#allocation2 + $0x80] sm:$0xff] %vm3413, %v3392
      %3431 = vst.msk [vmem:[#allocation2 + $0x88] sm:$0xff] %vm3413, %v3394
      %3432 = vrot.lane.b32.xlu0 %v1143, 112
      %v3433 = vpop.permute.xlu0 %3432
      %3434 = vrot.lane.b32.xlu0 %v1143, 80
      %v3435 = vpop.permute.xlu0 %3434
      %v3437 = vsel %vm1155, %v3433, 0
      %v3440 = vsel %vm1155, %v3435, 0
      %3442 = vmatprep.subr.bf16.mxu0 0
      %3443 = vmatpush1.bf16.xpose.msra.mxu0 %v3440
      %3444 = vmatprep.subr.bf16.mxu0 0
      %3445 = vmatpush1.bf16.xpose.msra.mxu0 0
      %3446 = vmatprep.subr.bf16.mxu0 0
      %3447 = vmatpush1.bf16.xpose.msra.mxu0 0
      %3448 = vmatprep.subr.bf16.mxu0 0
      %3449 = vmatpush1.bf16.xpose.msra.mxu0 0
      %3450 = vmatprep.subr.bf16.mxu0 0
      %3451 = vmatpush1.bf16.xpose.msra.mxu0 0
      %3452 = vmatprep.subr.bf16.mxu0 0
      %3453 = vmatpush1.bf16.xpose.msra.mxu0 0
      %3454 = vmatprep.subr.bf16.mxu0 0
      %3455 = vmatpush1.bf16.xpose.msra.mxu0 0
      %3456 = vmatprep.subr.bf16.mxu0 0
      %3457 = vmatpush1.bf16.xpose.msra.mxu0 0
      %3458 = vmatprep.subr.bf16.mxu0 0
      %3459 = vmatpush1.bf16.xpose.msra.mxu0 0
      %3460 = vmatprep.subr.bf16.mxu0 0
      %3461 = vmatpush1.bf16.xpose.msra.mxu0 0
      %3462 = vmatprep.subr.bf16.mxu0 0
      %3463 = vmatpush1.bf16.xpose.msra.mxu0 0
      %3464 = vmatprep.subr.bf16.mxu0 0
      %3465 = vmatpush1.bf16.xpose.msra.mxu0 0
      %3466 = vmatprep.subr.bf16.mxu0 0
      %3467 = vmatpush1.bf16.xpose.msra.mxu0 0
      %3468 = vmatprep.subr.bf16.mxu0 0
      %3469 = vmatpush1.bf16.xpose.msra.mxu0 0
      %3470 = vmatprep.subr.bf16.mxu0 0
      %3471 = vmatpush1.bf16.xpose.msra.mxu0 0
      %3472 = vmatprep.subr.bf16.mxu0 0
      %3473 = vmatpush1.bf16.xpose.msra.mxu0 0
      %3474 = vmatprep.mubr.bf16.mxu0 0
      %3475 = vmatmul.mubr.bf16.gmra.mrb[0].mxu0 %v3437
      %v3476 = vpop.f32.mrb[0].mxu0
      %v3477 = vadd.f32 %v588, %v3476
      %v3478 = vpop.f32.mrb[0].mxu0
      %v3479 = vpop.f32.mrb[0].mxu0
      %v3480 = vadd.f32 %v589, %v3479
      %v3481 = vpop.f32.mrb[0].mxu0
      %3482 = vdwg.mxu0
      %3483 = vrot.lane.b32.xlu0 %v1144, 112
      %v3484 = vpop.permute.xlu0 %3483
      %3485 = vrot.lane.b32.xlu0 %v1144, 80
      %v3486 = vpop.permute.xlu0 %3485
      %v3488 = vsel %vm1155, %v3484, 0
      %v3491 = vsel %vm1155, %v3486, 0
      %3493 = vmatprep.subr.bf16.mxu0 0
      %3494 = vmatpush1.bf16.xpose.msra.mxu0 %v3491
      %3495 = vmatprep.subr.bf16.mxu0 0
      %3496 = vmatpush1.bf16.xpose.msra.mxu0 0
      %3497 = vmatprep.subr.bf16.mxu0 0
      %3498 = vmatpush1.bf16.xpose.msra.mxu0 0
      %3499 = vmatprep.subr.bf16.mxu0 0
      %3500 = vmatpush1.bf16.xpose.msra.mxu0 0
      %3501 = vmatprep.subr.bf16.mxu0 0
      %3502 = vmatpush1.bf16.xpose.msra.mxu0 0
      %3503 = vmatprep.subr.bf16.mxu0 0
      %3504 = vmatpush1.bf16.xpose.msra.mxu0 0
      %3505 = vmatprep.subr.bf16.mxu0 0
      %3506 = vmatpush1.bf16.xpose.msra.mxu0 0
      %3507 = vmatprep.subr.bf16.mxu0 0
      %3508 = vmatpush1.bf16.xpose.msra.mxu0 0
      %3509 = vmatprep.subr.bf16.mxu0 0
      %3510 = vmatpush1.bf16.xpose.msra.mxu0 0
      %3511 = vmatprep.subr.bf16.mxu0 0
      %3512 = vmatpush1.bf16.xpose.msra.mxu0 0
      %3513 = vmatprep.subr.bf16.mxu0 0
      %3514 = vmatpush1.bf16.xpose.msra.mxu0 0
      %3515 = vmatprep.subr.bf16.mxu0 0
      %3516 = vmatpush1.bf16.xpose.msra.mxu0 0
      %3517 = vmatprep.subr.bf16.mxu0 0
      %3518 = vmatpush1.bf16.xpose.msra.mxu0 0
      %3519 = vmatprep.subr.bf16.mxu0 0
      %3520 = vmatpush1.bf16.xpose.msra.mxu0 0
      %3521 = vmatprep.subr.bf16.mxu0 0
      %3522 = vmatpush1.bf16.xpose.msra.mxu0 0
      %3523 = vmatprep.subr.bf16.mxu0 0
      %3524 = vmatpush1.bf16.xpose.msra.mxu0 0
      %3525 = vmatprep.mubr.bf16.mxu0 0
      %3526 = vmatmul.mubr.bf16.gmra.mrb[0].mxu0 %v3488
      %v3527 = vpop.f32.mrb[0].mxu0
      %v3528 = vadd.f32 %v590, %v3527
      %v3529 = vpop.f32.mrb[0].mxu0
      %v3530 = vpop.f32.mrb[0].mxu0
      %v3531 = vadd.f32 %v591, %v3530
      %v3532 = vpop.f32.mrb[0].mxu0
      %3533 = vdwg.mxu0
      %3534 = vrot.lane.b32.xlu0 %v1145, 112
      %v3535 = vpop.permute.xlu0 %3534
      %3536 = vrot.lane.b32.xlu0 %v1145, 80
      %v3537 = vpop.permute.xlu0 %3536
      %v3539 = vsel %vm1155, %v3535, 0
      %v3542 = vsel %vm1155, %v3537, 0
      %3544 = vmatprep.subr.bf16.mxu0 0
      %3545 = vmatpush1.bf16.xpose.msra.mxu0 %v3542
      %3546 = vmatprep.subr.bf16.mxu0 0
      %3547 = vmatpush1.bf16.xpose.msra.mxu0 0
      %3548 = vmatprep.subr.bf16.mxu0 0
      %3549 = vmatpush1.bf16.xpose.msra.mxu0 0
      %3550 = vmatprep.subr.bf16.mxu0 0
      %3551 = vmatpush1.bf16.xpose.msra.mxu0 0
      %3552 = vmatprep.subr.bf16.mxu0 0
      %3553 = vmatpush1.bf16.xpose.msra.mxu0 0
      %3554 = vmatprep.subr.bf16.mxu0 0
      %3555 = vmatpush1.bf16.xpose.msra.mxu0 0
      %3556 = vmatprep.subr.bf16.mxu0 0
      %3557 = vmatpush1.bf16.xpose.msra.mxu0 0
      %3558 = vmatprep.subr.bf16.mxu0 0
      %3559 = vmatpush1.bf16.xpose.msra.mxu0 0
      %3560 = vmatprep.subr.bf16.mxu0 0
      %3561 = vmatpush1.bf16.xpose.msra.mxu0 0
      %3562 = vmatprep.subr.bf16.mxu0 0
      %3563 = vmatpush1.bf16.xpose.msra.mxu0 0
      %3564 = vmatprep.subr.bf16.mxu0 0
      %3565 = vmatpush1.bf16.xpose.msra.mxu0 0
      %3566 = vmatprep.subr.bf16.mxu0 0
      %3567 = vmatpush1.bf16.xpose.msra.mxu0 0
      %3568 = vmatprep.subr.bf16.mxu0 0
      %3569 = vmatpush1.bf16.xpose.msra.mxu0 0
      %3570 = vmatprep.subr.bf16.mxu0 0
      %3571 = vmatpush1.bf16.xpose.msra.mxu0 0
      %3572 = vmatprep.subr.bf16.mxu0 0
      %3573 = vmatpush1.bf16.xpose.msra.mxu0 0
      %3574 = vmatprep.subr.bf16.mxu0 0
      %3575 = vmatpush1.bf16.xpose.msra.mxu0 0
      %3576 = vmatprep.mubr.bf16.mxu0 0
      %3577 = vmatmul.mubr.bf16.gmra.mrb[0].mxu0 %v3539
      %v3578 = vpop.f32.mrb[0].mxu0
      %v3579 = vadd.f32 %v592, %v3578
      %v3580 = vpop.f32.mrb[0].mxu0
      %v3581 = vpop.f32.mrb[0].mxu0
      %v3582 = vadd.f32 %v593, %v3581
      %v3583 = vpop.f32.mrb[0].mxu0
      %3584 = vdwg.mxu0
      %3585 = vrot.lane.b32.xlu0 %v1146, 112
      %v3586 = vpop.permute.xlu0 %3585
      %3587 = vrot.lane.b32.xlu0 %v1146, 80
      %v3588 = vpop.permute.xlu0 %3587
      %v3590 = vsel %vm1155, %v3586, 0
      %v3593 = vsel %vm1155, %v3588, 0
      %3595 = vmatprep.subr.bf16.mxu0 0
      %3596 = vmatpush1.bf16.xpose.msra.mxu0 %v3593
      %3597 = vmatprep.subr.bf16.mxu0 0
      %3598 = vmatpush1.bf16.xpose.msra.mxu0 0
      %3599 = vmatprep.subr.bf16.mxu0 0
      %3600 = vmatpush1.bf16.xpose.msra.mxu0 0
      %3601 = vmatprep.subr.bf16.mxu0 0
      %3602 = vmatpush1.bf16.xpose.msra.mxu0 0
      %3603 = vmatprep.subr.bf16.mxu0 0
      %3604 = vmatpush1.bf16.xpose.msra.mxu0 0
      %3605 = vmatprep.subr.bf16.mxu0 0
      %3606 = vmatpush1.bf16.xpose.msra.mxu0 0
      %3607 = vmatprep.subr.bf16.mxu0 0
      %3608 = vmatpush1.bf16.xpose.msra.mxu0 0
      %3609 = vmatprep.subr.bf16.mxu0 0
      %3610 = vmatpush1.bf16.xpose.msra.mxu0 0
      %3611 = vmatprep.subr.bf16.mxu0 0
      %3612 = vmatpush1.bf16.xpose.msra.mxu0 0
      %3613 = vmatprep.subr.bf16.mxu0 0
      %3614 = vmatpush1.bf16.xpose.msra.mxu0 0
      %3615 = vmatprep.subr.bf16.mxu0 0
      %3616 = vmatpush1.bf16.xpose.msra.mxu0 0
      %3617 = vmatprep.subr.bf16.mxu0 0
      %3618 = vmatpush1.bf16.xpose.msra.mxu0 0
      %3619 = vmatprep.subr.bf16.mxu0 0
      %3620 = vmatpush1.bf16.xpose.msra.mxu0 0
      %3621 = vmatprep.subr.bf16.mxu0 0
      %3622 = vmatpush1.bf16.xpose.msra.mxu0 0
      %3623 = vmatprep.subr.bf16.mxu0 0
      %3624 = vmatpush1.bf16.xpose.msra.mxu0 0
      %3625 = vmatprep.subr.bf16.mxu0 0
      %3626 = vmatpush1.bf16.xpose.msra.mxu0 0
      %3627 = vmatprep.mubr.bf16.mxu0 0
      %3628 = vmatmul.mubr.bf16.gmra.mrb[0].mxu0 %v3590
      %v3629 = vpop.f32.mrb[0].mxu0
      %v3630 = vadd.f32 %v594, %v3629
      %v3631 = vpop.f32.mrb[0].mxu0
      %v3632 = vpop.f32.mrb[0].mxu0
      %v3633 = vadd.f32 %v595, %v3632
      %v3634 = vpop.f32.mrb[0].mxu0
      %3635 = vdwg.mxu0
      %3636 = vrot.lane.b32.xlu0 %v1147, 112
      %v3637 = vpop.permute.xlu0 %3636
      %3638 = vrot.lane.b32.xlu0 %v1147, 80
      %v3639 = vpop.permute.xlu0 %3638
      %v3641 = vsel %vm1155, %v3637, 0
      %v3644 = vsel %vm1155, %v3639, 0
      %3646 = vmatprep.subr.bf16.mxu0 0
      %3647 = vmatpush1.bf16.xpose.msra.mxu0 %v3644
      %3648 = vmatprep.subr.bf16.mxu0 0
      %3649 = vmatpush1.bf16.xpose.msra.mxu0 0
      %3650 = vmatprep.subr.bf16.mxu0 0
      %3651 = vmatpush1.bf16.xpose.msra.mxu0 0
      %3652 = vmatprep.subr.bf16.mxu0 0
      %3653 = vmatpush1.bf16.xpose.msra.mxu0 0
      %3654 = vmatprep.subr.bf16.mxu0 0
      %3655 = vmatpush1.bf16.xpose.msra.mxu0 0
      %3656 = vmatprep.subr.bf16.mxu0 0
      %3657 = vmatpush1.bf16.xpose.msra.mxu0 0
      %3658 = vmatprep.subr.bf16.mxu0 0
      %3659 = vmatpush1.bf16.xpose.msra.mxu0 0
      %3660 = vmatprep.subr.bf16.mxu0 0
      %3661 = vmatpush1.bf16.xpose.msra.mxu0 0
      %3662 = vmatprep.subr.bf16.mxu0 0
      %3663 = vmatpush1.bf16.xpose.msra.mxu0 0
      %3664 = vmatprep.subr.bf16.mxu0 0
      %3665 = vmatpush1.bf16.xpose.msra.mxu0 0
      %3666 = vmatprep.subr.bf16.mxu0 0
      %3667 = vmatpush1.bf16.xpose.msra.mxu0 0
      %3668 = vmatprep.subr.bf16.mxu0 0
      %3669 = vmatpush1.bf16.xpose.msra.mxu0 0
      %3670 = vmatprep.subr.bf16.mxu0 0
      %3671 = vmatpush1.bf16.xpose.msra.mxu0 0
      %3672 = vmatprep.subr.bf16.mxu0 0
      %3673 = vmatpush1.bf16.xpose.msra.mxu0 0
      %3674 = vmatprep.subr.bf16.mxu0 0
      %3675 = vmatpush1.bf16.xpose.msra.mxu0 0
      %3676 = vmatprep.subr.bf16.mxu0 0
      %3677 = vmatpush1.bf16.xpose.msra.mxu0 0
      %3678 = vmatprep.mubr.bf16.mxu0 0
      %3679 = vmatmul.mubr.bf16.gmra.mrb[0].mxu0 %v3641
      %v3680 = vpop.f32.mrb[0].mxu0
      %v3681 = vadd.f32 %v596, %v3680
      %v3682 = vpop.f32.mrb[0].mxu0
      %v3683 = vpop.f32.mrb[0].mxu0
      %v3684 = vadd.f32 %v597, %v3683
      %v3685 = vpop.f32.mrb[0].mxu0
      %3686 = vdwg.mxu0
      %3687 = vrot.lane.b32.xlu0 %v1148, 112
      %v3688 = vpop.permute.xlu0 %3687
      %3689 = vrot.lane.b32.xlu0 %v1148, 80
      %v3690 = vpop.permute.xlu0 %3689
      %v3692 = vsel %vm1155, %v3688, 0
      %v3695 = vsel %vm1155, %v3690, 0
      %3697 = vmatprep.subr.bf16.mxu0 0
      %3698 = vmatpush1.bf16.xpose.msra.mxu0 %v3695
      %3699 = vmatprep.subr.bf16.mxu0 0
      %3700 = vmatpush1.bf16.xpose.msra.mxu0 0
      %3701 = vmatprep.subr.bf16.mxu0 0
      %3702 = vmatpush1.bf16.xpose.msra.mxu0 0
      %3703 = vmatprep.subr.bf16.mxu0 0
      %3704 = vmatpush1.bf16.xpose.msra.mxu0 0
      %3705 = vmatprep.subr.bf16.mxu0 0
      %3706 = vmatpush1.bf16.xpose.msra.mxu0 0
      %3707 = vmatprep.subr.bf16.mxu0 0
      %3708 = vmatpush1.bf16.xpose.msra.mxu0 0
      %3709 = vmatprep.subr.bf16.mxu0 0
      %3710 = vmatpush1.bf16.xpose.msra.mxu0 0
      %3711 = vmatprep.subr.bf16.mxu0 0
      %3712 = vmatpush1.bf16.xpose.msra.mxu0 0
      %3713 = vmatprep.subr.bf16.mxu0 0
      %3714 = vmatpush1.bf16.xpose.msra.mxu0 0
      %3715 = vmatprep.subr.bf16.mxu0 0
      %3716 = vmatpush1.bf16.xpose.msra.mxu0 0
      %3717 = vmatprep.subr.bf16.mxu0 0
      %3718 = vmatpush1.bf16.xpose.msra.mxu0 0
      %3719 = vmatprep.subr.bf16.mxu0 0
      %3720 = vmatpush1.bf16.xpose.msra.mxu0 0
      %3721 = vmatprep.subr.bf16.mxu0 0
      %3722 = vmatpush1.bf16.xpose.msra.mxu0 0
      %3723 = vmatprep.subr.bf16.mxu0 0
      %3724 = vmatpush1.bf16.xpose.msra.mxu0 0
      %3725 = vmatprep.subr.bf16.mxu0 0
      %3726 = vmatpush1.bf16.xpose.msra.mxu0 0
      %3727 = vmatprep.subr.bf16.mxu0 0
      %3728 = vmatpush1.bf16.xpose.msra.mxu0 0
      %3729 = vmatprep.mubr.bf16.mxu0 0
      %3730 = vmatmul.mubr.bf16.gmra.mrb[0].mxu0 %v3692
      %v3731 = vpop.f32.mrb[0].mxu0
      %v3732 = vadd.f32 %v598, %v3731
      %v3733 = vpop.f32.mrb[0].mxu0
      %v3734 = vpop.f32.mrb[0].mxu0
      %v3735 = vadd.f32 %v599, %v3734
      %v3736 = vpop.f32.mrb[0].mxu0
      %3737 = vdwg.mxu0
      %3738 = vrot.lane.b32.xlu0 %v1149, 112
      %v3739 = vpop.permute.xlu0 %3738
      %3740 = vrot.lane.b32.xlu0 %v1149, 80
      %v3741 = vpop.permute.xlu0 %3740
      %v3743 = vsel %vm1155, %v3739, 0
      %v3746 = vsel %vm1155, %v3741, 0
      %3748 = vmatprep.subr.bf16.mxu0 0
      %3749 = vmatpush1.bf16.xpose.msra.mxu0 %v3746
      %3750 = vmatprep.subr.bf16.mxu0 0
      %3751 = vmatpush1.bf16.xpose.msra.mxu0 0
      %3752 = vmatprep.subr.bf16.mxu0 0
      %3753 = vmatpush1.bf16.xpose.msra.mxu0 0
      %3754 = vmatprep.subr.bf16.mxu0 0
      %3755 = vmatpush1.bf16.xpose.msra.mxu0 0
      %3756 = vmatprep.subr.bf16.mxu0 0
      %3757 = vmatpush1.bf16.xpose.msra.mxu0 0
      %3758 = vmatprep.subr.bf16.mxu0 0
      %3759 = vmatpush1.bf16.xpose.msra.mxu0 0
      %3760 = vmatprep.subr.bf16.mxu0 0
      %3761 = vmatpush1.bf16.xpose.msra.mxu0 0
      %3762 = vmatprep.subr.bf16.mxu0 0
      %3763 = vmatpush1.bf16.xpose.msra.mxu0 0
      %3764 = vmatprep.subr.bf16.mxu0 0
      %3765 = vmatpush1.bf16.xpose.msra.mxu0 0
      %3766 = vmatprep.subr.bf16.mxu0 0
      %3767 = vmatpush1.bf16.xpose.msra.mxu0 0
      %3768 = vmatprep.subr.bf16.mxu0 0
      %3769 = vmatpush1.bf16.xpose.msra.mxu0 0
      %3770 = vmatprep.subr.bf16.mxu0 0
      %3771 = vmatpush1.bf16.xpose.msra.mxu0 0
      %3772 = vmatprep.subr.bf16.mxu0 0
      %3773 = vmatpush1.bf16.xpose.msra.mxu0 0
      %3774 = vmatprep.subr.bf16.mxu0 0
      %3775 = vmatpush1.bf16.xpose.msra.mxu0 0
      %3776 = vmatprep.subr.bf16.mxu0 0
      %3777 = vmatpush1.bf16.xpose.msra.mxu0 0
      %3778 = vmatprep.subr.bf16.mxu0 0
      %3779 = vmatpush1.bf16.xpose.msra.mxu0 0
      %3780 = vmatprep.mubr.bf16.mxu0 0
      %3781 = vmatmul.mubr.bf16.gmra.mrb[0].mxu0 %v3743
      %v3782 = vpop.f32.mrb[0].mxu0
      %v3783 = vadd.f32 %v600, %v3782
      %v3784 = vpop.f32.mrb[0].mxu0
      %v3785 = vpop.f32.mrb[0].mxu0
      %v3786 = vadd.f32 %v601, %v3785
      %v3787 = vpop.f32.mrb[0].mxu0
      %3788 = vdwg.mxu0
      %3789 = vrot.lane.b32.xlu0 %v1150, 112
      %v3790 = vpop.permute.xlu0 %3789
      %3791 = vrot.lane.b32.xlu0 %v1150, 80
      %v3792 = vpop.permute.xlu0 %3791
      %v3794 = vsel %vm1155, %v3790, 0
      %v3797 = vsel %vm1155, %v3792, 0
      %3799 = vmatprep.subr.bf16.mxu0 0
      %3800 = vmatpush1.bf16.xpose.msra.mxu0 %v3797
      %3801 = vmatprep.subr.bf16.mxu0 0
      %3802 = vmatpush1.bf16.xpose.msra.mxu0 0
      %3803 = vmatprep.subr.bf16.mxu0 0
      %3804 = vmatpush1.bf16.xpose.msra.mxu0 0
      %3805 = vmatprep.subr.bf16.mxu0 0
      %3806 = vmatpush1.bf16.xpose.msra.mxu0 0
      %3807 = vmatprep.subr.bf16.mxu0 0
      %3808 = vmatpush1.bf16.xpose.msra.mxu0 0
      %3809 = vmatprep.subr.bf16.mxu0 0
      %3810 = vmatpush1.bf16.xpose.msra.mxu0 0
      %3811 = vmatprep.subr.bf16.mxu0 0
      %3812 = vmatpush1.bf16.xpose.msra.mxu0 0
      %3813 = vmatprep.subr.bf16.mxu0 0
      %3814 = vmatpush1.bf16.xpose.msra.mxu0 0
      %3815 = vmatprep.subr.bf16.mxu0 0
      %3816 = vmatpush1.bf16.xpose.msra.mxu0 0
      %3817 = vmatprep.subr.bf16.mxu0 0
      %3818 = vmatpush1.bf16.xpose.msra.mxu0 0
      %3819 = vmatprep.subr.bf16.mxu0 0
      %3820 = vmatpush1.bf16.xpose.msra.mxu0 0
      %3821 = vmatprep.subr.bf16.mxu0 0
      %3822 = vmatpush1.bf16.xpose.msra.mxu0 0
      %3823 = vmatprep.subr.bf16.mxu0 0
      %3824 = vmatpush1.bf16.xpose.msra.mxu0 0
      %3825 = vmatprep.subr.bf16.mxu0 0
      %3826 = vmatpush1.bf16.xpose.msra.mxu0 0
      %3827 = vmatprep.subr.bf16.mxu0 0
      %3828 = vmatpush1.bf16.xpose.msra.mxu0 0
      %3829 = vmatprep.subr.bf16.mxu0 0
      %3830 = vmatpush1.bf16.xpose.msra.mxu0 0
      %3831 = vmatprep.mubr.bf16.mxu0 0
      %3832 = vmatmul.mubr.bf16.gmra.mrb[0].mxu0 %v3794
      %v3833 = vpop.f32.mrb[0].mxu0
      %v3834 = vadd.f32 %v602, %v3833
      %v3835 = vpop.f32.mrb[0].mxu0
      %v3836 = vpop.f32.mrb[0].mxu0
      %v3837 = vadd.f32 %v603, %v3836
      %v3838 = vpop.f32.mrb[0].mxu0
      %3839 = vdwg.mxu0
      %3840 = vrot.lane.b32.xlu0 %v1151, 112
      %v3841 = vpop.permute.xlu0 %3840
      %3842 = vrot.lane.b32.xlu0 %v1151, 80
      %v3843 = vpop.permute.xlu0 %3842
      %v3845 = vsel %vm1155, %v3841, 0
      %v3848 = vsel %vm1155, %v3843, 0
      %3850 = vmatprep.subr.bf16.mxu0 0
      %3851 = vmatpush1.bf16.xpose.msra.mxu0 %v3848
      %3852 = vmatprep.subr.bf16.mxu0 0
      %3853 = vmatpush1.bf16.xpose.msra.mxu0 0
      %3854 = vmatprep.subr.bf16.mxu0 0
      %3855 = vmatpush1.bf16.xpose.msra.mxu0 0
      %3856 = vmatprep.subr.bf16.mxu0 0
      %3857 = vmatpush1.bf16.xpose.msra.mxu0 0
      %3858 = vmatprep.subr.bf16.mxu0 0
      %3859 = vmatpush1.bf16.xpose.msra.mxu0 0
      %3860 = vmatprep.subr.bf16.mxu0 0
      %3861 = vmatpush1.bf16.xpose.msra.mxu0 0
      %3862 = vmatprep.subr.bf16.mxu0 0
      %3863 = vmatpush1.bf16.xpose.msra.mxu0 0
      %3864 = vmatprep.subr.bf16.mxu0 0
      %3865 = vmatpush1.bf16.xpose.msra.mxu0 0
      %3866 = vmatprep.subr.bf16.mxu0 0
      %3867 = vmatpush1.bf16.xpose.msra.mxu0 0
      %3868 = vmatprep.subr.bf16.mxu0 0
      %3869 = vmatpush1.bf16.xpose.msra.mxu0 0
      %3870 = vmatprep.subr.bf16.mxu0 0
      %3871 = vmatpush1.bf16.xpose.msra.mxu0 0
      %3872 = vmatprep.subr.bf16.mxu0 0
      %3873 = vmatpush1.bf16.xpose.msra.mxu0 0
      %3874 = vmatprep.subr.bf16.mxu0 0
      %3875 = vmatpush1.bf16.xpose.msra.mxu0 0
      %3876 = vmatprep.subr.bf16.mxu0 0
      %3877 = vmatpush1.bf16.xpose.msra.mxu0 0
      %3878 = vmatprep.subr.bf16.mxu0 0
      %3879 = vmatpush1.bf16.xpose.msra.mxu0 0
      %3880 = vmatprep.subr.bf16.mxu0 0
      %3881 = vmatpush1.bf16.xpose.msra.mxu0 0
      %3882 = vmatprep.mubr.bf16.mxu0 0
      %3883 = vmatmul.mubr.bf16.gmra.mrb[0].mxu0 %v3845
      %v3884 = vpop.f32.mrb[0].mxu0
      %v3885 = vadd.f32 %v604, %v3884
      %v3886 = vpop.f32.mrb[0].mxu0
      %v3887 = vpop.f32.mrb[0].mxu0
      %v3888 = vadd.f32 %v605, %v3887
      %v3889 = vpop.f32.mrb[0].mxu0
      %3890 = vdwg.mxu0
      %v3891 = vsel %vm1603, %v3477, -inf
      %3892 = vmax.xlane.f32.xlu0 %v3891
      %v3893 = vpop.xlane.xlu0 %3892
      %v3894 = vsel %vm1603, %v3480, -inf
      %3895 = vmax.xlane.f32.xlu0 %v3894
      %v3896 = vpop.xlane.xlu0 %3895
      %v3897 = vsel %vm1603, %v3528, -inf
      %3898 = vmax.xlane.f32.xlu0 %v3897
      %v3899 = vpop.xlane.xlu0 %3898
      %v3900 = vsel %vm1603, %v3531, -inf
      %3901 = vmax.xlane.f32.xlu0 %v3900
      %v3902 = vpop.xlane.xlu0 %3901
      %v3903 = vsel %vm1603, %v3579, -inf
      %3904 = vmax.xlane.f32.xlu0 %v3903
      %v3905 = vpop.xlane.xlu0 %3904
      %v3906 = vsel %vm1603, %v3582, -inf
      %3907 = vmax.xlane.f32.xlu0 %v3906
      %v3908 = vpop.xlane.xlu0 %3907
      %v3909 = vsel %vm1603, %v3630, -inf
      %3910 = vmax.xlane.f32.xlu0 %v3909
      %v3911 = vpop.xlane.xlu0 %3910
      %v3912 = vsel %vm1603, %v3633, -inf
      %3913 = vmax.xlane.f32.xlu0 %v3912
      %v3914 = vpop.xlane.xlu0 %3913
      %v3915 = vsel %vm1603, %v3681, -inf
      %3916 = vmax.xlane.f32.xlu0 %v3915
      %v3917 = vpop.xlane.xlu0 %3916
      %v3918 = vsel %vm1603, %v3684, -inf
      %3919 = vmax.xlane.f32.xlu0 %v3918
      %v3920 = vpop.xlane.xlu0 %3919
      %v3921 = vsel %vm1603, %v3732, -inf
      %3922 = vmax.xlane.f32.xlu0 %v3921
      %v3923 = vpop.xlane.xlu0 %3922
      %v3924 = vsel %vm1603, %v3735, -inf
      %3925 = vmax.xlane.f32.xlu0 %v3924
      %v3926 = vpop.xlane.xlu0 %3925
      %v3927 = vsel %vm1603, %v3783, -inf
      %3928 = vmax.xlane.f32.xlu0 %v3927
      %v3929 = vpop.xlane.xlu0 %3928
      %v3930 = vsel %vm1603, %v3786, -inf
      %3931 = vmax.xlane.f32.xlu0 %v3930
      %v3932 = vpop.xlane.xlu0 %3931
      %v3933 = vsel %vm1603, %v3834, -inf
      %3934 = vmax.xlane.f32.xlu0 %v3933
      %v3935 = vpop.xlane.xlu0 %3934
      %v3936 = vsel %vm1603, %v3837, -inf
      %3937 = vmax.xlane.f32.xlu0 %v3936
      %v3938 = vpop.xlane.xlu0 %3937
      %v3939 = vsel %vm1603, %v3885, -inf
      %3940 = vmax.xlane.f32.xlu0 %v3939
      %v3941 = vpop.xlane.xlu0 %3940
      %v3942 = vsel %vm1603, %v3888, -inf
      %3943 = vmax.xlane.f32.xlu0 %v3942
      %v3944 = vpop.xlane.xlu0 %3943
      %v3945 = vsub.f32 %v3477, %v3893
      %v3946 = vsub.f32 %v3480, %v3896
      %v3947 = vsub.f32 %v3528, %v3899
      %v3948 = vsub.f32 %v3531, %v3902
      %v3949 = vsub.f32 %v3579, %v3905
      %v3950 = vsub.f32 %v3582, %v3908
      %v3951 = vsub.f32 %v3630, %v3911
      %v3952 = vsub.f32 %v3633, %v3914
      %v3953 = vsub.f32 %v3681, %v3917
      %v3954 = vsub.f32 %v3684, %v3920
      %v3955 = vsub.f32 %v3732, %v3923
      %v3956 = vsub.f32 %v3735, %v3926
      %v3957 = vsub.f32 %v3783, %v3929
      %v3958 = vsub.f32 %v3786, %v3932
      %v3959 = vsub.f32 %v3834, %v3935
      %v3960 = vsub.f32 %v3837, %v3938
      %v3961 = vsub.f32 %v3885, %v3941
      %v3962 = vsub.f32 %v3888, %v3944
      %v3963 = vmul.f32 %v3945, 1.442695
      %v3964 = vpow.pop %v3963
      %v3965 = vmul.f32 %v3946, 1.442695
      %v3966 = vpow.pop %v3965
      %v3967 = vmul.f32 %v3947, 1.442695
      %v3968 = vpow.pop %v3967
      %v3969 = vmul.f32 %v3948, 1.442695
      %v3970 = vpow.pop %v3969
      %v3971 = vmul.f32 %v3949, 1.442695
      %v3972 = vpow.pop %v3971
      %v3973 = vmul.f32 %v3950, 1.442695
      %v3974 = vpow.pop %v3973
      %v3975 = vmul.f32 %v3951, 1.442695
      %v3976 = vpow.pop %v3975
      %v3977 = vmul.f32 %v3952, 1.442695
      %v3978 = vpow.pop %v3977
      %v3979 = vmul.f32 %v3953, 1.442695
      %v3980 = vpow.pop %v3979
      %v3981 = vmul.f32 %v3954, 1.442695
      %v3982 = vpow.pop %v3981
      %v3983 = vmul.f32 %v3955, 1.442695
      %v3984 = vpow.pop %v3983
      %v3985 = vmul.f32 %v3956, 1.442695
      %v3986 = vpow.pop %v3985
      %v3987 = vmul.f32 %v3957, 1.442695
      %v3988 = vpow.pop %v3987
      %v3989 = vmul.f32 %v3958, 1.442695
      %v3990 = vpow.pop %v3989
      %v3991 = vmul.f32 %v3959, 1.442695
      %v3992 = vpow.pop %v3991
      %v3993 = vmul.f32 %v3960, 1.442695
      %v3994 = vpow.pop %v3993
      %v3995 = vmul.f32 %v3961, 1.442695
      %v3996 = vpow.pop %v3995
      %v3997 = vmul.f32 %v3962, 1.442695
      %v3998 = vpow.pop %v3997
      %v3999 = vsel %vm1603, %v3964, 0.0
      %4000 = vadd.xlane.f32.xlu0 %v3999
      %v4001 = vpop.xlane.xlu0 %4000
      %v4002 = vsel %vm1603, %v3966, 0.0
      %4003 = vadd.xlane.f32.xlu0 %v4002
      %v4004 = vpop.xlane.xlu0 %4003
      %v4005 = vsel %vm1603, %v3968, 0.0
      %4006 = vadd.xlane.f32.xlu0 %v4005
      %v4007 = vpop.xlane.xlu0 %4006
      %v4008 = vsel %vm1603, %v3970, 0.0
      %4009 = vadd.xlane.f32.xlu0 %v4008
      %v4010 = vpop.xlane.xlu0 %4009
      %v4011 = vsel %vm1603, %v3972, 0.0
      %4012 = vadd.xlane.f32.xlu0 %v4011
      %v4013 = vpop.xlane.xlu0 %4012
      %v4014 = vsel %vm1603, %v3974, 0.0
      %4015 = vadd.xlane.f32.xlu0 %v4014
      %v4016 = vpop.xlane.xlu0 %4015
      %v4017 = vsel %vm1603, %v3976, 0.0
      %4018 = vadd.xlane.f32.xlu0 %v4017
      %v4019 = vpop.xlane.xlu0 %4018
      %v4020 = vsel %vm1603, %v3978, 0.0
      %4021 = vadd.xlane.f32.xlu0 %v4020
      %v4022 = vpop.xlane.xlu0 %4021
      %v4023 = vsel %vm1603, %v3980, 0.0
      %4024 = vadd.xlane.f32.xlu0 %v4023
      %v4025 = vpop.xlane.xlu0 %4024
      %v4026 = vsel %vm1603, %v3982, 0.0
      %4027 = vadd.xlane.f32.xlu0 %v4026
      %v4028 = vpop.xlane.xlu0 %4027
      %v4029 = vsel %vm1603, %v3984, 0.0
      %4030 = vadd.xlane.f32.xlu0 %v4029
      %v4031 = vpop.xlane.xlu0 %4030
      %v4032 = vsel %vm1603, %v3986, 0.0
      %4033 = vadd.xlane.f32.xlu0 %v4032
      %v4034 = vpop.xlane.xlu0 %4033
      %v4035 = vsel %vm1603, %v3988, 0.0
      %4036 = vadd.xlane.f32.xlu0 %v4035
      %v4037 = vpop.xlane.xlu0 %4036
      %v4038 = vsel %vm1603, %v3990, 0.0
      %4039 = vadd.xlane.f32.xlu0 %v4038
      %v4040 = vpop.xlane.xlu0 %4039
      %v4041 = vsel %vm1603, %v3992, 0.0
      %4042 = vadd.xlane.f32.xlu0 %v4041
      %v4043 = vpop.xlane.xlu0 %4042
      %v4044 = vsel %vm1603, %v3994, 0.0
      %4045 = vadd.xlane.f32.xlu0 %v4044
      %v4046 = vpop.xlane.xlu0 %4045
      %v4047 = vsel %vm1603, %v3996, 0.0
      %4048 = vadd.xlane.f32.xlu0 %v4047
      %v4049 = vpop.xlane.xlu0 %4048
      %v4050 = vsel %vm1603, %v3998, 0.0
      %4051 = vadd.xlane.f32.xlu0 %v4050
      %v4052 = vpop.xlane.xlu0 %4051
      %v4053 = vrcp.pop %v4001
      %v4054 = vrcp.pop %v4004
      %v4055 = vrcp.pop %v4007
      %v4056 = vrcp.pop %v4010
      %v4057 = vrcp.pop %v4013
      %v4058 = vrcp.pop %v4016
      %v4059 = vrcp.pop %v4019
      %v4060 = vrcp.pop %v4022
      %v4061 = vrcp.pop %v4025
      %v4062 = vrcp.pop %v4028
      %v4063 = vrcp.pop %v4031
      %v4064 = vrcp.pop %v4034
      %v4065 = vrcp.pop %v4037
      %v4066 = vrcp.pop %v4040
      %v4067 = vrcp.pop %v4043
      %v4068 = vrcp.pop %v4046
      %v4069 = vrcp.pop %v4049
      %v4070 = vrcp.pop %v4052
      %v4071 = vmul.f32 %v3964, %v4053
      %v4072 = vmul.f32 %v3966, %v4054
      %v4073 = vmul.f32 %v3968, %v4055
      %v4074 = vmul.f32 %v3970, %v4056
      %v4075 = vmul.f32 %v3972, %v4057
      %v4076 = vmul.f32 %v3974, %v4058
      %v4077 = vmul.f32 %v3976, %v4059
      %v4078 = vmul.f32 %v3978, %v4060
      %v4079 = vmul.f32 %v3980, %v4061
      %v4080 = vmul.f32 %v3982, %v4062
      %v4081 = vmul.f32 %v3984, %v4063
      %v4082 = vmul.f32 %v3986, %v4064
      %v4083 = vmul.f32 %v3988, %v4065
      %v4084 = vmul.f32 %v3990, %v4066
      %v4085 = vmul.f32 %v3992, %v4067
      %v4086 = vmul.f32 %v3994, %v4068
      %v4087 = vmul.f32 %v3996, %v4069
      %v4088 = vmul.f32 %v3998, %v4070
      %v4089 = vpack.c.bf16 %v4072, %v4071
      %v4090 = vpack.c.bf16 %v4074, %v4073
      %v4091 = vpack.c.bf16 %v4076, %v4075
      %v4092 = vpack.c.bf16 %v4078, %v4077
      %v4093 = vpack.c.bf16 %v4080, %v4079
      %v4094 = vpack.c.bf16 %v4082, %v4081
      %v4095 = vpack.c.bf16 %v4084, %v4083
      %v4096 = vpack.c.bf16 %v4086, %v4085
      %v4097 = vpack.c.bf16 %v4088, %v4087
      %4098 = vrot.lane.b32.xlu0 %v1143, 48
      %v4099 = vpop.permute.xlu0 %4098
      %v4102 = vsel %vm1603, %v4089, 0
      %4104 = vmatprep.subr.bf16.mxu0 0
      %4105 = vmatpush1.bf16.msra.mxu0 %v4099
      %4106 = vmatprep.subr.bf16.mxu0 0
      %4107 = vmatpush1.bf16.msra.mxu0 0
      %4108 = vmatprep.subr.bf16.mxu0 0
      %4109 = vmatpush1.bf16.msra.mxu0 0
      %4110 = vmatprep.subr.bf16.mxu0 0
      %4111 = vmatpush1.bf16.msra.mxu0 0
      %4112 = vmatprep.subr.bf16.mxu0 0
      %4113 = vmatpush1.bf16.msra.mxu0 0
      %4114 = vmatprep.subr.bf16.mxu0 0
      %4115 = vmatpush1.bf16.msra.mxu0 0
      %4116 = vmatprep.subr.bf16.mxu0 0
      %4117 = vmatpush1.bf16.msra.mxu0 0
      %4118 = vmatprep.subr.bf16.mxu0 0
      %4119 = vmatpush1.bf16.msra.mxu0 0
      %4120 = vmatprep.subr.bf16.mxu0 0
      %4121 = vmatpush1.bf16.msra.mxu0 0
      %4122 = vmatprep.subr.bf16.mxu0 0
      %4123 = vmatpush1.bf16.msra.mxu0 0
      %4124 = vmatprep.subr.bf16.mxu0 0
      %4125 = vmatpush1.bf16.msra.mxu0 0
      %4126 = vmatprep.subr.bf16.mxu0 0
      %4127 = vmatpush1.bf16.msra.mxu0 0
      %4128 = vmatprep.subr.bf16.mxu0 0
      %4129 = vmatpush1.bf16.msra.mxu0 0
      %4130 = vmatprep.subr.bf16.mxu0 0
      %4131 = vmatpush1.bf16.msra.mxu0 0
      %4132 = vmatprep.subr.bf16.mxu0 0
      %4133 = vmatpush1.bf16.msra.mxu0 0
      %4134 = vmatprep.subr.bf16.mxu0 0
      %4135 = vmatpush1.bf16.msra.mxu0 0
      %4136 = vmatprep.mubr.bf16.mxu0 0
      %4137 = vmatmul.mubr.bf16.gmra.mrb[0].mxu0 %v4102
      %v4138 = vpop.f32.mrb[0].mxu0
      %v4139 = vadd.f32 0.0, %v4138
      %v4140 = vpop.f32.mrb[0].mxu0
      %v4141 = vpop.f32.mrb[0].mxu0
      %v4142 = vadd.f32 0.0, %v4141
      %v4143 = vpop.f32.mrb[0].mxu0
      %4144 = vdwg.mxu0
      %4145 = vrot.lane.b32.xlu0 %v1144, 48
      %v4146 = vpop.permute.xlu0 %4145
      %v4149 = vsel %vm1603, %v4090, 0
      %4151 = vmatprep.subr.bf16.mxu0 0
      %4152 = vmatpush1.bf16.msra.mxu0 %v4146
      %4153 = vmatprep.subr.bf16.mxu0 0
      %4154 = vmatpush1.bf16.msra.mxu0 0
      %4155 = vmatprep.subr.bf16.mxu0 0
      %4156 = vmatpush1.bf16.msra.mxu0 0
      %4157 = vmatprep.subr.bf16.mxu0 0
      %4158 = vmatpush1.bf16.msra.mxu0 0
      %4159 = vmatprep.subr.bf16.mxu0 0
      %4160 = vmatpush1.bf16.msra.mxu0 0
      %4161 = vmatprep.subr.bf16.mxu0 0
      %4162 = vmatpush1.bf16.msra.mxu0 0
      %4163 = vmatprep.subr.bf16.mxu0 0
      %4164 = vmatpush1.bf16.msra.mxu0 0
      %4165 = vmatprep.subr.bf16.mxu0 0
      %4166 = vmatpush1.bf16.msra.mxu0 0
      %4167 = vmatprep.subr.bf16.mxu0 0
      %4168 = vmatpush1.bf16.msra.mxu0 0
      %4169 = vmatprep.subr.bf16.mxu0 0
      %4170 = vmatpush1.bf16.msra.mxu0 0
      %4171 = vmatprep.subr.bf16.mxu0 0
      %4172 = vmatpush1.bf16.msra.mxu0 0
      %4173 = vmatprep.subr.bf16.mxu0 0
      %4174 = vmatpush1.bf16.msra.mxu0 0
      %4175 = vmatprep.subr.bf16.mxu0 0
      %4176 = vmatpush1.bf16.msra.mxu0 0
      %4177 = vmatprep.subr.bf16.mxu0 0
      %4178 = vmatpush1.bf16.msra.mxu0 0
      %4179 = vmatprep.subr.bf16.mxu0 0
      %4180 = vmatpush1.bf16.msra.mxu0 0
      %4181 = vmatprep.subr.bf16.mxu0 0
      %4182 = vmatpush1.bf16.msra.mxu0 0
      %4183 = vmatprep.mubr.bf16.mxu0 0
      %4184 = vmatmul.mubr.bf16.gmra.mrb[0].mxu0 %v4149
      %v4185 = vpop.f32.mrb[0].mxu0
      %v4186 = vadd.f32 0.0, %v4185
      %v4187 = vpop.f32.mrb[0].mxu0
      %v4188 = vpop.f32.mrb[0].mxu0
      %v4189 = vadd.f32 0.0, %v4188
      %v4190 = vpop.f32.mrb[0].mxu0
      %4191 = vdwg.mxu0
      %4192 = vrot.lane.b32.xlu0 %v1145, 48
      %v4193 = vpop.permute.xlu0 %4192
      %v4196 = vsel %vm1603, %v4091, 0
      %4198 = vmatprep.subr.bf16.mxu0 0
      %4199 = vmatpush1.bf16.msra.mxu0 %v4193
      %4200 = vmatprep.subr.bf16.mxu0 0
      %4201 = vmatpush1.bf16.msra.mxu0 0
      %4202 = vmatprep.subr.bf16.mxu0 0
      %4203 = vmatpush1.bf16.msra.mxu0 0
      %4204 = vmatprep.subr.bf16.mxu0 0
      %4205 = vmatpush1.bf16.msra.mxu0 0
      %4206 = vmatprep.subr.bf16.mxu0 0
      %4207 = vmatpush1.bf16.msra.mxu0 0
      %4208 = vmatprep.subr.bf16.mxu0 0
      %4209 = vmatpush1.bf16.msra.mxu0 0
      %4210 = vmatprep.subr.bf16.mxu0 0
      %4211 = vmatpush1.bf16.msra.mxu0 0
      %4212 = vmatprep.subr.bf16.mxu0 0
      %4213 = vmatpush1.bf16.msra.mxu0 0
      %4214 = vmatprep.subr.bf16.mxu0 0
      %4215 = vmatpush1.bf16.msra.mxu0 0
      %4216 = vmatprep.subr.bf16.mxu0 0
      %4217 = vmatpush1.bf16.msra.mxu0 0
      %4218 = vmatprep.subr.bf16.mxu0 0
      %4219 = vmatpush1.bf16.msra.mxu0 0
      %4220 = vmatprep.subr.bf16.mxu0 0
      %4221 = vmatpush1.bf16.msra.mxu0 0
      %4222 = vmatprep.subr.bf16.mxu0 0
      %4223 = vmatpush1.bf16.msra.mxu0 0
      %4224 = vmatprep.subr.bf16.mxu0 0
      %4225 = vmatpush1.bf16.msra.mxu0 0
      %4226 = vmatprep.subr.bf16.mxu0 0
      %4227 = vmatpush1.bf16.msra.mxu0 0
      %4228 = vmatprep.subr.bf16.mxu0 0
      %4229 = vmatpush1.bf16.msra.mxu0 0
      %4230 = vmatprep.mubr.bf16.mxu0 0
      %4231 = vmatmul.mubr.bf16.gmra.mrb[0].mxu0 %v4196
      %v4232 = vpop.f32.mrb[0].mxu0
      %v4233 = vadd.f32 0.0, %v4232
      %v4234 = vpop.f32.mrb[0].mxu0
      %v4235 = vpop.f32.mrb[0].mxu0
      %v4236 = vadd.f32 0.0, %v4235
      %v4237 = vpop.f32.mrb[0].mxu0
      %4238 = vdwg.mxu0
      %4239 = vrot.lane.b32.xlu0 %v1146, 48
      %v4240 = vpop.permute.xlu0 %4239
      %v4243 = vsel %vm1603, %v4092, 0
      %4245 = vmatprep.subr.bf16.mxu0 0
      %4246 = vmatpush1.bf16.msra.mxu0 %v4240
      %4247 = vmatprep.subr.bf16.mxu0 0
      %4248 = vmatpush1.bf16.msra.mxu0 0
      %4249 = vmatprep.subr.bf16.mxu0 0
      %4250 = vmatpush1.bf16.msra.mxu0 0
      %4251 = vmatprep.subr.bf16.mxu0 0
      %4252 = vmatpush1.bf16.msra.mxu0 0
      %4253 = vmatprep.subr.bf16.mxu0 0
      %4254 = vmatpush1.bf16.msra.mxu0 0
      %4255 = vmatprep.subr.bf16.mxu0 0
      %4256 = vmatpush1.bf16.msra.mxu0 0
      %4257 = vmatprep.subr.bf16.mxu0 0
      %4258 = vmatpush1.bf16.msra.mxu0 0
      %4259 = vmatprep.subr.bf16.mxu0 0
      %4260 = vmatpush1.bf16.msra.mxu0 0
      %4261 = vmatprep.subr.bf16.mxu0 0
      %4262 = vmatpush1.bf16.msra.mxu0 0
      %4263 = vmatprep.subr.bf16.mxu0 0
      %4264 = vmatpush1.bf16.msra.mxu0 0
      %4265 = vmatprep.subr.bf16.mxu0 0
      %4266 = vmatpush1.bf16.msra.mxu0 0
      %4267 = vmatprep.subr.bf16.mxu0 0
      %4268 = vmatpush1.bf16.msra.mxu0 0
      %4269 = vmatprep.subr.bf16.mxu0 0
      %4270 = vmatpush1.bf16.msra.mxu0 0
      %4271 = vmatprep.subr.bf16.mxu0 0
      %4272 = vmatpush1.bf16.msra.mxu0 0
      %4273 = vmatprep.subr.bf16.mxu0 0
      %4274 = vmatpush1.bf16.msra.mxu0 0
      %4275 = vmatprep.subr.bf16.mxu0 0
      %4276 = vmatpush1.bf16.msra.mxu0 0
      %4277 = vmatprep.mubr.bf16.mxu0 0
      %4278 = vmatmul.mubr.bf16.gmra.mrb[0].mxu0 %v4243
      %v4279 = vpop.f32.mrb[0].mxu0
      %v4280 = vadd.f32 0.0, %v4279
      %v4281 = vpop.f32.mrb[0].mxu0
      %v4282 = vpop.f32.mrb[0].mxu0
      %v4283 = vadd.f32 0.0, %v4282
      %v4284 = vpop.f32.mrb[0].mxu0
      %4285 = vdwg.mxu0
      %4286 = vrot.lane.b32.xlu0 %v1147, 48
      %v4287 = vpop.permute.xlu0 %4286
      %v4290 = vsel %vm1603, %v4093, 0
      %4292 = vmatprep.subr.bf16.mxu0 0
      %4293 = vmatpush1.bf16.msra.mxu0 %v4287
      %4294 = vmatprep.subr.bf16.mxu0 0
      %4295 = vmatpush1.bf16.msra.mxu0 0
      %4296 = vmatprep.subr.bf16.mxu0 0
      %4297 = vmatpush1.bf16.msra.mxu0 0
      %4298 = vmatprep.subr.bf16.mxu0 0
      %4299 = vmatpush1.bf16.msra.mxu0 0
      %4300 = vmatprep.subr.bf16.mxu0 0
      %4301 = vmatpush1.bf16.msra.mxu0 0
      %4302 = vmatprep.subr.bf16.mxu0 0
      %4303 = vmatpush1.bf16.msra.mxu0 0
      %4304 = vmatprep.subr.bf16.mxu0 0
      %4305 = vmatpush1.bf16.msra.mxu0 0
      %4306 = vmatprep.subr.bf16.mxu0 0
      %4307 = vmatpush1.bf16.msra.mxu0 0
      %4308 = vmatprep.subr.bf16.mxu0 0
      %4309 = vmatpush1.bf16.msra.mxu0 0
      %4310 = vmatprep.subr.bf16.mxu0 0
      %4311 = vmatpush1.bf16.msra.mxu0 0
      %4312 = vmatprep.subr.bf16.mxu0 0
      %4313 = vmatpush1.bf16.msra.mxu0 0
      %4314 = vmatprep.subr.bf16.mxu0 0
      %4315 = vmatpush1.bf16.msra.mxu0 0
      %4316 = vmatprep.subr.bf16.mxu0 0
      %4317 = vmatpush1.bf16.msra.mxu0 0
      %4318 = vmatprep.subr.bf16.mxu0 0
      %4319 = vmatpush1.bf16.msra.mxu0 0
      %4320 = vmatprep.subr.bf16.mxu0 0
      %4321 = vmatpush1.bf16.msra.mxu0 0
      %4322 = vmatprep.subr.bf16.mxu0 0
      %4323 = vmatpush1.bf16.msra.mxu0 0
      %4324 = vmatprep.mubr.bf16.mxu0 0
      %4325 = vmatmul.mubr.bf16.gmra.mrb[0].mxu0 %v4290
      %v4326 = vpop.f32.mrb[0].mxu0
      %v4327 = vadd.f32 0.0, %v4326
      %v4328 = vpop.f32.mrb[0].mxu0
      %v4329 = vpop.f32.mrb[0].mxu0
      %v4330 = vadd.f32 0.0, %v4329
      %v4331 = vpop.f32.mrb[0].mxu0
      %4332 = vdwg.mxu0
      %4333 = vrot.lane.b32.xlu0 %v1148, 48
      %v4334 = vpop.permute.xlu0 %4333
      %v4337 = vsel %vm1603, %v4094, 0
      %4339 = vmatprep.subr.bf16.mxu0 0
      %4340 = vmatpush1.bf16.msra.mxu0 %v4334
      %4341 = vmatprep.subr.bf16.mxu0 0
      %4342 = vmatpush1.bf16.msra.mxu0 0
      %4343 = vmatprep.subr.bf16.mxu0 0
      %4344 = vmatpush1.bf16.msra.mxu0 0
      %4345 = vmatprep.subr.bf16.mxu0 0
      %4346 = vmatpush1.bf16.msra.mxu0 0
      %4347 = vmatprep.subr.bf16.mxu0 0
      %4348 = vmatpush1.bf16.msra.mxu0 0
      %4349 = vmatprep.subr.bf16.mxu0 0
      %4350 = vmatpush1.bf16.msra.mxu0 0
      %4351 = vmatprep.subr.bf16.mxu0 0
      %4352 = vmatpush1.bf16.msra.mxu0 0
      %4353 = vmatprep.subr.bf16.mxu0 0
      %4354 = vmatpush1.bf16.msra.mxu0 0
      %4355 = vmatprep.subr.bf16.mxu0 0
      %4356 = vmatpush1.bf16.msra.mxu0 0
      %4357 = vmatprep.subr.bf16.mxu0 0
      %4358 = vmatpush1.bf16.msra.mxu0 0
      %4359 = vmatprep.subr.bf16.mxu0 0
      %4360 = vmatpush1.bf16.msra.mxu0 0
      %4361 = vmatprep.subr.bf16.mxu0 0
      %4362 = vmatpush1.bf16.msra.mxu0 0
      %4363 = vmatprep.subr.bf16.mxu0 0
      %4364 = vmatpush1.bf16.msra.mxu0 0
      %4365 = vmatprep.subr.bf16.mxu0 0
      %4366 = vmatpush1.bf16.msra.mxu0 0
      %4367 = vmatprep.subr.bf16.mxu0 0
      %4368 = vmatpush1.bf16.msra.mxu0 0
      %4369 = vmatprep.subr.bf16.mxu0 0
      %4370 = vmatpush1.bf16.msra.mxu0 0
      %4371 = vmatprep.mubr.bf16.mxu0 0
      %4372 = vmatmul.mubr.bf16.gmra.mrb[0].mxu0 %v4337
      %v4373 = vpop.f32.mrb[0].mxu0
      %v4374 = vadd.f32 0.0, %v4373
      %v4375 = vpop.f32.mrb[0].mxu0
      %v4376 = vpop.f32.mrb[0].mxu0
      %v4377 = vadd.f32 0.0, %v4376
      %v4378 = vpop.f32.mrb[0].mxu0
      %4379 = vdwg.mxu0
      %4380 = vrot.lane.b32.xlu0 %v1149, 48
      %v4381 = vpop.permute.xlu0 %4380
      %v4384 = vsel %vm1603, %v4095, 0
      %4386 = vmatprep.subr.bf16.mxu0 0
      %4387 = vmatpush1.bf16.msra.mxu0 %v4381
      %4388 = vmatprep.subr.bf16.mxu0 0
      %4389 = vmatpush1.bf16.msra.mxu0 0
      %4390 = vmatprep.subr.bf16.mxu0 0
      %4391 = vmatpush1.bf16.msra.mxu0 0
      %4392 = vmatprep.subr.bf16.mxu0 0
      %4393 = vmatpush1.bf16.msra.mxu0 0
      %4394 = vmatprep.subr.bf16.mxu0 0
      %4395 = vmatpush1.bf16.msra.mxu0 0
      %4396 = vmatprep.subr.bf16.mxu0 0
      %4397 = vmatpush1.bf16.msra.mxu0 0
      %4398 = vmatprep.subr.bf16.mxu0 0
      %4399 = vmatpush1.bf16.msra.mxu0 0
      %4400 = vmatprep.subr.bf16.mxu0 0
      %4401 = vmatpush1.bf16.msra.mxu0 0
      %4402 = vmatprep.subr.bf16.mxu0 0
      %4403 = vmatpush1.bf16.msra.mxu0 0
      %4404 = vmatprep.subr.bf16.mxu0 0
      %4405 = vmatpush1.bf16.msra.mxu0 0
      %4406 = vmatprep.subr.bf16.mxu0 0
      %4407 = vmatpush1.bf16.msra.mxu0 0
      %4408 = vmatprep.subr.bf16.mxu0 0
      %4409 = vmatpush1.bf16.msra.mxu0 0
      %4410 = vmatprep.subr.bf16.mxu0 0
      %4411 = vmatpush1.bf16.msra.mxu0 0
      %4412 = vmatprep.subr.bf16.mxu0 0
      %4413 = vmatpush1.bf16.msra.mxu0 0
      %4414 = vmatprep.subr.bf16.mxu0 0
      %4415 = vmatpush1.bf16.msra.mxu0 0
      %4416 = vmatprep.subr.bf16.mxu0 0
      %4417 = vmatpush1.bf16.msra.mxu0 0
      %4418 = vmatprep.mubr.bf16.mxu0 0
      %4419 = vmatmul.mubr.bf16.gmra.mrb[0].mxu0 %v4384
      %v4420 = vpop.f32.mrb[0].mxu0
      %v4421 = vadd.f32 0.0, %v4420
      %v4422 = vpop.f32.mrb[0].mxu0
      %v4423 = vpop.f32.mrb[0].mxu0
      %v4424 = vadd.f32 0.0, %v4423
      %v4425 = vpop.f32.mrb[0].mxu0
      %4426 = vdwg.mxu0
      %4427 = vrot.lane.b32.xlu0 %v1150, 48
      %v4428 = vpop.permute.xlu0 %4427
      %v4431 = vsel %vm1603, %v4096, 0
      %4433 = vmatprep.subr.bf16.mxu0 0
      %4434 = vmatpush1.bf16.msra.mxu0 %v4428
      %4435 = vmatprep.subr.bf16.mxu0 0
      %4436 = vmatpush1.bf16.msra.mxu0 0
      %4437 = vmatprep.subr.bf16.mxu0 0
      %4438 = vmatpush1.bf16.msra.mxu0 0
      %4439 = vmatprep.subr.bf16.mxu0 0
      %4440 = vmatpush1.bf16.msra.mxu0 0
      %4441 = vmatprep.subr.bf16.mxu0 0
      %4442 = vmatpush1.bf16.msra.mxu0 0
      %4443 = vmatprep.subr.bf16.mxu0 0
      %4444 = vmatpush1.bf16.msra.mxu0 0
      %4445 = vmatprep.subr.bf16.mxu0 0
      %4446 = vmatpush1.bf16.msra.mxu0 0
      %4447 = vmatprep.subr.bf16.mxu0 0
      %4448 = vmatpush1.bf16.msra.mxu0 0
      %4449 = vmatprep.subr.bf16.mxu0 0
      %4450 = vmatpush1.bf16.msra.mxu0 0
      %4451 = vmatprep.subr.bf16.mxu0 0
      %4452 = vmatpush1.bf16.msra.mxu0 0
      %4453 = vmatprep.subr.bf16.mxu0 0
      %4454 = vmatpush1.bf16.msra.mxu0 0
      %4455 = vmatprep.subr.bf16.mxu0 0
      %4456 = vmatpush1.bf16.msra.mxu0 0
      %4457 = vmatprep.subr.bf16.mxu0 0
      %4458 = vmatpush1.bf16.msra.mxu0 0
      %4459 = vmatprep.subr.bf16.mxu0 0
      %4460 = vmatpush1.bf16.msra.mxu0 0
      %4461 = vmatprep.subr.bf16.mxu0 0
      %4462 = vmatpush1.bf16.msra.mxu0 0
      %4463 = vmatprep.subr.bf16.mxu0 0
      %4464 = vmatpush1.bf16.msra.mxu0 0
      %4465 = vmatprep.mubr.bf16.mxu0 0
      %4466 = vmatmul.mubr.bf16.gmra.mrb[0].mxu0 %v4431
      %v4467 = vpop.f32.mrb[0].mxu0
      %v4468 = vadd.f32 0.0, %v4467
      %v4469 = vpop.f32.mrb[0].mxu0
      %v4470 = vpop.f32.mrb[0].mxu0
      %v4471 = vadd.f32 0.0, %v4470
      %v4472 = vpop.f32.mrb[0].mxu0
      %4473 = vdwg.mxu0
      %4474 = vrot.lane.b32.xlu0 %v1151, 48
      %v4475 = vpop.permute.xlu0 %4474
      %v4478 = vsel %vm1603, %v4097, 0
      %4480 = vmatprep.subr.bf16.mxu0 0
      %4481 = vmatpush1.bf16.msra.mxu0 %v4475
      %4482 = vmatprep.subr.bf16.mxu0 0
      %4483 = vmatpush1.bf16.msra.mxu0 0
      %4484 = vmatprep.subr.bf16.mxu0 0
      %4485 = vmatpush1.bf16.msra.mxu0 0
      %4486 = vmatprep.subr.bf16.mxu0 0
      %4487 = vmatpush1.bf16.msra.mxu0 0
      %4488 = vmatprep.subr.bf16.mxu0 0
      %4489 = vmatpush1.bf16.msra.mxu0 0
      %4490 = vmatprep.subr.bf16.mxu0 0
      %4491 = vmatpush1.bf16.msra.mxu0 0
      %4492 = vmatprep.subr.bf16.mxu0 0
      %4493 = vmatpush1.bf16.msra.mxu0 0
      %4494 = vmatprep.subr.bf16.mxu0 0
      %4495 = vmatpush1.bf16.msra.mxu0 0
      %4496 = vmatprep.subr.bf16.mxu0 0
      %4497 = vmatpush1.bf16.msra.mxu0 0
      %4498 = vmatprep.subr.bf16.mxu0 0
      %4499 = vmatpush1.bf16.msra.mxu0 0
      %4500 = vmatprep.subr.bf16.mxu0 0
      %4501 = vmatpush1.bf16.msra.mxu0 0
      %4502 = vmatprep.subr.bf16.mxu0 0
      %4503 = vmatpush1.bf16.msra.mxu0 0
      %4504 = vmatprep.subr.bf16.mxu0 0
      %4505 = vmatpush1.bf16.msra.mxu0 0
      %4506 = vmatprep.subr.bf16.mxu0 0
      %4507 = vmatpush1.bf16.msra.mxu0 0
      %4508 = vmatprep.subr.bf16.mxu0 0
      %4509 = vmatpush1.bf16.msra.mxu0 0
      %4510 = vmatprep.subr.bf16.mxu0 0
      %4511 = vmatpush1.bf16.msra.mxu0 0
      %4512 = vmatprep.mubr.bf16.mxu0 0
      %4513 = vmatmul.mubr.bf16.gmra.mrb[0].mxu0 %v4478
      %v4514 = vpop.f32.mrb[0].mxu0
      %v4515 = vadd.f32 0.0, %v4514
      %v4516 = vpop.f32.mrb[0].mxu0
      %v4517 = vpop.f32.mrb[0].mxu0
      %v4518 = vadd.f32 0.0, %v4517
      %v4519 = vpop.f32.mrb[0].mxu0
      %4520 = vdwg.mxu0
      %4539 = vrot.lane.b32.xlu0 %v4139, 16
      %v4540 = vpop.permute.xlu0 %4539
      %4541 = vrot.lane.b32.xlu0 %v4142, 16
      %v4542 = vpop.permute.xlu0 %4541
      %4543 = vrot.lane.b32.xlu0 %v4186, 16
      %v4544 = vpop.permute.xlu0 %4543
      %4545 = vrot.lane.b32.xlu0 %v4189, 16
      %v4546 = vpop.permute.xlu0 %4545
      %4547 = vrot.lane.b32.xlu0 %v4233, 16
      %v4548 = vpop.permute.xlu0 %4547
      %4549 = vrot.lane.b32.xlu0 %v4236, 16
      %v4550 = vpop.permute.xlu0 %4549
      %4551 = vrot.lane.b32.xlu0 %v4280, 16
      %v4552 = vpop.permute.xlu0 %4551
      %4553 = vrot.lane.b32.xlu0 %v4283, 16
      %v4554 = vpop.permute.xlu0 %4553
      %4555 = vrot.lane.b32.xlu0 %v4327, 16
      %v4556 = vpop.permute.xlu0 %4555
      %4557 = vrot.lane.b32.xlu0 %v4330, 16
      %v4558 = vpop.permute.xlu0 %4557
      %4559 = vrot.lane.b32.xlu0 %v4374, 16
      %v4560 = vpop.permute.xlu0 %4559
      %4561 = vrot.lane.b32.xlu0 %v4377, 16
      %v4562 = vpop.permute.xlu0 %4561
      %4563 = vrot.lane.b32.xlu0 %v4421, 16
      %v4564 = vpop.permute.xlu0 %4563
      %4565 = vrot.lane.b32.xlu0 %v4424, 16
      %v4566 = vpop.permute.xlu0 %4565
      %4567 = vrot.lane.b32.xlu0 %v4468, 16
      %v4568 = vpop.permute.xlu0 %4567
      %4569 = vrot.lane.b32.xlu0 %v4471, 16
      %v4570 = vpop.permute.xlu0 %4569
      %4571 = vrot.lane.b32.xlu0 %v4515, 16
      %v4572 = vpop.permute.xlu0 %4571
      %4573 = vrot.lane.b32.xlu0 %v4518, 16
      %v4574 = vpop.permute.xlu0 %4573
      %vm4593 = vcmask 195712
      %4594 = vst.msk [vmem:[#allocation2] sm:$0xff] %vm4593, %v4540
      %4595 = vst.msk [vmem:[#allocation2 + $0x8] sm:$0xff] %vm4593, %v4542
      %4596 = vst.msk [vmem:[#allocation2 + $0x10] sm:$0xff] %vm4593, %v4544
      %4597 = vst.msk [vmem:[#allocation2 + $0x18] sm:$0xff] %vm4593, %v4546
      %4598 = vst.msk [vmem:[#allocation2 + $0x20] sm:$0xff] %vm4593, %v4548
      %4599 = vst.msk [vmem:[#allocation2 + $0x28] sm:$0xff] %vm4593, %v4550
      %4600 = vst.msk [vmem:[#allocation2 + $0x30] sm:$0xff] %vm4593, %v4552
      %4601 = vst.msk [vmem:[#allocation2 + $0x38] sm:$0xff] %vm4593, %v4554
      %4602 = vst.msk [vmem:[#allocation2 + $0x40] sm:$0xff] %vm4593, %v4556
      %4603 = vst.msk [vmem:[#allocation2 + $0x48] sm:$0xff] %vm4593, %v4558
      %4604 = vst.msk [vmem:[#allocation2 + $0x50] sm:$0xff] %vm4593, %v4560
      %4605 = vst.msk [vmem:[#allocation2 + $0x58] sm:$0xff] %vm4593, %v4562
      %4606 = vst.msk [vmem:[#allocation2 + $0x60] sm:$0xff] %vm4593, %v4564
      %4607 = vst.msk [vmem:[#allocation2 + $0x68] sm:$0xff] %vm4593, %v4566
      %4608 = vst.msk [vmem:[#allocation2 + $0x70] sm:$0xff] %vm4593, %v4568
      %4609 = vst.msk [vmem:[#allocation2 + $0x78] sm:$0xff] %vm4593, %v4570
      %4610 = vst.msk [vmem:[#allocation2 + $0x80] sm:$0xff] %vm4593, %v4572
      %4611 = vst.msk [vmem:[#allocation2 + $0x88] sm:$0xff] %vm4593, %v4574
      %4612 = vrot.lane.b32.xlu0 %v1143, 104
      %v4613 = vpop.permute.xlu0 %4612
      %4614 = vrot.lane.b32.xlu0 %v1143, 72
      %v4615 = vpop.permute.xlu0 %4614
      %v4617 = vsel %vm1155, %v4613, 0
      %v4620 = vsel %vm1155, %v4615, 0
      %4622 = vmatprep.subr.bf16.mxu0 0
      %4623 = vmatpush1.bf16.xpose.msra.mxu0 %v4620
      %4624 = vmatprep.subr.bf16.mxu0 0
      %4625 = vmatpush1.bf16.xpose.msra.mxu0 0
      %4626 = vmatprep.subr.bf16.mxu0 0
      %4627 = vmatpush1.bf16.xpose.msra.mxu0 0
      %4628 = vmatprep.subr.bf16.mxu0 0
      %4629 = vmatpush1.bf16.xpose.msra.mxu0 0
      %4630 = vmatprep.subr.bf16.mxu0 0
      %4631 = vmatpush1.bf16.xpose.msra.mxu0 0
      %4632 = vmatprep.subr.bf16.mxu0 0
      %4633 = vmatpush1.bf16.xpose.msra.mxu0 0
      %4634 = vmatprep.subr.bf16.mxu0 0
      %4635 = vmatpush1.bf16.xpose.msra.mxu0 0
      %4636 = vmatprep.subr.bf16.mxu0 0
      %4637 = vmatpush1.bf16.xpose.msra.mxu0 0
      %4638 = vmatprep.subr.bf16.mxu0 0
      %4639 = vmatpush1.bf16.xpose.msra.mxu0 0
      %4640 = vmatprep.subr.bf16.mxu0 0
      %4641 = vmatpush1.bf16.xpose.msra.mxu0 0
      %4642 = vmatprep.subr.bf16.mxu0 0
      %4643 = vmatpush1.bf16.xpose.msra.mxu0 0
      %4644 = vmatprep.subr.bf16.mxu0 0
      %4645 = vmatpush1.bf16.xpose.msra.mxu0 0
      %4646 = vmatprep.subr.bf16.mxu0 0
      %4647 = vmatpush1.bf16.xpose.msra.mxu0 0
      %4648 = vmatprep.subr.bf16.mxu0 0
      %4649 = vmatpush1.bf16.xpose.msra.mxu0 0
      %4650 = vmatprep.subr.bf16.mxu0 0
      %4651 = vmatpush1.bf16.xpose.msra.mxu0 0
      %4652 = vmatprep.subr.bf16.mxu0 0
      %4653 = vmatpush1.bf16.xpose.msra.mxu0 0
      %4654 = vmatprep.mubr.bf16.mxu0 0
      %4655 = vmatmul.mubr.bf16.gmra.mrb[0].mxu0 %v4617
      %v4656 = vpop.f32.mrb[0].mxu0
      %v4657 = vadd.f32 %v606, %v4656
      %v4658 = vpop.f32.mrb[0].mxu0
      %v4659 = vpop.f32.mrb[0].mxu0
      %v4660 = vadd.f32 %v607, %v4659
      %v4661 = vpop.f32.mrb[0].mxu0
      %4662 = vdwg.mxu0
      %4663 = vrot.lane.b32.xlu0 %v1144, 104
      %v4664 = vpop.permute.xlu0 %4663
      %4665 = vrot.lane.b32.xlu0 %v1144, 72
      %v4666 = vpop.permute.xlu0 %4665
      %v4668 = vsel %vm1155, %v4664, 0
      %v4671 = vsel %vm1155, %v4666, 0
      %4673 = vmatprep.subr.bf16.mxu0 0
      %4674 = vmatpush1.bf16.xpose.msra.mxu0 %v4671
      %4675 = vmatprep.subr.bf16.mxu0 0
      %4676 = vmatpush1.bf16.xpose.msra.mxu0 0
      %4677 = vmatprep.subr.bf16.mxu0 0
      %4678 = vmatpush1.bf16.xpose.msra.mxu0 0
      %4679 = vmatprep.subr.bf16.mxu0 0
      %4680 = vmatpush1.bf16.xpose.msra.mxu0 0
      %4681 = vmatprep.subr.bf16.mxu0 0
      %4682 = vmatpush1.bf16.xpose.msra.mxu0 0
      %4683 = vmatprep.subr.bf16.mxu0 0
      %4684 = vmatpush1.bf16.xpose.msra.mxu0 0
      %4685 = vmatprep.subr.bf16.mxu0 0
      %4686 = vmatpush1.bf16.xpose.msra.mxu0 0
      %4687 = vmatprep.subr.bf16.mxu0 0
      %4688 = vmatpush1.bf16.xpose.msra.mxu0 0
      %4689 = vmatprep.subr.bf16.mxu0 0
      %4690 = vmatpush1.bf16.xpose.msra.mxu0 0
      %4691 = vmatprep.subr.bf16.mxu0 0
      %4692 = vmatpush1.bf16.xpose.msra.mxu0 0
      %4693 = vmatprep.subr.bf16.mxu0 0
      %4694 = vmatpush1.bf16.xpose.msra.mxu0 0
      %4695 = vmatprep.subr.bf16.mxu0 0
      %4696 = vmatpush1.bf16.xpose.msra.mxu0 0
      %4697 = vmatprep.subr.bf16.mxu0 0
      %4698 = vmatpush1.bf16.xpose.msra.mxu0 0
      %4699 = vmatprep.subr.bf16.mxu0 0
      %4700 = vmatpush1.bf16.xpose.msra.mxu0 0
      %4701 = vmatprep.subr.bf16.mxu0 0
      %4702 = vmatpush1.bf16.xpose.msra.mxu0 0
      %4703 = vmatprep.subr.bf16.mxu0 0
      %4704 = vmatpush1.bf16.xpose.msra.mxu0 0
      %4705 = vmatprep.mubr.bf16.mxu0 0
      %4706 = vmatmul.mubr.bf16.gmra.mrb[0].mxu0 %v4668
      %v4707 = vpop.f32.mrb[0].mxu0
      %v4708 = vadd.f32 %v608, %v4707
      %v4709 = vpop.f32.mrb[0].mxu0
      %v4710 = vpop.f32.mrb[0].mxu0
      %v4711 = vadd.f32 %v609, %v4710
      %v4712 = vpop.f32.mrb[0].mxu0
      %4713 = vdwg.mxu0
      %4714 = vrot.lane.b32.xlu0 %v1145, 104
      %v4715 = vpop.permute.xlu0 %4714
      %4716 = vrot.lane.b32.xlu0 %v1145, 72
      %v4717 = vpop.permute.xlu0 %4716
      %v4719 = vsel %vm1155, %v4715, 0
      %v4722 = vsel %vm1155, %v4717, 0
      %4724 = vmatprep.subr.bf16.mxu0 0
      %4725 = vmatpush1.bf16.xpose.msra.mxu0 %v4722
      %4726 = vmatprep.subr.bf16.mxu0 0
      %4727 = vmatpush1.bf16.xpose.msra.mxu0 0
      %4728 = vmatprep.subr.bf16.mxu0 0
      %4729 = vmatpush1.bf16.xpose.msra.mxu0 0
      %4730 = vmatprep.subr.bf16.mxu0 0
      %4731 = vmatpush1.bf16.xpose.msra.mxu0 0
      %4732 = vmatprep.subr.bf16.mxu0 0
      %4733 = vmatpush1.bf16.xpose.msra.mxu0 0
      %4734 = vmatprep.subr.bf16.mxu0 0
      %4735 = vmatpush1.bf16.xpose.msra.mxu0 0
      %4736 = vmatprep.subr.bf16.mxu0 0
      %4737 = vmatpush1.bf16.xpose.msra.mxu0 0
      %4738 = vmatprep.subr.bf16.mxu0 0
      %4739 = vmatpush1.bf16.xpose.msra.mxu0 0
      %4740 = vmatprep.subr.bf16.mxu0 0
      %4741 = vmatpush1.bf16.xpose.msra.mxu0 0
      %4742 = vmatprep.subr.bf16.mxu0 0
      %4743 = vmatpush1.bf16.xpose.msra.mxu0 0
      %4744 = vmatprep.subr.bf16.mxu0 0
      %4745 = vmatpush1.bf16.xpose.msra.mxu0 0
      %4746 = vmatprep.subr.bf16.mxu0 0
      %4747 = vmatpush1.bf16.xpose.msra.mxu0 0
      %4748 = vmatprep.subr.bf16.mxu0 0
      %4749 = vmatpush1.bf16.xpose.msra.mxu0 0
      %4750 = vmatprep.subr.bf16.mxu0 0
      %4751 = vmatpush1.bf16.xpose.msra.mxu0 0
      %4752 = vmatprep.subr.bf16.mxu0 0
      %4753 = vmatpush1.bf16.xpose.msra.mxu0 0
      %4754 = vmatprep.subr.bf16.mxu0 0
      %4755 = vmatpush1.bf16.xpose.msra.mxu0 0
      %4756 = vmatprep.mubr.bf16.mxu0 0
      %4757 = vmatmul.mubr.bf16.gmra.mrb[0].mxu0 %v4719
      %v4758 = vpop.f32.mrb[0].mxu0
      %v4759 = vadd.f32 %v610, %v4758
      %v4760 = vpop.f32.mrb[0].mxu0
      %v4761 = vpop.f32.mrb[0].mxu0
      %v4762 = vadd.f32 %v611, %v4761
      %v4763 = vpop.f32.mrb[0].mxu0
      %4764 = vdwg.mxu0
      %4765 = vrot.lane.b32.xlu0 %v1146, 104
      %v4766 = vpop.permute.xlu0 %4765
      %4767 = vrot.lane.b32.xlu0 %v1146, 72
      %v4768 = vpop.permute.xlu0 %4767
      %v4770 = vsel %vm1155, %v4766, 0
      %v4773 = vsel %vm1155, %v4768, 0
      %4775 = vmatprep.subr.bf16.mxu0 0
      %4776 = vmatpush1.bf16.xpose.msra.mxu0 %v4773
      %4777 = vmatprep.subr.bf16.mxu0 0
      %4778 = vmatpush1.bf16.xpose.msra.mxu0 0
      %4779 = vmatprep.subr.bf16.mxu0 0
      %4780 = vmatpush1.bf16.xpose.msra.mxu0 0
      %4781 = vmatprep.subr.bf16.mxu0 0
      %4782 = vmatpush1.bf16.xpose.msra.mxu0 0
      %4783 = vmatprep.subr.bf16.mxu0 0
      %4784 = vmatpush1.bf16.xpose.msra.mxu0 0
      %4785 = vmatprep.subr.bf16.mxu0 0
      %4786 = vmatpush1.bf16.xpose.msra.mxu0 0
      %4787 = vmatprep.subr.bf16.mxu0 0
      %4788 = vmatpush1.bf16.xpose.msra.mxu0 0
      %4789 = vmatprep.subr.bf16.mxu0 0
      %4790 = vmatpush1.bf16.xpose.msra.mxu0 0
      %4791 = vmatprep.subr.bf16.mxu0 0
      %4792 = vmatpush1.bf16.xpose.msra.mxu0 0
      %4793 = vmatprep.subr.bf16.mxu0 0
      %4794 = vmatpush1.bf16.xpose.msra.mxu0 0
      %4795 = vmatprep.subr.bf16.mxu0 0
      %4796 = vmatpush1.bf16.xpose.msra.mxu0 0
      %4797 = vmatprep.subr.bf16.mxu0 0
      %4798 = vmatpush1.bf16.xpose.msra.mxu0 0
      %4799 = vmatprep.subr.bf16.mxu0 0
      %4800 = vmatpush1.bf16.xpose.msra.mxu0 0
      %4801 = vmatprep.subr.bf16.mxu0 0
      %4802 = vmatpush1.bf16.xpose.msra.mxu0 0
      %4803 = vmatprep.subr.bf16.mxu0 0
      %4804 = vmatpush1.bf16.xpose.msra.mxu0 0
      %4805 = vmatprep.subr.bf16.mxu0 0
      %4806 = vmatpush1.bf16.xpose.msra.mxu0 0
      %4807 = vmatprep.mubr.bf16.mxu0 0
      %4808 = vmatmul.mubr.bf16.gmra.mrb[0].mxu0 %v4770
      %v4809 = vpop.f32.mrb[0].mxu0
      %v4810 = vadd.f32 %v612, %v4809
      %v4811 = vpop.f32.mrb[0].mxu0
      %v4812 = vpop.f32.mrb[0].mxu0
      %v4813 = vadd.f32 %v613, %v4812
      %v4814 = vpop.f32.mrb[0].mxu0
      %4815 = vdwg.mxu0
      %4816 = vrot.lane.b32.xlu0 %v1147, 104
      %v4817 = vpop.permute.xlu0 %4816
      %4818 = vrot.lane.b32.xlu0 %v1147, 72
      %v4819 = vpop.permute.xlu0 %4818
      %v4821 = vsel %vm1155, %v4817, 0
      %v4824 = vsel %vm1155, %v4819, 0
      %4826 = vmatprep.subr.bf16.mxu0 0
      %4827 = vmatpush1.bf16.xpose.msra.mxu0 %v4824
      %4828 = vmatprep.subr.bf16.mxu0 0
      %4829 = vmatpush1.bf16.xpose.msra.mxu0 0
      %4830 = vmatprep.subr.bf16.mxu0 0
      %4831 = vmatpush1.bf16.xpose.msra.mxu0 0
      %4832 = vmatprep.subr.bf16.mxu0 0
      %4833 = vmatpush1.bf16.xpose.msra.mxu0 0
      %4834 = vmatprep.subr.bf16.mxu0 0
      %4835 = vmatpush1.bf16.xpose.msra.mxu0 0
      %4836 = vmatprep.subr.bf16.mxu0 0
      %4837 = vmatpush1.bf16.xpose.msra.mxu0 0
      %4838 = vmatprep.subr.bf16.mxu0 0
      %4839 = vmatpush1.bf16.xpose.msra.mxu0 0
      %4840 = vmatprep.subr.bf16.mxu0 0
      %4841 = vmatpush1.bf16.xpose.msra.mxu0 0
      %4842 = vmatprep.subr.bf16.mxu0 0
      %4843 = vmatpush1.bf16.xpose.msra.mxu0 0
      %4844 = vmatprep.subr.bf16.mxu0 0
      %4845 = vmatpush1.bf16.xpose.msra.mxu0 0
      %4846 = vmatprep.subr.bf16.mxu0 0
      %4847 = vmatpush1.bf16.xpose.msra.mxu0 0
      %4848 = vmatprep.subr.bf16.mxu0 0
      %4849 = vmatpush1.bf16.xpose.msra.mxu0 0
      %4850 = vmatprep.subr.bf16.mxu0 0
      %4851 = vmatpush1.bf16.xpose.msra.mxu0 0
      %4852 = vmatprep.subr.bf16.mxu0 0
      %4853 = vmatpush1.bf16.xpose.msra.mxu0 0
      %4854 = vmatprep.subr.bf16.mxu0 0
      %4855 = vmatpush1.bf16.xpose.msra.mxu0 0
      %4856 = vmatprep.subr.bf16.mxu0 0
      %4857 = vmatpush1.bf16.xpose.msra.mxu0 0
      %4858 = vmatprep.mubr.bf16.mxu0 0
      %4859 = vmatmul.mubr.bf16.gmra.mrb[0].mxu0 %v4821
      %v4860 = vpop.f32.mrb[0].mxu0
      %v4861 = vadd.f32 %v614, %v4860
      %v4862 = vpop.f32.mrb[0].mxu0
      %v4863 = vpop.f32.mrb[0].mxu0
      %v4864 = vadd.f32 %v615, %v4863
      %v4865 = vpop.f32.mrb[0].mxu0
      %4866 = vdwg.mxu0
      %4867 = vrot.lane.b32.xlu0 %v1148, 104
      %v4868 = vpop.permute.xlu0 %4867
      %4869 = vrot.lane.b32.xlu0 %v1148, 72
      %v4870 = vpop.permute.xlu0 %4869
      %v4872 = vsel %vm1155, %v4868, 0
      %v4875 = vsel %vm1155, %v4870, 0
      %4877 = vmatprep.subr.bf16.mxu0 0
      %4878 = vmatpush1.bf16.xpose.msra.mxu0 %v4875
      %4879 = vmatprep.subr.bf16.mxu0 0
      %4880 = vmatpush1.bf16.xpose.msra.mxu0 0
      %4881 = vmatprep.subr.bf16.mxu0 0
      %4882 = vmatpush1.bf16.xpose.msra.mxu0 0
      %4883 = vmatprep.subr.bf16.mxu0 0
      %4884 = vmatpush1.bf16.xpose.msra.mxu0 0
      %4885 = vmatprep.subr.bf16.mxu0 0
      %4886 = vmatpush1.bf16.xpose.msra.mxu0 0
      %4887 = vmatprep.subr.bf16.mxu0 0
      %4888 = vmatpush1.bf16.xpose.msra.mxu0 0
      %4889 = vmatprep.subr.bf16.mxu0 0
      %4890 = vmatpush1.bf16.xpose.msra.mxu0 0
      %4891 = vmatprep.subr.bf16.mxu0 0
      %4892 = vmatpush1.bf16.xpose.msra.mxu0 0
      %4893 = vmatprep.subr.bf16.mxu0 0
      %4894 = vmatpush1.bf16.xpose.msra.mxu0 0
      %4895 = vmatprep.subr.bf16.mxu0 0
      %4896 = vmatpush1.bf16.xpose.msra.mxu0 0
      %4897 = vmatprep.subr.bf16.mxu0 0
      %4898 = vmatpush1.bf16.xpose.msra.mxu0 0
      %4899 = vmatprep.subr.bf16.mxu0 0
      %4900 = vmatpush1.bf16.xpose.msra.mxu0 0
      %4901 = vmatprep.subr.bf16.mxu0 0
      %4902 = vmatpush1.bf16.xpose.msra.mxu0 0
      %4903 = vmatprep.subr.bf16.mxu0 0
      %4904 = vmatpush1.bf16.xpose.msra.mxu0 0
      %4905 = vmatprep.subr.bf16.mxu0 0
      %4906 = vmatpush1.bf16.xpose.msra.mxu0 0
      %4907 = vmatprep.subr.bf16.mxu0 0
      %4908 = vmatpush1.bf16.xpose.msra.mxu0 0
      %4909 = vmatprep.mubr.bf16.mxu0 0
      %4910 = vmatmul.mubr.bf16.gmra.mrb[0].mxu0 %v4872
      %v4911 = vpop.f32.mrb[0].mxu0
      %v4912 = vadd.f32 %v616, %v4911
      %v4913 = vpop.f32.mrb[0].mxu0
      %v4914 = vpop.f32.mrb[0].mxu0
      %v4915 = vadd.f32 %v617, %v4914
      %v4916 = vpop.f32.mrb[0].mxu0
      %4917 = vdwg.mxu0
      %4918 = vrot.lane.b32.xlu0 %v1149, 104
      %v4919 = vpop.permute.xlu0 %4918
      %4920 = vrot.lane.b32.xlu0 %v1149, 72
      %v4921 = vpop.permute.xlu0 %4920
      %v4923 = vsel %vm1155, %v4919, 0
      %v4926 = vsel %vm1155, %v4921, 0
      %4928 = vmatprep.subr.bf16.mxu0 0
      %4929 = vmatpush1.bf16.xpose.msra.mxu0 %v4926
      %4930 = vmatprep.subr.bf16.mxu0 0
      %4931 = vmatpush1.bf16.xpose.msra.mxu0 0
      %4932 = vmatprep.subr.bf16.mxu0 0
      %4933 = vmatpush1.bf16.xpose.msra.mxu0 0
      %4934 = vmatprep.subr.bf16.mxu0 0
      %4935 = vmatpush1.bf16.xpose.msra.mxu0 0
      %4936 = vmatprep.subr.bf16.mxu0 0
      %4937 = vmatpush1.bf16.xpose.msra.mxu0 0
      %4938 = vmatprep.subr.bf16.mxu0 0
      %4939 = vmatpush1.bf16.xpose.msra.mxu0 0
      %4940 = vmatprep.subr.bf16.mxu0 0
      %4941 = vmatpush1.bf16.xpose.msra.mxu0 0
      %4942 = vmatprep.subr.bf16.mxu0 0
      %4943 = vmatpush1.bf16.xpose.msra.mxu0 0
      %4944 = vmatprep.subr.bf16.mxu0 0
      %4945 = vmatpush1.bf16.xpose.msra.mxu0 0
      %4946 = vmatprep.subr.bf16.mxu0 0
      %4947 = vmatpush1.bf16.xpose.msra.mxu0 0
      %4948 = vmatprep.subr.bf16.mxu0 0
      %4949 = vmatpush1.bf16.xpose.msra.mxu0 0
      %4950 = vmatprep.subr.bf16.mxu0 0
      %4951 = vmatpush1.bf16.xpose.msra.mxu0 0
      %4952 = vmatprep.subr.bf16.mxu0 0
      %4953 = vmatpush1.bf16.xpose.msra.mxu0 0
      %4954 = vmatprep.subr.bf16.mxu0 0
      %4955 = vmatpush1.bf16.xpose.msra.mxu0 0
      %4956 = vmatprep.subr.bf16.mxu0 0
      %4957 = vmatpush1.bf16.xpose.msra.mxu0 0
      %4958 = vmatprep.subr.bf16.mxu0 0
      %4959 = vmatpush1.bf16.xpose.msra.mxu0 0
      %4960 = vmatprep.mubr.bf16.mxu0 0
      %4961 = vmatmul.mubr.bf16.gmra.mrb[0].mxu0 %v4923
      %v4962 = vpop.f32.mrb[0].mxu0
      %v4963 = vadd.f32 %v618, %v4962
      %v4964 = vpop.f32.mrb[0].mxu0
      %v4965 = vpop.f32.mrb[0].mxu0
      %v4966 = vadd.f32 %v619, %v4965
      %v4967 = vpop.f32.mrb[0].mxu0
      %4968 = vdwg.mxu0
      %4969 = vrot.lane.b32.xlu0 %v1150, 104
      %v4970 = vpop.permute.xlu0 %4969
      %4971 = vrot.lane.b32.xlu0 %v1150, 72
      %v4972 = vpop.permute.xlu0 %4971
      %v4974 = vsel %vm1155, %v4970, 0
      %v4977 = vsel %vm1155, %v4972, 0
      %4979 = vmatprep.subr.bf16.mxu0 0
      %4980 = vmatpush1.bf16.xpose.msra.mxu0 %v4977
      %4981 = vmatprep.subr.bf16.mxu0 0
      %4982 = vmatpush1.bf16.xpose.msra.mxu0 0
      %4983 = vmatprep.subr.bf16.mxu0 0
      %4984 = vmatpush1.bf16.xpose.msra.mxu0 0
      %4985 = vmatprep.subr.bf16.mxu0 0
      %4986 = vmatpush1.bf16.xpose.msra.mxu0 0
      %4987 = vmatprep.subr.bf16.mxu0 0
      %4988 = vmatpush1.bf16.xpose.msra.mxu0 0
      %4989 = vmatprep.subr.bf16.mxu0 0
      %4990 = vmatpush1.bf16.xpose.msra.mxu0 0
      %4991 = vmatprep.subr.bf16.mxu0 0
      %4992 = vmatpush1.bf16.xpose.msra.mxu0 0
      %4993 = vmatprep.subr.bf16.mxu0 0
      %4994 = vmatpush1.bf16.xpose.msra.mxu0 0
      %4995 = vmatprep.subr.bf16.mxu0 0
      %4996 = vmatpush1.bf16.xpose.msra.mxu0 0
      %4997 = vmatprep.subr.bf16.mxu0 0
      %4998 = vmatpush1.bf16.xpose.msra.mxu0 0
      %4999 = vmatprep.subr.bf16.mxu0 0
      %5000 = vmatpush1.bf16.xpose.msra.mxu0 0
      %5001 = vmatprep.subr.bf16.mxu0 0
      %5002 = vmatpush1.bf16.xpose.msra.mxu0 0
      %5003 = vmatprep.subr.bf16.mxu0 0
      %5004 = vmatpush1.bf16.xpose.msra.mxu0 0
      %5005 = vmatprep.subr.bf16.mxu0 0
      %5006 = vmatpush1.bf16.xpose.msra.mxu0 0
      %5007 = vmatprep.subr.bf16.mxu0 0
      %5008 = vmatpush1.bf16.xpose.msra.mxu0 0
      %5009 = vmatprep.subr.bf16.mxu0 0
      %5010 = vmatpush1.bf16.xpose.msra.mxu0 0
      %5011 = vmatprep.mubr.bf16.mxu0 0
      %5012 = vmatmul.mubr.bf16.gmra.mrb[0].mxu0 %v4974
      %v5013 = vpop.f32.mrb[0].mxu0
      %v5014 = vadd.f32 %v620, %v5013
      %v5015 = vpop.f32.mrb[0].mxu0
      %v5016 = vpop.f32.mrb[0].mxu0
      %v5017 = vadd.f32 %v621, %v5016
      %v5018 = vpop.f32.mrb[0].mxu0
      %5019 = vdwg.mxu0
      %5020 = vrot.lane.b32.xlu0 %v1151, 104
      %v5021 = vpop.permute.xlu0 %5020
      %5022 = vrot.lane.b32.xlu0 %v1151, 72
      %v5023 = vpop.permute.xlu0 %5022
      %v5025 = vsel %vm1155, %v5021, 0
      %v5028 = vsel %vm1155, %v5023, 0
      %5030 = vmatprep.subr.bf16.mxu0 0
      %5031 = vmatpush1.bf16.xpose.msra.mxu0 %v5028
      %5032 = vmatprep.subr.bf16.mxu0 0
      %5033 = vmatpush1.bf16.xpose.msra.mxu0 0
      %5034 = vmatprep.subr.bf16.mxu0 0
      %5035 = vmatpush1.bf16.xpose.msra.mxu0 0
      %5036 = vmatprep.subr.bf16.mxu0 0
      %5037 = vmatpush1.bf16.xpose.msra.mxu0 0
      %5038 = vmatprep.subr.bf16.mxu0 0
      %5039 = vmatpush1.bf16.xpose.msra.mxu0 0
      %5040 = vmatprep.subr.bf16.mxu0 0
      %5041 = vmatpush1.bf16.xpose.msra.mxu0 0
      %5042 = vmatprep.subr.bf16.mxu0 0
      %5043 = vmatpush1.bf16.xpose.msra.mxu0 0
      %5044 = vmatprep.subr.bf16.mxu0 0
      %5045 = vmatpush1.bf16.xpose.msra.mxu0 0
      %5046 = vmatprep.subr.bf16.mxu0 0
      %5047 = vmatpush1.bf16.xpose.msra.mxu0 0
      %5048 = vmatprep.subr.bf16.mxu0 0
      %5049 = vmatpush1.bf16.xpose.msra.mxu0 0
      %5050 = vmatprep.subr.bf16.mxu0 0
      %5051 = vmatpush1.bf16.xpose.msra.mxu0 0
      %5052 = vmatprep.subr.bf16.mxu0 0
      %5053 = vmatpush1.bf16.xpose.msra.mxu0 0
      %5054 = vmatprep.subr.bf16.mxu0 0
      %5055 = vmatpush1.bf16.xpose.msra.mxu0 0
      %5056 = vmatprep.subr.bf16.mxu0 0
      %5057 = vmatpush1.bf16.xpose.msra.mxu0 0
      %5058 = vmatprep.subr.bf16.mxu0 0
      %5059 = vmatpush1.bf16.xpose.msra.mxu0 0
      %5060 = vmatprep.subr.bf16.mxu0 0
      %5061 = vmatpush1.bf16.xpose.msra.mxu0 0
      %5062 = vmatprep.mubr.bf16.mxu0 0
      %5063 = vmatmul.mubr.bf16.gmra.mrb[0].mxu0 %v5025
      %v5064 = vpop.f32.mrb[0].mxu0
      %v5065 = vadd.f32 %v622, %v5064
      %v5066 = vpop.f32.mrb[0].mxu0
      %v5067 = vpop.f32.mrb[0].mxu0
      %v5068 = vadd.f32 %v623, %v5067
      %v5069 = vpop.f32.mrb[0].mxu0
      %5070 = vdwg.mxu0
      %v5071 = vsel %vm1603, %v4657, -inf
      %5072 = vmax.xlane.f32.xlu0 %v5071
      %v5073 = vpop.xlane.xlu0 %5072
      %v5074 = vsel %vm1603, %v4660, -inf
      %5075 = vmax.xlane.f32.xlu0 %v5074
      %v5076 = vpop.xlane.xlu0 %5075
      %v5077 = vsel %vm1603, %v4708, -inf
      %5078 = vmax.xlane.f32.xlu0 %v5077
      %v5079 = vpop.xlane.xlu0 %5078
      %v5080 = vsel %vm1603, %v4711, -inf
      %5081 = vmax.xlane.f32.xlu0 %v5080
      %v5082 = vpop.xlane.xlu0 %5081
      %v5083 = vsel %vm1603, %v4759, -inf
      %5084 = vmax.xlane.f32.xlu0 %v5083
      %v5085 = vpop.xlane.xlu0 %5084
      %v5086 = vsel %vm1603, %v4762, -inf
      %5087 = vmax.xlane.f32.xlu0 %v5086
      %v5088 = vpop.xlane.xlu0 %5087
      %v5089 = vsel %vm1603, %v4810, -inf
      %5090 = vmax.xlane.f32.xlu0 %v5089
      %v5091 = vpop.xlane.xlu0 %5090
      %v5092 = vsel %vm1603, %v4813, -inf
      %5093 = vmax.xlane.f32.xlu0 %v5092
      %v5094 = vpop.xlane.xlu0 %5093
      %v5095 = vsel %vm1603, %v4861, -inf
      %5096 = vmax.xlane.f32.xlu0 %v5095
      %v5097 = vpop.xlane.xlu0 %5096
      %v5098 = vsel %vm1603, %v4864, -inf
      %5099 = vmax.xlane.f32.xlu0 %v5098
      %v5100 = vpop.xlane.xlu0 %5099
      %v5101 = vsel %vm1603, %v4912, -inf
      %5102 = vmax.xlane.f32.xlu0 %v5101
      %v5103 = vpop.xlane.xlu0 %5102
      %v5104 = vsel %vm1603, %v4915, -inf
      %5105 = vmax.xlane.f32.xlu0 %v5104
      %v5106 = vpop.xlane.xlu0 %5105
      %v5107 = vsel %vm1603, %v4963, -inf
      %5108 = vmax.xlane.f32.xlu0 %v5107
      %v5109 = vpop.xlane.xlu0 %5108
      %v5110 = vsel %vm1603, %v4966, -inf
      %5111 = vmax.xlane.f32.xlu0 %v5110
      %v5112 = vpop.xlane.xlu0 %5111
      %v5113 = vsel %vm1603, %v5014, -inf
      %5114 = vmax.xlane.f32.xlu0 %v5113
      %v5115 = vpop.xlane.xlu0 %5114
      %v5116 = vsel %vm1603, %v5017, -inf
      %5117 = vmax.xlane.f32.xlu0 %v5116
      %v5118 = vpop.xlane.xlu0 %5117
      %v5119 = vsel %vm1603, %v5065, -inf
      %5120 = vmax.xlane.f32.xlu0 %v5119
      %v5121 = vpop.xlane.xlu0 %5120
      %v5122 = vsel %vm1603, %v5068, -inf
      %5123 = vmax.xlane.f32.xlu0 %v5122
      %v5124 = vpop.xlane.xlu0 %5123
      %v5125 = vsub.f32 %v4657, %v5073
      %v5126 = vsub.f32 %v4660, %v5076
      %v5127 = vsub.f32 %v4708, %v5079
      %v5128 = vsub.f32 %v4711, %v5082
      %v5129 = vsub.f32 %v4759, %v5085
      %v5130 = vsub.f32 %v4762, %v5088
      %v5131 = vsub.f32 %v4810, %v5091
      %v5132 = vsub.f32 %v4813, %v5094
      %v5133 = vsub.f32 %v4861, %v5097
      %v5134 = vsub.f32 %v4864, %v5100
      %v5135 = vsub.f32 %v4912, %v5103
      %v5136 = vsub.f32 %v4915, %v5106
      %v5137 = vsub.f32 %v4963, %v5109
      %v5138 = vsub.f32 %v4966, %v5112
      %v5139 = vsub.f32 %v5014, %v5115
      %v5140 = vsub.f32 %v5017, %v5118
      %v5141 = vsub.f32 %v5065, %v5121
      %v5142 = vsub.f32 %v5068, %v5124
      %v5143 = vmul.f32 %v5125, 1.442695
      %v5144 = vpow.pop %v5143
      %v5145 = vmul.f32 %v5126, 1.442695
      %v5146 = vpow.pop %v5145
      %v5147 = vmul.f32 %v5127, 1.442695
      %v5148 = vpow.pop %v5147
      %v5149 = vmul.f32 %v5128, 1.442695
      %v5150 = vpow.pop %v5149
      %v5151 = vmul.f32 %v5129, 1.442695
      %v5152 = vpow.pop %v5151
      %v5153 = vmul.f32 %v5130, 1.442695
      %v5154 = vpow.pop %v5153
      %v5155 = vmul.f32 %v5131, 1.442695
      %v5156 = vpow.pop %v5155
      %v5157 = vmul.f32 %v5132, 1.442695
      %v5158 = vpow.pop %v5157
      %v5159 = vmul.f32 %v5133, 1.442695
      %v5160 = vpow.pop %v5159
      %v5161 = vmul.f32 %v5134, 1.442695
      %v5162 = vpow.pop %v5161
      %v5163 = vmul.f32 %v5135, 1.442695
      %v5164 = vpow.pop %v5163
      %v5165 = vmul.f32 %v5136, 1.442695
      %v5166 = vpow.pop %v5165
      %v5167 = vmul.f32 %v5137, 1.442695
      %v5168 = vpow.pop %v5167
      %v5169 = vmul.f32 %v5138, 1.442695
      %v5170 = vpow.pop %v5169
      %v5171 = vmul.f32 %v5139, 1.442695
      %v5172 = vpow.pop %v5171
      %v5173 = vmul.f32 %v5140, 1.442695
      %v5174 = vpow.pop %v5173
      %v5175 = vmul.f32 %v5141, 1.442695
      %v5176 = vpow.pop %v5175
      %v5177 = vmul.f32 %v5142, 1.442695
      %v5178 = vpow.pop %v5177
      %v5179 = vsel %vm1603, %v5144, 0.0
      %5180 = vadd.xlane.f32.xlu0 %v5179
      %v5181 = vpop.xlane.xlu0 %5180
      %v5182 = vsel %vm1603, %v5146, 0.0
      %5183 = vadd.xlane.f32.xlu0 %v5182
      %v5184 = vpop.xlane.xlu0 %5183
      %v5185 = vsel %vm1603, %v5148, 0.0
      %5186 = vadd.xlane.f32.xlu0 %v5185
      %v5187 = vpop.xlane.xlu0 %5186
      %v5188 = vsel %vm1603, %v5150, 0.0
      %5189 = vadd.xlane.f32.xlu0 %v5188
      %v5190 = vpop.xlane.xlu0 %5189
      %v5191 = vsel %vm1603, %v5152, 0.0
      %5192 = vadd.xlane.f32.xlu0 %v5191
      %v5193 = vpop.xlane.xlu0 %5192
      %v5194 = vsel %vm1603, %v5154, 0.0
      %5195 = vadd.xlane.f32.xlu0 %v5194
      %v5196 = vpop.xlane.xlu0 %5195
      %v5197 = vsel %vm1603, %v5156, 0.0
      %5198 = vadd.xlane.f32.xlu0 %v5197
      %v5199 = vpop.xlane.xlu0 %5198
      %v5200 = vsel %vm1603, %v5158, 0.0
      %5201 = vadd.xlane.f32.xlu0 %v5200
      %v5202 = vpop.xlane.xlu0 %5201
      %v5203 = vsel %vm1603, %v5160, 0.0
      %5204 = vadd.xlane.f32.xlu0 %v5203
      %v5205 = vpop.xlane.xlu0 %5204
      %v5206 = vsel %vm1603, %v5162, 0.0
      %5207 = vadd.xlane.f32.xlu0 %v5206
      %v5208 = vpop.xlane.xlu0 %5207
      %v5209 = vsel %vm1603, %v5164, 0.0
      %5210 = vadd.xlane.f32.xlu0 %v5209
      %v5211 = vpop.xlane.xlu0 %5210
      %v5212 = vsel %vm1603, %v5166, 0.0
      %5213 = vadd.xlane.f32.xlu0 %v5212
      %v5214 = vpop.xlane.xlu0 %5213
      %v5215 = vsel %vm1603, %v5168, 0.0
      %5216 = vadd.xlane.f32.xlu0 %v5215
      %v5217 = vpop.xlane.xlu0 %5216
      %v5218 = vsel %vm1603, %v5170, 0.0
      %5219 = vadd.xlane.f32.xlu0 %v5218
      %v5220 = vpop.xlane.xlu0 %5219
      %v5221 = vsel %vm1603, %v5172, 0.0
      %5222 = vadd.xlane.f32.xlu0 %v5221
      %v5223 = vpop.xlane.xlu0 %5222
      %v5224 = vsel %vm1603, %v5174, 0.0
      %5225 = vadd.xlane.f32.xlu0 %v5224
      %v5226 = vpop.xlane.xlu0 %5225
      %v5227 = vsel %vm1603, %v5176, 0.0
      %5228 = vadd.xlane.f32.xlu0 %v5227
      %v5229 = vpop.xlane.xlu0 %5228
      %v5230 = vsel %vm1603, %v5178, 0.0
      %5231 = vadd.xlane.f32.xlu0 %v5230
      %v5232 = vpop.xlane.xlu0 %5231
      %v5233 = vrcp.pop %v5181
      %v5234 = vrcp.pop %v5184
      %v5235 = vrcp.pop %v5187
      %v5236 = vrcp.pop %v5190
      %v5237 = vrcp.pop %v5193
      %v5238 = vrcp.pop %v5196
      %v5239 = vrcp.pop %v5199
      %v5240 = vrcp.pop %v5202
      %v5241 = vrcp.pop %v5205
      %v5242 = vrcp.pop %v5208
      %v5243 = vrcp.pop %v5211
      %v5244 = vrcp.pop %v5214
      %v5245 = vrcp.pop %v5217
      %v5246 = vrcp.pop %v5220
      %v5247 = vrcp.pop %v5223
      %v5248 = vrcp.pop %v5226
      %v5249 = vrcp.pop %v5229
      %v5250 = vrcp.pop %v5232
      %v5251 = vmul.f32 %v5144, %v5233
      %v5252 = vmul.f32 %v5146, %v5234
      %v5253 = vmul.f32 %v5148, %v5235
      %v5254 = vmul.f32 %v5150, %v5236
      %v5255 = vmul.f32 %v5152, %v5237
      %v5256 = vmul.f32 %v5154, %v5238
      %v5257 = vmul.f32 %v5156, %v5239
      %v5258 = vmul.f32 %v5158, %v5240
      %v5259 = vmul.f32 %v5160, %v5241
      %v5260 = vmul.f32 %v5162, %v5242
      %v5261 = vmul.f32 %v5164, %v5243
      %v5262 = vmul.f32 %v5166, %v5244
      %v5263 = vmul.f32 %v5168, %v5245
      %v5264 = vmul.f32 %v5170, %v5246
      %v5265 = vmul.f32 %v5172, %v5247
      %v5266 = vmul.f32 %v5174, %v5248
      %v5267 = vmul.f32 %v5176, %v5249
      %v5268 = vmul.f32 %v5178, %v5250
      %v5269 = vpack.c.bf16 %v5252, %v5251
      %v5270 = vpack.c.bf16 %v5254, %v5253
      %v5271 = vpack.c.bf16 %v5256, %v5255
      %v5272 = vpack.c.bf16 %v5258, %v5257
      %v5273 = vpack.c.bf16 %v5260, %v5259
      %v5274 = vpack.c.bf16 %v5262, %v5261
      %v5275 = vpack.c.bf16 %v5264, %v5263
      %v5276 = vpack.c.bf16 %v5266, %v5265
      %v5277 = vpack.c.bf16 %v5268, %v5267
      %5278 = vrot.lane.b32.xlu0 %v1143, 40
      %v5279 = vpop.permute.xlu0 %5278
      %v5282 = vsel %vm1603, %v5269, 0
      %5284 = vmatprep.subr.bf16.mxu0 0
      %5285 = vmatpush1.bf16.msra.mxu0 %v5279
      %5286 = vmatprep.subr.bf16.mxu0 0
      %5287 = vmatpush1.bf16.msra.mxu0 0
      %5288 = vmatprep.subr.bf16.mxu0 0
      %5289 = vmatpush1.bf16.msra.mxu0 0
      %5290 = vmatprep.subr.bf16.mxu0 0
      %5291 = vmatpush1.bf16.msra.mxu0 0
      %5292 = vmatprep.subr.bf16.mxu0 0
      %5293 = vmatpush1.bf16.msra.mxu0 0
      %5294 = vmatprep.subr.bf16.mxu0 0
      %5295 = vmatpush1.bf16.msra.mxu0 0
      %5296 = vmatprep.subr.bf16.mxu0 0
      %5297 = vmatpush1.bf16.msra.mxu0 0
      %5298 = vmatprep.subr.bf16.mxu0 0
      %5299 = vmatpush1.bf16.msra.mxu0 0
      %5300 = vmatprep.subr.bf16.mxu0 0
      %5301 = vmatpush1.bf16.msra.mxu0 0
      %5302 = vmatprep.subr.bf16.mxu0 0
      %5303 = vmatpush1.bf16.msra.mxu0 0
      %5304 = vmatprep.subr.bf16.mxu0 0
      %5305 = vmatpush1.bf16.msra.mxu0 0
      %5306 = vmatprep.subr.bf16.mxu0 0
      %5307 = vmatpush1.bf16.msra.mxu0 0
      %5308 = vmatprep.subr.bf16.mxu0 0
      %5309 = vmatpush1.bf16.msra.mxu0 0
      %5310 = vmatprep.subr.bf16.mxu0 0
      %5311 = vmatpush1.bf16.msra.mxu0 0
      %5312 = vmatprep.subr.bf16.mxu0 0
      %5313 = vmatpush1.bf16.msra.mxu0 0
      %5314 = vmatprep.subr.bf16.mxu0 0
      %5315 = vmatpush1.bf16.msra.mxu0 0
      %5316 = vmatprep.mubr.bf16.mxu0 0
      %5317 = vmatmul.mubr.bf16.gmra.mrb[0].mxu0 %v5282
      %v5318 = vpop.f32.mrb[0].mxu0
      %v5319 = vadd.f32 0.0, %v5318
      %v5320 = vpop.f32.mrb[0].mxu0
      %v5321 = vpop.f32.mrb[0].mxu0
      %v5322 = vadd.f32 0.0, %v5321
      %v5323 = vpop.f32.mrb[0].mxu0
      %5324 = vdwg.mxu0
      %5325 = vrot.lane.b32.xlu0 %v1144, 40
      %v5326 = vpop.permute.xlu0 %5325
      %v5329 = vsel %vm1603, %v5270, 0
      %5331 = vmatprep.subr.bf16.mxu0 0
      %5332 = vmatpush1.bf16.msra.mxu0 %v5326
      %5333 = vmatprep.subr.bf16.mxu0 0
      %5334 = vmatpush1.bf16.msra.mxu0 0
      %5335 = vmatprep.subr.bf16.mxu0 0
      %5336 = vmatpush1.bf16.msra.mxu0 0
      %5337 = vmatprep.subr.bf16.mxu0 0
      %5338 = vmatpush1.bf16.msra.mxu0 0
      %5339 = vmatprep.subr.bf16.mxu0 0
      %5340 = vmatpush1.bf16.msra.mxu0 0
      %5341 = vmatprep.subr.bf16.mxu0 0
      %5342 = vmatpush1.bf16.msra.mxu0 0
      %5343 = vmatprep.subr.bf16.mxu0 0
      %5344 = vmatpush1.bf16.msra.mxu0 0
      %5345 = vmatprep.subr.bf16.mxu0 0
      %5346 = vmatpush1.bf16.msra.mxu0 0
      %5347 = vmatprep.subr.bf16.mxu0 0
      %5348 = vmatpush1.bf16.msra.mxu0 0
      %5349 = vmatprep.subr.bf16.mxu0 0
      %5350 = vmatpush1.bf16.msra.mxu0 0
      %5351 = vmatprep.subr.bf16.mxu0 0
      %5352 = vmatpush1.bf16.msra.mxu0 0
      %5353 = vmatprep.subr.bf16.mxu0 0
      %5354 = vmatpush1.bf16.msra.mxu0 0
      %5355 = vmatprep.subr.bf16.mxu0 0
      %5356 = vmatpush1.bf16.msra.mxu0 0
      %5357 = vmatprep.subr.bf16.mxu0 0
      %5358 = vmatpush1.bf16.msra.mxu0 0
      %5359 = vmatprep.subr.bf16.mxu0 0
      %5360 = vmatpush1.bf16.msra.mxu0 0
      %5361 = vmatprep.subr.bf16.mxu0 0
      %5362 = vmatpush1.bf16.msra.mxu0 0
      %5363 = vmatprep.mubr.bf16.mxu0 0
      %5364 = vmatmul.mubr.bf16.gmra.mrb[0].mxu0 %v5329
      %v5365 = vpop.f32.mrb[0].mxu0
      %v5366 = vadd.f32 0.0, %v5365
      %v5367 = vpop.f32.mrb[0].mxu0
      %v5368 = vpop.f32.mrb[0].mxu0
      %v5369 = vadd.f32 0.0, %v5368
      %v5370 = vpop.f32.mrb[0].mxu0
      %5371 = vdwg.mxu0
      %5372 = vrot.lane.b32.xlu0 %v1145, 40
      %v5373 = vpop.permute.xlu0 %5372
      %v5376 = vsel %vm1603, %v5271, 0
      %5378 = vmatprep.subr.bf16.mxu0 0
      %5379 = vmatpush1.bf16.msra.mxu0 %v5373
      %5380 = vmatprep.subr.bf16.mxu0 0
      %5381 = vmatpush1.bf16.msra.mxu0 0
      %5382 = vmatprep.subr.bf16.mxu0 0
      %5383 = vmatpush1.bf16.msra.mxu0 0
      %5384 = vmatprep.subr.bf16.mxu0 0
      %5385 = vmatpush1.bf16.msra.mxu0 0
      %5386 = vmatprep.subr.bf16.mxu0 0
      %5387 = vmatpush1.bf16.msra.mxu0 0
      %5388 = vmatprep.subr.bf16.mxu0 0
      %5389 = vmatpush1.bf16.msra.mxu0 0
      %5390 = vmatprep.subr.bf16.mxu0 0
      %5391 = vmatpush1.bf16.msra.mxu0 0
      %5392 = vmatprep.subr.bf16.mxu0 0
      %5393 = vmatpush1.bf16.msra.mxu0 0
      %5394 = vmatprep.subr.bf16.mxu0 0
      %5395 = vmatpush1.bf16.msra.mxu0 0
      %5396 = vmatprep.subr.bf16.mxu0 0
      %5397 = vmatpush1.bf16.msra.mxu0 0
      %5398 = vmatprep.subr.bf16.mxu0 0
      %5399 = vmatpush1.bf16.msra.mxu0 0
      %5400 = vmatprep.subr.bf16.mxu0 0
      %5401 = vmatpush1.bf16.msra.mxu0 0
      %5402 = vmatprep.subr.bf16.mxu0 0
      %5403 = vmatpush1.bf16.msra.mxu0 0
      %5404 = vmatprep.subr.bf16.mxu0 0
      %5405 = vmatpush1.bf16.msra.mxu0 0
      %5406 = vmatprep.subr.bf16.mxu0 0
      %5407 = vmatpush1.bf16.msra.mxu0 0
      %5408 = vmatprep.subr.bf16.mxu0 0
      %5409 = vmatpush1.bf16.msra.mxu0 0
      %5410 = vmatprep.mubr.bf16.mxu0 0
      %5411 = vmatmul.mubr.bf16.gmra.mrb[0].mxu0 %v5376
      %v5412 = vpop.f32.mrb[0].mxu0
      %v5413 = vadd.f32 0.0, %v5412
      %v5414 = vpop.f32.mrb[0].mxu0
      %v5415 = vpop.f32.mrb[0].mxu0
      %v5416 = vadd.f32 0.0, %v5415
      %v5417 = vpop.f32.mrb[0].mxu0
      %5418 = vdwg.mxu0
      %5419 = vrot.lane.b32.xlu0 %v1146, 40
      %v5420 = vpop.permute.xlu0 %5419
      %v5423 = vsel %vm1603, %v5272, 0
      %5425 = vmatprep.subr.bf16.mxu0 0
      %5426 = vmatpush1.bf16.msra.mxu0 %v5420
      %5427 = vmatprep.subr.bf16.mxu0 0
      %5428 = vmatpush1.bf16.msra.mxu0 0
      %5429 = vmatprep.subr.bf16.mxu0 0
      %5430 = vmatpush1.bf16.msra.mxu0 0
      %5431 = vmatprep.subr.bf16.mxu0 0
      %5432 = vmatpush1.bf16.msra.mxu0 0
      %5433 = vmatprep.subr.bf16.mxu0 0
      %5434 = vmatpush1.bf16.msra.mxu0 0
      %5435 = vmatprep.subr.bf16.mxu0 0
      %5436 = vmatpush1.bf16.msra.mxu0 0
      %5437 = vmatprep.subr.bf16.mxu0 0
      %5438 = vmatpush1.bf16.msra.mxu0 0
      %5439 = vmatprep.subr.bf16.mxu0 0
      %5440 = vmatpush1.bf16.msra.mxu0 0
      %5441 = vmatprep.subr.bf16.mxu0 0
      %5442 = vmatpush1.bf16.msra.mxu0 0
      %5443 = vmatprep.subr.bf16.mxu0 0
      %5444 = vmatpush1.bf16.msra.mxu0 0
      %5445 = vmatprep.subr.bf16.mxu0 0
      %5446 = vmatpush1.bf16.msra.mxu0 0
      %5447 = vmatprep.subr.bf16.mxu0 0
      %5448 = vmatpush1.bf16.msra.mxu0 0
      %5449 = vmatprep.subr.bf16.mxu0 0
      %5450 = vmatpush1.bf16.msra.mxu0 0
      %5451 = vmatprep.subr.bf16.mxu0 0
      %5452 = vmatpush1.bf16.msra.mxu0 0
      %5453 = vmatprep.subr.bf16.mxu0 0
      %5454 = vmatpush1.bf16.msra.mxu0 0
      %5455 = vmatprep.subr.bf16.mxu0 0
      %5456 = vmatpush1.bf16.msra.mxu0 0
      %5457 = vmatprep.mubr.bf16.mxu0 0
      %5458 = vmatmul.mubr.bf16.gmra.mrb[0].mxu0 %v5423
      %v5459 = vpop.f32.mrb[0].mxu0
      %v5460 = vadd.f32 0.0, %v5459
      %v5461 = vpop.f32.mrb[0].mxu0
      %v5462 = vpop.f32.mrb[0].mxu0
      %v5463 = vadd.f32 0.0, %v5462
      %v5464 = vpop.f32.mrb[0].mxu0
      %5465 = vdwg.mxu0
      %5466 = vrot.lane.b32.xlu0 %v1147, 40
      %v5467 = vpop.permute.xlu0 %5466
      %v5470 = vsel %vm1603, %v5273, 0
      %5472 = vmatprep.subr.bf16.mxu0 0
      %5473 = vmatpush1.bf16.msra.mxu0 %v5467
      %5474 = vmatprep.subr.bf16.mxu0 0
      %5475 = vmatpush1.bf16.msra.mxu0 0
      %5476 = vmatprep.subr.bf16.mxu0 0
      %5477 = vmatpush1.bf16.msra.mxu0 0
      %5478 = vmatprep.subr.bf16.mxu0 0
      %5479 = vmatpush1.bf16.msra.mxu0 0
      %5480 = vmatprep.subr.bf16.mxu0 0
      %5481 = vmatpush1.bf16.msra.mxu0 0
      %5482 = vmatprep.subr.bf16.mxu0 0
      %5483 = vmatpush1.bf16.msra.mxu0 0
      %5484 = vmatprep.subr.bf16.mxu0 0
      %5485 = vmatpush1.bf16.msra.mxu0 0
      %5486 = vmatprep.subr.bf16.mxu0 0
      %5487 = vmatpush1.bf16.msra.mxu0 0
      %5488 = vmatprep.subr.bf16.mxu0 0
      %5489 = vmatpush1.bf16.msra.mxu0 0
      %5490 = vmatprep.subr.bf16.mxu0 0
      %5491 = vmatpush1.bf16.msra.mxu0 0
      %5492 = vmatprep.subr.bf16.mxu0 0
      %5493 = vmatpush1.bf16.msra.mxu0 0
      %5494 = vmatprep.subr.bf16.mxu0 0
      %5495 = vmatpush1.bf16.msra.mxu0 0
      %5496 = vmatprep.subr.bf16.mxu0 0
      %5497 = vmatpush1.bf16.msra.mxu0 0
      %5498 = vmatprep.subr.bf16.mxu0 0
      %5499 = vmatpush1.bf16.msra.mxu0 0
      %5500 = vmatprep.subr.bf16.mxu0 0
      %5501 = vmatpush1.bf16.msra.mxu0 0
      %5502 = vmatprep.subr.bf16.mxu0 0
      %5503 = vmatpush1.bf16.msra.mxu0 0
      %5504 = vmatprep.mubr.bf16.mxu0 0
      %5505 = vmatmul.mubr.bf16.gmra.mrb[0].mxu0 %v5470
      %v5506 = vpop.f32.mrb[0].mxu0
      %v5507 = vadd.f32 0.0, %v5506
      %v5508 = vpop.f32.mrb[0].mxu0
      %v5509 = vpop.f32.mrb[0].mxu0
      %v5510 = vadd.f32 0.0, %v5509
      %v5511 = vpop.f32.mrb[0].mxu0
      %5512 = vdwg.mxu0
      %5513 = vrot.lane.b32.xlu0 %v1148, 40
      %v5514 = vpop.permute.xlu0 %5513
      %v5517 = vsel %vm1603, %v5274, 0
      %5519 = vmatprep.subr.bf16.mxu0 0
      %5520 = vmatpush1.bf16.msra.mxu0 %v5514
      %5521 = vmatprep.subr.bf16.mxu0 0
      %5522 = vmatpush1.bf16.msra.mxu0 0
      %5523 = vmatprep.subr.bf16.mxu0 0
      %5524 = vmatpush1.bf16.msra.mxu0 0
      %5525 = vmatprep.subr.bf16.mxu0 0
      %5526 = vmatpush1.bf16.msra.mxu0 0
      %5527 = vmatprep.subr.bf16.mxu0 0
      %5528 = vmatpush1.bf16.msra.mxu0 0
      %5529 = vmatprep.subr.bf16.mxu0 0
      %5530 = vmatpush1.bf16.msra.mxu0 0
      %5531 = vmatprep.subr.bf16.mxu0 0
      %5532 = vmatpush1.bf16.msra.mxu0 0
      %5533 = vmatprep.subr.bf16.mxu0 0
      %5534 = vmatpush1.bf16.msra.mxu0 0
      %5535 = vmatprep.subr.bf16.mxu0 0
      %5536 = vmatpush1.bf16.msra.mxu0 0
      %5537 = vmatprep.subr.bf16.mxu0 0
      %5538 = vmatpush1.bf16.msra.mxu0 0
      %5539 = vmatprep.subr.bf16.mxu0 0
      %5540 = vmatpush1.bf16.msra.mxu0 0
      %5541 = vmatprep.subr.bf16.mxu0 0
      %5542 = vmatpush1.bf16.msra.mxu0 0
      %5543 = vmatprep.subr.bf16.mxu0 0
      %5544 = vmatpush1.bf16.msra.mxu0 0
      %5545 = vmatprep.subr.bf16.mxu0 0
      %5546 = vmatpush1.bf16.msra.mxu0 0
      %5547 = vmatprep.subr.bf16.mxu0 0
      %5548 = vmatpush1.bf16.msra.mxu0 0
      %5549 = vmatprep.subr.bf16.mxu0 0
      %5550 = vmatpush1.bf16.msra.mxu0 0
      %5551 = vmatprep.mubr.bf16.mxu0 0
      %5552 = vmatmul.mubr.bf16.gmra.mrb[0].mxu0 %v5517
      %v5553 = vpop.f32.mrb[0].mxu0
      %v5554 = vadd.f32 0.0, %v5553
      %v5555 = vpop.f32.mrb[0].mxu0
      %v5556 = vpop.f32.mrb[0].mxu0
      %v5557 = vadd.f32 0.0, %v5556
      %v5558 = vpop.f32.mrb[0].mxu0
      %5559 = vdwg.mxu0
      %5560 = vrot.lane.b32.xlu0 %v1149, 40
      %v5561 = vpop.permute.xlu0 %5560
      %v5564 = vsel %vm1603, %v5275, 0
      %5566 = vmatprep.subr.bf16.mxu0 0
      %5567 = vmatpush1.bf16.msra.mxu0 %v5561
      %5568 = vmatprep.subr.bf16.mxu0 0
      %5569 = vmatpush1.bf16.msra.mxu0 0
      %5570 = vmatprep.subr.bf16.mxu0 0
      %5571 = vmatpush1.bf16.msra.mxu0 0
      %5572 = vmatprep.subr.bf16.mxu0 0
      %5573 = vmatpush1.bf16.msra.mxu0 0
      %5574 = vmatprep.subr.bf16.mxu0 0
      %5575 = vmatpush1.bf16.msra.mxu0 0
      %5576 = vmatprep.subr.bf16.mxu0 0
      %5577 = vmatpush1.bf16.msra.mxu0 0
      %5578 = vmatprep.subr.bf16.mxu0 0
      %5579 = vmatpush1.bf16.msra.mxu0 0
      %5580 = vmatprep.subr.bf16.mxu0 0
      %5581 = vmatpush1.bf16.msra.mxu0 0
      %5582 = vmatprep.subr.bf16.mxu0 0
      %5583 = vmatpush1.bf16.msra.mxu0 0
      %5584 = vmatprep.subr.bf16.mxu0 0
      %5585 = vmatpush1.bf16.msra.mxu0 0
      %5586 = vmatprep.subr.bf16.mxu0 0
      %5587 = vmatpush1.bf16.msra.mxu0 0
      %5588 = vmatprep.subr.bf16.mxu0 0
      %5589 = vmatpush1.bf16.msra.mxu0 0
      %5590 = vmatprep.subr.bf16.mxu0 0
      %5591 = vmatpush1.bf16.msra.mxu0 0
      %5592 = vmatprep.subr.bf16.mxu0 0
      %5593 = vmatpush1.bf16.msra.mxu0 0
      %5594 = vmatprep.subr.bf16.mxu0 0
      %5595 = vmatpush1.bf16.msra.mxu0 0
      %5596 = vmatprep.subr.bf16.mxu0 0
      %5597 = vmatpush1.bf16.msra.mxu0 0
      %5598 = vmatprep.mubr.bf16.mxu0 0
      %5599 = vmatmul.mubr.bf16.gmra.mrb[0].mxu0 %v5564
      %v5600 = vpop.f32.mrb[0].mxu0
      %v5601 = vadd.f32 0.0, %v5600
      %v5602 = vpop.f32.mrb[0].mxu0
      %v5603 = vpop.f32.mrb[0].mxu0
      %v5604 = vadd.f32 0.0, %v5603
      %v5605 = vpop.f32.mrb[0].mxu0
      %5606 = vdwg.mxu0
      %5607 = vrot.lane.b32.xlu0 %v1150, 40
      %v5608 = vpop.permute.xlu0 %5607
      %v5611 = vsel %vm1603, %v5276, 0
      %5613 = vmatprep.subr.bf16.mxu0 0
      %5614 = vmatpush1.bf16.msra.mxu0 %v5608
      %5615 = vmatprep.subr.bf16.mxu0 0
      %5616 = vmatpush1.bf16.msra.mxu0 0
      %5617 = vmatprep.subr.bf16.mxu0 0
      %5618 = vmatpush1.bf16.msra.mxu0 0
      %5619 = vmatprep.subr.bf16.mxu0 0
      %5620 = vmatpush1.bf16.msra.mxu0 0
      %5621 = vmatprep.subr.bf16.mxu0 0
      %5622 = vmatpush1.bf16.msra.mxu0 0
      %5623 = vmatprep.subr.bf16.mxu0 0
      %5624 = vmatpush1.bf16.msra.mxu0 0
      %5625 = vmatprep.subr.bf16.mxu0 0
      %5626 = vmatpush1.bf16.msra.mxu0 0
      %5627 = vmatprep.subr.bf16.mxu0 0
      %5628 = vmatpush1.bf16.msra.mxu0 0
      %5629 = vmatprep.subr.bf16.mxu0 0
      %5630 = vmatpush1.bf16.msra.mxu0 0
      %5631 = vmatprep.subr.bf16.mxu0 0
      %5632 = vmatpush1.bf16.msra.mxu0 0
      %5633 = vmatprep.subr.bf16.mxu0 0
      %5634 = vmatpush1.bf16.msra.mxu0 0
      %5635 = vmatprep.subr.bf16.mxu0 0
      %5636 = vmatpush1.bf16.msra.mxu0 0
      %5637 = vmatprep.subr.bf16.mxu0 0
      %5638 = vmatpush1.bf16.msra.mxu0 0
      %5639 = vmatprep.subr.bf16.mxu0 0
      %5640 = vmatpush1.bf16.msra.mxu0 0
      %5641 = vmatprep.subr.bf16.mxu0 0
      %5642 = vmatpush1.bf16.msra.mxu0 0
      %5643 = vmatprep.subr.bf16.mxu0 0
      %5644 = vmatpush1.bf16.msra.mxu0 0
      %5645 = vmatprep.mubr.bf16.mxu0 0
      %5646 = vmatmul.mubr.bf16.gmra.mrb[0].mxu0 %v5611
      %v5647 = vpop.f32.mrb[0].mxu0
      %v5648 = vadd.f32 0.0, %v5647
      %v5649 = vpop.f32.mrb[0].mxu0
      %v5650 = vpop.f32.mrb[0].mxu0
      %v5651 = vadd.f32 0.0, %v5650
      %v5652 = vpop.f32.mrb[0].mxu0
      %5653 = vdwg.mxu0
      %5654 = vrot.lane.b32.xlu0 %v1151, 40
      %v5655 = vpop.permute.xlu0 %5654
      %v5658 = vsel %vm1603, %v5277, 0
      %5660 = vmatprep.subr.bf16.mxu0 0
      %5661 = vmatpush1.bf16.msra.mxu0 %v5655
      %5662 = vmatprep.subr.bf16.mxu0 0
      %5663 = vmatpush1.bf16.msra.mxu0 0
      %5664 = vmatprep.subr.bf16.mxu0 0
      %5665 = vmatpush1.bf16.msra.mxu0 0
      %5666 = vmatprep.subr.bf16.mxu0 0
      %5667 = vmatpush1.bf16.msra.mxu0 0
      %5668 = vmatprep.subr.bf16.mxu0 0
      %5669 = vmatpush1.bf16.msra.mxu0 0
      %5670 = vmatprep.subr.bf16.mxu0 0
      %5671 = vmatpush1.bf16.msra.mxu0 0
      %5672 = vmatprep.subr.bf16.mxu0 0
      %5673 = vmatpush1.bf16.msra.mxu0 0
      %5674 = vmatprep.subr.bf16.mxu0 0
      %5675 = vmatpush1.bf16.msra.mxu0 0
      %5676 = vmatprep.subr.bf16.mxu0 0
      %5677 = vmatpush1.bf16.msra.mxu0 0
      %5678 = vmatprep.subr.bf16.mxu0 0
      %5679 = vmatpush1.bf16.msra.mxu0 0
      %5680 = vmatprep.subr.bf16.mxu0 0
      %5681 = vmatpush1.bf16.msra.mxu0 0
      %5682 = vmatprep.subr.bf16.mxu0 0
      %5683 = vmatpush1.bf16.msra.mxu0 0
      %5684 = vmatprep.subr.bf16.mxu0 0
      %5685 = vmatpush1.bf16.msra.mxu0 0
      %5686 = vmatprep.subr.bf16.mxu0 0
      %5687 = vmatpush1.bf16.msra.mxu0 0
      %5688 = vmatprep.subr.bf16.mxu0 0
      %5689 = vmatpush1.bf16.msra.mxu0 0
      %5690 = vmatprep.subr.bf16.mxu0 0
      %5691 = vmatpush1.bf16.msra.mxu0 0
      %5692 = vmatprep.mubr.bf16.mxu0 0
      %5693 = vmatmul.mubr.bf16.gmra.mrb[0].mxu0 %v5658
      %v5694 = vpop.f32.mrb[0].mxu0
      %v5695 = vadd.f32 0.0, %v5694
      %v5696 = vpop.f32.mrb[0].mxu0
      %v5697 = vpop.f32.mrb[0].mxu0
      %v5698 = vadd.f32 0.0, %v5697
      %v5699 = vpop.f32.mrb[0].mxu0
      %5700 = vdwg.mxu0
      %5719 = vrot.lane.b32.xlu0 %v5319, 24
      %v5720 = vpop.permute.xlu0 %5719
      %5721 = vrot.lane.b32.xlu0 %v5322, 24
      %v5722 = vpop.permute.xlu0 %5721
      %5723 = vrot.lane.b32.xlu0 %v5366, 24
      %v5724 = vpop.permute.xlu0 %5723
      %5725 = vrot.lane.b32.xlu0 %v5369, 24
      %v5726 = vpop.permute.xlu0 %5725
      %5727 = vrot.lane.b32.xlu0 %v5413, 24
      %v5728 = vpop.permute.xlu0 %5727
      %5729 = vrot.lane.b32.xlu0 %v5416, 24
      %v5730 = vpop.permute.xlu0 %5729
      %5731 = vrot.lane.b32.xlu0 %v5460, 24
      %v5732 = vpop.permute.xlu0 %5731
      %5733 = vrot.lane.b32.xlu0 %v5463, 24
      %v5734 = vpop.permute.xlu0 %5733
      %5735 = vrot.lane.b32.xlu0 %v5507, 24
      %v5736 = vpop.permute.xlu0 %5735
      %5737 = vrot.lane.b32.xlu0 %v5510, 24
      %v5738 = vpop.permute.xlu0 %5737
      %5739 = vrot.lane.b32.xlu0 %v5554, 24
      %v5740 = vpop.permute.xlu0 %5739
      %5741 = vrot.lane.b32.xlu0 %v5557, 24
      %v5742 = vpop.permute.xlu0 %5741
      %5743 = vrot.lane.b32.xlu0 %v5601, 24
      %v5744 = vpop.permute.xlu0 %5743
      %5745 = vrot.lane.b32.xlu0 %v5604, 24
      %v5746 = vpop.permute.xlu0 %5745
      %5747 = vrot.lane.b32.xlu0 %v5648, 24
      %v5748 = vpop.permute.xlu0 %5747
      %5749 = vrot.lane.b32.xlu0 %v5651, 24
      %v5750 = vpop.permute.xlu0 %5749
      %5751 = vrot.lane.b32.xlu0 %v5695, 24
      %v5752 = vpop.permute.xlu0 %5751
      %5753 = vrot.lane.b32.xlu0 %v5698, 24
      %v5754 = vpop.permute.xlu0 %5753
      %vm5773 = vcmask 261312
      %5774 = vst.msk [vmem:[#allocation2] sm:$0xff] %vm5773, %v5720
      %5775 = vst.msk [vmem:[#allocation2 + $0x8] sm:$0xff] %vm5773, %v5722
      %5776 = vst.msk [vmem:[#allocation2 + $0x10] sm:$0xff] %vm5773, %v5724
      %5777 = vst.msk [vmem:[#allocation2 + $0x18] sm:$0xff] %vm5773, %v5726
      %5778 = vst.msk [vmem:[#allocation2 + $0x20] sm:$0xff] %vm5773, %v5728
      %5779 = vst.msk [vmem:[#allocation2 + $0x28] sm:$0xff] %vm5773, %v5730
      %5780 = vst.msk [vmem:[#allocation2 + $0x30] sm:$0xff] %vm5773, %v5732
      %5781 = vst.msk [vmem:[#allocation2 + $0x38] sm:$0xff] %vm5773, %v5734
      %5782 = vst.msk [vmem:[#allocation2 + $0x40] sm:$0xff] %vm5773, %v5736
      %5783 = vst.msk [vmem:[#allocation2 + $0x48] sm:$0xff] %vm5773, %v5738
      %5784 = vst.msk [vmem:[#allocation2 + $0x50] sm:$0xff] %vm5773, %v5740
      %5785 = vst.msk [vmem:[#allocation2 + $0x58] sm:$0xff] %vm5773, %v5742
      %5786 = vst.msk [vmem:[#allocation2 + $0x60] sm:$0xff] %vm5773, %v5744
      %5787 = vst.msk [vmem:[#allocation2 + $0x68] sm:$0xff] %vm5773, %v5746
      %5788 = vst.msk [vmem:[#allocation2 + $0x70] sm:$0xff] %vm5773, %v5748
      %5789 = vst.msk [vmem:[#allocation2 + $0x78] sm:$0xff] %vm5773, %v5750
      %5790 = vst.msk [vmem:[#allocation2 + $0x80] sm:$0xff] %vm5773, %v5752
      %5791 = vst.msk [vmem:[#allocation2 + $0x88] sm:$0xff] %vm5773, %v5754
      %v5792 = vld [vmem:[#allocation2] sm:$0xff]
      %v5793 = vld [vmem:[#allocation2 + $0x8] sm:$0xff]
      %v5794 = vld [vmem:[#allocation2 + $0x10] sm:$0xff]
      %v5795 = vld [vmem:[#allocation2 + $0x18] sm:$0xff]
      %v5796 = vld [vmem:[#allocation2 + $0x20] sm:$0xff]
      %v5797 = vld [vmem:[#allocation2 + $0x28] sm:$0xff]
      %v5798 = vld [vmem:[#allocation2 + $0x30] sm:$0xff]
      %v5799 = vld [vmem:[#allocation2 + $0x38] sm:$0xff]
      %v5800 = vld [vmem:[#allocation2 + $0x40] sm:$0xff]
      %v5801 = vld [vmem:[#allocation2 + $0x48] sm:$0xff]
      %v5802 = vld [vmem:[#allocation2 + $0x50] sm:$0xff]
      %v5803 = vld [vmem:[#allocation2 + $0x58] sm:$0xff]
      %v5804 = vld [vmem:[#allocation2 + $0x60] sm:$0xff]
      %v5805 = vld [vmem:[#allocation2 + $0x68] sm:$0xff]
      %v5806 = vld [vmem:[#allocation2 + $0x70] sm:$0xff]
      %v5807 = vld [vmem:[#allocation2 + $0x78] sm:$0xff]
      %v5808 = vld [vmem:[#allocation2 + $0x80] sm:$0xff]
      %v5809 = vld [vmem:[#allocation2 + $0x88] sm:$0xff]
      %v5810 = vpack.c.bf16 %v5793, %v5792
      %v5811 = vpack.c.bf16 %v5795, %v5794
      %v5812 = vpack.c.bf16 %v5797, %v5796
      %v5813 = vpack.c.bf16 %v5799, %v5798
      %v5814 = vpack.c.bf16 %v5801, %v5800
      %v5815 = vpack.c.bf16 %v5803, %v5802
      %v5816 = vpack.c.bf16 %v5805, %v5804
      %v5817 = vpack.c.bf16 %v5807, %v5806
      %v5818 = vpack.c.bf16 %v5809, %v5808
      %v5820 = vlaneseq
      %v5821 = vshrl.u32 %v5820, 7
      %v5822 = vsub.s32 0, %v5821
      %v5823 = vrot.slane %v633, %v5822
      %v5829 = vunpack.c.l.b16 %v629
      %v5830 = vunpack.c.l.b16 %v630
      %v5831 = vunpack.c.l.b16 %v631
      %v5832 = vunpack.c.l.b16 %v632
      %v5833 = vpack.c.b16 %v5830, %v5829
      %v5834 = vpack.c.b16 %v5832, %v5831
      %v5838 = vsel %vm668, %v5810, 0
      %v5841 = vsel %vm668, %v5811, 0
      %v5844 = vsel %vm668, %v5812, 0
      %v5847 = vsel %vm668, %v5813, 0
      %v5850 = vsel %vm668, %v5814, 0
      %v5853 = vsel %vm668, %v5815, 0
      %v5856 = vsel %vm668, %v5816, 0
      %v5859 = vsel %vm668, %v5817, 0
      %v5862 = vsel %vm668, %v5818, 0
      %5864 = vmatprep.subr.bf16.mxu0 0
      %5865 = vmatpush1.bf16.msra.mxu0 %v5833
      %5866 = vmatprep.subr.bf16.mxu0 0
      %5867 = vmatpush1.bf16.msra.mxu0 %v5834
      %5868 = vmatprep.subr.bf16.mxu0 0
      %5869 = vmatpush1.bf16.msra.mxu0 0
      %5870 = vmatprep.subr.bf16.mxu0 0
      %5871 = vmatpush1.bf16.msra.mxu0 0
      %5872 = vmatprep.subr.bf16.mxu0 0
      %5873 = vmatpush1.bf16.msra.mxu0 0
      %5874 = vmatprep.subr.bf16.mxu0 0
      %5875 = vmatpush1.bf16.msra.mxu0 0
      %5876 = vmatprep.subr.bf16.mxu0 0
      %5877 = vmatpush1.bf16.msra.mxu0 0
      %5878 = vmatprep.subr.bf16.mxu0 0
      %5879 = vmatpush1.bf16.msra.mxu0 0
      %5880 = vmatprep.subr.bf16.mxu0 0
      %5881 = vmatpush1.bf16.msra.mxu0 0
      %5882 = vmatprep.subr.bf16.mxu0 0
      %5883 = vmatpush1.bf16.msra.mxu0 0
      %5884 = vmatprep.subr.bf16.mxu0 0
      %5885 = vmatpush1.bf16.msra.mxu0 0
      %5886 = vmatprep.subr.bf16.mxu0 0
      %5887 = vmatpush1.bf16.msra.mxu0 0
      %5888 = vmatprep.subr.bf16.mxu0 0
      %5889 = vmatpush1.bf16.msra.mxu0 0
      %5890 = vmatprep.subr.bf16.mxu0 0
      %5891 = vmatpush1.bf16.msra.mxu0 0
      %5892 = vmatprep.subr.bf16.mxu0 0
      %5893 = vmatpush1.bf16.msra.mxu0 0
      %5894 = vmatprep.subr.bf16.mxu0 0
      %5895 = vmatpush1.bf16.msra.mxu0 0
      %5896 = vmatprep.mubr.bf16.mxu0 0
      %5897 = vmatmul.mubr.bf16.gmra.mrb[0].mxu0 %v5838
      %v5898 = vpop.f32.mrb[0].mxu0
      %v5899 = vadd.f32 %v5823, %v5898
      %v5900 = vpop.f32.mrb[0].mxu0
      %v5901 = vpop.f32.mrb[0].mxu0
      %v5902 = vadd.f32 %v5823, %v5901
      %v5903 = vpop.f32.mrb[0].mxu0
      %5904 = vmatprep.mubr.bf16.mxu0 0
      %5905 = vmatmul.mubr.bf16.gmra.mrb[0].mxu0 %v5841
      %v5906 = vpop.f32.mrb[0].mxu0
      %v5907 = vadd.f32 %v5823, %v5906
      %v5908 = vpop.f32.mrb[0].mxu0
      %v5909 = vpop.f32.mrb[0].mxu0
      %v5910 = vadd.f32 %v5823, %v5909
      %v5911 = vpop.f32.mrb[0].mxu0
      %5912 = vmatprep.mubr.bf16.mxu0 0
      %5913 = vmatmul.mubr.bf16.gmra.mrb[0].mxu0 %v5844
      %v5914 = vpop.f32.mrb[0].mxu0
      %v5915 = vadd.f32 %v5823, %v5914
      %v5916 = vpop.f32.mrb[0].mxu0
      %v5917 = vpop.f32.mrb[0].mxu0
      %v5918 = vadd.f32 %v5823, %v5917
      %v5919 = vpop.f32.mrb[0].mxu0
      %5920 = vmatprep.mubr.bf16.mxu0 0
      %5921 = vmatmul.mubr.bf16.gmra.mrb[0].mxu0 %v5847
      %v5922 = vpop.f32.mrb[0].mxu0
      %v5923 = vadd.f32 %v5823, %v5922
      %v5924 = vpop.f32.mrb[0].mxu0
      %v5925 = vpop.f32.mrb[0].mxu0
      %v5926 = vadd.f32 %v5823, %v5925
      %v5927 = vpop.f32.mrb[0].mxu0
      %5928 = vmatprep.mubr.bf16.mxu0 0
      %5929 = vmatmul.mubr.bf16.gmra.mrb[0].mxu0 %v5850
      %v5930 = vpop.f32.mrb[0].mxu0
      %v5931 = vadd.f32 %v5823, %v5930
      %v5932 = vpop.f32.mrb[0].mxu0
      %v5933 = vpop.f32.mrb[0].mxu0
      %v5934 = vadd.f32 %v5823, %v5933
      %v5935 = vpop.f32.mrb[0].mxu0
      %5936 = vmatprep.mubr.bf16.mxu0 0
      %5937 = vmatmul.mubr.bf16.gmra.mrb[0].mxu0 %v5853
      %v5938 = vpop.f32.mrb[0].mxu0
      %v5939 = vadd.f32 %v5823, %v5938
      %v5940 = vpop.f32.mrb[0].mxu0
      %v5941 = vpop.f32.mrb[0].mxu0
      %v5942 = vadd.f32 %v5823, %v5941
      %v5943 = vpop.f32.mrb[0].mxu0
      %5944 = vmatprep.mubr.bf16.mxu0 0
      %5945 = vmatmul.mubr.bf16.gmra.mrb[0].mxu0 %v5856
      %v5946 = vpop.f32.mrb[0].mxu0
      %v5947 = vadd.f32 %v5823, %v5946
      %v5948 = vpop.f32.mrb[0].mxu0
      %v5949 = vpop.f32.mrb[0].mxu0
      %v5950 = vadd.f32 %v5823, %v5949
      %v5951 = vpop.f32.mrb[0].mxu0
      %5952 = vmatprep.mubr.bf16.mxu0 0
      %5953 = vmatmul.mubr.bf16.gmra.mrb[0].mxu0 %v5859
      %v5954 = vpop.f32.mrb[0].mxu0
      %v5955 = vadd.f32 %v5823, %v5954
      %v5956 = vpop.f32.mrb[0].mxu0
      %v5957 = vpop.f32.mrb[0].mxu0
      %v5958 = vadd.f32 %v5823, %v5957
      %v5959 = vpop.f32.mrb[0].mxu0
      %5960 = vmatprep.mubr.bf16.mxu0 0
      %5961 = vmatmul.mubr.bf16.gmra.mrb[0].mxu0 %v5862
      %v5962 = vpop.f32.mrb[0].mxu0
      %v5963 = vadd.f32 %v5823, %v5962
      %v5964 = vpop.f32.mrb[0].mxu0
      %v5965 = vpop.f32.mrb[0].mxu0
      %v5966 = vadd.f32 %v5823, %v5965
      %v5967 = vpop.f32.mrb[0].mxu0
      %5968 = vdwg.mxu0
      %v5969 = vpack.c.bf16 %v5902, %v5899
      %v5970 = vpack.c.bf16 %v5910, %v5907
      %v5971 = vpack.c.bf16 %v5918, %v5915
      %v5972 = vpack.c.bf16 %v5926, %v5923
      %v5973 = vpack.c.bf16 %v5934, %v5931
      %v5974 = vpack.c.bf16 %v5942, %v5939
      %v5975 = vpack.c.bf16 %v5950, %v5947
      %v5976 = vpack.c.bf16 %v5958, %v5955
      %v5977 = vpack.c.bf16 %v5966, %v5963
      %v5986 = vunpack.c.l.b16 %v544
      %v5987 = vunpack.c.h.b16 %v544
      %v5988 = vunpack.c.l.b16 %v545
      %v5989 = vunpack.c.h.b16 %v545
      %v5990 = vunpack.c.l.b16 %v546
      %v5991 = vunpack.c.h.b16 %v546
      %v5992 = vunpack.c.l.b16 %v547
      %v5993 = vunpack.c.h.b16 %v547
      %v5994 = vunpack.c.l.b16 %v548
      %v5995 = vunpack.c.h.b16 %v548
      %v5996 = vunpack.c.l.b16 %v549
      %v5997 = vunpack.c.h.b16 %v549
      %v5998 = vunpack.c.l.b16 %v550
      %v5999 = vunpack.c.h.b16 %v550
      %v6000 = vunpack.c.l.b16 %v551
      %v6001 = vunpack.c.h.b16 %v551
      %v6002 = vpack.c.b16 %v5988, %v5986
      %v6003 = vpack.c.b16 %v5989, %v5987
      %v6004 = vpack.c.b16 %v5992, %v5990
      %v6005 = vpack.c.b16 %v5993, %v5991
      %v6006 = vpack.c.b16 %v5996, %v5994
      %v6007 = vpack.c.b16 %v5997, %v5995
      %v6008 = vpack.c.b16 %v6000, %v5998
      %v6009 = vpack.c.b16 %v6001, %v5999
      %v6015 = vsel %vm1603, %v6003, 0
      %v6018 = vsel %vm1603, %v6005, 0
      %v6021 = vsel %vm1603, %v6007, 0
      %v6024 = vsel %vm1603, %v6009, 0
      %6026 = vmatprep.subr.bf16.mxu0 0
      %6027 = vmatpush1.bf16.msra.mxu0 %v5969
      %6028 = vmatprep.subr.bf16.mxu0 0
      %6029 = vmatpush1.bf16.msra.mxu0 %v5970
      %6030 = vmatprep.subr.bf16.mxu0 0
      %6031 = vmatpush1.bf16.msra.mxu0 %v5971
      %6032 = vmatprep.subr.bf16.mxu0 0
      %6033 = vmatpush1.bf16.msra.mxu0 %v5972
      %6034 = vmatprep.subr.bf16.mxu0 0
      %6035 = vmatpush1.bf16.msra.mxu0 %v5973
      %6036 = vmatprep.subr.bf16.mxu0 0
      %6037 = vmatpush1.bf16.msra.mxu0 %v5974
      %6038 = vmatprep.subr.bf16.mxu0 0
      %6039 = vmatpush1.bf16.msra.mxu0 %v5975
      %6040 = vmatprep.subr.bf16.mxu0 0
      %6041 = vmatpush1.bf16.msra.mxu0 %v5976
      %6042 = vmatprep.subr.bf16.mxu0 0
      %6043 = vmatpush1.bf16.msra.mxu0 %v5977
      %6044 = vmatprep.subr.bf16.mxu0 0
      %6045 = vmatpush1.bf16.msra.mxu0 0
      %6046 = vmatprep.subr.bf16.mxu0 0
      %6047 = vmatpush1.bf16.msra.mxu0 0
      %6048 = vmatprep.subr.bf16.mxu0 0
      %6049 = vmatpush1.bf16.msra.mxu0 0
      %6050 = vmatprep.subr.bf16.mxu0 0
      %6051 = vmatpush1.bf16.msra.mxu0 0
      %6052 = vmatprep.subr.bf16.mxu0 0
      %6053 = vmatpush1.bf16.msra.mxu0 0
      %6054 = vmatprep.subr.bf16.mxu0 0
      %6055 = vmatpush1.bf16.msra.mxu0 0
      %6056 = vmatprep.subr.bf16.mxu0 0
      %6057 = vmatpush1.bf16.msra.mxu0 0
      %6058 = vmatprep.mubr.bf16.mxu0 %v6015
      %6059 = vmatmul.mubr.bf16.gmra.mrb[0].mxu0 %v6002
      %v6060 = vpop.f32.mrb[0].mxu0
      %v6061 = vadd.f32 0.0, %v6060
      %v6062 = vpop.f32.mrb[0].mxu0
      %v6063 = vpop.f32.mrb[0].mxu0
      %v6064 = vadd.f32 0.0, %v6063
      %v6065 = vpop.f32.mrb[0].mxu0
      %6066 = vmatprep.mubr.bf16.mxu0 %v6018
      %6067 = vmatmul.mubr.bf16.gmra.mrb[0].mxu0 %v6004
      %v6068 = vpop.f32.mrb[0].mxu0
      %v6069 = vadd.f32 0.0, %v6068
      %v6070 = vpop.f32.mrb[0].mxu0
      %v6071 = vpop.f32.mrb[0].mxu0
      %v6072 = vadd.f32 0.0, %v6071
      %v6073 = vpop.f32.mrb[0].mxu0
      %6074 = vmatprep.mubr.bf16.mxu0 %v6021
      %6075 = vmatmul.mubr.bf16.gmra.mrb[0].mxu0 %v6006
      %v6076 = vpop.f32.mrb[0].mxu0
      %v6077 = vadd.f32 0.0, %v6076
      %v6078 = vpop.f32.mrb[0].mxu0
      %v6079 = vpop.f32.mrb[0].mxu0
      %v6080 = vadd.f32 0.0, %v6079
      %v6081 = vpop.f32.mrb[0].mxu0
      %6082 = vmatprep.mubr.bf16.mxu0 %v6024
      %6083 = vmatmul.mubr.bf16.gmra.mrb[0].mxu0 %v6008
      %v6084 = vpop.f32.mrb[0].mxu0
      %v6085 = vadd.f32 0.0, %v6084
      %v6086 = vpop.f32.mrb[0].mxu0
      %v6087 = vpop.f32.mrb[0].mxu0
      %v6088 = vadd.f32 0.0, %v6087
      %v6089 = vpop.f32.mrb[0].mxu0
      %6090 = vdwg.mxu0
      %v6091 = vadd.f32 %v660, %v6061
      %v6092 = vadd.f32 %v661, %v6064
      %v6093 = vadd.f32 %v662, %v6069
      %v6094 = vadd.f32 %v663, %v6072
      %v6095 = vadd.f32 %v664, %v6077
      %v6096 = vadd.f32 %v665, %v6080
      %v6097 = vadd.f32 %v666, %v6085
      %v6098 = vadd.f32 %v667, %v6088
      %v6099 = vsel %vm668, %v6091, 0.0
      %6100 = vadd.xlane.f32.xlu0 %v6099
      %v6101 = vpop.xlane.xlu0 %6100
      %v6102 = vsel %vm668, %v6092, 0.0
      %6103 = vadd.xlane.f32.xlu0 %v6102
      %v6104 = vpop.xlane.xlu0 %6103
      %v6105 = vsel %vm668, %v6093, 0.0
      %6106 = vadd.xlane.f32.xlu0 %v6105
      %v6107 = vpop.xlane.xlu0 %6106
      %v6108 = vsel %vm668, %v6094, 0.0
      %6109 = vadd.xlane.f32.xlu0 %v6108
      %v6110 = vpop.xlane.xlu0 %6109
      %v6111 = vsel %vm668, %v6095, 0.0
      %6112 = vadd.xlane.f32.xlu0 %v6111
      %v6113 = vpop.xlane.xlu0 %6112
      %v6114 = vsel %vm668, %v6096, 0.0
      %6115 = vadd.xlane.f32.xlu0 %v6114
      %v6116 = vpop.xlane.xlu0 %6115
      %v6117 = vsel %vm668, %v6097, 0.0
      %6118 = vadd.xlane.f32.xlu0 %v6117
      %v6119 = vpop.xlane.xlu0 %6118
      %v6120 = vsel %vm668, %v6098, 0.0
      %6121 = vadd.xlane.f32.xlu0 %v6120
      %v6122 = vpop.xlane.xlu0 %6121
      %v6123 = vmul.f32 %v6101, %v693
      %v6124 = vmul.f32 %v6104, %v693
      %v6125 = vmul.f32 %v6107, %v693
      %v6126 = vmul.f32 %v6110, %v693
      %v6127 = vmul.f32 %v6113, %v693
      %v6128 = vmul.f32 %v6116, %v693
      %v6129 = vmul.f32 %v6119, %v693
      %v6130 = vmul.f32 %v6122, %v693
      %v6131 = vsub.f32 %v6091, %v6123
      %v6132 = vsub.f32 %v6092, %v6124
      %v6133 = vsub.f32 %v6093, %v6125
      %v6134 = vsub.f32 %v6094, %v6126
      %v6135 = vsub.f32 %v6095, %v6127
      %v6136 = vsub.f32 %v6096, %v6128
      %v6137 = vsub.f32 %v6097, %v6129
      %v6138 = vsub.f32 %v6098, %v6130
      %v6139 = vmul.f32 %v6131, %v6131
      %v6140 = vmul.f32 %v6132, %v6132
      %v6141 = vmul.f32 %v6133, %v6133
      %v6142 = vmul.f32 %v6134, %v6134
      %v6143 = vmul.f32 %v6135, %v6135
      %v6144 = vmul.f32 %v6136, %v6136
      %v6145 = vmul.f32 %v6137, %v6137
      %v6146 = vmul.f32 %v6138, %v6138
      %v6147 = vsel %vm668, %v6139, 0.0
      %6148 = vadd.xlane.f32.xlu0 %v6147
      %v6149 = vpop.xlane.xlu0 %6148
      %v6150 = vsel %vm668, %v6140, 0.0
      %6151 = vadd.xlane.f32.xlu0 %v6150
      %v6152 = vpop.xlane.xlu0 %6151
      %v6153 = vsel %vm668, %v6141, 0.0
      %6154 = vadd.xlane.f32.xlu0 %v6153
      %v6155 = vpop.xlane.xlu0 %6154
      %v6156 = vsel %vm668, %v6142, 0.0
      %6157 = vadd.xlane.f32.xlu0 %v6156
      %v6158 = vpop.xlane.xlu0 %6157
      %v6159 = vsel %vm668, %v6143, 0.0
      %6160 = vadd.xlane.f32.xlu0 %v6159
      %v6161 = vpop.xlane.xlu0 %6160
      %v6162 = vsel %vm668, %v6144, 0.0
      %6163 = vadd.xlane.f32.xlu0 %v6162
      %v6164 = vpop.xlane.xlu0 %6163
      %v6165 = vsel %vm668, %v6145, 0.0
      %6166 = vadd.xlane.f32.xlu0 %v6165
      %v6167 = vpop.xlane.xlu0 %6166
      %v6168 = vsel %vm668, %v6146, 0.0
      %6169 = vadd.xlane.f32.xlu0 %v6168
      %v6170 = vpop.xlane.xlu0 %6169
      %v6171 = vmul.f32 %v6149, %v693
      %v6172 = vmul.f32 %v6152, %v693
      %v6173 = vmul.f32 %v6155, %v693
      %v6174 = vmul.f32 %v6158, %v693
      %v6175 = vmul.f32 %v6161, %v693
      %v6176 = vmul.f32 %v6164, %v693
      %v6177 = vmul.f32 %v6167, %v693
      %v6178 = vmul.f32 %v6170, %v693
      %v6179 = vadd.f32 %v6171, 1e-05
      %v6180 = vadd.f32 %v6172, 1e-05
      %v6181 = vadd.f32 %v6173, 1e-05
      %v6182 = vadd.f32 %v6174, 1e-05
      %v6183 = vadd.f32 %v6175, 1e-05
      %v6184 = vadd.f32 %v6176, 1e-05
      %v6185 = vadd.f32 %v6177, 1e-05
      %v6186 = vadd.f32 %v6178, 1e-05
      %v6187 = vrsqrt.pop %v6179
      %v6188 = vrsqrt.pop %v6180
      %v6189 = vrsqrt.pop %v6181
      %v6190 = vrsqrt.pop %v6182
      %v6191 = vrsqrt.pop %v6183
      %v6192 = vrsqrt.pop %v6184
      %v6193 = vrsqrt.pop %v6185
      %v6194 = vrsqrt.pop %v6186
      %v6195 = vmul.f32 %v6131, %v6187
      %v6196 = vmul.f32 %v6132, %v6188
      %v6197 = vmul.f32 %v6133, %v6189
      %v6198 = vmul.f32 %v6134, %v6190
      %v6199 = vmul.f32 %v6135, %v6191
      %v6200 = vmul.f32 %v6136, %v6192
      %v6201 = vmul.f32 %v6137, %v6193
      %v6202 = vmul.f32 %v6138, %v6194
      %v6204 = vlaneseq
      %v6205 = vshrl.u32 %v6204, 7
      %v6206 = vsub.s32 0, %v6205
      %v6207 = vrot.slane %v658, %v6206
      %v6209 = vmul.f32 %v6195, %v6207
      %v6210 = vmul.f32 %v6196, %v6207
      %v6211 = vmul.f32 %v6197, %v6207
      %v6212 = vmul.f32 %v6198, %v6207
      %v6213 = vmul.f32 %v6199, %v6207
      %v6214 = vmul.f32 %v6200, %v6207
      %v6215 = vmul.f32 %v6201, %v6207
      %v6216 = vmul.f32 %v6202, %v6207
      %v6218 = vlaneseq
      %v6219 = vshrl.u32 %v6218, 7
      %v6220 = vsub.s32 0, %v6219
      %v6221 = vrot.slane %v659, %v6220
      %v6223 = vadd.f32 %v6209, %v6221
      %v6224 = vadd.f32 %v6210, %v6221
      %v6225 = vadd.f32 %v6211, %v6221
      %v6226 = vadd.f32 %v6212, %v6221
      %v6227 = vadd.f32 %v6213, %v6221
      %v6228 = vadd.f32 %v6214, %v6221
      %v6229 = vadd.f32 %v6215, %v6221
      %v6230 = vadd.f32 %v6216, %v6221
      %v6231 = vpack.c.bf16 %v6224, %v6223
      %v6232 = vpack.c.bf16 %v6226, %v6225
      %v6233 = vpack.c.bf16 %v6228, %v6227
      %v6234 = vpack.c.bf16 %v6230, %v6229
      %v6236 = vlaneseq
      %v6237 = vshrl.u32 %v6236, 7
      %v6238 = vsub.s32 0, %v6237
      %v6239 = vrot.slane %v638, %v6238
      %v6245 = vunpack.c.l.b16 %v634
      %v6246 = vunpack.c.l.b16 %v635
      %v6247 = vunpack.c.l.b16 %v636
      %v6248 = vunpack.c.l.b16 %v637
      %v6249 = vpack.c.b16 %v6246, %v6245
      %v6250 = vpack.c.b16 %v6248, %v6247
      %v6254 = vsel %vm668, %v6231, 0
      %v6257 = vsel %vm668, %v6232, 0
      %v6260 = vsel %vm668, %v6233, 0
      %v6263 = vsel %vm668, %v6234, 0
      %6265 = vmatprep.subr.bf16.mxu0 0
      %6266 = vmatpush1.bf16.msra.mxu0 %v6249
      %6267 = vmatprep.subr.bf16.mxu0 0
      %6268 = vmatpush1.bf16.msra.mxu0 %v6250
      %6269 = vmatprep.subr.bf16.mxu0 0
      %6270 = vmatpush1.bf16.msra.mxu0 0
      %6271 = vmatprep.subr.bf16.mxu0 0
      %6272 = vmatpush1.bf16.msra.mxu0 0
      %6273 = vmatprep.subr.bf16.mxu0 0
      %6274 = vmatpush1.bf16.msra.mxu0 0
      %6275 = vmatprep.subr.bf16.mxu0 0
      %6276 = vmatpush1.bf16.msra.mxu0 0
      %6277 = vmatprep.subr.bf16.mxu0 0
      %6278 = vmatpush1.bf16.msra.mxu0 0
      %6279 = vmatprep.subr.bf16.mxu0 0
      %6280 = vmatpush1.bf16.msra.mxu0 0
      %6281 = vmatprep.subr.bf16.mxu0 0
      %6282 = vmatpush1.bf16.msra.mxu0 0
      %6283 = vmatprep.subr.bf16.mxu0 0
      %6284 = vmatpush1.bf16.msra.mxu0 0
      %6285 = vmatprep.subr.bf16.mxu0 0
      %6286 = vmatpush1.bf16.msra.mxu0 0
      %6287 = vmatprep.subr.bf16.mxu0 0
      %6288 = vmatpush1.bf16.msra.mxu0 0
      %6289 = vmatprep.subr.bf16.mxu0 0
      %6290 = vmatpush1.bf16.msra.mxu0 0
      %6291 = vmatprep.subr.bf16.mxu0 0
      %6292 = vmatpush1.bf16.msra.mxu0 0
      %6293 = vmatprep.subr.bf16.mxu0 0
      %6294 = vmatpush1.bf16.msra.mxu0 0
      %6295 = vmatprep.subr.bf16.mxu0 0
      %6296 = vmatpush1.bf16.msra.mxu0 0
      %6297 = vmatprep.mubr.bf16.mxu0 0
      %6298 = vmatmul.mubr.bf16.gmra.mrb[0].mxu0 %v6254
      %v6299 = vpop.f32.mrb[0].mxu0
      %v6300 = vadd.f32 %v6239, %v6299
      %v6301 = vpop.f32.mrb[0].mxu0
      %v6302 = vpop.f32.mrb[0].mxu0
      %v6303 = vadd.f32 %v6239, %v6302
      %v6304 = vpop.f32.mrb[0].mxu0
      %6305 = vmatprep.mubr.bf16.mxu0 0
      %6306 = vmatmul.mubr.bf16.gmra.mrb[0].mxu0 %v6257
      %v6307 = vpop.f32.mrb[0].mxu0
      %v6308 = vadd.f32 %v6239, %v6307
      %v6309 = vpop.f32.mrb[0].mxu0
      %v6310 = vpop.f32.mrb[0].mxu0
      %v6311 = vadd.f32 %v6239, %v6310
      %v6312 = vpop.f32.mrb[0].mxu0
      %6313 = vmatprep.mubr.bf16.mxu0 0
      %6314 = vmatmul.mubr.bf16.gmra.mrb[0].mxu0 %v6260
      %v6315 = vpop.f32.mrb[0].mxu0
      %v6316 = vadd.f32 %v6239, %v6315
      %v6317 = vpop.f32.mrb[0].mxu0
      %v6318 = vpop.f32.mrb[0].mxu0
      %v6319 = vadd.f32 %v6239, %v6318
      %v6320 = vpop.f32.mrb[0].mxu0
      %6321 = vmatprep.mubr.bf16.mxu0 0
      %6322 = vmatmul.mubr.bf16.gmra.mrb[0].mxu0 %v6263
      %v6323 = vpop.f32.mrb[0].mxu0
      %v6324 = vadd.f32 %v6239, %v6323
      %v6325 = vpop.f32.mrb[0].mxu0
      %v6326 = vpop.f32.mrb[0].mxu0
      %v6327 = vadd.f32 %v6239, %v6326
      %v6328 = vpop.f32.mrb[0].mxu0
      %6329 = vdwg.mxu0
      %v6330 = vmul.f32 %v6300, 0.5
      %v6331 = vmul.f32 %v6303, 0.5
      %v6332 = vmul.f32 %v6308, 0.5
      %v6333 = vmul.f32 %v6311, 0.5
      %v6334 = vmul.f32 %v6316, 0.5
      %v6335 = vmul.f32 %v6319, 0.5
      %v6336 = vmul.f32 %v6324, 0.5
      %v6337 = vmul.f32 %v6327, 0.5
      %v6338 = vmul.f32 %v6300, 0.70710677
      %v6339 = vmul.f32 %v6303, 0.70710677
      %v6340 = vmul.f32 %v6308, 0.70710677
      %v6341 = vmul.f32 %v6311, 0.70710677
      %v6342 = vmul.f32 %v6316, 0.70710677
      %v6343 = vmul.f32 %v6319, 0.70710677
      %v6344 = vmul.f32 %v6324, 0.70710677
      %v6345 = vmul.f32 %v6327, 0.70710677
      %vm6346 = vcmp.ge.f32.partialorder %v6338, 0.0
      %vm6347 = vcmp.ge.f32.partialorder %v6339, 0.0
      %vm6348 = vcmp.ge.f32.partialorder %v6340, 0.0
      %vm6349 = vcmp.ge.f32.partialorder %v6341, 0.0
      %vm6350 = vcmp.ge.f32.partialorder %v6342, 0.0
      %vm6351 = vcmp.ge.f32.partialorder %v6343, 0.0
      %vm6352 = vcmp.ge.f32.partialorder %v6344, 0.0
      %vm6353 = vcmp.ge.f32.partialorder %v6345, 0.0
      %v6354 = vsel %vm6346, 1.0, -1.0
      %v6355 = vsel %vm6347, 1.0, -1.0
      %v6356 = vsel %vm6348, 1.0, -1.0
      %v6357 = vsel %vm6349, 1.0, -1.0
      %v6358 = vsel %vm6350, 1.0, -1.0
      %v6359 = vsel %vm6351, 1.0, -1.0
      %v6360 = vsel %vm6352, 1.0, -1.0
      %v6361 = vsel %vm6353, 1.0, -1.0
      %v6362 = vand.u32 2147483647, %v6338
      %v6363 = vand.u32 2147483647, %v6339
      %v6364 = vand.u32 2147483647, %v6340
      %v6365 = vand.u32 2147483647, %v6341
      %v6366 = vand.u32 2147483647, %v6342
      %v6367 = vand.u32 2147483647, %v6343
      %v6368 = vand.u32 2147483647, %v6344
      %v6369 = vand.u32 2147483647, %v6345
      %v6370 = vmul.f32 %v6362, 0.3275911
      %v6371 = vmul.f32 %v6363, 0.3275911
      %v6372 = vmul.f32 %v6364, 0.3275911
      %v6373 = vmul.f32 %v6365, 0.3275911
      %v6374 = vmul.f32 %v6366, 0.3275911
      %v6375 = vmul.f32 %v6367, 0.3275911
      %v6376 = vmul.f32 %v6368, 0.3275911
      %v6377 = vmul.f32 %v6369, 0.3275911
      %v6378 = vadd.f32 %v6370, 1.0
      %v6379 = vadd.f32 %v6371, 1.0
      %v6380 = vadd.f32 %v6372, 1.0
      %v6381 = vadd.f32 %v6373, 1.0
      %v6382 = vadd.f32 %v6374, 1.0
      %v6383 = vadd.f32 %v6375, 1.0
      %v6384 = vadd.f32 %v6376, 1.0
      %v6385 = vadd.f32 %v6377, 1.0
      %v6386 = vrcp.pop %v6378
      %v6387 = vrcp.pop %v6379
      %v6388 = vrcp.pop %v6380
      %v6389 = vrcp.pop %v6381
      %v6390 = vrcp.pop %v6382
      %v6391 = vrcp.pop %v6383
      %v6392 = vrcp.pop %v6384
      %v6393 = vrcp.pop %v6385
      %v6394 = vmul.f32 %v6386, 1.0614054
      %v6395 = vmul.f32 %v6387, 1.0614054
      %v6396 = vmul.f32 %v6388, 1.0614054
      %v6397 = vmul.f32 %v6389, 1.0614054
      %v6398 = vmul.f32 %v6390, 1.0614054
      %v6399 = vmul.f32 %v6391, 1.0614054
      %v6400 = vmul.f32 %v6392, 1.0614054
      %v6401 = vmul.f32 %v6393, 1.0614054
      %v6402 = vadd.f32 %v6394, -1.4531521
      %v6403 = vadd.f32 %v6395, -1.4531521
      %v6404 = vadd.f32 %v6396, -1.4531521
      %v6405 = vadd.f32 %v6397, -1.4531521
      %v6406 = vadd.f32 %v6398, -1.4531521
      %v6407 = vadd.f32 %v6399, -1.4531521
      %v6408 = vadd.f32 %v6400, -1.4531521
      %v6409 = vadd.f32 %v6401, -1.4531521
      %v6410 = vmul.f32 %v6402, %v6386
      %v6411 = vmul.f32 %v6403, %v6387
      %v6412 = vmul.f32 %v6404, %v6388
      %v6413 = vmul.f32 %v6405, %v6389
      %v6414 = vmul.f32 %v6406, %v6390
      %v6415 = vmul.f32 %v6407, %v6391
      %v6416 = vmul.f32 %v6408, %v6392
      %v6417 = vmul.f32 %v6409, %v6393
      %v6418 = vadd.f32 %v6410, 1.4214138
      %v6419 = vadd.f32 %v6411, 1.4214138
      %v6420 = vadd.f32 %v6412, 1.4214138
      %v6421 = vadd.f32 %v6413, 1.4214138
      %v6422 = vadd.f32 %v6414, 1.4214138
      %v6423 = vadd.f32 %v6415, 1.4214138
      %v6424 = vadd.f32 %v6416, 1.4214138
      %v6425 = vadd.f32 %v6417, 1.4214138
      %v6426 = vmul.f32 %v6418, %v6386
      %v6427 = vmul.f32 %v6419, %v6387
      %v6428 = vmul.f32 %v6420, %v6388
      %v6429 = vmul.f32 %v6421, %v6389
      %v6430 = vmul.f32 %v6422, %v6390
      %v6431 = vmul.f32 %v6423, %v6391
      %v6432 = vmul.f32 %v6424, %v6392
      %v6433 = vmul.f32 %v6425, %v6393
      %v6434 = vadd.f32 %v6426, -0.28449672
      %v6435 = vadd.f32 %v6427, -0.28449672
      %v6436 = vadd.f32 %v6428, -0.28449672
      %v6437 = vadd.f32 %v6429, -0.28449672
      %v6438 = vadd.f32 %v6430, -0.28449672
      %v6439 = vadd.f32 %v6431, -0.28449672
      %v6440 = vadd.f32 %v6432, -0.28449672
      %v6441 = vadd.f32 %v6433, -0.28449672
      %v6442 = vmul.f32 %v6434, %v6386
      %v6443 = vmul.f32 %v6435, %v6387
      %v6444 = vmul.f32 %v6436, %v6388
      %v6445 = vmul.f32 %v6437, %v6389
      %v6446 = vmul.f32 %v6438, %v6390
      %v6447 = vmul.f32 %v6439, %v6391
      %v6448 = vmul.f32 %v6440, %v6392
      %v6449 = vmul.f32 %v6441, %v6393
      %v6450 = vadd.f32 %v6442, 0.2548296
      %v6451 = vadd.f32 %v6443, 0.2548296
      %v6452 = vadd.f32 %v6444, 0.2548296
      %v6453 = vadd.f32 %v6445, 0.2548296
      %v6454 = vadd.f32 %v6446, 0.2548296
      %v6455 = vadd.f32 %v6447, 0.2548296
      %v6456 = vadd.f32 %v6448, 0.2548296
      %v6457 = vadd.f32 %v6449, 0.2548296
      %v6458 = vmul.f32 %v6450, %v6386
      %v6459 = vmul.f32 %v6451, %v6387
      %v6460 = vmul.f32 %v6452, %v6388
      %v6461 = vmul.f32 %v6453, %v6389
      %v6462 = vmul.f32 %v6454, %v6390
      %v6463 = vmul.f32 %v6455, %v6391
      %v6464 = vmul.f32 %v6456, %v6392
      %v6465 = vmul.f32 %v6457, %v6393
      %v6466 = vsub.f32 0.0, %v6362
      %v6467 = vsub.f32 0.0, %v6363
      %v6468 = vsub.f32 0.0, %v6364
      %v6469 = vsub.f32 0.0, %v6365
      %v6470 = vsub.f32 0.0, %v6366
      %v6471 = vsub.f32 0.0, %v6367
      %v6472 = vsub.f32 0.0, %v6368
      %v6473 = vsub.f32 0.0, %v6369
      %v6474 = vmul.f32 %v6466, %v6362
      %v6475 = vmul.f32 %v6467, %v6363
      %v6476 = vmul.f32 %v6468, %v6364
      %v6477 = vmul.f32 %v6469, %v6365
      %v6478 = vmul.f32 %v6470, %v6366
      %v6479 = vmul.f32 %v6471, %v6367
      %v6480 = vmul.f32 %v6472, %v6368
      %v6481 = vmul.f32 %v6473, %v6369
      %v6482 = vmul.f32 %v6474, 1.442695
      %v6483 = vpow.pop %v6482
      %v6484 = vmul.f32 %v6475, 1.442695
      %v6485 = vpow.pop %v6484
      %v6486 = vmul.f32 %v6476, 1.442695
      %v6487 = vpow.pop %v6486
      %v6488 = vmul.f32 %v6477, 1.442695
      %v6489 = vpow.pop %v6488
      %v6490 = vmul.f32 %v6478, 1.442695
      %v6491 = vpow.pop %v6490
      %v6492 = vmul.f32 %v6479, 1.442695
      %v6493 = vpow.pop %v6492
      %v6494 = vmul.f32 %v6480, 1.442695
      %v6495 = vpow.pop %v6494
      %v6496 = vmul.f32 %v6481, 1.442695
      %v6497 = vpow.pop %v6496
      %v6498 = vmul.f32 %v6458, %v6483
      %v6499 = vmul.f32 %v6459, %v6485
      %v6500 = vmul.f32 %v6460, %v6487
      %v6501 = vmul.f32 %v6461, %v6489
      %v6502 = vmul.f32 %v6462, %v6491
      %v6503 = vmul.f32 %v6463, %v6493
      %v6504 = vmul.f32 %v6464, %v6495
      %v6505 = vmul.f32 %v6465, %v6497
      %v6506 = vsub.f32 1.0, %v6498
      %v6507 = vsub.f32 1.0, %v6499
      %v6508 = vsub.f32 1.0, %v6500
      %v6509 = vsub.f32 1.0, %v6501
      %v6510 = vsub.f32 1.0, %v6502
      %v6511 = vsub.f32 1.0, %v6503
      %v6512 = vsub.f32 1.0, %v6504
      %v6513 = vsub.f32 1.0, %v6505
      %v6514 = vmul.f32 %v6354, %v6506
      %v6515 = vmul.f32 %v6355, %v6507
      %v6516 = vmul.f32 %v6356, %v6508
      %v6517 = vmul.f32 %v6357, %v6509
      %v6518 = vmul.f32 %v6358, %v6510
      %v6519 = vmul.f32 %v6359, %v6511
      %v6520 = vmul.f32 %v6360, %v6512
      %v6521 = vmul.f32 %v6361, %v6513
      %v6522 = vadd.f32 %v6514, 1.0
      %v6523 = vadd.f32 %v6515, 1.0
      %v6524 = vadd.f32 %v6516, 1.0
      %v6525 = vadd.f32 %v6517, 1.0
      %v6526 = vadd.f32 %v6518, 1.0
      %v6527 = vadd.f32 %v6519, 1.0
      %v6528 = vadd.f32 %v6520, 1.0
      %v6529 = vadd.f32 %v6521, 1.0
      %v6530 = vmul.f32 %v6330, %v6522
      %v6531 = vmul.f32 %v6331, %v6523
      %v6532 = vmul.f32 %v6332, %v6524
      %v6533 = vmul.f32 %v6333, %v6525
      %v6534 = vmul.f32 %v6334, %v6526
      %v6535 = vmul.f32 %v6335, %v6527
      %v6536 = vmul.f32 %v6336, %v6528
      %v6537 = vmul.f32 %v6337, %v6529
      %v6538 = vpack.c.bf16 %v6531, %v6530
      %v6539 = vpack.c.bf16 %v6533, %v6532
      %v6540 = vpack.c.bf16 %v6535, %v6534
      %v6541 = vpack.c.bf16 %v6537, %v6536
      %v6543 = vlaneseq
      %v6544 = vshrl.u32 %v6543, 7
      %v6545 = vsub.s32 0, %v6544
      %v6546 = vrot.slane %v655, %v6545
      %v6564 = vunpack.c.l.b16 %v639
      %v6565 = vunpack.c.l.b16 %v640
      %v6566 = vunpack.c.l.b16 %v641
      %v6567 = vunpack.c.l.b16 %v642
      %v6568 = vunpack.c.l.b16 %v643
      %v6569 = vunpack.c.l.b16 %v644
      %v6570 = vunpack.c.l.b16 %v645
      %v6571 = vunpack.c.l.b16 %v646
      %v6572 = vunpack.c.l.b16 %v647
      %v6573 = vunpack.c.l.b16 %v648
      %v6574 = vunpack.c.l.b16 %v649
      %v6575 = vunpack.c.l.b16 %v650
      %v6576 = vunpack.c.l.b16 %v651
      %v6577 = vunpack.c.l.b16 %v652
      %v6578 = vunpack.c.l.b16 %v653
      %v6579 = vunpack.c.l.b16 %v654
      %v6580 = vpack.c.b16 %v6565, %v6564
      %v6581 = vpack.c.b16 %v6567, %v6566
      %v6582 = vpack.c.b16 %v6569, %v6568
      %v6583 = vpack.c.b16 %v6571, %v6570
      %v6584 = vpack.c.b16 %v6573, %v6572
      %v6585 = vpack.c.b16 %v6575, %v6574
      %v6586 = vpack.c.b16 %v6577, %v6576
      %v6587 = vpack.c.b16 %v6579, %v6578
      %6596 = vmatprep.subr.bf16.mxu0 0
      %6597 = vmatpush1.bf16.msra.mxu0 %v6580
      %6598 = vmatprep.subr.bf16.mxu0 0
      %6599 = vmatpush1.bf16.msra.mxu0 %v6581
      %6600 = vmatprep.subr.bf16.mxu0 0
      %6601 = vmatpush1.bf16.msra.mxu0 %v6582
      %6602 = vmatprep.subr.bf16.mxu0 0
      %6603 = vmatpush1.bf16.msra.mxu0 %v6583
      %6604 = vmatprep.subr.bf16.mxu0 0
      %6605 = vmatpush1.bf16.msra.mxu0 %v6584
      %6606 = vmatprep.subr.bf16.mxu0 0
      %6607 = vmatpush1.bf16.msra.mxu0 %v6585
      %6608 = vmatprep.subr.bf16.mxu0 0
      %6609 = vmatpush1.bf16.msra.mxu0 %v6586
      %6610 = vmatprep.subr.bf16.mxu0 0
      %6611 = vmatpush1.bf16.msra.mxu0 %v6587
      %6612 = vmatprep.subr.bf16.mxu0 0
      %6613 = vmatpush1.bf16.msra.mxu0 0
      %6614 = vmatprep.subr.bf16.mxu0 0
      %6615 = vmatpush1.bf16.msra.mxu0 0
      %6616 = vmatprep.subr.bf16.mxu0 0
      %6617 = vmatpush1.bf16.msra.mxu0 0
      %6618 = vmatprep.subr.bf16.mxu0 0
      %6619 = vmatpush1.bf16.msra.mxu0 0
      %6620 = vmatprep.subr.bf16.mxu0 0
      %6621 = vmatpush1.bf16.msra.mxu0 0
      %6622 = vmatprep.subr.bf16.mxu0 0
      %6623 = vmatpush1.bf16.msra.mxu0 0
      %6624 = vmatprep.subr.bf16.mxu0 0
      %6625 = vmatpush1.bf16.msra.mxu0 0
      %6626 = vmatprep.subr.bf16.mxu0 0
      %6627 = vmatpush1.bf16.msra.mxu0 0
      %6628 = vmatprep.mubr.bf16.mxu0 0
      %6629 = vmatmul.mubr.bf16.gmra.mrb[0].mxu0 %v6538
      %v6630 = vpop.f32.mrb[0].mxu0
      %v6631 = vadd.f32 %v6546, %v6630
      %v6632 = vpop.f32.mrb[0].mxu0
      %v6633 = vpop.f32.mrb[0].mxu0
      %v6634 = vadd.f32 %v6546, %v6633
      %v6635 = vpop.f32.mrb[0].mxu0
      %6636 = vmatprep.mubr.bf16.mxu0 0
      %6637 = vmatmul.mubr.bf16.gmra.mrb[0].mxu0 %v6539
      %v6638 = vpop.f32.mrb[0].mxu0
      %v6639 = vadd.f32 %v6546, %v6638
      %v6640 = vpop.f32.mrb[0].mxu0
      %v6641 = vpop.f32.mrb[0].mxu0
      %v6642 = vadd.f32 %v6546, %v6641
      %v6643 = vpop.f32.mrb[0].mxu0
      %6644 = vmatprep.mubr.bf16.mxu0 0
      %6645 = vmatmul.mubr.bf16.gmra.mrb[0].mxu0 %v6540
      %v6646 = vpop.f32.mrb[0].mxu0
      %v6647 = vadd.f32 %v6546, %v6646
      %v6648 = vpop.f32.mrb[0].mxu0
      %v6649 = vpop.f32.mrb[0].mxu0
      %v6650 = vadd.f32 %v6546, %v6649
      %v6651 = vpop.f32.mrb[0].mxu0
      %6652 = vmatprep.mubr.bf16.mxu0 0
      %6653 = vmatmul.mubr.bf16.gmra.mrb[0].mxu0 %v6541
      %v6654 = vpop.f32.mrb[0].mxu0
      %v6655 = vadd.f32 %v6546, %v6654
      %v6656 = vpop.f32.mrb[0].mxu0
      %v6657 = vpop.f32.mrb[0].mxu0
      %v6658 = vadd.f32 %v6546, %v6657
      %v6659 = vpop.f32.mrb[0].mxu0
      %6660 = vdwg.mxu0
      %v6661 = vadd.f32 %v6091, %v6631
      %v6662 = vadd.f32 %v6092, %v6634
      %v6663 = vadd.f32 %v6093, %v6639
      %v6664 = vadd.f32 %v6094, %v6642
      %v6665 = vadd.f32 %v6095, %v6647
      %v6666 = vadd.f32 %v6096, %v6650
      %v6667 = vadd.f32 %v6097, %v6655
      %v6668 = vadd.f32 %v6098, %v6658
      %6669 = vst.msk [vmem:[%s523] sm:$0xff] %vm668, %v6661
      %6670 = vst.msk [vmem:[%s523 + $0x8] sm:$0xff] %vm668, %v6662
      %6671 = vst.msk [vmem:[%s523 + $0x10] sm:$0xff] %vm668, %v6663
      %6672 = vst.msk [vmem:[%s523 + $0x18] sm:$0xff] %vm668, %v6664
      %6673 = vst.msk [vmem:[%s523 + $0x20] sm:$0xff] %vm668, %v6665
      %6674 = vst.msk [vmem:[%s523 + $0x28] sm:$0xff] %vm668, %v6666
      %6675 = vst.msk [vmem:[%s523 + $0x30] sm:$0xff] %vm668, %v6667
      %6676 = vst.msk [vmem:[%s523 + $0x38] sm:$0xff] %vm668, %v6668
      %s6677 = smul.u32 8, %s27
      %p6678 = scmp.lt.s32.totalorder %s6677, 15
      %s6679 = scalar_select %p6678, %s6677, 15
      %s6680 = smul.addr %s6679, 8
      %s6681 = scalar_lea.vmem %s16, %s6680
      // Predicated region
      $region85: #{tpu_custom_call.1} parent=83 // pred_check
        %p6682 = pneg %p386
      $region86: #{tpu_custom_call.1} parent=83 // pred_check_branch
        %6684 = sbr.rel (%p6682) target = $region88
      $region87: #{tpu_custom_call.1} parent=83 // pred_region
        %s6685 = smul.u32 8, %s27
      $region88: #{tpu_custom_call.1} parent=83 // pred_fallthru
        _
    $region84: #{tpu_custom_call.1} parent=5 // pred_fallthru
      _
    %p6686 = scmp.le.s32.totalorder 2, %s22
    // Predicated region
    $region89: #{tpu_custom_call.1} parent=5 // pred_check
      %p6687 = pneg %p6686
    $region90: #{tpu_custom_call.1} parent=5 // pred_check_branch
      %6689 = sbr.rel (%p6687) target = $region92
    $region91: #{tpu_custom_call.1} parent=5 // pred_region
      %s6690 = ssub.s32 %s22, 2
      // Predicated region
      $region93: #{tpu_custom_call.1} parent=91 // pred_check
        %p6691 = pneg %p392
      $region94: #{tpu_custom_call.1} parent=91 // pred_check_branch
        %6693 = sbr.rel (%p6691) target = $region96
      $region95: #{tpu_custom_call.1} parent=91 // pred_region
        %s6694 = smul.u32 8, %s28
        %p6695 = scmp.lt.s32.totalorder %s6694, 15
        %s6696 = scalar_select %p6695, %s6694, 15
        %s6697 = smul.addr %s6696, 8
        %s6698 = scalar_lea.vmem %s16, %s6697
      $region96: #{tpu_custom_call.1} parent=91 // pred_fallthru
        _
    $region92: #{tpu_custom_call.1} parent=5 // pred_fallthru
      _
  $region6: #{tpu_custom_call.1} parent=0 // loop_footer
    %s26 = sadd.s32 1, %s22
  $region7: #{tpu_custom_call.1} parent=0 // loop_footer_branch
    %21 = sbr.rel target = $region3
  $region8: #{tpu_custom_call.1} parent=0 // loop_exit
    _

</llo_original>
